<compile_context>
chip_gen: v5e
topology: v5e:2x2
jax: 0.10.0
libtpu: 0.0.40
codegen_flags: <defaults>
</compile_context>

<pallas_src>
import functools
import math

import jax
import jax.numpy as jnp
from jax import lax
from jax.experimental import pallas as pl
from jax.experimental.pallas import tpu as pltpu

C_HIDDEN = 32  # per-head dim, fixed by the module


# ----------------------------- fused Pallas kernel -------------------------- #

def _fused_kernel(eps, z_ref, nw_ref, w_ref, bg_ref, bo_ref, bias_ref, o_ref):
    """One grid step: TB batch rows -> RMSNorm, packed projection, attention, gate.

    w_ref packs [wq/sqrt(D) | wk | wg | wv_0@wo_0 | ... | wv_{H-1}@wo_{H-1}] along
    the output (lane) dim, so one MXU matmul produces q, k, the gate pre-activation
    and every head's output-projected values v'_h.
    """
    TB, S, C = z_ref.shape
    H = bias_ref.shape[0]
    D = C_HIDDEN
    f32, bf16 = jnp.float32, jnp.bfloat16

    # RMSNorm (f32 elementwise; rsqrt routes to the EUP).
    z = z_ref[...]                                                    # [TB, S, C]
    zn = z * lax.rsqrt(jnp.mean(z * z, axis=-1, keepdims=True) + eps) * nw_ref[...]

    # One packed projection matmul: [TB*S, C] x [C, (3+H)*C], bf16 in / f32 acc.
    zn2 = zn.reshape(TB * S, C).astype(bf16)
    proj = jnp.dot(zn2, w_ref[...], preferred_element_type=f32)       # [TB*S, (3+H)*C]

    # Column splits land on 128-lane boundaries (free).
    q = proj[:, 0 * C:1 * C].astype(bf16).reshape(TB, S, C)           # 1/sqrt(D) folded in
    k = proj[:, 1 * C:2 * C].astype(bf16).reshape(TB, S, C)
    g = proj[:, 2 * C:3 * C].reshape(TB, S, C) + bg_ref[...]          # gate stays f32
    vp = proj[:, 3 * C:].astype(bf16).reshape(TB, S, H * C)           # v'_h, all heads

    # Per-head attention.  H = c_z/32 is tiny, so a static unroll is kept; the
    # review's fori_loop-over-heads variant would need dynamic lane slicing of
    # packed bf16 values, which costs more than it saves at these head counts.
    acc = jnp.zeros((TB, S, C), dtype=f32)
    for h in range(H):
        qh = q[:, :, h * D:(h + 1) * D]                               # [TB, S, D] bf16
        kh = k[:, :, h * D:(h + 1) * D]
        logits = jnp.einsum('bqd,bkd->bqk', qh, kh,
                            preferred_element_type=f32)               # [TB, S, S] f32
        logits = logits + bias_ref[h].astype(f32)                     # bf16 pair+mask bias
        m = jnp.max(logits, axis=-1, keepdims=True)
        p = jnp.exp(logits - m)
        l = jnp.sum(p, axis=-1, keepdims=True)
        oh = jnp.einsum('bqk,bko->bqo', p.astype(bf16),
                        vp[:, :, h * C:(h + 1) * C],
                        preferred_element_type=f32)                   # [TB, S, C]
        acc = acc + oh * pl.reciprocal(l, approx=False)               # deferred softmax norm

    o_ref[...] = (acc + bo_ref[...]) * g


# ------------------------------ sizing helpers ------------------------------ #

def _round_up(x, m):
    return ((x + m - 1) // m) * m


def _vmem_capacity_bytes():
    try:
        return int(pltpu.get_tpu_info().vmem_capacity_bytes)
    except Exception:
        return 64 * 1024 * 1024            # conservative fallback (v7x per-core VMEM)


def _block_vmem_bytes(tb, S, C, H):
    """Per-grid-step VMEM footprint: double-buffered row blocks + single-buffered
    resident operands + kernel temporaries (lane/sublane padding included)."""
    f32b, bf16b = 4, 2
    lane_s, sub_s = _round_up(S, 128), _round_up(S, 8)
    lane_c = _round_up(C, 128)
    P = 3 + H
    io = 2 * 2 * tb * sub_s * lane_c * f32b               # z in + o out, x2 pipeline buffers
    resident = (C * _round_up(P * C, 128) * bf16b         # packed weight (bf16)
                + H * sub_s * lane_s * bf16b              # pair+mask bias (bf16)
                + 3 * 8 * lane_c * f32b)                  # norm_w / bg / bo
    tmp = (tb * S * C * f32b                              # zn
           + tb * S * P * C * f32b                        # packed projection output
           + 2 * tb * S * C * bf16b                       # q, k
           + tb * S * H * C * bf16b                       # v' (all heads)
           + 2 * tb * S * C * f32b                        # g, acc
           + 2 * 2 * tb * sub_s * lane_s * f32b)          # ~2 heads' logits/p live
    return io + resident + tmp


def _pick_row_block(B, S, C, H, vmem_cap):
    """Largest TB dividing B whose footprint fits ~65% of physical VMEM while the
    grid keeps >= 2 steps per v7x TensorCore (grid >= 4); collapse to grid >= 2
    only for tiny tiles where per-step overhead dominates the row DMA."""
    budget = int(0.65 * vmem_cap)
    min_grid = 2 if S <= 64 else 4
    best = 1
    for tb in range(1, B + 1):
        if B % tb:
            continue
        if B // tb < min(min_grid, B):
            continue
        if _block_vmem_bytes(tb, S, C, H) <= budget:
            best = tb
    return best


# ------------------------------ wrapper (glue) ------------------------------ #

def triangle_attention(z, z_mask, params, *, inf=1e9, eps=1e-6, transpose=False):
    if transpose:
        z = jnp.swapaxes(z, -2, -3)
    z = z.astype(jnp.float32)
    z_mask = z_mask.astype(jnp.float32)

    B, S, c_z = z.shape
    # The module's bias broadcast ([1,H,B,S] against [B,H,S,S] logits) is only
    # well-defined for a square pair representation; mask indexes [query, key].
    assert B == S, "pair representation required (B == S) for the bias broadcast"
    assert c_z % C_HIDDEN == 0
    H, D = c_z // C_HIDDEN, C_HIDDEN
    f32, bf16 = jnp.float32, jnp.bfloat16
    hi = jax.lax.Precision.HIGHEST

    # ---- plain-XLA preamble (needs all rows of z_norm): combined bias --------
    zn = z * lax.rsqrt(jnp.mean(z * z, -1, keepdims=True) + eps) * params['norm_w']
    pair_bias = jnp.transpose(jnp.dot(zn, params['wz'], precision=hi), (2, 0, 1))  # [H, q, k]
    mask_bias = jnp.where(z_mask == 0.0, jnp.float32(-inf), 0.0)                   # [q, k]
    bias = (pair_bias + mask_bias[None]).astype(bf16)     # bf16: halves resident VMEM + DMA

    # ---- weight prep: fold 1/sqrt(D) into wq, pre-compose wv_h@wo_h (f32), pack
    scale = 1.0 / math.sqrt(D)
    wvo = jnp.concatenate(
        [jnp.dot(params['wv'][:, h * D:(h + 1) * D],
                 params['wo'][h * D:(h + 1) * D, :], precision=hi) for h in range(H)],
        axis=1)                                                       # [c_z, H*c_z]
    w_packed = jnp.concatenate(
        [params['wq'] * scale, params['wk'], params['wg'], wvo], axis=1).astype(bf16)
    nw = params['norm_w'].reshape(1, c_z).astype(f32)
    bg = params['bg'].reshape(1, c_z).astype(f32)
    bo = params['bo'].reshape(1, c_z).astype(f32)

    vmem_cap = _vmem_capacity_bytes()
    TB = _pick_row_block(B, S, c_z, H, vmem_cap)
    est = _block_vmem_bytes(TB, S, c_z, H)

    cp = dict(dimension_semantics=("parallel",))
    if est > 12 * 1024 * 1024:
        # estimate + margin, capped well below physical VMEM (compiler headroom);
        # for the demo shapes this branch is not taken and the default limit holds.
        cp["vmem_limit_bytes"] = min(int(0.85 * vmem_cap),
                                     max(int(1.3 * est), 32 * 1024 * 1024))

    def build(resident):
        row = pl.BlockSpec((TB, S, c_z), lambda b: (b, 0, 0))
        if resident:
            # Whole-array VMEM-resident operands: single-buffered, no per-step
            # double-buffer copy of the (potentially large) [H,S,S] bias.
            def const(shape):
                return pl.BlockSpec(memory_space=pltpu.MemorySpace.VMEM)
        else:
            # Fallback: constant-index full blocks (double-buffered but always
            # supported); used only if the resident form fails to lower.
            def const(shape):
                n = len(shape)
                return pl.BlockSpec(shape, lambda b: (0,) * n)
        return pl.pallas_call(
            functools.partial(_fused_kernel, eps),
            grid=(B // TB,),
            in_specs=[row,                    # z rows (pipelined)
                      const(nw.shape),        # RMSNorm weight
                      const(w_packed.shape),  # packed q|k|g|v' weight (bf16)
                      const(bg.shape),        # gate bias
                      const(bo.shape),        # output bias
                      const(bias.shape)],     # combined pair + mask bias (bf16)
            out_specs=row,
            out_shape=jax.ShapeDtypeStruct((B, S, c_z), jnp.float32),
            compiler_params=pltpu.CompilerParams(**cp),
        )

    try:
        o = build(resident=True)(z, nw, w_packed, bg, bo, bias)
    except Exception:
        o = build(resident=False)(z, nw, w_packed, bg, bo, bias)

    if transpose:
        o = jnp.swapaxes(o, -2, -3)
    return o.astype(jnp.float32)


# ------------------------------ pure-JAX reference -------------------------- #

def triangle_attention_ref(z, z_mask, params, *, inf=1e9, eps=1e-6):
    z = z.astype(jnp.float32)
    B, S, c_z = z.shape
    H, D = c_z // C_HIDDEN, C_HIDDEN
    zn = z * lax.rsqrt(jnp.mean(z * z, -1, keepdims=True) + eps) * params['norm_w']
    q = (zn @ params['wq']).reshape(B, S, H, D).transpose(0, 2, 1, 3)
    k = (zn @ params['wk']).reshape(B, S, H, D).transpose(0, 2, 1, 3)
    v = (zn @ params['wv']).reshape(B, S, H, D).transpose(0, 2, 1, 3)
    g = zn @ params['wg'] + params['bg']
    attn_bias = jnp.transpose(zn @ params['wz'], (2, 0, 1))[None]          # [1,H,B,S]
    attn_bias = attn_bias + jnp.where(z_mask == 0, -inf, 0.0)[None, None]  # + [1,1,B,S]
    logits = jnp.einsum('bhqd,bhkd->bhqk', q, k) / math.sqrt(D) + attn_bias
    attn = jax.nn.softmax(logits, axis=-1)
    out = jnp.einsum('bhqk,bhkd->bhqd', attn, v).transpose(0, 2, 1, 3).reshape(B, S, c_z)
    return ((out @ params['wo'] + params['bo']) * g).astype(jnp.float32)


# ----------------------------------- main ----------------------------------- #

if __name__ == "__main__":
    N = 16         # B == S == N (pair representation rows/cols)
    c_z = 128      # => no_heads = 4, c_hidden = 32 (lane-dense channel dim)
    inf, eps = 1e9, 1e-6

    key = jax.random.PRNGKey(0)
    ks = jax.random.split(key, 11)
    s = 1.0 / math.sqrt(c_z)
    params = {
        'norm_w': 1.0 + 0.1 * jax.random.normal(ks[0], (c_z,), jnp.float32),
        'wq': s * jax.random.normal(ks[1], (c_z, c_z), jnp.float32),
        'wk': s * jax.random.normal(ks[2], (c_z, c_z), jnp.float32),
        'wv': s * jax.random.normal(ks[3], (c_z, c_z), jnp.float32),
        'wz': s * jax.random.normal(ks[4], (c_z, c_z // C_HIDDEN), jnp.float32),
        'wg': s * jax.random.normal(ks[5], (c_z, c_z), jnp.float32),
        'bg': 0.1 * jax.random.normal(ks[6], (c_z,), jnp.float32),
        'wo': s * jax.random.normal(ks[7], (c_z, c_z), jnp.float32),
        'bo': 0.1 * jax.random.normal(ks[8], (c_z,), jnp.float32),
    }
    z = jax.random.normal(ks[9], (N, N, c_z), jnp.float32)
    z_mask = (jax.random.uniform(ks[10], (N, N)) > 0.25).astype(jnp.float32)

    out = triangle_attention(z, z_mask, params, inf=inf, eps=eps, transpose=False)
    out = jax.block_until_ready(out)

    ref = triangle_attention_ref(z, z_mask, params, inf=inf, eps=eps)
    assert out.shape == (N, N, c_z) and out.dtype == jnp.float32
    err = float(jnp.max(jnp.abs(out - ref)))
    # bf16 MXU operands (f32 accumulation) vs. a pure-f32 reference: standard
    # bf16 kernel tolerance (|out-ref| <= 5e-2 + 5e-2*|ref|).
    assert jnp.allclose(out, ref, atol=5e-2, rtol=5e-2), f"max abs err {err}"
    print("KERNEL_OK")
</pallas_src>

<mosaic_0001>
module attributes {stable_mosaic.version = 11 : i64} {
  func.func @_fused_kernel(%arg0: i32, %arg1: memref<8x16x128xf32, #tpu.memory_space<vmem>>, %arg2: memref<1x128xf32, #tpu.memory_space<vmem>>, %arg3: memref<128x896xbf16, #tpu.memory_space<vmem>>, %arg4: memref<1x128xf32, #tpu.memory_space<vmem>>, %arg5: memref<1x128xf32, #tpu.memory_space<vmem>>, %arg6: memref<4x16x16xbf16, #tpu.memory_space<vmem>>, %arg7: memref<8x16x128xf32, #tpu.memory_space<vmem>>) attributes {dimension_semantics = [#tpu.dimension_semantics<parallel>], iteration_bounds = array<i64: 2>, scalar_prefetch = 0 : i64, scratch_operands = 0 : i64, tpu.core_type = #tpu.core_type<tc>, window_params = [{transform_indices = @transform_0, window_bounds = array<i64: 8, 16, 128>}, {pipeline_mode = #tpu.pipeline_mode<synchronous>, transform_indices = @transform_1, window_bounds = array<i64: 1, 128>}, {pipeline_mode = #tpu.pipeline_mode<synchronous>, transform_indices = @transform_2, window_bounds = array<i64: 128, 896>}, {pipeline_mode = #tpu.pipeline_mode<synchronous>, transform_indices = @transform_3, window_bounds = array<i64: 1, 128>}, {pipeline_mode = #tpu.pipeline_mode<synchronous>, transform_indices = @transform_4, window_bounds = array<i64: 1, 128>}, {pipeline_mode = #tpu.pipeline_mode<synchronous>, transform_indices = @transform_5, window_bounds = array<i64: 4, 16, 16>}, {transform_indices = @transform_6, window_bounds = array<i64: 8, 16, 128>}]} {
    %c0 = arith.constant 0 : index
    %c0_0 = arith.constant 0 : index
    %c0_1 = arith.constant 0 : index
    %0 = vector.load %arg1[%c0, %c0_0, %c0_1] : memref<8x16x128xf32, #tpu.memory_space<vmem>>, vector<8x16x128xf32>
    %1 = arith.mulf %0, %0 : vector<8x16x128xf32>
    %cst = arith.constant dense<0.000000e+00> : vector<8x16xf32>
    %2 = vector.multi_reduction <add>, %1, %cst [2] : vector<8x16x128xf32> to vector<8x16xf32>
    %3 = vector.shape_cast %2 : vector<8x16xf32> to vector<8x16x1xf32>
    %cst_2 = arith.constant 1.280000e+02 : f32
    %4 = vector.broadcast %cst_2 : f32 to vector<8x16x1xf32>
    %5 = arith.divf %3, %4 : vector<8x16x1xf32>
    %cst_3 = arith.constant 9.99999997E-7 : f32
    %6 = vector.broadcast %cst_3 : f32 to vector<8x16x1xf32>
    %7 = arith.addf %5, %6 : vector<8x16x1xf32>
    %8 = math.rsqrt %7 : vector<8x16x1xf32>
    %9 = vector.broadcast %8 : vector<8x16x1xf32> to vector<8x16x128xf32>
    %10 = arith.mulf %0, %9 : vector<8x16x128xf32>
    %c0_4 = arith.constant 0 : index
    %c0_5 = arith.constant 0 : index
    %11 = vector.load %arg2[%c0_4, %c0_5] : memref<1x128xf32, #tpu.memory_space<vmem>>, vector<1x128xf32>
    %12 = vector.shape_cast %11 : vector<1x128xf32> to vector<1x1x128xf32>
    %13 = vector.broadcast %12 : vector<1x1x128xf32> to vector<8x16x128xf32>
    %14 = arith.mulf %10, %13 : vector<8x16x128xf32>
    %15 = vector.shape_cast %14 : vector<8x16x128xf32> to vector<128x128xf32>
    %16 = arith.truncf %15 : vector<128x128xf32> to vector<128x128xbf16>
    %c0_6 = arith.constant 0 : index
    %c0_7 = arith.constant 0 : index
    %17 = vector.load %arg3[%c0_6, %c0_7] : memref<128x896xbf16, #tpu.memory_space<vmem>>, vector<128x896xbf16>
    %cst_8 = arith.constant dense<0.000000e+00> : vector<128x896xf32>
    %18 = tpu.matmul %16, %17, %cst_8 {dimension_numbers = #tpu.dot_dimension_numbers<[1], [0], [0], [1], [0, 0, 1, 1], [], []>} : vector<128x128xbf16>, vector<128x896xbf16>, vector<128x896xf32> -> vector<128x896xf32>
    %19 = vector.extract_strided_slice %18 {offsets = [0, 0], sizes = [128, 128], strides = [1, 1]} : vector<128x896xf32> to vector<128x128xf32>
    %20 = arith.truncf %19 : vector<128x128xf32> to vector<128x128xbf16>
    %21 = vector.shape_cast %20 : vector<128x128xbf16> to vector<8x16x128xbf16>
    %22 = vector.extract_strided_slice %18 {offsets = [0, 128], sizes = [128, 128], strides = [1, 1]} : vector<128x896xf32> to vector<128x128xf32>
    %23 = arith.truncf %22 : vector<128x128xf32> to vector<128x128xbf16>
    %24 = vector.shape_cast %23 : vector<128x128xbf16> to vector<8x16x128xbf16>
    %25 = vector.extract_strided_slice %18 {offsets = [0, 256], sizes = [128, 128], strides = [1, 1]} : vector<128x896xf32> to vector<128x128xf32>
    %26 = vector.shape_cast %25 : vector<128x128xf32> to vector<8x16x128xf32>
    %c0_9 = arith.constant 0 : index
    %c0_10 = arith.constant 0 : index
    %27 = vector.load %arg4[%c0_9, %c0_10] : memref<1x128xf32, #tpu.memory_space<vmem>>, vector<1x128xf32>
    %28 = vector.shape_cast %27 : vector<1x128xf32> to vector<1x1x128xf32>
    %29 = vector.broadcast %28 : vector<1x1x128xf32> to vector<8x16x128xf32>
    %30 = arith.addf %26, %29 : vector<8x16x128xf32>
    %31 = vector.extract_strided_slice %18 {offsets = [0, 384], sizes = [128, 512], strides = [1, 1]} : vector<128x896xf32> to vector<128x512xf32>
    %32 = arith.truncf %31 : vector<128x512xf32> to vector<128x512xbf16>
    %33 = vector.shape_cast %32 : vector<128x512xbf16> to vector<8x16x512xbf16>
    %cst_11 = arith.constant 0.000000e+00 : f32
    %34 = vector.broadcast %cst_11 : f32 to vector<8x16x128xf32>
    %35 = vector.extract_strided_slice %21 {offsets = [0, 0, 0], sizes = [8, 16, 32], strides = [1, 1, 1]} : vector<8x16x128xbf16> to vector<8x16x32xbf16>
    %36 = vector.extract_strided_slice %24 {offsets = [0, 0, 0], sizes = [8, 16, 32], strides = [1, 1, 1]} : vector<8x16x128xbf16> to vector<8x16x32xbf16>
    "tpu.trace_start"() <{level = 10 : i32, message = "bqd,bkd->bqk"}> : () -> ()
    %cst_12 = arith.constant dense<0.000000e+00> : vector<8x16x16xf32>
    %37 = tpu.matmul %35, %36, %cst_12 {dimension_numbers = #tpu.dot_dimension_numbers<[2], [2], [1], [1], [0, 0, 0, 1, 1, 1], [0], [0]>} : vector<8x16x32xbf16>, vector<8x16x32xbf16>, vector<8x16x16xf32> -> vector<8x16x16xf32>
    "tpu.trace_stop"() : () -> ()
    %c0_13 = arith.constant 0 : index
    %c0_14 = arith.constant 0 : index
    %c0_15 = arith.constant 0 : index
    %38 = vector.load %arg6[%c0_13, %c0_14, %c0_15] : memref<4x16x16xbf16, #tpu.memory_space<vmem>>, vector<1x16x16xbf16>
    %39 = vector.shape_cast %38 : vector<1x16x16xbf16> to vector<16x16xbf16>
    %40 = arith.extf %39 : vector<16x16xbf16> to vector<16x16xf32>
    %41 = vector.shape_cast %40 : vector<16x16xf32> to vector<1x16x16xf32>
    %42 = vector.broadcast %41 : vector<1x16x16xf32> to vector<8x16x16xf32>
    %43 = arith.addf %37, %42 : vector<8x16x16xf32>
    %cst_16 = arith.constant dense<0xFF800000> : vector<8x16xf32>
    %44 = vector.multi_reduction <maximumf>, %43, %cst_16 [2] : vector<8x16x16xf32> to vector<8x16xf32>
    %45 = vector.shape_cast %44 : vector<8x16xf32> to vector<8x16x1xf32>
    %46 = vector.broadcast %45 : vector<8x16x1xf32> to vector<8x16x16xf32>
    %47 = arith.subf %43, %46 : vector<8x16x16xf32>
    %48 = math.exp %47 : vector<8x16x16xf32>
    %cst_17 = arith.constant dense<0.000000e+00> : vector<8x16xf32>
    %49 = vector.multi_reduction <add>, %48, %cst_17 [2] : vector<8x16x16xf32> to vector<8x16xf32>
    %50 = vector.shape_cast %49 : vector<8x16xf32> to vector<8x16x1xf32>
    %51 = arith.truncf %48 : vector<8x16x16xf32> to vector<8x16x16xbf16>
    %52 = vector.extract_strided_slice %33 {offsets = [0, 0, 0], sizes = [8, 16, 128], strides = [1, 1, 1]} : vector<8x16x512xbf16> to vector<8x16x128xbf16>
    "tpu.trace_start"() <{level = 10 : i32, message = "bqk,bko->bqo"}> : () -> ()
    %cst_18 = arith.constant dense<0.000000e+00> : vector<8x16x128xf32>
    %53 = tpu.matmul %51, %52, %cst_18 {dimension_numbers = #tpu.dot_dimension_numbers<[2], [1], [1], [2], [0, 0, 0, 1, 1, 2], [0], [0]>} : vector<8x16x16xbf16>, vector<8x16x128xbf16>, vector<8x16x128xf32> -> vector<8x16x128xf32>
    "tpu.trace_stop"() : () -> ()
    %54 = tpu.reciprocal %50 : vector<8x16x1xf32> -> vector<8x16x1xf32>
    %55 = vector.broadcast %54 : vector<8x16x1xf32> to vector<8x16x128xf32>
    %56 = arith.mulf %53, %55 : vector<8x16x128xf32>
    %57 = arith.addf %34, %56 : vector<8x16x128xf32>
    %58 = vector.extract_strided_slice %21 {offsets = [0, 0, 32], sizes = [8, 16, 32], strides = [1, 1, 1]} : vector<8x16x128xbf16> to vector<8x16x32xbf16>
    %59 = vector.extract_strided_slice %24 {offsets = [0, 0, 32], sizes = [8, 16, 32], strides = [1, 1, 1]} : vector<8x16x128xbf16> to vector<8x16x32xbf16>
    "tpu.trace_start"() <{level = 10 : i32, message = "bqd,bkd->bqk"}> : () -> ()
    %cst_19 = arith.constant dense<0.000000e+00> : vector<8x16x16xf32>
    %60 = tpu.matmul %58, %59, %cst_19 {dimension_numbers = #tpu.dot_dimension_numbers<[2], [2], [1], [1], [0, 0, 0, 1, 1, 1], [0], [0]>} : vector<8x16x32xbf16>, vector<8x16x32xbf16>, vector<8x16x16xf32> -> vector<8x16x16xf32>
    "tpu.trace_stop"() : () -> ()
    %c1 = arith.constant 1 : index
    %c0_20 = arith.constant 0 : index
    %c0_21 = arith.constant 0 : index
    %61 = vector.load %arg6[%c1, %c0_20, %c0_21] : memref<4x16x16xbf16, #tpu.memory_space<vmem>>, vector<1x16x16xbf16>
    %62 = vector.shape_cast %61 : vector<1x16x16xbf16> to vector<16x16xbf16>
    %63 = arith.extf %62 : vector<16x16xbf16> to vector<16x16xf32>
    %64 = vector.shape_cast %63 : vector<16x16xf32> to vector<1x16x16xf32>
    %65 = vector.broadcast %64 : vector<1x16x16xf32> to vector<8x16x16xf32>
    %66 = arith.addf %60, %65 : vector<8x16x16xf32>
    %cst_22 = arith.constant dense<0xFF800000> : vector<8x16xf32>
    %67 = vector.multi_reduction <maximumf>, %66, %cst_22 [2] : vector<8x16x16xf32> to vector<8x16xf32>
    %68 = vector.shape_cast %67 : vector<8x16xf32> to vector<8x16x1xf32>
    %69 = vector.broadcast %68 : vector<8x16x1xf32> to vector<8x16x16xf32>
    %70 = arith.subf %66, %69 : vector<8x16x16xf32>
    %71 = math.exp %70 : vector<8x16x16xf32>
    %cst_23 = arith.constant dense<0.000000e+00> : vector<8x16xf32>
    %72 = vector.multi_reduction <add>, %71, %cst_23 [2] : vector<8x16x16xf32> to vector<8x16xf32>
    %73 = vector.shape_cast %72 : vector<8x16xf32> to vector<8x16x1xf32>
    %74 = arith.truncf %71 : vector<8x16x16xf32> to vector<8x16x16xbf16>
    %75 = vector.extract_strided_slice %33 {offsets = [0, 0, 128], sizes = [8, 16, 128], strides = [1, 1, 1]} : vector<8x16x512xbf16> to vector<8x16x128xbf16>
    "tpu.trace_start"() <{level = 10 : i32, message = "bqk,bko->bqo"}> : () -> ()
    %cst_24 = arith.constant dense<0.000000e+00> : vector<8x16x128xf32>
    %76 = tpu.matmul %74, %75, %cst_24 {dimension_numbers = #tpu.dot_dimension_numbers<[2], [1], [1], [2], [0, 0, 0, 1, 1, 2], [0], [0]>} : vector<8x16x16xbf16>, vector<8x16x128xbf16>, vector<8x16x128xf32> -> vector<8x16x128xf32>
    "tpu.trace_stop"() : () -> ()
    %77 = tpu.reciprocal %73 : vector<8x16x1xf32> -> vector<8x16x1xf32>
    %78 = vector.broadcast %77 : vector<8x16x1xf32> to vector<8x16x128xf32>
    %79 = arith.mulf %76, %78 : vector<8x16x128xf32>
    %80 = arith.addf %57, %79 : vector<8x16x128xf32>
    %81 = vector.extract_strided_slice %21 {offsets = [0, 0, 64], sizes = [8, 16, 32], strides = [1, 1, 1]} : vector<8x16x128xbf16> to vector<8x16x32xbf16>
    %82 = vector.extract_strided_slice %24 {offsets = [0, 0, 64], sizes = [8, 16, 32], strides = [1, 1, 1]} : vector<8x16x128xbf16> to vector<8x16x32xbf16>
    "tpu.trace_start"() <{level = 10 : i32, message = "bqd,bkd->bqk"}> : () -> ()
    %cst_25 = arith.constant dense<0.000000e+00> : vector<8x16x16xf32>
    %83 = tpu.matmul %81, %82, %cst_25 {dimension_numbers = #tpu.dot_dimension_numbers<[2], [2], [1], [1], [0, 0, 0, 1, 1, 1], [0], [0]>} : vector<8x16x32xbf16>, vector<8x16x32xbf16>, vector<8x16x16xf32> -> vector<8x16x16xf32>
    "tpu.trace_stop"() : () -> ()
    %c2 = arith.constant 2 : index
    %c0_26 = arith.constant 0 : index
    %c0_27 = arith.constant 0 : index
    %84 = vector.load %arg6[%c2, %c0_26, %c0_27] : memref<4x16x16xbf16, #tpu.memory_space<vmem>>, vector<1x16x16xbf16>
    %85 = vector.shape_cast %84 : vector<1x16x16xbf16> to vector<16x16xbf16>
    %86 = arith.extf %85 : vector<16x16xbf16> to vector<16x16xf32>
    %87 = vector.shape_cast %86 : vector<16x16xf32> to vector<1x16x16xf32>
    %88 = vector.broadcast %87 : vector<1x16x16xf32> to vector<8x16x16xf32>
    %89 = arith.addf %83, %88 : vector<8x16x16xf32>
    %cst_28 = arith.constant dense<0xFF800000> : vector<8x16xf32>
    %90 = vector.multi_reduction <maximumf>, %89, %cst_28 [2] : vector<8x16x16xf32> to vector<8x16xf32>
    %91 = vector.shape_cast %90 : vector<8x16xf32> to vector<8x16x1xf32>
    %92 = vector.broadcast %91 : vector<8x16x1xf32> to vector<8x16x16xf32>
    %93 = arith.subf %89, %92 : vector<8x16x16xf32>
    %94 = math.exp %93 : vector<8x16x16xf32>
    %cst_29 = arith.constant dense<0.000000e+00> : vector<8x16xf32>
    %95 = vector.multi_reduction <add>, %94, %cst_29 [2] : vector<8x16x16xf32> to vector<8x16xf32>
    %96 = vector.shape_cast %95 : vector<8x16xf32> to vector<8x16x1xf32>
    %97 = arith.truncf %94 : vector<8x16x16xf32> to vector<8x16x16xbf16>
    %98 = vector.extract_strided_slice %33 {offsets = [0, 0, 256], sizes = [8, 16, 128], strides = [1, 1, 1]} : vector<8x16x512xbf16> to vector<8x16x128xbf16>
    "tpu.trace_start"() <{level = 10 : i32, message = "bqk,bko->bqo"}> : () -> ()
    %cst_30 = arith.constant dense<0.000000e+00> : vector<8x16x128xf32>
    %99 = tpu.matmul %97, %98, %cst_30 {dimension_numbers = #tpu.dot_dimension_numbers<[2], [1], [1], [2], [0, 0, 0, 1, 1, 2], [0], [0]>} : vector<8x16x16xbf16>, vector<8x16x128xbf16>, vector<8x16x128xf32> -> vector<8x16x128xf32>
    "tpu.trace_stop"() : () -> ()
    %100 = tpu.reciprocal %96 : vector<8x16x1xf32> -> vector<8x16x1xf32>
    %101 = vector.broadcast %100 : vector<8x16x1xf32> to vector<8x16x128xf32>
    %102 = arith.mulf %99, %101 : vector<8x16x128xf32>
    %103 = arith.addf %80, %102 : vector<8x16x128xf32>
    %104 = vector.extract_strided_slice %21 {offsets = [0, 0, 96], sizes = [8, 16, 32], strides = [1, 1, 1]} : vector<8x16x128xbf16> to vector<8x16x32xbf16>
    %105 = vector.extract_strided_slice %24 {offsets = [0, 0, 96], sizes = [8, 16, 32], strides = [1, 1, 1]} : vector<8x16x128xbf16> to vector<8x16x32xbf16>
    "tpu.trace_start"() <{level = 10 : i32, message = "bqd,bkd->bqk"}> : () -> ()
    %cst_31 = arith.constant dense<0.000000e+00> : vector<8x16x16xf32>
    %106 = tpu.matmul %104, %105, %cst_31 {dimension_numbers = #tpu.dot_dimension_numbers<[2], [2], [1], [1], [0, 0, 0, 1, 1, 1], [0], [0]>} : vector<8x16x32xbf16>, vector<8x16x32xbf16>, vector<8x16x16xf32> -> vector<8x16x16xf32>
    "tpu.trace_stop"() : () -> ()
    %c3 = arith.constant 3 : index
    %c0_32 = arith.constant 0 : index
    %c0_33 = arith.constant 0 : index
    %107 = vector.load %arg6[%c3, %c0_32, %c0_33] : memref<4x16x16xbf16, #tpu.memory_space<vmem>>, vector<1x16x16xbf16>
    %108 = vector.shape_cast %107 : vector<1x16x16xbf16> to vector<16x16xbf16>
    %109 = arith.extf %108 : vector<16x16xbf16> to vector<16x16xf32>
    %110 = vector.shape_cast %109 : vector<16x16xf32> to vector<1x16x16xf32>
    %111 = vector.broadcast %110 : vector<1x16x16xf32> to vector<8x16x16xf32>
    %112 = arith.addf %106, %111 : vector<8x16x16xf32>
    %cst_34 = arith.constant dense<0xFF800000> : vector<8x16xf32>
    %113 = vector.multi_reduction <maximumf>, %112, %cst_34 [2] : vector<8x16x16xf32> to vector<8x16xf32>
    %114 = vector.shape_cast %113 : vector<8x16xf32> to vector<8x16x1xf32>
    %115 = vector.broadcast %114 : vector<8x16x1xf32> to vector<8x16x16xf32>
    %116 = arith.subf %112, %115 : vector<8x16x16xf32>
    %117 = math.exp %116 : vector<8x16x16xf32>
    %cst_35 = arith.constant dense<0.000000e+00> : vector<8x16xf32>
    %118 = vector.multi_reduction <add>, %117, %cst_35 [2] : vector<8x16x16xf32> to vector<8x16xf32>
    %119 = vector.shape_cast %118 : vector<8x16xf32> to vector<8x16x1xf32>
    %120 = arith.truncf %117 : vector<8x16x16xf32> to vector<8x16x16xbf16>
    %121 = vector.extract_strided_slice %33 {offsets = [0, 0, 384], sizes = [8, 16, 128], strides = [1, 1, 1]} : vector<8x16x512xbf16> to vector<8x16x128xbf16>
    "tpu.trace_start"() <{level = 10 : i32, message = "bqk,bko->bqo"}> : () -> ()
    %cst_36 = arith.constant dense<0.000000e+00> : vector<8x16x128xf32>
    %122 = tpu.matmul %120, %121, %cst_36 {dimension_numbers = #tpu.dot_dimension_numbers<[2], [1], [1], [2], [0, 0, 0, 1, 1, 2], [0], [0]>} : vector<8x16x16xbf16>, vector<8x16x128xbf16>, vector<8x16x128xf32> -> vector<8x16x128xf32>
    "tpu.trace_stop"() : () -> ()
    %123 = tpu.reciprocal %119 : vector<8x16x1xf32> -> vector<8x16x1xf32>
    %124 = vector.broadcast %123 : vector<8x16x1xf32> to vector<8x16x128xf32>
    %125 = arith.mulf %122, %124 : vector<8x16x128xf32>
    %126 = arith.addf %103, %125 : vector<8x16x128xf32>
    %c0_37 = arith.constant 0 : index
    %c0_38 = arith.constant 0 : index
    %127 = vector.load %arg5[%c0_37, %c0_38] : memref<1x128xf32, #tpu.memory_space<vmem>>, vector<1x128xf32>
    %128 = vector.shape_cast %127 : vector<1x128xf32> to vector<1x1x128xf32>
    %129 = vector.broadcast %128 : vector<1x1x128xf32> to vector<8x16x128xf32>
    %130 = arith.addf %126, %129 : vector<8x16x128xf32>
    %131 = arith.mulf %130, %30 : vector<8x16x128xf32>
    %c0_39 = arith.constant 0 : index
    %c0_40 = arith.constant 0 : index
    %c0_41 = arith.constant 0 : index
    %132 = vector.load %arg7[%c0_39, %c0_40, %c0_41] : memref<8x16x128xf32, #tpu.memory_space<vmem>>, vector<8x16x128xf32>
    tpu.vector_store %arg7[%c0_39, %c0_40, %c0_41], %131 {strides = array<i32>} : memref<8x16x128xf32, #tpu.memory_space<vmem>>, vector<8x16x128xf32>,
    return
  }
  func.func @transform_0(%arg0: i32) -> (i32, i32, i32) {
    %c0_i32 = arith.constant 0 : i32
    %c0_i32_0 = arith.constant 0 : i32
    %c0_i32_1 = arith.constant 0 : i32
    return %arg0, %c0_i32, %c0_i32_0 : i32, i32, i32
  }
  func.func @transform_1(%arg0: i32) -> (i32, i32) {
    %c0_i32 = arith.constant 0 : i32
    %c0_i32_0 = arith.constant 0 : i32
    %c0_i32_1 = arith.constant 0 : i32
    return %c0_i32, %c0_i32_0 : i32, i32
  }
  func.func @transform_2(%arg0: i32) -> (i32, i32) {
    %c0_i32 = arith.constant 0 : i32
    %c0_i32_0 = arith.constant 0 : i32
    %c0_i32_1 = arith.constant 0 : i32
    return %c0_i32, %c0_i32_0 : i32, i32
  }
  func.func @transform_3(%arg0: i32) -> (i32, i32) {
    %c0_i32 = arith.constant 0 : i32
    %c0_i32_0 = arith.constant 0 : i32
    %c0_i32_1 = arith.constant 0 : i32
    return %c0_i32, %c0_i32_0 : i32, i32
  }
  func.func @transform_4(%arg0: i32) -> (i32, i32) {
    %c0_i32 = arith.constant 0 : i32
    %c0_i32_0 = arith.constant 0 : i32
    %c0_i32_1 = arith.constant 0 : i32
    return %c0_i32, %c0_i32_0 : i32, i32
  }
  func.func @transform_5(%arg0: i32) -> (i32, i32, i32) {
    %c0_i32 = arith.constant 0 : i32
    %c0_i32_0 = arith.constant 0 : i32
    %c0_i32_1 = arith.constant 0 : i32
    %c0_i32_2 = arith.constant 0 : i32
    return %c0_i32, %c0_i32_0, %c0_i32_1 : i32, i32, i32
  }
  func.func @transform_6(%arg0: i32) -> (i32, i32, i32) {
    %c0_i32 = arith.constant 0 : i32
    %c0_i32_0 = arith.constant 0 : i32
    %c0_i32_1 = arith.constant 0 : i32
    return %arg0, %c0_i32, %c0_i32_0 : i32, i32, i32
  }
}

module attributes {stable_mosaic.version = 11 : i64} {
  func.func @_fused_kernel(%arg0: i32, %arg1: memref<8x16x128xf32, #tpu.memory_space<vmem>>, %arg2: memref<1x128xf32, #tpu.memory_space<vmem>>, %arg3: memref<128x896xbf16, #tpu.memory_space<vmem>>, %arg4: memref<1x128xf32, #tpu.memory_space<vmem>>, %arg5: memref<1x128xf32, #tpu.memory_space<vmem>>, %arg6: memref<4x16x16xbf16, #tpu.memory_space<vmem>>, %arg7: memref<8x16x128xf32, #tpu.memory_space<vmem>>) attributes {dimension_semantics = [#tpu.dimension_semantics<parallel>], iteration_bounds = array<i64: 2>, scalar_prefetch = 0 : i64, scratch_operands = 0 : i64, tpu.core_type = #tpu.core_type<tc>, window_params = [{transform_indices = @transform_0, window_bounds = array<i64: 8, 16, 128>}, {pipeline_mode = #tpu.pipeline_mode<synchronous>, transform_indices = @transform_1, window_bounds = array<i64: 1, 128>}, {pipeline_mode = #tpu.pipeline_mode<synchronous>, transform_indices = @transform_2, window_bounds = array<i64: 128, 896>}, {pipeline_mode = #tpu.pipeline_mode<synchronous>, transform_indices = @transform_3, window_bounds = array<i64: 1, 128>}, {pipeline_mode = #tpu.pipeline_mode<synchronous>, transform_indices = @transform_4, window_bounds = array<i64: 1, 128>}, {pipeline_mode = #tpu.pipeline_mode<synchronous>, transform_indices = @transform_5, window_bounds = array<i64: 4, 16, 16>}, {transform_indices = @transform_6, window_bounds = array<i64: 8, 16, 128>}]} {
    %c0 = arith.constant 0 : index
    %c0_0 = arith.constant 0 : index
    %c0_1 = arith.constant 0 : index
    %0 = vector.load %arg1[%c0, %c0_0, %c0_1] : memref<8x16x128xf32, #tpu.memory_space<vmem>>, vector<8x16x128xf32>
    %1 = arith.mulf %0, %0 : vector<8x16x128xf32>
    %cst = arith.constant dense<0.000000e+00> : vector<8x16xf32>
    %2 = vector.multi_reduction <add>, %1, %cst [2] : vector<8x16x128xf32> to vector<8x16xf32>
    %3 = vector.shape_cast %2 : vector<8x16xf32> to vector<8x16x1xf32>
    %cst_2 = arith.constant 1.280000e+02 : f32
    %4 = vector.broadcast %cst_2 : f32 to vector<8x16x1xf32>
    %5 = arith.divf %3, %4 : vector<8x16x1xf32>
    %cst_3 = arith.constant 9.99999997E-7 : f32
    %6 = vector.broadcast %cst_3 : f32 to vector<8x16x1xf32>
    %7 = arith.addf %5, %6 : vector<8x16x1xf32>
    %8 = math.rsqrt %7 : vector<8x16x1xf32>
    %9 = vector.broadcast %8 : vector<8x16x1xf32> to vector<8x16x128xf32>
    %10 = arith.mulf %0, %9 : vector<8x16x128xf32>
    %c0_4 = arith.constant 0 : index
    %c0_5 = arith.constant 0 : index
    %11 = vector.load %arg2[%c0_4, %c0_5] : memref<1x128xf32, #tpu.memory_space<vmem>>, vector<1x128xf32>
    %12 = vector.shape_cast %11 : vector<1x128xf32> to vector<1x1x128xf32>
    %13 = vector.broadcast %12 : vector<1x1x128xf32> to vector<8x16x128xf32>
    %14 = arith.mulf %10, %13 : vector<8x16x128xf32>
    %15 = vector.shape_cast %14 : vector<8x16x128xf32> to vector<128x128xf32>
    %16 = arith.truncf %15 : vector<128x128xf32> to vector<128x128xbf16>
    %c0_6 = arith.constant 0 : index
    %c0_7 = arith.constant 0 : index
    %17 = vector.load %arg3[%c0_6, %c0_7] : memref<128x896xbf16, #tpu.memory_space<vmem>>, vector<128x896xbf16>
    %cst_8 = arith.constant dense<0.000000e+00> : vector<128x896xf32>
    %18 = tpu.matmul %16, %17, %cst_8 {dimension_numbers = #tpu.dot_dimension_numbers<[1], [0], [0], [1], [0, 0, 1, 1], [], []>} : vector<128x128xbf16>, vector<128x896xbf16>, vector<128x896xf32> -> vector<128x896xf32>
    %19 = vector.extract_strided_slice %18 {offsets = [0, 0], sizes = [128, 128], strides = [1, 1]} : vector<128x896xf32> to vector<128x128xf32>
    %20 = arith.truncf %19 : vector<128x128xf32> to vector<128x128xbf16>
    %21 = vector.shape_cast %20 : vector<128x128xbf16> to vector<8x16x128xbf16>
    %22 = vector.extract_strided_slice %18 {offsets = [0, 128], sizes = [128, 128], strides = [1, 1]} : vector<128x896xf32> to vector<128x128xf32>
    %23 = arith.truncf %22 : vector<128x128xf32> to vector<128x128xbf16>
    %24 = vector.shape_cast %23 : vector<128x128xbf16> to vector<8x16x128xbf16>
    %25 = vector.extract_strided_slice %18 {offsets = [0, 256], sizes = [128, 128], strides = [1, 1]} : vector<128x896xf32> to vector<128x128xf32>
    %26 = vector.shape_cast %25 : vector<128x128xf32> to vector<8x16x128xf32>
    %c0_9 = arith.constant 0 : index
    %c0_10 = arith.constant 0 : index
    %27 = vector.load %arg4[%c0_9, %c0_10] : memref<1x128xf32, #tpu.memory_space<vmem>>, vector<1x128xf32>
    %28 = vector.shape_cast %27 : vector<1x128xf32> to vector<1x1x128xf32>
    %29 = vector.broadcast %28 : vector<1x1x128xf32> to vector<8x16x128xf32>
    %30 = arith.addf %26, %29 : vector<8x16x128xf32>
    %31 = vector.extract_strided_slice %18 {offsets = [0, 384], sizes = [128, 512], strides = [1, 1]} : vector<128x896xf32> to vector<128x512xf32>
    %32 = arith.truncf %31 : vector<128x512xf32> to vector<128x512xbf16>
    %33 = vector.shape_cast %32 : vector<128x512xbf16> to vector<8x16x512xbf16>
    %cst_11 = arith.constant 0.000000e+00 : f32
    %34 = vector.broadcast %cst_11 : f32 to vector<8x16x128xf32>
    %35 = vector.extract_strided_slice %21 {offsets = [0, 0, 0], sizes = [8, 16, 32], strides = [1, 1, 1]} : vector<8x16x128xbf16> to vector<8x16x32xbf16>
    %36 = vector.extract_strided_slice %24 {offsets = [0, 0, 0], sizes = [8, 16, 32], strides = [1, 1, 1]} : vector<8x16x128xbf16> to vector<8x16x32xbf16>
    "tpu.trace_start"() <{level = 10 : i32, message = "bqd,bkd->bqk"}> : () -> ()
    %cst_12 = arith.constant dense<0.000000e+00> : vector<8x16x16xf32>
    %37 = tpu.matmul %35, %36, %cst_12 {dimension_numbers = #tpu.dot_dimension_numbers<[2], [2], [1], [1], [0, 0, 0, 1, 1, 1], [0], [0]>} : vector<8x16x32xbf16>, vector<8x16x32xbf16>, vector<8x16x16xf32> -> vector<8x16x16xf32>
    "tpu.trace_stop"() : () -> ()
    %c0_13 = arith.constant 0 : index
    %c0_14 = arith.constant 0 : index
    %c0_15 = arith.constant 0 : index
    %38 = vector.load %arg6[%c0_13, %c0_14, %c0_15] : memref<4x16x16xbf16, #tpu.memory_space<vmem>>, vector<1x16x16xbf16>
    %39 = vector.shape_cast %38 : vector<1x16x16xbf16> to vector<16x16xbf16>
    %40 = arith.extf %39 : vector<16x16xbf16> to vector<16x16xf32>
    %41 = vector.shape_cast %40 : vector<16x16xf32> to vector<1x16x16xf32>
    %42 = vector.broadcast %41 : vector<1x16x16xf32> to vector<8x16x16xf32>
    %43 = arith.addf %37, %42 : vector<8x16x16xf32>
    %cst_16 = arith.constant dense<0xFF800000> : vector<8x16xf32>
    %44 = vector.multi_reduction <maximumf>, %43, %cst_16 [2] : vector<8x16x16xf32> to vector<8x16xf32>
    %45 = vector.shape_cast %44 : vector<8x16xf32> to vector<8x16x1xf32>
    %46 = vector.broadcast %45 : vector<8x16x1xf32> to vector<8x16x16xf32>
    %47 = arith.subf %43, %46 : vector<8x16x16xf32>
    %48 = math.exp %47 : vector<8x16x16xf32>
    %cst_17 = arith.constant dense<0.000000e+00> : vector<8x16xf32>
    %49 = vector.multi_reduction <add>, %48, %cst_17 [2] : vector<8x16x16xf32> to vector<8x16xf32>
    %50 = vector.shape_cast %49 : vector<8x16xf32> to vector<8x16x1xf32>
    %51 = arith.truncf %48 : vector<8x16x16xf32> to vector<8x16x16xbf16>
    %52 = vector.extract_strided_slice %33 {offsets = [0, 0, 0], sizes = [8, 16, 128], strides = [1, 1, 1]} : vector<8x16x512xbf16> to vector<8x16x128xbf16>
    "tpu.trace_start"() <{level = 10 : i32, message = "bqk,bko->bqo"}> : () -> ()
    %cst_18 = arith.constant dense<0.000000e+00> : vector<8x16x128xf32>
    %53 = tpu.matmul %51, %52, %cst_18 {dimension_numbers = #tpu.dot_dimension_numbers<[2], [1], [1], [2], [0, 0, 0, 1, 1, 2], [0], [0]>} : vector<8x16x16xbf16>, vector<8x16x128xbf16>, vector<8x16x128xf32> -> vector<8x16x128xf32>
    "tpu.trace_stop"() : () -> ()
    %54 = tpu.reciprocal %50 : vector<8x16x1xf32> -> vector<8x16x1xf32>
    %55 = vector.broadcast %54 : vector<8x16x1xf32> to vector<8x16x128xf32>
    %56 = arith.mulf %53, %55 : vector<8x16x128xf32>
    %57 = arith.addf %34, %56 : vector<8x16x128xf32>
    %58 = vector.extract_strided_slice %21 {offsets = [0, 0, 32], sizes = [8, 16, 32], strides = [1, 1, 1]} : vector<8x16x128xbf16> to vector<8x16x32xbf16>
    %59 = vector.extract_strided_slice %24 {offsets = [0, 0, 32], sizes = [8, 16, 32], strides = [1, 1, 1]} : vector<8x16x128xbf16> to vector<8x16x32xbf16>
    "tpu.trace_start"() <{level = 10 : i32, message = "bqd,bkd->bqk"}> : () -> ()
    %cst_19 = arith.constant dense<0.000000e+00> : vector<8x16x16xf32>
    %60 = tpu.matmul %58, %59, %cst_19 {dimension_numbers = #tpu.dot_dimension_numbers<[2], [2], [1], [1], [0, 0, 0, 1, 1, 1], [0], [0]>} : vector<8x16x32xbf16>, vector<8x16x32xbf16>, vector<8x16x16xf32> -> vector<8x16x16xf32>
    "tpu.trace_stop"() : () -> ()
    %c1 = arith.constant 1 : index
    %c0_20 = arith.constant 0 : index
    %c0_21 = arith.constant 0 : index
    %61 = vector.load %arg6[%c1, %c0_20, %c0_21] : memref<4x16x16xbf16, #tpu.memory_space<vmem>>, vector<1x16x16xbf16>
    %62 = vector.shape_cast %61 : vector<1x16x16xbf16> to vector<16x16xbf16>
    %63 = arith.extf %62 : vector<16x16xbf16> to vector<16x16xf32>
    %64 = vector.shape_cast %63 : vector<16x16xf32> to vector<1x16x16xf32>
    %65 = vector.broadcast %64 : vector<1x16x16xf32> to vector<8x16x16xf32>
    %66 = arith.addf %60, %65 : vector<8x16x16xf32>
    %cst_22 = arith.constant dense<0xFF800000> : vector<8x16xf32>
    %67 = vector.multi_reduction <maximumf>, %66, %cst_22 [2] : vector<8x16x16xf32> to vector<8x16xf32>
    %68 = vector.shape_cast %67 : vector<8x16xf32> to vector<8x16x1xf32>
    %69 = vector.broadcast %68 : vector<8x16x1xf32> to vector<8x16x16xf32>
    %70 = arith.subf %66, %69 : vector<8x16x16xf32>
    %71 = math.exp %70 : vector<8x16x16xf32>
    %cst_23 = arith.constant dense<0.000000e+00> : vector<8x16xf32>
    %72 = vector.multi_reduction <add>, %71, %cst_23 [2] : vector<8x16x16xf32> to vector<8x16xf32>
    %73 = vector.shape_cast %72 : vector<8x16xf32> to vector<8x16x1xf32>
    %74 = arith.truncf %71 : vector<8x16x16xf32> to vector<8x16x16xbf16>
    %75 = vector.extract_strided_slice %33 {offsets = [0, 0, 128], sizes = [8, 16, 128], strides = [1, 1, 1]} : vector<8x16x512xbf16> to vector<8x16x128xbf16>
    "tpu.trace_start"() <{level = 10 : i32, message = "bqk,bko->bqo"}> : () -> ()
    %cst_24 = arith.constant dense<0.000000e+00> : vector<8x16x128xf32>
    %76 = tpu.matmul %74, %75, %cst_24 {dimension_numbers = #tpu.dot_dimension_numbers<[2], [1], [1], [2], [0, 0, 0, 1, 1, 2], [0], [0]>} : vector<8x16x16xbf16>, vector<8x16x128xbf16>, vector<8x16x128xf32> -> vector<8x16x128xf32>
    "tpu.trace_stop"() : () -> ()
    %77 = tpu.reciprocal %73 : vector<8x16x1xf32> -> vector<8x16x1xf32>
    %78 = vector.broadcast %77 : vector<8x16x1xf32> to vector<8x16x128xf32>
    %79 = arith.mulf %76, %78 : vector<8x16x128xf32>
    %80 = arith.addf %57, %79 : vector<8x16x128xf32>
    %81 = vector.extract_strided_slice %21 {offsets = [0, 0, 64], sizes = [8, 16, 32], strides = [1, 1, 1]} : vector<8x16x128xbf16> to vector<8x16x32xbf16>
    %82 = vector.extract_strided_slice %24 {offsets = [0, 0, 64], sizes = [8, 16, 32], strides = [1, 1, 1]} : vector<8x16x128xbf16> to vector<8x16x32xbf16>
    "tpu.trace_start"() <{level = 10 : i32, message = "bqd,bkd->bqk"}> : () -> ()
    %cst_25 = arith.constant dense<0.000000e+00> : vector<8x16x16xf32>
    %83 = tpu.matmul %81, %82, %cst_25 {dimension_numbers = #tpu.dot_dimension_numbers<[2], [2], [1], [1], [0, 0, 0, 1, 1, 1], [0], [0]>} : vector<8x16x32xbf16>, vector<8x16x32xbf16>, vector<8x16x16xf32> -> vector<8x16x16xf32>
    "tpu.trace_stop"() : () -> ()
    %c2 = arith.constant 2 : index
    %c0_26 = arith.constant 0 : index
    %c0_27 = arith.constant 0 : index
    %84 = vector.load %arg6[%c2, %c0_26, %c0_27] : memref<4x16x16xbf16, #tpu.memory_space<vmem>>, vector<1x16x16xbf16>
    %85 = vector.shape_cast %84 : vector<1x16x16xbf16> to vector<16x16xbf16>
    %86 = arith.extf %85 : vector<16x16xbf16> to vector<16x16xf32>
    %87 = vector.shape_cast %86 : vector<16x16xf32> to vector<1x16x16xf32>
    %88 = vector.broadcast %87 : vector<1x16x16xf32> to vector<8x16x16xf32>
    %89 = arith.addf %83, %88 : vector<8x16x16xf32>
    %cst_28 = arith.constant dense<0xFF800000> : vector<8x16xf32>
    %90 = vector.multi_reduction <maximumf>, %89, %cst_28 [2] : vector<8x16x16xf32> to vector<8x16xf32>
    %91 = vector.shape_cast %90 : vector<8x16xf32> to vector<8x16x1xf32>
    %92 = vector.broadcast %91 : vector<8x16x1xf32> to vector<8x16x16xf32>
    %93 = arith.subf %89, %92 : vector<8x16x16xf32>
    %94 = math.exp %93 : vector<8x16x16xf32>
    %cst_29 = arith.constant dense<0.000000e+00> : vector<8x16xf32>
    %95 = vector.multi_reduction <add>, %94, %cst_29 [2] : vector<8x16x16xf32> to vector<8x16xf32>
    %96 = vector.shape_cast %95 : vector<8x16xf32> to vector<8x16x1xf32>
    %97 = arith.truncf %94 : vector<8x16x16xf32> to vector<8x16x16xbf16>
    %98 = vector.extract_strided_slice %33 {offsets = [0, 0, 256], sizes = [8, 16, 128], strides = [1, 1, 1]} : vector<8x16x512xbf16> to vector<8x16x128xbf16>
    "tpu.trace_start"() <{level = 10 : i32, message = "bqk,bko->bqo"}> : () -> ()
    %cst_30 = arith.constant dense<0.000000e+00> : vector<8x16x128xf32>
    %99 = tpu.matmul %97, %98, %cst_30 {dimension_numbers = #tpu.dot_dimension_numbers<[2], [1], [1], [2], [0, 0, 0, 1, 1, 2], [0], [0]>} : vector<8x16x16xbf16>, vector<8x16x128xbf16>, vector<8x16x128xf32> -> vector<8x16x128xf32>
    "tpu.trace_stop"() : () -> ()
    %100 = tpu.reciprocal %96 : vector<8x16x1xf32> -> vector<8x16x1xf32>
    %101 = vector.broadcast %100 : vector<8x16x1xf32> to vector<8x16x128xf32>
    %102 = arith.mulf %99, %101 : vector<8x16x128xf32>
    %103 = arith.addf %80, %102 : vector<8x16x128xf32>
    %104 = vector.extract_strided_slice %21 {offsets = [0, 0, 96], sizes = [8, 16, 32], strides = [1, 1, 1]} : vector<8x16x128xbf16> to vector<8x16x32xbf16>
    %105 = vector.extract_strided_slice %24 {offsets = [0, 0, 96], sizes = [8, 16, 32], strides = [1, 1, 1]} : vector<8x16x128xbf16> to vector<8x16x32xbf16>
    "tpu.trace_start"() <{level = 10 : i32, message = "bqd,bkd->bqk"}> : () -> ()
    %cst_31 = arith.constant dense<0.000000e+00> : vector<8x16x16xf32>
    %106 = tpu.matmul %104, %105, %cst_31 {dimension_numbers = #tpu.dot_dimension_numbers<[2], [2], [1], [1], [0, 0, 0, 1, 1, 1], [0], [0]>} : vector<8x16x32xbf16>, vector<8x16x32xbf16>, vector<8x16x16xf32> -> vector<8x16x16xf32>
    "tpu.trace_stop"() : () -> ()
    %c3 = arith.constant 3 : index
    %c0_32 = arith.constant 0 : index
    %c0_33 = arith.constant 0 : index
    %107 = vector.load %arg6[%c3, %c0_32, %c0_33] : memref<4x16x16xbf16, #tpu.memory_space<vmem>>, vector<1x16x16xbf16>
    %108 = vector.shape_cast %107 : vector<1x16x16xbf16> to vector<16x16xbf16>
    %109 = arith.extf %108 : vector<16x16xbf16> to vector<16x16xf32>
    %110 = vector.shape_cast %109 : vector<16x16xf32> to vector<1x16x16xf32>
    %111 = vector.broadcast %110 : vector<1x16x16xf32> to vector<8x16x16xf32>
    %112 = arith.addf %106, %111 : vector<8x16x16xf32>
    %cst_34 = arith.constant dense<0xFF800000> : vector<8x16xf32>
    %113 = vector.multi_reduction <maximumf>, %112, %cst_34 [2] : vector<8x16x16xf32> to vector<8x16xf32>
    %114 = vector.shape_cast %113 : vector<8x16xf32> to vector<8x16x1xf32>
    %115 = vector.broadcast %114 : vector<8x16x1xf32> to vector<8x16x16xf32>
    %116 = arith.subf %112, %115 : vector<8x16x16xf32>
    %117 = math.exp %116 : vector<8x16x16xf32>
    %cst_35 = arith.constant dense<0.000000e+00> : vector<8x16xf32>
    %118 = vector.multi_reduction <add>, %117, %cst_35 [2] : vector<8x16x16xf32> to vector<8x16xf32>
    %119 = vector.shape_cast %118 : vector<8x16xf32> to vector<8x16x1xf32>
    %120 = arith.truncf %117 : vector<8x16x16xf32> to vector<8x16x16xbf16>
    %121 = vector.extract_strided_slice %33 {offsets = [0, 0, 384], sizes = [8, 16, 128], strides = [1, 1, 1]} : vector<8x16x512xbf16> to vector<8x16x128xbf16>
    "tpu.trace_start"() <{level = 10 : i32, message = "bqk,bko->bqo"}> : () -> ()
    %cst_36 = arith.constant dense<0.000000e+00> : vector<8x16x128xf32>
    %122 = tpu.matmul %120, %121, %cst_36 {dimension_numbers = #tpu.dot_dimension_numbers<[2], [1], [1], [2], [0, 0, 0, 1, 1, 2], [0], [0]>} : vector<8x16x16xbf16>, vector<8x16x128xbf16>, vector<8x16x128xf32> -> vector<8x16x128xf32>
    "tpu.trace_stop"() : () -> ()
    %123 = tpu.reciprocal %119 : vector<8x16x1xf32> -> vector<8x16x1xf32>
    %124 = vector.broadcast %123 : vector<8x16x1xf32> to vector<8x16x128xf32>
    %125 = arith.mulf %122, %124 : vector<8x16x128xf32>
    %126 = arith.addf %103, %125 : vector<8x16x128xf32>
    %c0_37 = arith.constant 0 : index
    %c0_38 = arith.constant 0 : index
    %127 = vector.load %arg5[%c0_37, %c0_38] : memref<1x128xf32, #tpu.memory_space<vmem>>, vector<1x128xf32>
    %128 = vector.shape_cast %127 : vector<1x128xf32> to vector<1x1x128xf32>
    %129 = vector.broadcast %128 : vector<1x1x128xf32> to vector<8x16x128xf32>
    %130 = arith.addf %126, %129 : vector<8x16x128xf32>
    %131 = arith.mulf %130, %30 : vector<8x16x128xf32>
    %c0_39 = arith.constant 0 : index
    %c0_40 = arith.constant 0 : index
    %c0_41 = arith.constant 0 : index
    %132 = vector.load %arg7[%c0_39, %c0_40, %c0_41] : memref<8x16x128xf32, #tpu.memory_space<vmem>>, vector<8x16x128xf32>
    tpu.vector_store %arg7[%c0_39, %c0_40, %c0_41], %131 {strides = array<i32>} : memref<8x16x128xf32, #tpu.memory_space<vmem>>, vector<8x16x128xf32>,
    return
  }
  func.func @transform_0(%arg0: i32) -> (i32, i32, i32) {
    %c0_i32 = arith.constant 0 : i32
    %c0_i32_0 = arith.constant 0 : i32
    %c0_i32_1 = arith.constant 0 : i32
    return %arg0, %c0_i32, %c0_i32_0 : i32, i32, i32
  }
  func.func @transform_1(%arg0: i32) -> (i32, i32) {
    %c0_i32 = arith.constant 0 : i32
    %c0_i32_0 = arith.constant 0 : i32
    %c0_i32_1 = arith.constant 0 : i32
    return %c0_i32, %c0_i32_0 : i32, i32
  }
  func.func @transform_2(%arg0: i32) -> (i32, i32) {
    %c0_i32 = arith.constant 0 : i32
    %c0_i32_0 = arith.constant 0 : i32
    %c0_i32_1 = arith.constant 0 : i32
    return %c0_i32, %c0_i32_0 : i32, i32
  }
  func.func @transform_3(%arg0: i32) -> (i32, i32) {
    %c0_i32 = arith.constant 0 : i32
    %c0_i32_0 = arith.constant 0 : i32
    %c0_i32_1 = arith.constant 0 : i32
    return %c0_i32, %c0_i32_0 : i32, i32
  }
  func.func @transform_4(%arg0: i32) -> (i32, i32) {
    %c0_i32 = arith.constant 0 : i32
    %c0_i32_0 = arith.constant 0 : i32
    %c0_i32_1 = arith.constant 0 : i32
    return %c0_i32, %c0_i32_0 : i32, i32
  }
  func.func @transform_5(%arg0: i32) -> (i32, i32, i32) {
    %c0_i32 = arith.constant 0 : i32
    %c0_i32_0 = arith.constant 0 : i32
    %c0_i32_1 = arith.constant 0 : i32
    %c0_i32_2 = arith.constant 0 : i32
    return %c0_i32, %c0_i32_0, %c0_i32_1 : i32, i32, i32
  }
  func.func @transform_6(%arg0: i32) -> (i32, i32, i32) {
    %c0_i32 = arith.constant 0 : i32
    %c0_i32_0 = arith.constant 0 : i32
    %c0_i32_1 = arith.constant 0 : i32
    return %arg0, %c0_i32, %c0_i32_0 : i32, i32, i32
  }
}

</mosaic_0001>

<llo_original>
// kernel: tpu_custom_call.1
$region0: #{tpu_custom_call.1}
  #allocation0 [shape = 'u32[]', space=smem, size = 0x4, offset = 0x4, fixed_abs, tag = 'smem constant byte address 0x4 - core index']
  #allocation1 [shape = 'u32[72,128]{1,0:T(1,128)}', space=vmem, size = 0x9000, scoped, tag = 'internal scratch']
  %s0 = inlined_call_operand.hbm [shape: f32[16,16,128], index: 0, kind: input, shape index: {}]
  %s1 = inlined_call_operand.hbm [shape: f32[1,128], index: 1, kind: input, shape index: {}]
  %s2 = inlined_call_operand.hbm [shape: bf16[128,896], index: 2, kind: input, shape index: {}]
  %s3 = inlined_call_operand.vmem [shape: f32[1,128], index: 3, kind: input, shape index: {}]
  %s4 = inlined_call_operand.vmem [shape: f32[1,128], index: 4, kind: input, shape index: {}]
  %s5 = inlined_call_operand.hbm [shape: bf16[4,16,16], index: 5, kind: input, shape index: {}]
  %s6 = inlined_call_operand.hbm [shape: f32[16,16,128], index: 6, kind: output, shape index: {}]
  %s7 = sld [smem:[#allocation0]]
  $region73: #{tpu_custom_call.1} parent=0
    _
  %s9 = ssub.s32 1, %s7
  %s10 = scalar_select 0, %s9, %s7
  $region1: #{tpu_custom_call.1} parent=0
    #allocation2 [shape = 'u8[131072]{0}', space=vmem, size = 0x20000, scoped, tag = 'input window, operand 0']
    #allocation3 [shape = 's32[2]{0}', space=sflag, size = 0x8, scoped, tag = 'scoped memory for tpu_custom_call.1']
    #allocation4 [shape = 's32[2]{0}', space=sflag, size = 0x8, scoped, tag = 'scoped memory for tpu_custom_call.1']
    #allocation5 [shape = 'u8[512]{0}', space=vmem, size = 0x400, scoped, tag = 'input window, operand 1, single buffered']
    #allocation6 [shape = 's32[1]{0}', space=sflag, size = 0x4, scoped, tag = 'scoped memory for tpu_custom_call.1']
    #allocation7 [shape = 'u8[229376]{0}', space=vmem, size = 0x38000, scoped, tag = 'input window, operand 2, single buffered']
    #allocation8 [shape = 'u8[16384]{0}', space=vmem, size = 0x4000, scoped, tag = 'input window, operand 5, single buffered']
    #allocation9 [shape = 's32[1]{0}', space=sflag, size = 0x4, scoped, tag = 'scoped memory for tpu_custom_call.1']
    #allocation10 [shape = 'u8[131072]{0}', space=vmem, size = 0x20000, scoped, tag = 'output window, operand 0']
    %11 = vsyncpa [#allocation3], 0
    %s12 = scalar_lea.sflag [#allocation3], 1
    %13 = vsyncpa %s12, 0
    %14 = vsyncpa [#allocation6], 0
    %15 = vsyncpa [#allocation9], 0
    %16 = vsyncpa [#allocation4], 0
    %s17 = scalar_lea.sflag [#allocation4], 1
    %18 = vsyncpa %s17, 0
    loop: start=0, step=1, limit=4
    $region2: #{tpu_custom_call.1} parent=1 // loop_pre_header
      _
    $region3: #{tpu_custom_call.1} parent=1 // loop_header
      %s20 = sphi 0, %s24
      %p21 = scmp.ge.s32.totalorder %s20, 4
      %s30 = sphi 0, %s32
      %s33 = sphi 0, %s30
      %s34 = sphi 0, %s33
      %s50 = sphi 0, %s34
      %s54 = sphi 0, %s54
      %s56 = sphi 0, %s54
      %s57 = sphi 0, %s56
      %s71 = sphi 0, %s57
      %s75 = sphi 0, %s75
      %s77 = sphi 0, %s75
      %s78 = sphi 0, %s77
      %s92 = sphi 0, %s78
      %s96 = sphi 0, %s96
      %s98 = sphi 0, %s96
      %s99 = sphi 0, %s98
      %s113 = sphi 0, %s99
      %s117 = sphi 0, %s117
      %s119 = sphi 0, %s117
      %s120 = sphi 0, %s119
      %s134 = sphi 0, %s120
      %s138 = sphi 0, %s138
      %s140 = sphi 0, %s138
      %s141 = sphi 0, %s140
      %s155 = sphi 0, %s141
      %s161 = sphi 0, %s163
      %s164 = sphi 0, %s161
      %s165 = sphi 0, %s164
      %s181 = sphi 0, %s165
    $region4: #{tpu_custom_call.1} parent=1 // loop_header_branch
      %23 = sbr.rel (%p21) target = $region8
    $region5: #{tpu_custom_call.1} parent=1 // loop_body
      %s25 = ssub.s32 %s20, 1
      %s26 = ssub.s32 %s20, 2
      %s27 = sadd.s32 %s20, 1
      %s28 = ssub.s32 %s20, %s27
      %p29 = scmp.eq.s32.totalorder %s28, 0
      %s31 = sadd.s32 %s30, 1
      %s32 = scalar_select %p29, %s30, %s31
      %p35 = pneg %p29
      %p36 = scmp.eq.s32.totalorder %s20, 1
      %p37 = por %p35, %p36
      %p38 = scmp.ne.s32.totalorder %s30, %s33
      %p39 = scmp.eq.s32.totalorder %s20, 0
      %p40 = por %p38, %p39
      %p41 = scmp.ne.s32.totalorder %s30, %s33
      %p42 = scmp.eq.s32.totalorder %s25, 1
      %p43 = por %p41, %p42
      %p44 = scmp.ne.s32.totalorder %s33, %s34
      %p45 = scmp.eq.s32.totalorder %s25, 0
      %p46 = por %p44, %p45
      %p47 = scmp.ne.s32.totalorder %s33, %s34
      %p48 = scmp.eq.s32.totalorder %s26, 1
      %p49 = por %p47, %p48
      %p51 = scmp.ne.s32.totalorder %s34, %s50
      %p52 = scmp.eq.s32.totalorder %s26, 0
      %p53 = por %p51, %p52
      %s55 = sadd.s32 %s54, 1
      %p58 = scmp.eq.s32.totalorder %s20, 1
      %p59 = scmp.ne.s32.totalorder %s54, %s56
      %p60 = scmp.eq.s32.totalorder %s20, 0
      %p61 = por %p59, %p60
      %p62 = scmp.ne.s32.totalorder %s54, %s56
      %p63 = scmp.eq.s32.totalorder %s25, 1
      %p64 = por %p62, %p63
      %p65 = scmp.ne.s32.totalorder %s56, %s57
      %p66 = scmp.eq.s32.totalorder %s25, 0
      %p67 = por %p65, %p66
      %p68 = scmp.ne.s32.totalorder %s56, %s57
      %p69 = scmp.eq.s32.totalorder %s26, 1
      %p70 = por %p68, %p69
      %p72 = scmp.ne.s32.totalorder %s57, %s71
      %p73 = scmp.eq.s32.totalorder %s26, 0
      %p74 = por %p72, %p73
      %s76 = sadd.s32 %s75, 1
      %p79 = scmp.eq.s32.totalorder %s20, 1
      %p80 = scmp.ne.s32.totalorder %s75, %s77
      %p81 = scmp.eq.s32.totalorder %s20, 0
      %p82 = por %p80, %p81
      %p83 = scmp.ne.s32.totalorder %s75, %s77
      %p84 = scmp.eq.s32.totalorder %s25, 1
      %p85 = por %p83, %p84
      %p86 = scmp.ne.s32.totalorder %s77, %s78
      %p87 = scmp.eq.s32.totalorder %s25, 0
      %p88 = por %p86, %p87
      %p89 = scmp.ne.s32.totalorder %s77, %s78
      %p90 = scmp.eq.s32.totalorder %s26, 1
      %p91 = por %p89, %p90
      %p93 = scmp.ne.s32.totalorder %s78, %s92
      %p94 = scmp.eq.s32.totalorder %s26, 0
      %p95 = por %p93, %p94
      %s97 = sadd.s32 %s96, 1
      %p100 = scmp.eq.s32.totalorder %s20, 1
      %p101 = scmp.ne.s32.totalorder %s96, %s98
      %p102 = scmp.eq.s32.totalorder %s20, 0
      %p103 = por %p101, %p102
      %p104 = scmp.ne.s32.totalorder %s96, %s98
      %p105 = scmp.eq.s32.totalorder %s25, 1
      %p106 = por %p104, %p105
      %p107 = scmp.ne.s32.totalorder %s98, %s99
      %p108 = scmp.eq.s32.totalorder %s25, 0
      %p109 = por %p107, %p108
      %p110 = scmp.ne.s32.totalorder %s98, %s99
      %p111 = scmp.eq.s32.totalorder %s26, 1
      %p112 = por %p110, %p111
      %p114 = scmp.ne.s32.totalorder %s99, %s113
      %p115 = scmp.eq.s32.totalorder %s26, 0
      %p116 = por %p114, %p115
      %s118 = sadd.s32 %s117, 1
      %p121 = scmp.eq.s32.totalorder %s20, 1
      %p122 = scmp.ne.s32.totalorder %s117, %s119
      %p123 = scmp.eq.s32.totalorder %s20, 0
      %p124 = por %p122, %p123
      %p125 = scmp.ne.s32.totalorder %s117, %s119
      %p126 = scmp.eq.s32.totalorder %s25, 1
      %p127 = por %p125, %p126
      %p128 = scmp.ne.s32.totalorder %s119, %s120
      %p129 = scmp.eq.s32.totalorder %s25, 0
      %p130 = por %p128, %p129
      %p131 = scmp.ne.s32.totalorder %s119, %s120
      %p132 = scmp.eq.s32.totalorder %s26, 1
      %p133 = por %p131, %p132
      %p135 = scmp.ne.s32.totalorder %s120, %s134
      %p136 = scmp.eq.s32.totalorder %s26, 0
      %p137 = por %p135, %p136
      %s139 = sadd.s32 %s138, 1
      %p142 = scmp.eq.s32.totalorder %s20, 1
      %p143 = scmp.ne.s32.totalorder %s138, %s140
      %p144 = scmp.eq.s32.totalorder %s20, 0
      %p145 = por %p143, %p144
      %p146 = scmp.ne.s32.totalorder %s138, %s140
      %p147 = scmp.eq.s32.totalorder %s25, 1
      %p148 = por %p146, %p147
      %p149 = scmp.ne.s32.totalorder %s140, %s141
      %p150 = scmp.eq.s32.totalorder %s25, 0
      %p151 = por %p149, %p150
      %p152 = scmp.ne.s32.totalorder %s140, %s141
      %p153 = scmp.eq.s32.totalorder %s26, 1
      %p154 = por %p152, %p153
      %p156 = scmp.ne.s32.totalorder %s141, %s155
      %p157 = scmp.eq.s32.totalorder %s26, 0
      %p158 = por %p156, %p157
      %s159 = ssub.s32 %s20, %s27
      %p160 = scmp.eq.s32.totalorder %s159, 0
      %s162 = sadd.s32 %s161, 1
      %s163 = scalar_select %p160, %s161, %s162
      %p166 = pneg %p160
      %p167 = scmp.eq.s32.totalorder %s20, 1
      %p168 = por %p166, %p167
      %p169 = scmp.ne.s32.totalorder %s161, %s164
      %p170 = scmp.eq.s32.totalorder %s20, 0
      %p171 = por %p169, %p170
      %p172 = scmp.ne.s32.totalorder %s161, %s164
      %p173 = scmp.eq.s32.totalorder %s25, 1
      %p174 = por %p172, %p173
      %p175 = scmp.ne.s32.totalorder %s164, %s165
      %p176 = scmp.eq.s32.totalorder %s25, 0
      %p177 = por %p175, %p176
      %p178 = scmp.ne.s32.totalorder %s164, %s165
      %p179 = scmp.eq.s32.totalorder %s26, 1
      %p180 = por %p178, %p179
      %p182 = scmp.ne.s32.totalorder %s165, %s181
      %p183 = scmp.eq.s32.totalorder %s26, 0
      %p184 = por %p182, %p183
      %p185 = scmp.le.s32.totalorder 1, %s20
      %p186 = scmp.lt.s32.totalorder %s20, 3
      %p187 = pnand %p185, %p186
      %p188 = pneg %p187
      // Predicated region
      $region9: #{tpu_custom_call.1} parent=5 // pred_check
        _
      $region10: #{tpu_custom_call.1} parent=5 // pred_check_branch
        %190 = sbr.rel (%p187) target = $region12
      $region11: #{tpu_custom_call.1} parent=5 // pred_region
        %s191 = ssub.s32 %s20, 1
        // Predicated region
        $region13: #{tpu_custom_call.1} parent=11 // pred_check
          %p192 = pneg %p67
        $region14: #{tpu_custom_call.1} parent=11 // pred_check_branch
          %194 = sbr.rel (%p192) target = $region16
        $region15: #{tpu_custom_call.1} parent=11 // pred_region
          %196 = vsyncadd [#allocation6], 0
          %s198 = sshll.u32 %s1, 4
          %s199 = int_to_ptr.hbm [resolvable:$true] %s198
          %s200 = sshll.u32 [#allocation5], 4
          %s201 = int_to_ptr.vmem [resolvable:$true] %s200
          %203 = dma.hbm_to_vmem [thread:$0]  %s199, 16, %s201, [#allocation6]
        $region16: #{tpu_custom_call.1} parent=11 // pred_fallthru
          _
        // Predicated region
        $region17: #{tpu_custom_call.1} parent=11 // pred_check
          %p204 = pneg %p88
        $region18: #{tpu_custom_call.1} parent=11 // pred_check_branch
          %206 = sbr.rel (%p204) target = $region20
        $region19: #{tpu_custom_call.1} parent=11 // pred_region
          %208 = vsyncadd [#allocation6], 0
          %s209 = sshll.u32 %s2, 4
          %s210 = int_to_ptr.hbm [resolvable:$true] %s209
          %s211 = sshll.u32 [#allocation7], 4
          %s212 = int_to_ptr.vmem [resolvable:$true] %s211
          %217 = dma.hbm_to_vmem [thread:$0]  %s210, 7168, %s212, [#allocation6], 448, 448, 28
        $region20: #{tpu_custom_call.1} parent=11 // pred_fallthru
          _
        // Predicated region
        $region21: #{tpu_custom_call.1} parent=11 // pred_check
          %p218 = pneg %p109
        $region22: #{tpu_custom_call.1} parent=11 // pred_check_branch
          %220 = sbr.rel (%p218) target = $region24
        $region23: #{tpu_custom_call.1} parent=11 // pred_region
          _
        $region24: #{tpu_custom_call.1} parent=11 // pred_fallthru
          _
        // Predicated region
        $region25: #{tpu_custom_call.1} parent=11 // pred_check
          %p221 = pneg %p130
        $region26: #{tpu_custom_call.1} parent=11 // pred_check_branch
          %223 = sbr.rel (%p221) target = $region28
        $region27: #{tpu_custom_call.1} parent=11 // pred_region
          _
        $region28: #{tpu_custom_call.1} parent=11 // pred_fallthru
          _
        // Predicated region
        $region29: #{tpu_custom_call.1} parent=11 // pred_check
          %p224 = pneg %p151
        $region30: #{tpu_custom_call.1} parent=11 // pred_check_branch
          %226 = sbr.rel (%p224) target = $region32
        $region31: #{tpu_custom_call.1} parent=11 // pred_region
          %228 = vsyncadd [#allocation9], 0
          %s229 = sshll.u32 %s5, 4
          %s230 = int_to_ptr.hbm [resolvable:$true] %s229
          %s231 = sshll.u32 [#allocation8], 4
          %s232 = int_to_ptr.vmem [resolvable:$true] %s231
          %237 = dma.hbm_to_vmem [thread:$0]  %s230, 512, %s232, [#allocation9], 64, 64, 4
        $region32: #{tpu_custom_call.1} parent=11 // pred_fallthru
          _
      $region12: #{tpu_custom_call.1} parent=5 // pred_fallthru
        _
      %p238 = scmp.lt.s32.totalorder %s20, 2
      // Predicated region
      $region33: #{tpu_custom_call.1} parent=5 // pred_check
        %p239 = pneg %p238
      $region34: #{tpu_custom_call.1} parent=5 // pred_check_branch
        %241 = sbr.rel (%p239) target = $region36
      $region35: #{tpu_custom_call.1} parent=5 // pred_region
        // Predicated region
        $region37: #{tpu_custom_call.1} parent=35 // pred_check
          %p242 = pneg %p40
        $region38: #{tpu_custom_call.1} parent=35 // pred_check_branch
          %244 = sbr.rel (%p242) target = $region40
        $region39: #{tpu_custom_call.1} parent=35 // pred_region
          %s245 = sand.u32 %s30, 1
          %s246 = scalar_lea.sflag [#allocation3], %s245
          %s247 = sand.u32 %s30, 1
          %s248 = smul.addr %s247, 128
          %s249 = scalar_lea.vmem [#allocation2], %s248
          %s250 = smul.u32 8, %s20
          %252 = vsyncadd %s246, 0
          %s253 = smul.addr %s250, 2
          %s254 = smul.addr %s253, 8
          %s255 = scalar_lea.hbm %s0, %s254
          %s256 = sshll.u32 %s255, 4
          %s257 = int_to_ptr.hbm [resolvable:$true] %s256
          %s258 = sshll.u32 %s249, 4
          %s259 = int_to_ptr.vmem [resolvable:$true] %s258
          %264 = dma.hbm_to_vmem [thread:$0]  %s257, 2048, %s259, %s246, 128, 128, 8
        $region40: #{tpu_custom_call.1} parent=35 // pred_fallthru
          _
      $region36: #{tpu_custom_call.1} parent=5 // pred_fallthru
        _
      %p265 = scmp.le.s32.totalorder 1, %s20
      %p266 = scmp.lt.s32.totalorder %s20, 3
      %p267 = pnand %p265, %p266
      %p268 = pneg %p267
      // Predicated region
      $region41: #{tpu_custom_call.1} parent=5 // pred_check
        _
      $region42: #{tpu_custom_call.1} parent=5 // pred_check_branch
        %270 = sbr.rel (%p267) target = $region44
      $region43: #{tpu_custom_call.1} parent=5 // pred_region
        %s271 = ssub.s32 %s20, 1
        %s272 = sand.u32 %s33, 1
        %s273 = scalar_lea.sflag [#allocation3], %s272
        %s274 = sand.u32 %s33, 1
        %s275 = smul.addr %s274, 128
        %s276 = scalar_lea.vmem [#allocation2], %s275
        // Predicated region
        $region45: #{tpu_custom_call.1} parent=43 // pred_check
          %p277 = pneg %p46
        $region46: #{tpu_custom_call.1} parent=43 // pred_check_branch
          %279 = sbr.rel (%p277) target = $region48
        $region47: #{tpu_custom_call.1} parent=43 // pred_region
          %281 = dma.done %s273, 2048
        $region48: #{tpu_custom_call.1} parent=43 // pred_fallthru
          _
        // Predicated region
        $region49: #{tpu_custom_call.1} parent=43 // pred_check
          %p282 = pneg %p67
        $region50: #{tpu_custom_call.1} parent=43 // pred_check_branch
          %284 = sbr.rel (%p282) target = $region52
        $region51: #{tpu_custom_call.1} parent=43 // pred_region
          %286 = dma.done [#allocation6], 16
        $region52: #{tpu_custom_call.1} parent=43 // pred_fallthru
          _
        // Predicated region
        $region53: #{tpu_custom_call.1} parent=43 // pred_check
          %p287 = pneg %p88
        $region54: #{tpu_custom_call.1} parent=43 // pred_check_branch
          %289 = sbr.rel (%p287) target = $region56
        $region55: #{tpu_custom_call.1} parent=43 // pred_region
          %291 = dma.done [#allocation6], 7168
        $region56: #{tpu_custom_call.1} parent=43 // pred_fallthru
          _
        // Predicated region
        $region57: #{tpu_custom_call.1} parent=43 // pred_check
          %p292 = pneg %p151
        $region58: #{tpu_custom_call.1} parent=43 // pred_check_branch
          %294 = sbr.rel (%p292) target = $region60
        $region59: #{tpu_custom_call.1} parent=43 // pred_region
          %296 = dma.done [#allocation9], 512
        $region60: #{tpu_custom_call.1} parent=43 // pred_fallthru
          _
        %s297 = sand.u32 %s33, 1
        %s298 = scalar_lea.sflag [#allocation3], %s297
        %s299 = sand.u32 %s33, 1
        %s300 = smul.addr %s299, 128
        %s301 = scalar_lea.vmem [#allocation2], %s300
        %p302 = pneg %p46
        %p303 = pneg %p43
        %p304 = pneg %p67
        %p305 = pneg %p64
        %p306 = pneg %p88
        %p307 = pneg %p85
        %p308 = pneg %p109
        %p309 = pneg %p106
        %p310 = pneg %p130
        %p311 = pneg %p127
        %p312 = pneg %p151
        %p313 = pneg %p148
        %p314 = pneg %p177
        %p315 = pneg %p174
        %s316 = sand.u32 %s164, 1
        %s317 = scalar_lea.sflag [#allocation4], %s316
        %s318 = sand.u32 %s164, 1
        %s319 = smul.addr %s318, 128
        %s320 = scalar_lea.vmem [#allocation10], %s319
        %s321 = smul.u32 8, %s25
        %s322 = smul.u32 8, %s25
        %v324 = vld [vmem:[%s276] sm:$0xff]
        %v325 = vld [vmem:[%s276 + $0x8] sm:$0xff]
        %v326 = vld [vmem:[%s276 + $0x10] sm:$0xff]
        %v327 = vld [vmem:[%s276 + $0x18] sm:$0xff]
        %v328 = vld [vmem:[%s276 + $0x20] sm:$0xff]
        %v329 = vld [vmem:[%s276 + $0x28] sm:$0xff]
        %v330 = vld [vmem:[%s276 + $0x30] sm:$0xff]
        %v331 = vld [vmem:[%s276 + $0x38] sm:$0xff]
        %v332 = vld [vmem:[%s276 + $0x40] sm:$0xff]
        %v333 = vld [vmem:[%s276 + $0x48] sm:$0xff]
        %v334 = vld [vmem:[%s276 + $0x50] sm:$0xff]
        %v335 = vld [vmem:[%s276 + $0x58] sm:$0xff]
        %v336 = vld [vmem:[%s276 + $0x60] sm:$0xff]
        %v337 = vld [vmem:[%s276 + $0x68] sm:$0xff]
        %v338 = vld [vmem:[%s276 + $0x70] sm:$0xff]
        %v339 = vld [vmem:[%s276 + $0x78] sm:$0xff]
        %v340 = vmul.f32 %v324, %v324
        %v341 = vmul.f32 %v325, %v325
        %v342 = vmul.f32 %v326, %v326
        %v343 = vmul.f32 %v327, %v327
        %v344 = vmul.f32 %v328, %v328
        %v345 = vmul.f32 %v329, %v329
        %v346 = vmul.f32 %v330, %v330
        %v347 = vmul.f32 %v331, %v331
        %v348 = vmul.f32 %v332, %v332
        %v349 = vmul.f32 %v333, %v333
        %v350 = vmul.f32 %v334, %v334
        %v351 = vmul.f32 %v335, %v335
        %v352 = vmul.f32 %v336, %v336
        %v353 = vmul.f32 %v337, %v337
        %v354 = vmul.f32 %v338, %v338
        %v355 = vmul.f32 %v339, %v339
        %356 = vadd.xlane.f32.xlu0 %v340
        %v357 = vpop.xlane.xlu0 %356
        %358 = vadd.xlane.f32.xlu0 %v341
        %v359 = vpop.xlane.xlu0 %358
        %360 = vadd.xlane.f32.xlu0 %v342
        %v361 = vpop.xlane.xlu0 %360
        %362 = vadd.xlane.f32.xlu0 %v343
        %v363 = vpop.xlane.xlu0 %362
        %364 = vadd.xlane.f32.xlu0 %v344
        %v365 = vpop.xlane.xlu0 %364
        %366 = vadd.xlane.f32.xlu0 %v345
        %v367 = vpop.xlane.xlu0 %366
        %368 = vadd.xlane.f32.xlu0 %v346
        %v369 = vpop.xlane.xlu0 %368
        %370 = vadd.xlane.f32.xlu0 %v347
        %v371 = vpop.xlane.xlu0 %370
        %372 = vadd.xlane.f32.xlu0 %v348
        %v373 = vpop.xlane.xlu0 %372
        %374 = vadd.xlane.f32.xlu0 %v349
        %v375 = vpop.xlane.xlu0 %374
        %376 = vadd.xlane.f32.xlu0 %v350
        %v377 = vpop.xlane.xlu0 %376
        %378 = vadd.xlane.f32.xlu0 %v351
        %v379 = vpop.xlane.xlu0 %378
        %380 = vadd.xlane.f32.xlu0 %v352
        %v381 = vpop.xlane.xlu0 %380
        %382 = vadd.xlane.f32.xlu0 %v353
        %v383 = vpop.xlane.xlu0 %382
        %384 = vadd.xlane.f32.xlu0 %v354
        %v385 = vpop.xlane.xlu0 %384
        %386 = vadd.xlane.f32.xlu0 %v355
        %v387 = vpop.xlane.xlu0 %386
        %v388 = vrcp.pop 128.0
        %v389 = vmul.f32 128.0, %v388
        %v390 = vsub.f32 1.0, %v389
        %v391 = vmul.f32 %v388, %v390
        %v392 = vadd.f32 %v388, %v391
        %vm393 = vweird.f32 %v388
        %v394 = vsel %vm393, %v388, %v392
        %v395 = vmul.f32 %v357, %v394
        %v396 = vmul.f32 %v359, %v394
        %v397 = vmul.f32 %v361, %v394
        %v398 = vmul.f32 %v363, %v394
        %v399 = vmul.f32 %v365, %v394
        %v400 = vmul.f32 %v367, %v394
        %v401 = vmul.f32 %v369, %v394
        %v402 = vmul.f32 %v371, %v394
        %v403 = vmul.f32 %v373, %v394
        %v404 = vmul.f32 %v375, %v394
        %v405 = vmul.f32 %v377, %v394
        %v406 = vmul.f32 %v379, %v394
        %v407 = vmul.f32 %v381, %v394
        %v408 = vmul.f32 %v383, %v394
        %v409 = vmul.f32 %v385, %v394
        %v410 = vmul.f32 %v387, %v394
        %v411 = vadd.f32 %v395, 1e-06
        %v412 = vadd.f32 %v396, 1e-06
        %v413 = vadd.f32 %v397, 1e-06
        %v414 = vadd.f32 %v398, 1e-06
        %v415 = vadd.f32 %v399, 1e-06
        %v416 = vadd.f32 %v400, 1e-06
        %v417 = vadd.f32 %v401, 1e-06
        %v418 = vadd.f32 %v402, 1e-06
        %v419 = vadd.f32 %v403, 1e-06
        %v420 = vadd.f32 %v404, 1e-06
        %v421 = vadd.f32 %v405, 1e-06
        %v422 = vadd.f32 %v406, 1e-06
        %v423 = vadd.f32 %v407, 1e-06
        %v424 = vadd.f32 %v408, 1e-06
        %v425 = vadd.f32 %v409, 1e-06
        %v426 = vadd.f32 %v410, 1e-06
        %v427 = vrsqrt.pop %v411
        %v428 = vmul.f32 %v427, %v411
        %v429 = vmul.f32 %v428, %v427
        %v430 = vmul.f32 0.5, %v429
        %v431 = vsub.f32 1.5, %v430
        %v432 = vmul.f32 %v427, %v431
        %vm433 = vweird.f32 %v411
        %vm434 = vweird.f32 %v427
        %vm435 = vmor %vm433, %vm434
        %v436 = vsel %vm435, %v427, %v432
        %v437 = vrsqrt.pop %v412
        %v438 = vmul.f32 %v437, %v412
        %v439 = vmul.f32 %v438, %v437
        %v440 = vmul.f32 0.5, %v439
        %v441 = vsub.f32 1.5, %v440
        %v442 = vmul.f32 %v437, %v441
        %vm443 = vweird.f32 %v412
        %vm444 = vweird.f32 %v437
        %vm445 = vmor %vm443, %vm444
        %v446 = vsel %vm445, %v437, %v442
        %v447 = vrsqrt.pop %v413
        %v448 = vmul.f32 %v447, %v413
        %v449 = vmul.f32 %v448, %v447
        %v450 = vmul.f32 0.5, %v449
        %v451 = vsub.f32 1.5, %v450
        %v452 = vmul.f32 %v447, %v451
        %vm453 = vweird.f32 %v413
        %vm454 = vweird.f32 %v447
        %vm455 = vmor %vm453, %vm454
        %v456 = vsel %vm455, %v447, %v452
        %v457 = vrsqrt.pop %v414
        %v458 = vmul.f32 %v457, %v414
        %v459 = vmul.f32 %v458, %v457
        %v460 = vmul.f32 0.5, %v459
        %v461 = vsub.f32 1.5, %v460
        %v462 = vmul.f32 %v457, %v461
        %vm463 = vweird.f32 %v414
        %vm464 = vweird.f32 %v457
        %vm465 = vmor %vm463, %vm464
        %v466 = vsel %vm465, %v457, %v462
        %v467 = vrsqrt.pop %v415
        %v468 = vmul.f32 %v467, %v415
        %v469 = vmul.f32 %v468, %v467
        %v470 = vmul.f32 0.5, %v469
        %v471 = vsub.f32 1.5, %v470
        %v472 = vmul.f32 %v467, %v471
        %vm473 = vweird.f32 %v415
        %vm474 = vweird.f32 %v467
        %vm475 = vmor %vm473, %vm474
        %v476 = vsel %vm475, %v467, %v472
        %v477 = vrsqrt.pop %v416
        %v478 = vmul.f32 %v477, %v416
        %v479 = vmul.f32 %v478, %v477
        %v480 = vmul.f32 0.5, %v479
        %v481 = vsub.f32 1.5, %v480
        %v482 = vmul.f32 %v477, %v481
        %vm483 = vweird.f32 %v416
        %vm484 = vweird.f32 %v477
        %vm485 = vmor %vm483, %vm484
        %v486 = vsel %vm485, %v477, %v482
        %v487 = vrsqrt.pop %v417
        %v488 = vmul.f32 %v487, %v417
        %v489 = vmul.f32 %v488, %v487
        %v490 = vmul.f32 0.5, %v489
        %v491 = vsub.f32 1.5, %v490
        %v492 = vmul.f32 %v487, %v491
        %vm493 = vweird.f32 %v417
        %vm494 = vweird.f32 %v487
        %vm495 = vmor %vm493, %vm494
        %v496 = vsel %vm495, %v487, %v492
        %v497 = vrsqrt.pop %v418
        %v498 = vmul.f32 %v497, %v418
        %v499 = vmul.f32 %v498, %v497
        %v500 = vmul.f32 0.5, %v499
        %v501 = vsub.f32 1.5, %v500
        %v502 = vmul.f32 %v497, %v501
        %vm503 = vweird.f32 %v418
        %vm504 = vweird.f32 %v497
        %vm505 = vmor %vm503, %vm504
        %v506 = vsel %vm505, %v497, %v502
        %v507 = vrsqrt.pop %v419
        %v508 = vmul.f32 %v507, %v419
        %v509 = vmul.f32 %v508, %v507
        %v510 = vmul.f32 0.5, %v509
        %v511 = vsub.f32 1.5, %v510
        %v512 = vmul.f32 %v507, %v511
        %vm513 = vweird.f32 %v419
        %vm514 = vweird.f32 %v507
        %vm515 = vmor %vm513, %vm514
        %v516 = vsel %vm515, %v507, %v512
        %v517 = vrsqrt.pop %v420
        %v518 = vmul.f32 %v517, %v420
        %v519 = vmul.f32 %v518, %v517
        %v520 = vmul.f32 0.5, %v519
        %v521 = vsub.f32 1.5, %v520
        %v522 = vmul.f32 %v517, %v521
        %vm523 = vweird.f32 %v420
        %vm524 = vweird.f32 %v517
        %vm525 = vmor %vm523, %vm524
        %v526 = vsel %vm525, %v517, %v522
        %v527 = vrsqrt.pop %v421
        %v528 = vmul.f32 %v527, %v421
        %v529 = vmul.f32 %v528, %v527
        %v530 = vmul.f32 0.5, %v529
        %v531 = vsub.f32 1.5, %v530
        %v532 = vmul.f32 %v527, %v531
        %vm533 = vweird.f32 %v421
        %vm534 = vweird.f32 %v527
        %vm535 = vmor %vm533, %vm534
        %v536 = vsel %vm535, %v527, %v532
        %v537 = vrsqrt.pop %v422
        %v538 = vmul.f32 %v537, %v422
        %v539 = vmul.f32 %v538, %v537
        %v540 = vmul.f32 0.5, %v539
        %v541 = vsub.f32 1.5, %v540
        %v542 = vmul.f32 %v537, %v541
        %vm543 = vweird.f32 %v422
        %vm544 = vweird.f32 %v537
        %vm545 = vmor %vm543, %vm544
        %v546 = vsel %vm545, %v537, %v542
        %v547 = vrsqrt.pop %v423
        %v548 = vmul.f32 %v547, %v423
        %v549 = vmul.f32 %v548, %v547
        %v550 = vmul.f32 0.5, %v549
        %v551 = vsub.f32 1.5, %v550
        %v552 = vmul.f32 %v547, %v551
        %vm553 = vweird.f32 %v423
        %vm554 = vweird.f32 %v547
        %vm555 = vmor %vm553, %vm554
        %v556 = vsel %vm555, %v547, %v552
        %v557 = vrsqrt.pop %v424
        %v558 = vmul.f32 %v557, %v424
        %v559 = vmul.f32 %v558, %v557
        %v560 = vmul.f32 0.5, %v559
        %v561 = vsub.f32 1.5, %v560
        %v562 = vmul.f32 %v557, %v561
        %vm563 = vweird.f32 %v424
        %vm564 = vweird.f32 %v557
        %vm565 = vmor %vm563, %vm564
        %v566 = vsel %vm565, %v557, %v562
        %v567 = vrsqrt.pop %v425
        %v568 = vmul.f32 %v567, %v425
        %v569 = vmul.f32 %v568, %v567
        %v570 = vmul.f32 0.5, %v569
        %v571 = vsub.f32 1.5, %v570
        %v572 = vmul.f32 %v567, %v571
        %vm573 = vweird.f32 %v425
        %vm574 = vweird.f32 %v567
        %vm575 = vmor %vm573, %vm574
        %v576 = vsel %vm575, %v567, %v572
        %v577 = vrsqrt.pop %v426
        %v578 = vmul.f32 %v577, %v426
        %v579 = vmul.f32 %v578, %v577
        %v580 = vmul.f32 0.5, %v579
        %v581 = vsub.f32 1.5, %v580
        %v582 = vmul.f32 %v577, %v581
        %vm583 = vweird.f32 %v426
        %vm584 = vweird.f32 %v577
        %vm585 = vmor %vm583, %vm584
        %v586 = vsel %vm585, %v577, %v582
        %v587 = vmul.f32 %v324, %v436
        %v588 = vmul.f32 %v325, %v446
        %v589 = vmul.f32 %v326, %v456
        %v590 = vmul.f32 %v327, %v466
        %v591 = vmul.f32 %v328, %v476
        %v592 = vmul.f32 %v329, %v486
        %v593 = vmul.f32 %v330, %v496
        %v594 = vmul.f32 %v331, %v506
        %v595 = vmul.f32 %v332, %v516
        %v596 = vmul.f32 %v333, %v526
        %v597 = vmul.f32 %v334, %v536
        %v598 = vmul.f32 %v335, %v546
        %v599 = vmul.f32 %v336, %v556
        %v600 = vmul.f32 %v337, %v566
        %v601 = vmul.f32 %v338, %v576
        %v602 = vmul.f32 %v339, %v586
        %v603 = vld [vmem:[#allocation5] sm:$0x1]
        %v605 = vperm.slane %v603, 0
        %v607 = vmul.f32 %v587, %v605
        %v608 = vmul.f32 %v588, %v605
        %v609 = vmul.f32 %v589, %v605
        %v610 = vmul.f32 %v590, %v605
        %v611 = vmul.f32 %v591, %v605
        %v612 = vmul.f32 %v592, %v605
        %v613 = vmul.f32 %v593, %v605
        %v614 = vmul.f32 %v594, %v605
        %v615 = vmul.f32 %v595, %v605
        %v616 = vmul.f32 %v596, %v605
        %v617 = vmul.f32 %v597, %v605
        %v618 = vmul.f32 %v598, %v605
        %v619 = vmul.f32 %v599, %v605
        %v620 = vmul.f32 %v600, %v605
        %v621 = vmul.f32 %v601, %v605
        %v622 = vmul.f32 %v602, %v605
        %v623 = vpack.c.bf16 %v608, %v607
        %v624 = vpack.c.bf16 %v610, %v609
        %v625 = vpack.c.bf16 %v612, %v611
        %v626 = vpack.c.bf16 %v614, %v613
        %v627 = vpack.c.bf16 %v616, %v615
        %v628 = vpack.c.bf16 %v618, %v617
        %v629 = vpack.c.bf16 %v620, %v619
        %v630 = vpack.c.bf16 %v622, %v621
        %v631 = vld [vmem:[#allocation7] sm:$0xff]
        %v632 = vld [vmem:[#allocation7 + $0x8] sm:$0xff]
        %v633 = vld [vmem:[#allocation7 + $0x10] sm:$0xff]
        %v634 = vld [vmem:[#allocation7 + $0x18] sm:$0xf]
        %v635 = vld [vmem:[#allocation7 + $0x1c] sm:$0xff]
        %v636 = vld [vmem:[#allocation7 + $0x24] sm:$0xff]
        %v637 = vld [vmem:[#allocation7 + $0x2c] sm:$0xff]
        %v638 = vld [vmem:[#allocation7 + $0x34] sm:$0xf]
        %v639 = vld [vmem:[#allocation7 + $0x38] sm:$0xff]
        %v640 = vld [vmem:[#allocation7 + $0x40] sm:$0xff]
        %v641 = vld [vmem:[#allocation7 + $0x48] sm:$0xff]
        %v642 = vld [vmem:[#allocation7 + $0x50] sm:$0xf]
        %v643 = vld [vmem:[#allocation7 + $0x54] sm:$0xff]
        %v644 = vld [vmem:[#allocation7 + $0x5c] sm:$0xff]
        %v645 = vld [vmem:[#allocation7 + $0x64] sm:$0xff]
        %v646 = vld [vmem:[#allocation7 + $0x6c] sm:$0xf]
        %v647 = vld [vmem:[#allocation7 + $0x70] sm:$0xff]
        %v648 = vld [vmem:[#allocation7 + $0x78] sm:$0xff]
        %v649 = vld [vmem:[#allocation7 + $0x80] sm:$0xff]
        %v650 = vld [vmem:[#allocation7 + $0x88] sm:$0xf]
        %v651 = vld [vmem:[#allocation7 + $0x8c] sm:$0xff]
        %v652 = vld [vmem:[#allocation7 + $0x94] sm:$0xff]
        %v653 = vld [vmem:[#allocation7 + $0x9c] sm:$0xff]
        %v654 = vld [vmem:[#allocation7 + $0xa4] sm:$0xf]
        %v655 = vld [vmem:[#allocation7 + $0xa8] sm:$0xff]
        %v656 = vld [vmem:[#allocation7 + $0xb0] sm:$0xff]
        %v657 = vld [vmem:[#allocation7 + $0xb8] sm:$0xff]
        %v658 = vld [vmem:[#allocation7 + $0xc0] sm:$0xf]
        %v659 = vld [vmem:[#allocation7 + $0xc4] sm:$0xff]
        %v660 = vld [vmem:[#allocation7 + $0xcc] sm:$0xff]
        %v661 = vld [vmem:[#allocation7 + $0xd4] sm:$0xff]
        %v662 = vld [vmem:[#allocation7 + $0xdc] sm:$0xf]
        %v663 = vld [vmem:[#allocation7 + $0xe0] sm:$0xff]
        %v664 = vld [vmem:[#allocation7 + $0xe8] sm:$0xff]
        %v665 = vld [vmem:[#allocation7 + $0xf0] sm:$0xff]
        %v666 = vld [vmem:[#allocation7 + $0xf8] sm:$0xf]
        %v667 = vld [vmem:[#allocation7 + $0xfc] sm:$0xff]
        %v668 = vld [vmem:[#allocation7 + $0x104] sm:$0xff]
        %v669 = vld [vmem:[#allocation7 + $0x10c] sm:$0xff]
        %v670 = vld [vmem:[#allocation7 + $0x114] sm:$0xf]
        %v671 = vld [vmem:[#allocation7 + $0x118] sm:$0xff]
        %v672 = vld [vmem:[#allocation7 + $0x120] sm:$0xff]
        %v673 = vld [vmem:[#allocation7 + $0x128] sm:$0xff]
        %v674 = vld [vmem:[#allocation7 + $0x130] sm:$0xf]
        %v675 = vld [vmem:[#allocation7 + $0x134] sm:$0xff]
        %v676 = vld [vmem:[#allocation7 + $0x13c] sm:$0xff]
        %v677 = vld [vmem:[#allocation7 + $0x144] sm:$0xff]
        %v678 = vld [vmem:[#allocation7 + $0x14c] sm:$0xf]
        %v679 = vld [vmem:[#allocation7 + $0x150] sm:$0xff]
        %v680 = vld [vmem:[#allocation7 + $0x158] sm:$0xff]
        %v681 = vld [vmem:[#allocation7 + $0x160] sm:$0xff]
        %v682 = vld [vmem:[#allocation7 + $0x168] sm:$0xf]
        %v683 = vld [vmem:[#allocation7 + $0x16c] sm:$0xff]
        %v684 = vld [vmem:[#allocation7 + $0x174] sm:$0xff]
        %v685 = vld [vmem:[#allocation7 + $0x17c] sm:$0xff]
        %v686 = vld [vmem:[#allocation7 + $0x184] sm:$0xf]
        %v687 = vld [vmem:[#allocation7 + $0x188] sm:$0xff]
        %v688 = vld [vmem:[#allocation7 + $0x190] sm:$0xff]
        %v689 = vld [vmem:[#allocation7 + $0x198] sm:$0xff]
        %v690 = vld [vmem:[#allocation7 + $0x1a0] sm:$0xf]
        %v691 = vld [vmem:[#allocation7 + $0x1a4] sm:$0xff]
        %v692 = vld [vmem:[#allocation7 + $0x1ac] sm:$0xff]
        %v693 = vld [vmem:[#allocation7 + $0x1b4] sm:$0xff]
        %v694 = vld [vmem:[#allocation7 + $0x1bc] sm:$0xf]
        %v759 = vunpack.c.l.b16 %v631
        %v760 = vunpack.c.h.b16 %v631
        %v761 = vunpack.c.l.b16 %v632
        %v762 = vunpack.c.h.b16 %v632
        %v763 = vunpack.c.l.b16 %v633
        %v764 = vunpack.c.h.b16 %v633
        %v765 = vunpack.c.l.b16 %v634
        %v766 = vunpack.c.l.b16 %v635
        %v767 = vunpack.c.h.b16 %v635
        %v768 = vunpack.c.l.b16 %v636
        %v769 = vunpack.c.h.b16 %v636
        %v770 = vunpack.c.l.b16 %v637
        %v771 = vunpack.c.h.b16 %v637
        %v772 = vunpack.c.l.b16 %v638
        %v773 = vunpack.c.l.b16 %v639
        %v774 = vunpack.c.h.b16 %v639
        %v775 = vunpack.c.l.b16 %v640
        %v776 = vunpack.c.h.b16 %v640
        %v777 = vunpack.c.l.b16 %v641
        %v778 = vunpack.c.h.b16 %v641
        %v779 = vunpack.c.l.b16 %v642
        %v780 = vunpack.c.l.b16 %v643
        %v781 = vunpack.c.h.b16 %v643
        %v782 = vunpack.c.l.b16 %v644
        %v783 = vunpack.c.h.b16 %v644
        %v784 = vunpack.c.l.b16 %v645
        %v785 = vunpack.c.h.b16 %v645
        %v786 = vunpack.c.l.b16 %v646
        %v787 = vunpack.c.l.b16 %v647
        %v788 = vunpack.c.h.b16 %v647
        %v789 = vunpack.c.l.b16 %v648
        %v790 = vunpack.c.h.b16 %v648
        %v791 = vunpack.c.l.b16 %v649
        %v792 = vunpack.c.h.b16 %v649
        %v793 = vunpack.c.l.b16 %v650
        %v794 = vunpack.c.l.b16 %v651
        %v795 = vunpack.c.h.b16 %v651
        %v796 = vunpack.c.l.b16 %v652
        %v797 = vunpack.c.h.b16 %v652
        %v798 = vunpack.c.l.b16 %v653
        %v799 = vunpack.c.h.b16 %v653
        %v800 = vunpack.c.l.b16 %v654
        %v801 = vunpack.c.l.b16 %v655
        %v802 = vunpack.c.h.b16 %v655
        %v803 = vunpack.c.l.b16 %v656
        %v804 = vunpack.c.h.b16 %v656
        %v805 = vunpack.c.l.b16 %v657
        %v806 = vunpack.c.h.b16 %v657
        %v807 = vunpack.c.l.b16 %v658
        %v808 = vunpack.c.l.b16 %v659
        %v809 = vunpack.c.h.b16 %v659
        %v810 = vunpack.c.l.b16 %v660
        %v811 = vunpack.c.h.b16 %v660
        %v812 = vunpack.c.l.b16 %v661
        %v813 = vunpack.c.h.b16 %v661
        %v814 = vunpack.c.l.b16 %v662
        %v815 = vunpack.c.l.b16 %v663
        %v816 = vunpack.c.h.b16 %v663
        %v817 = vunpack.c.l.b16 %v664
        %v818 = vunpack.c.h.b16 %v664
        %v819 = vunpack.c.l.b16 %v665
        %v820 = vunpack.c.h.b16 %v665
        %v821 = vunpack.c.l.b16 %v666
        %v822 = vunpack.c.l.b16 %v667
        %v823 = vunpack.c.h.b16 %v667
        %v824 = vunpack.c.l.b16 %v668
        %v825 = vunpack.c.h.b16 %v668
        %v826 = vunpack.c.l.b16 %v669
        %v827 = vunpack.c.h.b16 %v669
        %v828 = vunpack.c.l.b16 %v670
        %v829 = vunpack.c.l.b16 %v671
        %v830 = vunpack.c.h.b16 %v671
        %v831 = vunpack.c.l.b16 %v672
        %v832 = vunpack.c.h.b16 %v672
        %v833 = vunpack.c.l.b16 %v673
        %v834 = vunpack.c.h.b16 %v673
        %v835 = vunpack.c.l.b16 %v674
        %v836 = vunpack.c.l.b16 %v675
        %v837 = vunpack.c.h.b16 %v675
        %v838 = vunpack.c.l.b16 %v676
        %v839 = vunpack.c.h.b16 %v676
        %v840 = vunpack.c.l.b16 %v677
        %v841 = vunpack.c.h.b16 %v677
        %v842 = vunpack.c.l.b16 %v678
        %v843 = vunpack.c.l.b16 %v679
        %v844 = vunpack.c.h.b16 %v679
        %v845 = vunpack.c.l.b16 %v680
        %v846 = vunpack.c.h.b16 %v680
        %v847 = vunpack.c.l.b16 %v681
        %v848 = vunpack.c.h.b16 %v681
        %v849 = vunpack.c.l.b16 %v682
        %v850 = vunpack.c.l.b16 %v683
        %v851 = vunpack.c.h.b16 %v683
        %v852 = vunpack.c.l.b16 %v684
        %v853 = vunpack.c.h.b16 %v684
        %v854 = vunpack.c.l.b16 %v685
        %v855 = vunpack.c.h.b16 %v685
        %v856 = vunpack.c.l.b16 %v686
        %v857 = vunpack.c.l.b16 %v687
        %v858 = vunpack.c.h.b16 %v687
        %v859 = vunpack.c.l.b16 %v688
        %v860 = vunpack.c.h.b16 %v688
        %v861 = vunpack.c.l.b16 %v689
        %v862 = vunpack.c.h.b16 %v689
        %v863 = vunpack.c.l.b16 %v690
        %v864 = vunpack.c.l.b16 %v691
        %v865 = vunpack.c.h.b16 %v691
        %v866 = vunpack.c.l.b16 %v692
        %v867 = vunpack.c.h.b16 %v692
        %v868 = vunpack.c.l.b16 %v693
        %v869 = vunpack.c.h.b16 %v693
        %v870 = vunpack.c.l.b16 %v694
        %v871 = vpack.c.b16 %v766, %v759
        %v872 = vpack.c.b16 %v767, %v760
        %v873 = vpack.c.b16 %v768, %v761
        %v874 = vpack.c.b16 %v769, %v762
        %v875 = vpack.c.b16 %v770, %v763
        %v876 = vpack.c.b16 %v771, %v764
        %v877 = vpack.c.b16 %v772, %v765
        %v878 = vpack.c.b16 %v780, %v773
        %v879 = vpack.c.b16 %v781, %v774
        %v880 = vpack.c.b16 %v782, %v775
        %v881 = vpack.c.b16 %v783, %v776
        %v882 = vpack.c.b16 %v784, %v777
        %v883 = vpack.c.b16 %v785, %v778
        %v884 = vpack.c.b16 %v786, %v779
        %v885 = vpack.c.b16 %v794, %v787
        %v886 = vpack.c.b16 %v795, %v788
        %v887 = vpack.c.b16 %v796, %v789
        %v888 = vpack.c.b16 %v797, %v790
        %v889 = vpack.c.b16 %v798, %v791
        %v890 = vpack.c.b16 %v799, %v792
        %v891 = vpack.c.b16 %v800, %v793
        %v892 = vpack.c.b16 %v808, %v801
        %v893 = vpack.c.b16 %v809, %v802
        %v894 = vpack.c.b16 %v810, %v803
        %v895 = vpack.c.b16 %v811, %v804
        %v896 = vpack.c.b16 %v812, %v805
        %v897 = vpack.c.b16 %v813, %v806
        %v898 = vpack.c.b16 %v814, %v807
        %v899 = vpack.c.b16 %v822, %v815
        %v900 = vpack.c.b16 %v823, %v816
        %v901 = vpack.c.b16 %v824, %v817
        %v902 = vpack.c.b16 %v825, %v818
        %v903 = vpack.c.b16 %v826, %v819
        %v904 = vpack.c.b16 %v827, %v820
        %v905 = vpack.c.b16 %v828, %v821
        %v906 = vpack.c.b16 %v836, %v829
        %v907 = vpack.c.b16 %v837, %v830
        %v908 = vpack.c.b16 %v838, %v831
        %v909 = vpack.c.b16 %v839, %v832
        %v910 = vpack.c.b16 %v840, %v833
        %v911 = vpack.c.b16 %v841, %v834
        %v912 = vpack.c.b16 %v842, %v835
        %v913 = vpack.c.b16 %v850, %v843
        %v914 = vpack.c.b16 %v851, %v844
        %v915 = vpack.c.b16 %v852, %v845
        %v916 = vpack.c.b16 %v853, %v846
        %v917 = vpack.c.b16 %v854, %v847
        %v918 = vpack.c.b16 %v855, %v848
        %v919 = vpack.c.b16 %v856, %v849
        %v920 = vpack.c.b16 %v864, %v857
        %v921 = vpack.c.b16 %v865, %v858
        %v922 = vpack.c.b16 %v866, %v859
        %v923 = vpack.c.b16 %v867, %v860
        %v924 = vpack.c.b16 %v868, %v861
        %v925 = vpack.c.b16 %v869, %v862
        %v926 = vpack.c.b16 %v870, %v863
        %983 = vmatpush.bf16.msra.mxu0 %v920
        %984 = vmatpush.bf16.msra.mxu0 %v913
        %985 = vmatpush.bf16.msra.mxu0 %v906
        %986 = vmatpush.bf16.msra.mxu0 %v899
        %987 = vmatpush.bf16.msra.mxu0 %v892
        %988 = vmatpush.bf16.msra.mxu0 %v885
        %989 = vmatpush.bf16.msra.mxu0 %v878
        %990 = vmatpush.bf16.msra.mxu0 %v871
        %991 = vmatmul.bf16.gmra.mxu0 %v623
        %v992 = vpop.f32.mrf.mxu0
        %v993 = vadd.f32 0.0, %v992
        %v994 = vpop.f32.mrf.mxu0
        %v995 = vadd.f32 0.0, %v994
        %996 = vmatmul.bf16.gmra.mxu0 %v624
        %v997 = vpop.f32.mrf.mxu0
        %v998 = vadd.f32 0.0, %v997
        %v999 = vpop.f32.mrf.mxu0
        %v1000 = vadd.f32 0.0, %v999
        %1001 = vmatmul.bf16.gmra.mxu0 %v625
        %v1002 = vpop.f32.mrf.mxu0
        %v1003 = vadd.f32 0.0, %v1002
        %v1004 = vpop.f32.mrf.mxu0
        %v1005 = vadd.f32 0.0, %v1004
        %1006 = vmatmul.bf16.gmra.mxu0 %v626
        %v1007 = vpop.f32.mrf.mxu0
        %v1008 = vadd.f32 0.0, %v1007
        %v1009 = vpop.f32.mrf.mxu0
        %v1010 = vadd.f32 0.0, %v1009
        %1011 = vmatmul.bf16.gmra.mxu0 %v627
        %v1012 = vpop.f32.mrf.mxu0
        %v1013 = vadd.f32 0.0, %v1012
        %v1014 = vpop.f32.mrf.mxu0
        %v1015 = vadd.f32 0.0, %v1014
        %1016 = vmatmul.bf16.gmra.mxu0 %v628
        %v1017 = vpop.f32.mrf.mxu0
        %v1018 = vadd.f32 0.0, %v1017
        %v1019 = vpop.f32.mrf.mxu0
        %v1020 = vadd.f32 0.0, %v1019
        %1021 = vmatmul.bf16.gmra.mxu0 %v629
        %v1022 = vpop.f32.mrf.mxu0
        %v1023 = vadd.f32 0.0, %v1022
        %v1024 = vpop.f32.mrf.mxu0
        %v1025 = vadd.f32 0.0, %v1024
        %1026 = vmatmul.bf16.gmra.mxu0 %v630
        %v1027 = vpop.f32.mrf.mxu0
        %v1028 = vadd.f32 0.0, %v1027
        %v1029 = vpop.f32.mrf.mxu0
        %v1030 = vadd.f32 0.0, %v1029
        %1031 = vdwg.mxu0
        %1032 = vmatpush.bf16.msra.mxu0 %v921
        %1033 = vmatpush.bf16.msra.mxu0 %v914
        %1034 = vmatpush.bf16.msra.mxu0 %v907
        %1035 = vmatpush.bf16.msra.mxu0 %v900
        %1036 = vmatpush.bf16.msra.mxu0 %v893
        %1037 = vmatpush.bf16.msra.mxu0 %v886
        %1038 = vmatpush.bf16.msra.mxu0 %v879
        %1039 = vmatpush.bf16.msra.mxu0 %v872
        %1040 = vmatmul.bf16.gmra.mxu0 %v623
        %v1041 = vpop.f32.mrf.mxu0
        %v1042 = vadd.f32 0.0, %v1041
        %v1043 = vpop.f32.mrf.mxu0
        %v1044 = vadd.f32 0.0, %v1043
        %1045 = vmatmul.bf16.gmra.mxu0 %v624
        %v1046 = vpop.f32.mrf.mxu0
        %v1047 = vadd.f32 0.0, %v1046
        %v1048 = vpop.f32.mrf.mxu0
        %v1049 = vadd.f32 0.0, %v1048
        %1050 = vmatmul.bf16.gmra.mxu0 %v625
        %v1051 = vpop.f32.mrf.mxu0
        %v1052 = vadd.f32 0.0, %v1051
        %v1053 = vpop.f32.mrf.mxu0
        %v1054 = vadd.f32 0.0, %v1053
        %1055 = vmatmul.bf16.gmra.mxu0 %v626
        %v1056 = vpop.f32.mrf.mxu0
        %v1057 = vadd.f32 0.0, %v1056
        %v1058 = vpop.f32.mrf.mxu0
        %v1059 = vadd.f32 0.0, %v1058
        %1060 = vmatmul.bf16.gmra.mxu0 %v627
        %v1061 = vpop.f32.mrf.mxu0
        %v1062 = vadd.f32 0.0, %v1061
        %v1063 = vpop.f32.mrf.mxu0
        %v1064 = vadd.f32 0.0, %v1063
        %1065 = vmatmul.bf16.gmra.mxu0 %v628
        %v1066 = vpop.f32.mrf.mxu0
        %v1067 = vadd.f32 0.0, %v1066
        %v1068 = vpop.f32.mrf.mxu0
        %v1069 = vadd.f32 0.0, %v1068
        %1070 = vmatmul.bf16.gmra.mxu0 %v629
        %v1071 = vpop.f32.mrf.mxu0
        %v1072 = vadd.f32 0.0, %v1071
        %v1073 = vpop.f32.mrf.mxu0
        %v1074 = vadd.f32 0.0, %v1073
        %1075 = vmatmul.bf16.gmra.mxu0 %v630
        %v1076 = vpop.f32.mrf.mxu0
        %v1077 = vadd.f32 0.0, %v1076
        %v1078 = vpop.f32.mrf.mxu0
        %v1079 = vadd.f32 0.0, %v1078
        %1080 = vdwg.mxu0
        %1081 = vmatpush.bf16.msra.mxu0 %v922
        %1082 = vmatpush.bf16.msra.mxu0 %v915
        %1083 = vmatpush.bf16.msra.mxu0 %v908
        %1084 = vmatpush.bf16.msra.mxu0 %v901
        %1085 = vmatpush.bf16.msra.mxu0 %v894
        %1086 = vmatpush.bf16.msra.mxu0 %v887
        %1087 = vmatpush.bf16.msra.mxu0 %v880
        %1088 = vmatpush.bf16.msra.mxu0 %v873
        %1089 = vmatmul.bf16.gmra.mxu0 %v623
        %v1090 = vpop.f32.mrf.mxu0
        %v1091 = vadd.f32 0.0, %v1090
        %v1092 = vpop.f32.mrf.mxu0
        %v1093 = vadd.f32 0.0, %v1092
        %1094 = vmatmul.bf16.gmra.mxu0 %v624
        %v1095 = vpop.f32.mrf.mxu0
        %v1096 = vadd.f32 0.0, %v1095
        %v1097 = vpop.f32.mrf.mxu0
        %v1098 = vadd.f32 0.0, %v1097
        %1099 = vmatmul.bf16.gmra.mxu0 %v625
        %v1100 = vpop.f32.mrf.mxu0
        %v1101 = vadd.f32 0.0, %v1100
        %v1102 = vpop.f32.mrf.mxu0
        %v1103 = vadd.f32 0.0, %v1102
        %1104 = vmatmul.bf16.gmra.mxu0 %v626
        %v1105 = vpop.f32.mrf.mxu0
        %v1106 = vadd.f32 0.0, %v1105
        %v1107 = vpop.f32.mrf.mxu0
        %v1108 = vadd.f32 0.0, %v1107
        %1109 = vmatmul.bf16.gmra.mxu0 %v627
        %v1110 = vpop.f32.mrf.mxu0
        %v1111 = vadd.f32 0.0, %v1110
        %v1112 = vpop.f32.mrf.mxu0
        %v1113 = vadd.f32 0.0, %v1112
        %1114 = vmatmul.bf16.gmra.mxu0 %v628
        %v1115 = vpop.f32.mrf.mxu0
        %v1116 = vadd.f32 0.0, %v1115
        %v1117 = vpop.f32.mrf.mxu0
        %v1118 = vadd.f32 0.0, %v1117
        %1119 = vmatmul.bf16.gmra.mxu0 %v629
        %v1120 = vpop.f32.mrf.mxu0
        %v1121 = vadd.f32 0.0, %v1120
        %v1122 = vpop.f32.mrf.mxu0
        %v1123 = vadd.f32 0.0, %v1122
        %1124 = vmatmul.bf16.gmra.mxu0 %v630
        %v1125 = vpop.f32.mrf.mxu0
        %v1126 = vadd.f32 0.0, %v1125
        %v1127 = vpop.f32.mrf.mxu0
        %v1128 = vadd.f32 0.0, %v1127
        %1129 = vdwg.mxu0
        %1130 = vmatpush.bf16.msra.mxu0 %v923
        %1131 = vmatpush.bf16.msra.mxu0 %v916
        %1132 = vmatpush.bf16.msra.mxu0 %v909
        %1133 = vmatpush.bf16.msra.mxu0 %v902
        %1134 = vmatpush.bf16.msra.mxu0 %v895
        %1135 = vmatpush.bf16.msra.mxu0 %v888
        %1136 = vmatpush.bf16.msra.mxu0 %v881
        %1137 = vmatpush.bf16.msra.mxu0 %v874
        %1138 = vmatmul.bf16.gmra.mxu0 %v623
        %v1139 = vpop.f32.mrf.mxu0
        %v1140 = vadd.f32 0.0, %v1139
        %v1141 = vpop.f32.mrf.mxu0
        %v1142 = vadd.f32 0.0, %v1141
        %1143 = vmatmul.bf16.gmra.mxu0 %v624
        %v1144 = vpop.f32.mrf.mxu0
        %v1145 = vadd.f32 0.0, %v1144
        %v1146 = vpop.f32.mrf.mxu0
        %v1147 = vadd.f32 0.0, %v1146
        %1148 = vmatmul.bf16.gmra.mxu0 %v625
        %v1149 = vpop.f32.mrf.mxu0
        %v1150 = vadd.f32 0.0, %v1149
        %v1151 = vpop.f32.mrf.mxu0
        %v1152 = vadd.f32 0.0, %v1151
        %1153 = vmatmul.bf16.gmra.mxu0 %v626
        %v1154 = vpop.f32.mrf.mxu0
        %v1155 = vadd.f32 0.0, %v1154
        %v1156 = vpop.f32.mrf.mxu0
        %v1157 = vadd.f32 0.0, %v1156
        %1158 = vmatmul.bf16.gmra.mxu0 %v627
        %v1159 = vpop.f32.mrf.mxu0
        %v1160 = vadd.f32 0.0, %v1159
        %v1161 = vpop.f32.mrf.mxu0
        %v1162 = vadd.f32 0.0, %v1161
        %1163 = vmatmul.bf16.gmra.mxu0 %v628
        %v1164 = vpop.f32.mrf.mxu0
        %v1165 = vadd.f32 0.0, %v1164
        %v1166 = vpop.f32.mrf.mxu0
        %v1167 = vadd.f32 0.0, %v1166
        %1168 = vmatmul.bf16.gmra.mxu0 %v629
        %v1169 = vpop.f32.mrf.mxu0
        %v1170 = vadd.f32 0.0, %v1169
        %v1171 = vpop.f32.mrf.mxu0
        %v1172 = vadd.f32 0.0, %v1171
        %1173 = vmatmul.bf16.gmra.mxu0 %v630
        %v1174 = vpop.f32.mrf.mxu0
        %v1175 = vadd.f32 0.0, %v1174
        %v1176 = vpop.f32.mrf.mxu0
        %v1177 = vadd.f32 0.0, %v1176
        %1178 = vdwg.mxu0
        %1179 = vmatpush.bf16.msra.mxu0 %v924
        %1180 = vmatpush.bf16.msra.mxu0 %v917
        %1181 = vmatpush.bf16.msra.mxu0 %v910
        %1182 = vmatpush.bf16.msra.mxu0 %v903
        %1183 = vmatpush.bf16.msra.mxu0 %v896
        %1184 = vmatpush.bf16.msra.mxu0 %v889
        %1185 = vmatpush.bf16.msra.mxu0 %v882
        %1186 = vmatpush.bf16.msra.mxu0 %v875
        %1187 = vmatmul.bf16.gmra.mxu0 %v623
        %v1188 = vpop.f32.mrf.mxu0
        %v1189 = vadd.f32 0.0, %v1188
        %v1190 = vpop.f32.mrf.mxu0
        %v1191 = vadd.f32 0.0, %v1190
        %1192 = vmatmul.bf16.gmra.mxu0 %v624
        %v1193 = vpop.f32.mrf.mxu0
        %v1194 = vadd.f32 0.0, %v1193
        %v1195 = vpop.f32.mrf.mxu0
        %v1196 = vadd.f32 0.0, %v1195
        %1197 = vmatmul.bf16.gmra.mxu0 %v625
        %v1198 = vpop.f32.mrf.mxu0
        %v1199 = vadd.f32 0.0, %v1198
        %v1200 = vpop.f32.mrf.mxu0
        %v1201 = vadd.f32 0.0, %v1200
        %1202 = vmatmul.bf16.gmra.mxu0 %v626
        %v1203 = vpop.f32.mrf.mxu0
        %v1204 = vadd.f32 0.0, %v1203
        %v1205 = vpop.f32.mrf.mxu0
        %v1206 = vadd.f32 0.0, %v1205
        %1207 = vmatmul.bf16.gmra.mxu0 %v627
        %v1208 = vpop.f32.mrf.mxu0
        %v1209 = vadd.f32 0.0, %v1208
        %v1210 = vpop.f32.mrf.mxu0
        %v1211 = vadd.f32 0.0, %v1210
        %1212 = vmatmul.bf16.gmra.mxu0 %v628
        %v1213 = vpop.f32.mrf.mxu0
        %v1214 = vadd.f32 0.0, %v1213
        %v1215 = vpop.f32.mrf.mxu0
        %v1216 = vadd.f32 0.0, %v1215
        %1217 = vmatmul.bf16.gmra.mxu0 %v629
        %v1218 = vpop.f32.mrf.mxu0
        %v1219 = vadd.f32 0.0, %v1218
        %v1220 = vpop.f32.mrf.mxu0
        %v1221 = vadd.f32 0.0, %v1220
        %1222 = vmatmul.bf16.gmra.mxu0 %v630
        %v1223 = vpop.f32.mrf.mxu0
        %v1224 = vadd.f32 0.0, %v1223
        %v1225 = vpop.f32.mrf.mxu0
        %v1226 = vadd.f32 0.0, %v1225
        %1227 = vdwg.mxu0
        %1228 = vmatpush.bf16.msra.mxu0 %v925
        %1229 = vmatpush.bf16.msra.mxu0 %v918
        %1230 = vmatpush.bf16.msra.mxu0 %v911
        %1231 = vmatpush.bf16.msra.mxu0 %v904
        %1232 = vmatpush.bf16.msra.mxu0 %v897
        %1233 = vmatpush.bf16.msra.mxu0 %v890
        %1234 = vmatpush.bf16.msra.mxu0 %v883
        %1235 = vmatpush.bf16.msra.mxu0 %v876
        %1236 = vmatmul.bf16.gmra.mxu0 %v623
        %v1237 = vpop.f32.mrf.mxu0
        %v1238 = vadd.f32 0.0, %v1237
        %v1239 = vpop.f32.mrf.mxu0
        %v1240 = vadd.f32 0.0, %v1239
        %1241 = vmatmul.bf16.gmra.mxu0 %v624
        %v1242 = vpop.f32.mrf.mxu0
        %v1243 = vadd.f32 0.0, %v1242
        %v1244 = vpop.f32.mrf.mxu0
        %v1245 = vadd.f32 0.0, %v1244
        %1246 = vmatmul.bf16.gmra.mxu0 %v625
        %v1247 = vpop.f32.mrf.mxu0
        %v1248 = vadd.f32 0.0, %v1247
        %v1249 = vpop.f32.mrf.mxu0
        %v1250 = vadd.f32 0.0, %v1249
        %1251 = vmatmul.bf16.gmra.mxu0 %v626
        %v1252 = vpop.f32.mrf.mxu0
        %v1253 = vadd.f32 0.0, %v1252
        %v1254 = vpop.f32.mrf.mxu0
        %v1255 = vadd.f32 0.0, %v1254
        %1256 = vmatmul.bf16.gmra.mxu0 %v627
        %v1257 = vpop.f32.mrf.mxu0
        %v1258 = vadd.f32 0.0, %v1257
        %v1259 = vpop.f32.mrf.mxu0
        %v1260 = vadd.f32 0.0, %v1259
        %1261 = vmatmul.bf16.gmra.mxu0 %v628
        %v1262 = vpop.f32.mrf.mxu0
        %v1263 = vadd.f32 0.0, %v1262
        %v1264 = vpop.f32.mrf.mxu0
        %v1265 = vadd.f32 0.0, %v1264
        %1266 = vmatmul.bf16.gmra.mxu0 %v629
        %v1267 = vpop.f32.mrf.mxu0
        %v1268 = vadd.f32 0.0, %v1267
        %v1269 = vpop.f32.mrf.mxu0
        %v1270 = vadd.f32 0.0, %v1269
        %1271 = vmatmul.bf16.gmra.mxu0 %v630
        %v1272 = vpop.f32.mrf.mxu0
        %v1273 = vadd.f32 0.0, %v1272
        %v1274 = vpop.f32.mrf.mxu0
        %v1275 = vadd.f32 0.0, %v1274
        %1276 = vdwg.mxu0
        %1277 = vmatpush.bf16.msra.mxu0 %v926
        %1278 = vmatpush.bf16.msra.mxu0 %v919
        %1279 = vmatpush.bf16.msra.mxu0 %v912
        %1280 = vmatpush.bf16.msra.mxu0 %v905
        %1281 = vmatpush.bf16.msra.mxu0 %v898
        %1282 = vmatpush.bf16.msra.mxu0 %v891
        %1283 = vmatpush.bf16.msra.mxu0 %v884
        %1284 = vmatpush.bf16.msra.mxu0 %v877
        %1285 = vmatmul.bf16.gmra.mxu0 %v623
        %v1286 = vpop.f32.mrf.mxu0
        %v1287 = vadd.f32 0.0, %v1286
        %v1288 = vpop.f32.mrf.mxu0
        %v1289 = vadd.f32 0.0, %v1288
        %1290 = vmatmul.bf16.gmra.mxu0 %v624
        %v1291 = vpop.f32.mrf.mxu0
        %v1292 = vadd.f32 0.0, %v1291
        %v1293 = vpop.f32.mrf.mxu0
        %v1294 = vadd.f32 0.0, %v1293
        %1295 = vmatmul.bf16.gmra.mxu0 %v625
        %v1296 = vpop.f32.mrf.mxu0
        %v1297 = vadd.f32 0.0, %v1296
        %v1298 = vpop.f32.mrf.mxu0
        %v1299 = vadd.f32 0.0, %v1298
        %1300 = vmatmul.bf16.gmra.mxu0 %v626
        %v1301 = vpop.f32.mrf.mxu0
        %v1302 = vadd.f32 0.0, %v1301
        %v1303 = vpop.f32.mrf.mxu0
        %v1304 = vadd.f32 0.0, %v1303
        %1305 = vmatmul.bf16.gmra.mxu0 %v627
        %v1306 = vpop.f32.mrf.mxu0
        %v1307 = vadd.f32 0.0, %v1306
        %v1308 = vpop.f32.mrf.mxu0
        %v1309 = vadd.f32 0.0, %v1308
        %1310 = vmatmul.bf16.gmra.mxu0 %v628
        %v1311 = vpop.f32.mrf.mxu0
        %v1312 = vadd.f32 0.0, %v1311
        %v1313 = vpop.f32.mrf.mxu0
        %v1314 = vadd.f32 0.0, %v1313
        %1315 = vmatmul.bf16.gmra.mxu0 %v629
        %v1316 = vpop.f32.mrf.mxu0
        %v1317 = vadd.f32 0.0, %v1316
        %v1318 = vpop.f32.mrf.mxu0
        %v1319 = vadd.f32 0.0, %v1318
        %1320 = vmatmul.bf16.gmra.mxu0 %v630
        %v1321 = vpop.f32.mrf.mxu0
        %v1322 = vadd.f32 0.0, %v1321
        %v1323 = vpop.f32.mrf.mxu0
        %v1324 = vadd.f32 0.0, %v1323
        %1325 = vdwg.mxu0
        %v1326 = vpack.c.bf16 %v993, %v993
        %v1327 = vpack.c.bf16 %v995, %v995
        %v1328 = vpack.c.bf16 %v998, %v998
        %v1329 = vpack.c.bf16 %v1000, %v1000
        %v1330 = vpack.c.bf16 %v1003, %v1003
        %v1331 = vpack.c.bf16 %v1005, %v1005
        %v1332 = vpack.c.bf16 %v1008, %v1008
        %v1333 = vpack.c.bf16 %v1010, %v1010
        %v1334 = vpack.c.bf16 %v1013, %v1013
        %v1335 = vpack.c.bf16 %v1015, %v1015
        %v1336 = vpack.c.bf16 %v1018, %v1018
        %v1337 = vpack.c.bf16 %v1020, %v1020
        %v1338 = vpack.c.bf16 %v1023, %v1023
        %v1339 = vpack.c.bf16 %v1025, %v1025
        %v1340 = vpack.c.bf16 %v1028, %v1028
        %v1341 = vpack.c.bf16 %v1030, %v1030
        %v1342 = vpack.c.bf16 %v1042, %v1042
        %v1343 = vpack.c.bf16 %v1044, %v1044
        %v1344 = vpack.c.bf16 %v1047, %v1047
        %v1345 = vpack.c.bf16 %v1049, %v1049
        %v1346 = vpack.c.bf16 %v1052, %v1052
        %v1347 = vpack.c.bf16 %v1054, %v1054
        %v1348 = vpack.c.bf16 %v1057, %v1057
        %v1349 = vpack.c.bf16 %v1059, %v1059
        %v1350 = vpack.c.bf16 %v1062, %v1062
        %v1351 = vpack.c.bf16 %v1064, %v1064
        %v1352 = vpack.c.bf16 %v1067, %v1067
        %v1353 = vpack.c.bf16 %v1069, %v1069
        %v1354 = vpack.c.bf16 %v1072, %v1072
        %v1355 = vpack.c.bf16 %v1074, %v1074
        %v1356 = vpack.c.bf16 %v1077, %v1077
        %v1357 = vpack.c.bf16 %v1079, %v1079
        %v1358 = vld [vmem:[%s3] sm:$0x1]
        %v1360 = vperm.slane %v1358, 0
        %v1362 = vadd.f32 %v1091, %v1360
        %v1363 = vadd.f32 %v1093, %v1360
        %v1364 = vadd.f32 %v1096, %v1360
        %v1365 = vadd.f32 %v1098, %v1360
        %v1366 = vadd.f32 %v1101, %v1360
        %v1367 = vadd.f32 %v1103, %v1360
        %v1368 = vadd.f32 %v1106, %v1360
        %v1369 = vadd.f32 %v1108, %v1360
        %v1370 = vadd.f32 %v1111, %v1360
        %v1371 = vadd.f32 %v1113, %v1360
        %v1372 = vadd.f32 %v1116, %v1360
        %v1373 = vadd.f32 %v1118, %v1360
        %v1374 = vadd.f32 %v1121, %v1360
        %v1375 = vadd.f32 %v1123, %v1360
        %v1376 = vadd.f32 %v1126, %v1360
        %v1377 = vadd.f32 %v1128, %v1360
        %v1378 = vpack.c.bf16 %v1189, %v1140
        %v1379 = vpack.c.bf16 %v1287, %v1238
        %v1380 = vpack.c.bf16 %v1191, %v1142
        %v1381 = vpack.c.bf16 %v1289, %v1240
        %v1382 = vpack.c.bf16 %v1194, %v1145
        %v1383 = vpack.c.bf16 %v1292, %v1243
        %v1384 = vpack.c.bf16 %v1196, %v1147
        %v1385 = vpack.c.bf16 %v1294, %v1245
        %v1386 = vpack.c.bf16 %v1199, %v1150
        %v1387 = vpack.c.bf16 %v1297, %v1248
        %v1388 = vpack.c.bf16 %v1201, %v1152
        %v1389 = vpack.c.bf16 %v1299, %v1250
        %v1390 = vpack.c.bf16 %v1204, %v1155
        %v1391 = vpack.c.bf16 %v1302, %v1253
        %v1392 = vpack.c.bf16 %v1206, %v1157
        %v1393 = vpack.c.bf16 %v1304, %v1255
        %v1394 = vpack.c.bf16 %v1209, %v1160
        %v1395 = vpack.c.bf16 %v1307, %v1258
        %v1396 = vpack.c.bf16 %v1211, %v1162
        %v1397 = vpack.c.bf16 %v1309, %v1260
        %v1398 = vpack.c.bf16 %v1214, %v1165
        %v1399 = vpack.c.bf16 %v1312, %v1263
        %v1400 = vpack.c.bf16 %v1216, %v1167
        %v1401 = vpack.c.bf16 %v1314, %v1265
        %v1402 = vpack.c.bf16 %v1219, %v1170
        %v1403 = vpack.c.bf16 %v1317, %v1268
        %v1404 = vpack.c.bf16 %v1221, %v1172
        %v1405 = vpack.c.bf16 %v1319, %v1270
        %v1406 = vpack.c.bf16 %v1224, %v1175
        %v1407 = vpack.c.bf16 %v1322, %v1273
        %v1408 = vpack.c.bf16 %v1226, %v1177
        %v1409 = vpack.c.bf16 %v1324, %v1275
        %v1410 = vld [vmem:[#allocation8] sm:$0xf]
        %v1411 = vld [vmem:[#allocation8 + $0x4] sm:$0xf]
        %v1412 = vunpack.c.l.bf16 %v1410
        %v1413 = vunpack.c.l.bf16 %v1411
        %v1416 = vunpack.c.l.b16 %v1326
        %v1417 = vunpack.c.l.b16 %v1327
        %v1418 = vpack.c.b16 %v1417, %v1416
        %v1421 = vunpack.c.l.b16 %v1342
        %v1422 = vunpack.c.l.b16 %v1343
        %v1423 = vpack.c.b16 %v1422, %v1421
        %vm1424 = vcmask 261120
        %v1426 = vsel %vm1424, %v1418, 0
        %v1429 = vsel %vm1424, %v1423, 0
        %1431 = vmatpush.bf16.xpose.msra.mxu0 0
        %1432 = vmatpush.bf16.xpose.msra.mxu0 0
        %1433 = vmatpush.bf16.xpose.msra.mxu0 0
        %1434 = vmatpush.bf16.xpose.msra.mxu0 0
        %1435 = vmatpush.bf16.xpose.msra.mxu0 0
        %1436 = vmatpush.bf16.xpose.msra.mxu0 0
        %1437 = vmatpush.bf16.xpose.msra.mxu0 0
        %1438 = vmatpush.bf16.xpose.msra.mxu0 %v1429
        %1439 = vmatmul.bf16.gmra.mxu0 %v1426
        %v1440 = vpop.f32.mrf.mxu0
        %v1441 = vadd.f32 %v1412, %v1440
        %v1442 = vpop.f32.mrf.mxu0
        %v1443 = vadd.f32 %v1413, %v1442
        %1444 = vdwg.mxu0
        %v1447 = vunpack.c.l.b16 %v1328
        %v1448 = vunpack.c.l.b16 %v1329
        %v1449 = vpack.c.b16 %v1448, %v1447
        %v1452 = vunpack.c.l.b16 %v1344
        %v1453 = vunpack.c.l.b16 %v1345
        %v1454 = vpack.c.b16 %v1453, %v1452
        %v1456 = vsel %vm1424, %v1449, 0
        %v1459 = vsel %vm1424, %v1454, 0
        %1461 = vmatpush.bf16.xpose.msra.mxu0 0
        %1462 = vmatpush.bf16.xpose.msra.mxu0 0
        %1463 = vmatpush.bf16.xpose.msra.mxu0 0
        %1464 = vmatpush.bf16.xpose.msra.mxu0 0
        %1465 = vmatpush.bf16.xpose.msra.mxu0 0
        %1466 = vmatpush.bf16.xpose.msra.mxu0 0
        %1467 = vmatpush.bf16.xpose.msra.mxu0 0
        %1468 = vmatpush.bf16.xpose.msra.mxu0 %v1459
        %1469 = vmatmul.bf16.gmra.mxu0 %v1456
        %v1470 = vpop.f32.mrf.mxu0
        %v1471 = vadd.f32 %v1412, %v1470
        %v1472 = vpop.f32.mrf.mxu0
        %v1473 = vadd.f32 %v1413, %v1472
        %1474 = vdwg.mxu0
        %v1477 = vunpack.c.l.b16 %v1330
        %v1478 = vunpack.c.l.b16 %v1331
        %v1479 = vpack.c.b16 %v1478, %v1477
        %v1482 = vunpack.c.l.b16 %v1346
        %v1483 = vunpack.c.l.b16 %v1347
        %v1484 = vpack.c.b16 %v1483, %v1482
        %v1486 = vsel %vm1424, %v1479, 0
        %v1489 = vsel %vm1424, %v1484, 0
        %1491 = vmatpush.bf16.xpose.msra.mxu0 0
        %1492 = vmatpush.bf16.xpose.msra.mxu0 0
        %1493 = vmatpush.bf16.xpose.msra.mxu0 0
        %1494 = vmatpush.bf16.xpose.msra.mxu0 0
        %1495 = vmatpush.bf16.xpose.msra.mxu0 0
        %1496 = vmatpush.bf16.xpose.msra.mxu0 0
        %1497 = vmatpush.bf16.xpose.msra.mxu0 0
        %1498 = vmatpush.bf16.xpose.msra.mxu0 %v1489
        %1499 = vmatmul.bf16.gmra.mxu0 %v1486
        %v1500 = vpop.f32.mrf.mxu0
        %v1501 = vadd.f32 %v1412, %v1500
        %v1502 = vpop.f32.mrf.mxu0
        %v1503 = vadd.f32 %v1413, %v1502
        %1504 = vdwg.mxu0
        %v1507 = vunpack.c.l.b16 %v1332
        %v1508 = vunpack.c.l.b16 %v1333
        %v1509 = vpack.c.b16 %v1508, %v1507
        %v1512 = vunpack.c.l.b16 %v1348
        %v1513 = vunpack.c.l.b16 %v1349
        %v1514 = vpack.c.b16 %v1513, %v1512
        %v1516 = vsel %vm1424, %v1509, 0
        %v1519 = vsel %vm1424, %v1514, 0
        %1521 = vmatpush.bf16.xpose.msra.mxu0 0
        %1522 = vmatpush.bf16.xpose.msra.mxu0 0
        %1523 = vmatpush.bf16.xpose.msra.mxu0 0
        %1524 = vmatpush.bf16.xpose.msra.mxu0 0
        %1525 = vmatpush.bf16.xpose.msra.mxu0 0
        %1526 = vmatpush.bf16.xpose.msra.mxu0 0
        %1527 = vmatpush.bf16.xpose.msra.mxu0 0
        %1528 = vmatpush.bf16.xpose.msra.mxu0 %v1519
        %1529 = vmatmul.bf16.gmra.mxu0 %v1516
        %v1530 = vpop.f32.mrf.mxu0
        %v1531 = vadd.f32 %v1412, %v1530
        %v1532 = vpop.f32.mrf.mxu0
        %v1533 = vadd.f32 %v1413, %v1532
        %1534 = vdwg.mxu0
        %v1537 = vunpack.c.l.b16 %v1334
        %v1538 = vunpack.c.l.b16 %v1335
        %v1539 = vpack.c.b16 %v1538, %v1537
        %v1542 = vunpack.c.l.b16 %v1350
        %v1543 = vunpack.c.l.b16 %v1351
        %v1544 = vpack.c.b16 %v1543, %v1542
        %v1546 = vsel %vm1424, %v1539, 0
        %v1549 = vsel %vm1424, %v1544, 0
        %1551 = vmatpush.bf16.xpose.msra.mxu0 0
        %1552 = vmatpush.bf16.xpose.msra.mxu0 0
        %1553 = vmatpush.bf16.xpose.msra.mxu0 0
        %1554 = vmatpush.bf16.xpose.msra.mxu0 0
        %1555 = vmatpush.bf16.xpose.msra.mxu0 0
        %1556 = vmatpush.bf16.xpose.msra.mxu0 0
        %1557 = vmatpush.bf16.xpose.msra.mxu0 0
        %1558 = vmatpush.bf16.xpose.msra.mxu0 %v1549
        %1559 = vmatmul.bf16.gmra.mxu0 %v1546
        %v1560 = vpop.f32.mrf.mxu0
        %v1561 = vadd.f32 %v1412, %v1560
        %v1562 = vpop.f32.mrf.mxu0
        %v1563 = vadd.f32 %v1413, %v1562
        %1564 = vdwg.mxu0
        %v1567 = vunpack.c.l.b16 %v1336
        %v1568 = vunpack.c.l.b16 %v1337
        %v1569 = vpack.c.b16 %v1568, %v1567
        %v1572 = vunpack.c.l.b16 %v1352
        %v1573 = vunpack.c.l.b16 %v1353
        %v1574 = vpack.c.b16 %v1573, %v1572
        %v1576 = vsel %vm1424, %v1569, 0
        %v1579 = vsel %vm1424, %v1574, 0
        %1581 = vmatpush.bf16.xpose.msra.mxu0 0
        %1582 = vmatpush.bf16.xpose.msra.mxu0 0
        %1583 = vmatpush.bf16.xpose.msra.mxu0 0
        %1584 = vmatpush.bf16.xpose.msra.mxu0 0
        %1585 = vmatpush.bf16.xpose.msra.mxu0 0
        %1586 = vmatpush.bf16.xpose.msra.mxu0 0
        %1587 = vmatpush.bf16.xpose.msra.mxu0 0
        %1588 = vmatpush.bf16.xpose.msra.mxu0 %v1579
        %1589 = vmatmul.bf16.gmra.mxu0 %v1576
        %v1590 = vpop.f32.mrf.mxu0
        %v1591 = vadd.f32 %v1412, %v1590
        %v1592 = vpop.f32.mrf.mxu0
        %v1593 = vadd.f32 %v1413, %v1592
        %1594 = vdwg.mxu0
        %v1597 = vunpack.c.l.b16 %v1338
        %v1598 = vunpack.c.l.b16 %v1339
        %v1599 = vpack.c.b16 %v1598, %v1597
        %v1602 = vunpack.c.l.b16 %v1354
        %v1603 = vunpack.c.l.b16 %v1355
        %v1604 = vpack.c.b16 %v1603, %v1602
        %v1606 = vsel %vm1424, %v1599, 0
        %v1609 = vsel %vm1424, %v1604, 0
        %1611 = vmatpush.bf16.xpose.msra.mxu0 0
        %1612 = vmatpush.bf16.xpose.msra.mxu0 0
        %1613 = vmatpush.bf16.xpose.msra.mxu0 0
        %1614 = vmatpush.bf16.xpose.msra.mxu0 0
        %1615 = vmatpush.bf16.xpose.msra.mxu0 0
        %1616 = vmatpush.bf16.xpose.msra.mxu0 0
        %1617 = vmatpush.bf16.xpose.msra.mxu0 0
        %1618 = vmatpush.bf16.xpose.msra.mxu0 %v1609
        %1619 = vmatmul.bf16.gmra.mxu0 %v1606
        %v1620 = vpop.f32.mrf.mxu0
        %v1621 = vadd.f32 %v1412, %v1620
        %v1622 = vpop.f32.mrf.mxu0
        %v1623 = vadd.f32 %v1413, %v1622
        %1624 = vdwg.mxu0
        %v1627 = vunpack.c.l.b16 %v1340
        %v1628 = vunpack.c.l.b16 %v1341
        %v1629 = vpack.c.b16 %v1628, %v1627
        %v1632 = vunpack.c.l.b16 %v1356
        %v1633 = vunpack.c.l.b16 %v1357
        %v1634 = vpack.c.b16 %v1633, %v1632
        %v1636 = vsel %vm1424, %v1629, 0
        %v1639 = vsel %vm1424, %v1634, 0
        %1641 = vmatpush.bf16.xpose.msra.mxu0 0
        %1642 = vmatpush.bf16.xpose.msra.mxu0 0
        %1643 = vmatpush.bf16.xpose.msra.mxu0 0
        %1644 = vmatpush.bf16.xpose.msra.mxu0 0
        %1645 = vmatpush.bf16.xpose.msra.mxu0 0
        %1646 = vmatpush.bf16.xpose.msra.mxu0 0
        %1647 = vmatpush.bf16.xpose.msra.mxu0 0
        %1648 = vmatpush.bf16.xpose.msra.mxu0 %v1639
        %1649 = vmatmul.bf16.gmra.mxu0 %v1636
        %v1650 = vpop.f32.mrf.mxu0
        %v1651 = vadd.f32 %v1412, %v1650
        %v1652 = vpop.f32.mrf.mxu0
        %v1653 = vadd.f32 %v1413, %v1652
        %1654 = vdwg.mxu0
        %vm1655 = vcmask 130048
        %v1656 = vsel %vm1655, %v1441, -inf
        %1657 = vmax.xlane.f32.xlu0 %v1656
        %v1658 = vpop.xlane.xlu0 %1657
        %v1659 = vsel %vm1655, %v1443, -inf
        %1660 = vmax.xlane.f32.xlu0 %v1659
        %v1661 = vpop.xlane.xlu0 %1660
        %v1662 = vsel %vm1655, %v1471, -inf
        %1663 = vmax.xlane.f32.xlu0 %v1662
        %v1664 = vpop.xlane.xlu0 %1663
        %v1665 = vsel %vm1655, %v1473, -inf
        %1666 = vmax.xlane.f32.xlu0 %v1665
        %v1667 = vpop.xlane.xlu0 %1666
        %v1668 = vsel %vm1655, %v1501, -inf
        %1669 = vmax.xlane.f32.xlu0 %v1668
        %v1670 = vpop.xlane.xlu0 %1669
        %v1671 = vsel %vm1655, %v1503, -inf
        %1672 = vmax.xlane.f32.xlu0 %v1671
        %v1673 = vpop.xlane.xlu0 %1672
        %v1674 = vsel %vm1655, %v1531, -inf
        %1675 = vmax.xlane.f32.xlu0 %v1674
        %v1676 = vpop.xlane.xlu0 %1675
        %v1677 = vsel %vm1655, %v1533, -inf
        %1678 = vmax.xlane.f32.xlu0 %v1677
        %v1679 = vpop.xlane.xlu0 %1678
        %v1680 = vsel %vm1655, %v1561, -inf
        %1681 = vmax.xlane.f32.xlu0 %v1680
        %v1682 = vpop.xlane.xlu0 %1681
        %v1683 = vsel %vm1655, %v1563, -inf
        %1684 = vmax.xlane.f32.xlu0 %v1683
        %v1685 = vpop.xlane.xlu0 %1684
        %v1686 = vsel %vm1655, %v1591, -inf
        %1687 = vmax.xlane.f32.xlu0 %v1686
        %v1688 = vpop.xlane.xlu0 %1687
        %v1689 = vsel %vm1655, %v1593, -inf
        %1690 = vmax.xlane.f32.xlu0 %v1689
        %v1691 = vpop.xlane.xlu0 %1690
        %v1692 = vsel %vm1655, %v1621, -inf
        %1693 = vmax.xlane.f32.xlu0 %v1692
        %v1694 = vpop.xlane.xlu0 %1693
        %v1695 = vsel %vm1655, %v1623, -inf
        %1696 = vmax.xlane.f32.xlu0 %v1695
        %v1697 = vpop.xlane.xlu0 %1696
        %v1698 = vsel %vm1655, %v1651, -inf
        %1699 = vmax.xlane.f32.xlu0 %v1698
        %v1700 = vpop.xlane.xlu0 %1699
        %v1701 = vsel %vm1655, %v1653, -inf
        %1702 = vmax.xlane.f32.xlu0 %v1701
        %v1703 = vpop.xlane.xlu0 %1702
        %v1704 = vsub.f32 %v1441, %v1658
        %v1705 = vsub.f32 %v1443, %v1661
        %v1706 = vsub.f32 %v1471, %v1664
        %v1707 = vsub.f32 %v1473, %v1667
        %v1708 = vsub.f32 %v1501, %v1670
        %v1709 = vsub.f32 %v1503, %v1673
        %v1710 = vsub.f32 %v1531, %v1676
        %v1711 = vsub.f32 %v1533, %v1679
        %v1712 = vsub.f32 %v1561, %v1682
        %v1713 = vsub.f32 %v1563, %v1685
        %v1714 = vsub.f32 %v1591, %v1688
        %v1715 = vsub.f32 %v1593, %v1691
        %v1716 = vsub.f32 %v1621, %v1694
        %v1717 = vsub.f32 %v1623, %v1697
        %v1718 = vsub.f32 %v1651, %v1700
        %v1719 = vsub.f32 %v1653, %v1703
        %v1720 = vmul.f32 %v1704, 1.442695
        %v1721 = vpow.pop %v1720
        %v1722 = vmul.f32 %v1705, 1.442695
        %v1723 = vpow.pop %v1722
        %v1724 = vmul.f32 %v1706, 1.442695
        %v1725 = vpow.pop %v1724
        %v1726 = vmul.f32 %v1707, 1.442695
        %v1727 = vpow.pop %v1726
        %v1728 = vmul.f32 %v1708, 1.442695
        %v1729 = vpow.pop %v1728
        %v1730 = vmul.f32 %v1709, 1.442695
        %v1731 = vpow.pop %v1730
        %v1732 = vmul.f32 %v1710, 1.442695
        %v1733 = vpow.pop %v1732
        %v1734 = vmul.f32 %v1711, 1.442695
        %v1735 = vpow.pop %v1734
        %v1736 = vmul.f32 %v1712, 1.442695
        %v1737 = vpow.pop %v1736
        %v1738 = vmul.f32 %v1713, 1.442695
        %v1739 = vpow.pop %v1738
        %v1740 = vmul.f32 %v1714, 1.442695
        %v1741 = vpow.pop %v1740
        %v1742 = vmul.f32 %v1715, 1.442695
        %v1743 = vpow.pop %v1742
        %v1744 = vmul.f32 %v1716, 1.442695
        %v1745 = vpow.pop %v1744
        %v1746 = vmul.f32 %v1717, 1.442695
        %v1747 = vpow.pop %v1746
        %v1748 = vmul.f32 %v1718, 1.442695
        %v1749 = vpow.pop %v1748
        %v1750 = vmul.f32 %v1719, 1.442695
        %v1751 = vpow.pop %v1750
        %v1752 = vsel %vm1655, %v1721, 0.0
        %1753 = vadd.xlane.f32.xlu0 %v1752
        %v1754 = vpop.xlane.xlu0 %1753
        %v1755 = vsel %vm1655, %v1723, 0.0
        %1756 = vadd.xlane.f32.xlu0 %v1755
        %v1757 = vpop.xlane.xlu0 %1756
        %v1758 = vsel %vm1655, %v1725, 0.0
        %1759 = vadd.xlane.f32.xlu0 %v1758
        %v1760 = vpop.xlane.xlu0 %1759
        %v1761 = vsel %vm1655, %v1727, 0.0
        %1762 = vadd.xlane.f32.xlu0 %v1761
        %v1763 = vpop.xlane.xlu0 %1762
        %v1764 = vsel %vm1655, %v1729, 0.0
        %1765 = vadd.xlane.f32.xlu0 %v1764
        %v1766 = vpop.xlane.xlu0 %1765
        %v1767 = vsel %vm1655, %v1731, 0.0
        %1768 = vadd.xlane.f32.xlu0 %v1767
        %v1769 = vpop.xlane.xlu0 %1768
        %v1770 = vsel %vm1655, %v1733, 0.0
        %1771 = vadd.xlane.f32.xlu0 %v1770
        %v1772 = vpop.xlane.xlu0 %1771
        %v1773 = vsel %vm1655, %v1735, 0.0
        %1774 = vadd.xlane.f32.xlu0 %v1773
        %v1775 = vpop.xlane.xlu0 %1774
        %v1776 = vsel %vm1655, %v1737, 0.0
        %1777 = vadd.xlane.f32.xlu0 %v1776
        %v1778 = vpop.xlane.xlu0 %1777
        %v1779 = vsel %vm1655, %v1739, 0.0
        %1780 = vadd.xlane.f32.xlu0 %v1779
        %v1781 = vpop.xlane.xlu0 %1780
        %v1782 = vsel %vm1655, %v1741, 0.0
        %1783 = vadd.xlane.f32.xlu0 %v1782
        %v1784 = vpop.xlane.xlu0 %1783
        %v1785 = vsel %vm1655, %v1743, 0.0
        %1786 = vadd.xlane.f32.xlu0 %v1785
        %v1787 = vpop.xlane.xlu0 %1786
        %v1788 = vsel %vm1655, %v1745, 0.0
        %1789 = vadd.xlane.f32.xlu0 %v1788
        %v1790 = vpop.xlane.xlu0 %1789
        %v1791 = vsel %vm1655, %v1747, 0.0
        %1792 = vadd.xlane.f32.xlu0 %v1791
        %v1793 = vpop.xlane.xlu0 %1792
        %v1794 = vsel %vm1655, %v1749, 0.0
        %1795 = vadd.xlane.f32.xlu0 %v1794
        %v1796 = vpop.xlane.xlu0 %1795
        %v1797 = vsel %vm1655, %v1751, 0.0
        %1798 = vadd.xlane.f32.xlu0 %v1797
        %v1799 = vpop.xlane.xlu0 %1798
        %v1800 = vpack.c.bf16 %v1721, %v1721
        %v1801 = vpack.c.bf16 %v1723, %v1723
        %v1802 = vpack.c.bf16 %v1725, %v1725
        %v1803 = vpack.c.bf16 %v1727, %v1727
        %v1804 = vpack.c.bf16 %v1729, %v1729
        %v1805 = vpack.c.bf16 %v1731, %v1731
        %v1806 = vpack.c.bf16 %v1733, %v1733
        %v1807 = vpack.c.bf16 %v1735, %v1735
        %v1808 = vpack.c.bf16 %v1737, %v1737
        %v1809 = vpack.c.bf16 %v1739, %v1739
        %v1810 = vpack.c.bf16 %v1741, %v1741
        %v1811 = vpack.c.bf16 %v1743, %v1743
        %v1812 = vpack.c.bf16 %v1745, %v1745
        %v1813 = vpack.c.bf16 %v1747, %v1747
        %v1814 = vpack.c.bf16 %v1749, %v1749
        %v1815 = vpack.c.bf16 %v1751, %v1751
        %v1818 = vunpack.c.l.b16 %v1800
        %v1819 = vunpack.c.l.b16 %v1801
        %v1820 = vpack.c.b16 %v1819, %v1818
        %v1823 = vunpack.c.l.b16 %v1378
        %v1824 = vunpack.c.l.b16 %v1380
        %v1825 = vpack.c.b16 %v1824, %v1823
        %v1828 = vsel %vm1655, %v1820, 0
        %1830 = vmatpush.bf16.msra.mxu0 0
        %1831 = vmatpush.bf16.msra.mxu0 0
        %1832 = vmatpush.bf16.msra.mxu0 0
        %1833 = vmatpush.bf16.msra.mxu0 0
        %1834 = vmatpush.bf16.msra.mxu0 0
        %1835 = vmatpush.bf16.msra.mxu0 0
        %1836 = vmatpush.bf16.msra.mxu0 0
        %1837 = vmatpush.bf16.msra.mxu0 %v1825
        %1838 = vmatmul.bf16.gmra.mxu0 %v1828
        %v1839 = vpop.f32.mrf.mxu0
        %v1840 = vadd.f32 0.0, %v1839
        %v1841 = vpop.f32.mrf.mxu0
        %v1842 = vadd.f32 0.0, %v1841
        %1843 = vdwg.mxu0
        %v1846 = vunpack.c.l.b16 %v1802
        %v1847 = vunpack.c.l.b16 %v1803
        %v1848 = vpack.c.b16 %v1847, %v1846
        %v1851 = vunpack.c.l.b16 %v1382
        %v1852 = vunpack.c.l.b16 %v1384
        %v1853 = vpack.c.b16 %v1852, %v1851
        %v1856 = vsel %vm1655, %v1848, 0
        %1858 = vmatpush.bf16.msra.mxu0 0
        %1859 = vmatpush.bf16.msra.mxu0 0
        %1860 = vmatpush.bf16.msra.mxu0 0
        %1861 = vmatpush.bf16.msra.mxu0 0
        %1862 = vmatpush.bf16.msra.mxu0 0
        %1863 = vmatpush.bf16.msra.mxu0 0
        %1864 = vmatpush.bf16.msra.mxu0 0
        %1865 = vmatpush.bf16.msra.mxu0 %v1853
        %1866 = vmatmul.bf16.gmra.mxu0 %v1856
        %v1867 = vpop.f32.mrf.mxu0
        %v1868 = vadd.f32 0.0, %v1867
        %v1869 = vpop.f32.mrf.mxu0
        %v1870 = vadd.f32 0.0, %v1869
        %1871 = vdwg.mxu0
        %v1874 = vunpack.c.l.b16 %v1804
        %v1875 = vunpack.c.l.b16 %v1805
        %v1876 = vpack.c.b16 %v1875, %v1874
        %v1879 = vunpack.c.l.b16 %v1386
        %v1880 = vunpack.c.l.b16 %v1388
        %v1881 = vpack.c.b16 %v1880, %v1879
        %v1884 = vsel %vm1655, %v1876, 0
        %1886 = vmatpush.bf16.msra.mxu0 0
        %1887 = vmatpush.bf16.msra.mxu0 0
        %1888 = vmatpush.bf16.msra.mxu0 0
        %1889 = vmatpush.bf16.msra.mxu0 0
        %1890 = vmatpush.bf16.msra.mxu0 0
        %1891 = vmatpush.bf16.msra.mxu0 0
        %1892 = vmatpush.bf16.msra.mxu0 0
        %1893 = vmatpush.bf16.msra.mxu0 %v1881
        %1894 = vmatmul.bf16.gmra.mxu0 %v1884
        %v1895 = vpop.f32.mrf.mxu0
        %v1896 = vadd.f32 0.0, %v1895
        %v1897 = vpop.f32.mrf.mxu0
        %v1898 = vadd.f32 0.0, %v1897
        %1899 = vdwg.mxu0
        %v1902 = vunpack.c.l.b16 %v1806
        %v1903 = vunpack.c.l.b16 %v1807
        %v1904 = vpack.c.b16 %v1903, %v1902
        %v1907 = vunpack.c.l.b16 %v1390
        %v1908 = vunpack.c.l.b16 %v1392
        %v1909 = vpack.c.b16 %v1908, %v1907
        %v1912 = vsel %vm1655, %v1904, 0
        %1914 = vmatpush.bf16.msra.mxu0 0
        %1915 = vmatpush.bf16.msra.mxu0 0
        %1916 = vmatpush.bf16.msra.mxu0 0
        %1917 = vmatpush.bf16.msra.mxu0 0
        %1918 = vmatpush.bf16.msra.mxu0 0
        %1919 = vmatpush.bf16.msra.mxu0 0
        %1920 = vmatpush.bf16.msra.mxu0 0
        %1921 = vmatpush.bf16.msra.mxu0 %v1909
        %1922 = vmatmul.bf16.gmra.mxu0 %v1912
        %v1923 = vpop.f32.mrf.mxu0
        %v1924 = vadd.f32 0.0, %v1923
        %v1925 = vpop.f32.mrf.mxu0
        %v1926 = vadd.f32 0.0, %v1925
        %1927 = vdwg.mxu0
        %v1930 = vunpack.c.l.b16 %v1808
        %v1931 = vunpack.c.l.b16 %v1809
        %v1932 = vpack.c.b16 %v1931, %v1930
        %v1935 = vunpack.c.l.b16 %v1394
        %v1936 = vunpack.c.l.b16 %v1396
        %v1937 = vpack.c.b16 %v1936, %v1935
        %v1940 = vsel %vm1655, %v1932, 0
        %1942 = vmatpush.bf16.msra.mxu0 0
        %1943 = vmatpush.bf16.msra.mxu0 0
        %1944 = vmatpush.bf16.msra.mxu0 0
        %1945 = vmatpush.bf16.msra.mxu0 0
        %1946 = vmatpush.bf16.msra.mxu0 0
        %1947 = vmatpush.bf16.msra.mxu0 0
        %1948 = vmatpush.bf16.msra.mxu0 0
        %1949 = vmatpush.bf16.msra.mxu0 %v1937
        %1950 = vmatmul.bf16.gmra.mxu0 %v1940
        %v1951 = vpop.f32.mrf.mxu0
        %v1952 = vadd.f32 0.0, %v1951
        %v1953 = vpop.f32.mrf.mxu0
        %v1954 = vadd.f32 0.0, %v1953
        %1955 = vdwg.mxu0
        %v1958 = vunpack.c.l.b16 %v1810
        %v1959 = vunpack.c.l.b16 %v1811
        %v1960 = vpack.c.b16 %v1959, %v1958
        %v1963 = vunpack.c.l.b16 %v1398
        %v1964 = vunpack.c.l.b16 %v1400
        %v1965 = vpack.c.b16 %v1964, %v1963
        %v1968 = vsel %vm1655, %v1960, 0
        %1970 = vmatpush.bf16.msra.mxu0 0
        %1971 = vmatpush.bf16.msra.mxu0 0
        %1972 = vmatpush.bf16.msra.mxu0 0
        %1973 = vmatpush.bf16.msra.mxu0 0
        %1974 = vmatpush.bf16.msra.mxu0 0
        %1975 = vmatpush.bf16.msra.mxu0 0
        %1976 = vmatpush.bf16.msra.mxu0 0
        %1977 = vmatpush.bf16.msra.mxu0 %v1965
        %1978 = vmatmul.bf16.gmra.mxu0 %v1968
        %v1979 = vpop.f32.mrf.mxu0
        %v1980 = vadd.f32 0.0, %v1979
        %v1981 = vpop.f32.mrf.mxu0
        %v1982 = vadd.f32 0.0, %v1981
        %1983 = vdwg.mxu0
        %v1986 = vunpack.c.l.b16 %v1812
        %v1987 = vunpack.c.l.b16 %v1813
        %v1988 = vpack.c.b16 %v1987, %v1986
        %v1991 = vunpack.c.l.b16 %v1402
        %v1992 = vunpack.c.l.b16 %v1404
        %v1993 = vpack.c.b16 %v1992, %v1991
        %v1996 = vsel %vm1655, %v1988, 0
        %1998 = vmatpush.bf16.msra.mxu0 0
        %1999 = vmatpush.bf16.msra.mxu0 0
        %2000 = vmatpush.bf16.msra.mxu0 0
        %2001 = vmatpush.bf16.msra.mxu0 0
        %2002 = vmatpush.bf16.msra.mxu0 0
        %2003 = vmatpush.bf16.msra.mxu0 0
        %2004 = vmatpush.bf16.msra.mxu0 0
        %2005 = vmatpush.bf16.msra.mxu0 %v1993
        %2006 = vmatmul.bf16.gmra.mxu0 %v1996
        %v2007 = vpop.f32.mrf.mxu0
        %v2008 = vadd.f32 0.0, %v2007
        %v2009 = vpop.f32.mrf.mxu0
        %v2010 = vadd.f32 0.0, %v2009
        %2011 = vdwg.mxu0
        %v2014 = vunpack.c.l.b16 %v1814
        %v2015 = vunpack.c.l.b16 %v1815
        %v2016 = vpack.c.b16 %v2015, %v2014
        %v2019 = vunpack.c.l.b16 %v1406
        %v2020 = vunpack.c.l.b16 %v1408
        %v2021 = vpack.c.b16 %v2020, %v2019
        %v2024 = vsel %vm1655, %v2016, 0
        %2026 = vmatpush.bf16.msra.mxu0 0
        %2027 = vmatpush.bf16.msra.mxu0 0
        %2028 = vmatpush.bf16.msra.mxu0 0
        %2029 = vmatpush.bf16.msra.mxu0 0
        %2030 = vmatpush.bf16.msra.mxu0 0
        %2031 = vmatpush.bf16.msra.mxu0 0
        %2032 = vmatpush.bf16.msra.mxu0 0
        %2033 = vmatpush.bf16.msra.mxu0 %v2021
        %2034 = vmatmul.bf16.gmra.mxu0 %v2024
        %v2035 = vpop.f32.mrf.mxu0
        %v2036 = vadd.f32 0.0, %v2035
        %v2037 = vpop.f32.mrf.mxu0
        %v2038 = vadd.f32 0.0, %v2037
        %2039 = vdwg.mxu0
        %v2040 = vrcp.pop %v1754
        %v2041 = vmul.f32 %v1754, %v2040
        %v2042 = vsub.f32 1.0, %v2041
        %v2043 = vmul.f32 %v2040, %v2042
        %v2044 = vadd.f32 %v2040, %v2043
        %vm2045 = vweird.f32 %v1754
        %vm2046 = vweird.f32 %v2040
        %vm2047 = vmor %vm2045, %vm2046
        %v2048 = vsel %vm2047, %v2040, %v2044
        %v2049 = vand.u32 2147483647, %v1754
        %vm2050 = vcmp.eq.f32.partialorder %v2049, 8.507059e+37
        %v2051 = vand.u32 %v1754, 2147483648
        %v2052 = vor.u32 1.1754944e-38, %v2051
        %v2053 = vsel %vm2050, %v2052, %v2048
        %v2054 = vrcp.pop %v1757
        %v2055 = vmul.f32 %v1757, %v2054
        %v2056 = vsub.f32 1.0, %v2055
        %v2057 = vmul.f32 %v2054, %v2056
        %v2058 = vadd.f32 %v2054, %v2057
        %vm2059 = vweird.f32 %v1757
        %vm2060 = vweird.f32 %v2054
        %vm2061 = vmor %vm2059, %vm2060
        %v2062 = vsel %vm2061, %v2054, %v2058
        %v2063 = vand.u32 2147483647, %v1757
        %vm2064 = vcmp.eq.f32.partialorder %v2063, 8.507059e+37
        %v2065 = vand.u32 %v1757, 2147483648
        %v2066 = vor.u32 1.1754944e-38, %v2065
        %v2067 = vsel %vm2064, %v2066, %v2062
        %v2068 = vrcp.pop %v1760
        %v2069 = vmul.f32 %v1760, %v2068
        %v2070 = vsub.f32 1.0, %v2069
        %v2071 = vmul.f32 %v2068, %v2070
        %v2072 = vadd.f32 %v2068, %v2071
        %vm2073 = vweird.f32 %v1760
        %vm2074 = vweird.f32 %v2068
        %vm2075 = vmor %vm2073, %vm2074
        %v2076 = vsel %vm2075, %v2068, %v2072
        %v2077 = vand.u32 2147483647, %v1760
        %vm2078 = vcmp.eq.f32.partialorder %v2077, 8.507059e+37
        %v2079 = vand.u32 %v1760, 2147483648
        %v2080 = vor.u32 1.1754944e-38, %v2079
        %v2081 = vsel %vm2078, %v2080, %v2076
        %v2082 = vrcp.pop %v1763
        %v2083 = vmul.f32 %v1763, %v2082
        %v2084 = vsub.f32 1.0, %v2083
        %v2085 = vmul.f32 %v2082, %v2084
        %v2086 = vadd.f32 %v2082, %v2085
        %vm2087 = vweird.f32 %v1763
        %vm2088 = vweird.f32 %v2082
        %vm2089 = vmor %vm2087, %vm2088
        %v2090 = vsel %vm2089, %v2082, %v2086
        %v2091 = vand.u32 2147483647, %v1763
        %vm2092 = vcmp.eq.f32.partialorder %v2091, 8.507059e+37
        %v2093 = vand.u32 %v1763, 2147483648
        %v2094 = vor.u32 1.1754944e-38, %v2093
        %v2095 = vsel %vm2092, %v2094, %v2090
        %v2096 = vrcp.pop %v1766
        %v2097 = vmul.f32 %v1766, %v2096
        %v2098 = vsub.f32 1.0, %v2097
        %v2099 = vmul.f32 %v2096, %v2098
        %v2100 = vadd.f32 %v2096, %v2099
        %vm2101 = vweird.f32 %v1766
        %vm2102 = vweird.f32 %v2096
        %vm2103 = vmor %vm2101, %vm2102
        %v2104 = vsel %vm2103, %v2096, %v2100
        %v2105 = vand.u32 2147483647, %v1766
        %vm2106 = vcmp.eq.f32.partialorder %v2105, 8.507059e+37
        %v2107 = vand.u32 %v1766, 2147483648
        %v2108 = vor.u32 1.1754944e-38, %v2107
        %v2109 = vsel %vm2106, %v2108, %v2104
        %v2110 = vrcp.pop %v1769
        %v2111 = vmul.f32 %v1769, %v2110
        %v2112 = vsub.f32 1.0, %v2111
        %v2113 = vmul.f32 %v2110, %v2112
        %v2114 = vadd.f32 %v2110, %v2113
        %vm2115 = vweird.f32 %v1769
        %vm2116 = vweird.f32 %v2110
        %vm2117 = vmor %vm2115, %vm2116
        %v2118 = vsel %vm2117, %v2110, %v2114
        %v2119 = vand.u32 2147483647, %v1769
        %vm2120 = vcmp.eq.f32.partialorder %v2119, 8.507059e+37
        %v2121 = vand.u32 %v1769, 2147483648
        %v2122 = vor.u32 1.1754944e-38, %v2121
        %v2123 = vsel %vm2120, %v2122, %v2118
        %v2124 = vrcp.pop %v1772
        %v2125 = vmul.f32 %v1772, %v2124
        %v2126 = vsub.f32 1.0, %v2125
        %v2127 = vmul.f32 %v2124, %v2126
        %v2128 = vadd.f32 %v2124, %v2127
        %vm2129 = vweird.f32 %v1772
        %vm2130 = vweird.f32 %v2124
        %vm2131 = vmor %vm2129, %vm2130
        %v2132 = vsel %vm2131, %v2124, %v2128
        %v2133 = vand.u32 2147483647, %v1772
        %vm2134 = vcmp.eq.f32.partialorder %v2133, 8.507059e+37
        %v2135 = vand.u32 %v1772, 2147483648
        %v2136 = vor.u32 1.1754944e-38, %v2135
        %v2137 = vsel %vm2134, %v2136, %v2132
        %v2138 = vrcp.pop %v1775
        %v2139 = vmul.f32 %v1775, %v2138
        %v2140 = vsub.f32 1.0, %v2139
        %v2141 = vmul.f32 %v2138, %v2140
        %v2142 = vadd.f32 %v2138, %v2141
        %vm2143 = vweird.f32 %v1775
        %vm2144 = vweird.f32 %v2138
        %vm2145 = vmor %vm2143, %vm2144
        %v2146 = vsel %vm2145, %v2138, %v2142
        %v2147 = vand.u32 2147483647, %v1775
        %vm2148 = vcmp.eq.f32.partialorder %v2147, 8.507059e+37
        %v2149 = vand.u32 %v1775, 2147483648
        %v2150 = vor.u32 1.1754944e-38, %v2149
        %v2151 = vsel %vm2148, %v2150, %v2146
        %v2152 = vrcp.pop %v1778
        %v2153 = vmul.f32 %v1778, %v2152
        %v2154 = vsub.f32 1.0, %v2153
        %v2155 = vmul.f32 %v2152, %v2154
        %v2156 = vadd.f32 %v2152, %v2155
        %vm2157 = vweird.f32 %v1778
        %vm2158 = vweird.f32 %v2152
        %vm2159 = vmor %vm2157, %vm2158
        %v2160 = vsel %vm2159, %v2152, %v2156
        %v2161 = vand.u32 2147483647, %v1778
        %vm2162 = vcmp.eq.f32.partialorder %v2161, 8.507059e+37
        %v2163 = vand.u32 %v1778, 2147483648
        %v2164 = vor.u32 1.1754944e-38, %v2163
        %v2165 = vsel %vm2162, %v2164, %v2160
        %v2166 = vrcp.pop %v1781
        %v2167 = vmul.f32 %v1781, %v2166
        %v2168 = vsub.f32 1.0, %v2167
        %v2169 = vmul.f32 %v2166, %v2168
        %v2170 = vadd.f32 %v2166, %v2169
        %vm2171 = vweird.f32 %v1781
        %vm2172 = vweird.f32 %v2166
        %vm2173 = vmor %vm2171, %vm2172
        %v2174 = vsel %vm2173, %v2166, %v2170
        %v2175 = vand.u32 2147483647, %v1781
        %vm2176 = vcmp.eq.f32.partialorder %v2175, 8.507059e+37
        %v2177 = vand.u32 %v1781, 2147483648
        %v2178 = vor.u32 1.1754944e-38, %v2177
        %v2179 = vsel %vm2176, %v2178, %v2174
        %v2180 = vrcp.pop %v1784
        %v2181 = vmul.f32 %v1784, %v2180
        %v2182 = vsub.f32 1.0, %v2181
        %v2183 = vmul.f32 %v2180, %v2182
        %v2184 = vadd.f32 %v2180, %v2183
        %vm2185 = vweird.f32 %v1784
        %vm2186 = vweird.f32 %v2180
        %vm2187 = vmor %vm2185, %vm2186
        %v2188 = vsel %vm2187, %v2180, %v2184
        %v2189 = vand.u32 2147483647, %v1784
        %vm2190 = vcmp.eq.f32.partialorder %v2189, 8.507059e+37
        %v2191 = vand.u32 %v1784, 2147483648
        %v2192 = vor.u32 1.1754944e-38, %v2191
        %v2193 = vsel %vm2190, %v2192, %v2188
        %v2194 = vrcp.pop %v1787
        %v2195 = vmul.f32 %v1787, %v2194
        %v2196 = vsub.f32 1.0, %v2195
        %v2197 = vmul.f32 %v2194, %v2196
        %v2198 = vadd.f32 %v2194, %v2197
        %vm2199 = vweird.f32 %v1787
        %vm2200 = vweird.f32 %v2194
        %vm2201 = vmor %vm2199, %vm2200
        %v2202 = vsel %vm2201, %v2194, %v2198
        %v2203 = vand.u32 2147483647, %v1787
        %vm2204 = vcmp.eq.f32.partialorder %v2203, 8.507059e+37
        %v2205 = vand.u32 %v1787, 2147483648
        %v2206 = vor.u32 1.1754944e-38, %v2205
        %v2207 = vsel %vm2204, %v2206, %v2202
        %v2208 = vrcp.pop %v1790
        %v2209 = vmul.f32 %v1790, %v2208
        %v2210 = vsub.f32 1.0, %v2209
        %v2211 = vmul.f32 %v2208, %v2210
        %v2212 = vadd.f32 %v2208, %v2211
        %vm2213 = vweird.f32 %v1790
        %vm2214 = vweird.f32 %v2208
        %vm2215 = vmor %vm2213, %vm2214
        %v2216 = vsel %vm2215, %v2208, %v2212
        %v2217 = vand.u32 2147483647, %v1790
        %vm2218 = vcmp.eq.f32.partialorder %v2217, 8.507059e+37
        %v2219 = vand.u32 %v1790, 2147483648
        %v2220 = vor.u32 1.1754944e-38, %v2219
        %v2221 = vsel %vm2218, %v2220, %v2216
        %v2222 = vrcp.pop %v1793
        %v2223 = vmul.f32 %v1793, %v2222
        %v2224 = vsub.f32 1.0, %v2223
        %v2225 = vmul.f32 %v2222, %v2224
        %v2226 = vadd.f32 %v2222, %v2225
        %vm2227 = vweird.f32 %v1793
        %vm2228 = vweird.f32 %v2222
        %vm2229 = vmor %vm2227, %vm2228
        %v2230 = vsel %vm2229, %v2222, %v2226
        %v2231 = vand.u32 2147483647, %v1793
        %vm2232 = vcmp.eq.f32.partialorder %v2231, 8.507059e+37
        %v2233 = vand.u32 %v1793, 2147483648
        %v2234 = vor.u32 1.1754944e-38, %v2233
        %v2235 = vsel %vm2232, %v2234, %v2230
        %v2236 = vrcp.pop %v1796
        %v2237 = vmul.f32 %v1796, %v2236
        %v2238 = vsub.f32 1.0, %v2237
        %v2239 = vmul.f32 %v2236, %v2238
        %v2240 = vadd.f32 %v2236, %v2239
        %vm2241 = vweird.f32 %v1796
        %vm2242 = vweird.f32 %v2236
        %vm2243 = vmor %vm2241, %vm2242
        %v2244 = vsel %vm2243, %v2236, %v2240
        %v2245 = vand.u32 2147483647, %v1796
        %vm2246 = vcmp.eq.f32.partialorder %v2245, 8.507059e+37
        %v2247 = vand.u32 %v1796, 2147483648
        %v2248 = vor.u32 1.1754944e-38, %v2247
        %v2249 = vsel %vm2246, %v2248, %v2244
        %v2250 = vrcp.pop %v1799
        %v2251 = vmul.f32 %v1799, %v2250
        %v2252 = vsub.f32 1.0, %v2251
        %v2253 = vmul.f32 %v2250, %v2252
        %v2254 = vadd.f32 %v2250, %v2253
        %vm2255 = vweird.f32 %v1799
        %vm2256 = vweird.f32 %v2250
        %vm2257 = vmor %vm2255, %vm2256
        %v2258 = vsel %vm2257, %v2250, %v2254
        %v2259 = vand.u32 2147483647, %v1799
        %vm2260 = vcmp.eq.f32.partialorder %v2259, 8.507059e+37
        %v2261 = vand.u32 %v1799, 2147483648
        %v2262 = vor.u32 1.1754944e-38, %v2261
        %v2263 = vsel %vm2260, %v2262, %v2258
        %v2264 = vmul.f32 %v1840, %v2053
        %v2265 = vmul.f32 %v1842, %v2067
        %v2266 = vmul.f32 %v1868, %v2081
        %v2267 = vmul.f32 %v1870, %v2095
        %v2268 = vmul.f32 %v1896, %v2109
        %v2269 = vmul.f32 %v1898, %v2123
        %v2270 = vmul.f32 %v1924, %v2137
        %v2271 = vmul.f32 %v1926, %v2151
        %v2272 = vmul.f32 %v1952, %v2165
        %v2273 = vmul.f32 %v1954, %v2179
        %v2274 = vmul.f32 %v1980, %v2193
        %v2275 = vmul.f32 %v1982, %v2207
        %v2276 = vmul.f32 %v2008, %v2221
        %v2277 = vmul.f32 %v2010, %v2235
        %v2278 = vmul.f32 %v2036, %v2249
        %v2279 = vmul.f32 %v2038, %v2263
        %v2280 = vadd.f32 %v2264, 0.0
        %v2281 = vadd.f32 %v2265, 0.0
        %v2282 = vadd.f32 %v2266, 0.0
        %v2283 = vadd.f32 %v2267, 0.0
        %v2284 = vadd.f32 %v2268, 0.0
        %v2285 = vadd.f32 %v2269, 0.0
        %v2286 = vadd.f32 %v2270, 0.0
        %v2287 = vadd.f32 %v2271, 0.0
        %v2288 = vadd.f32 %v2272, 0.0
        %v2289 = vadd.f32 %v2273, 0.0
        %v2290 = vadd.f32 %v2274, 0.0
        %v2291 = vadd.f32 %v2275, 0.0
        %v2292 = vadd.f32 %v2276, 0.0
        %v2293 = vadd.f32 %v2277, 0.0
        %v2294 = vadd.f32 %v2278, 0.0
        %v2295 = vadd.f32 %v2279, 0.0
        %s2296 = scalar_lea.vmem [#allocation8], 8
        %v2297 = vld [vmem:[%s2296] sm:$0xf]
        %v2298 = vld [vmem:[%s2296 + $0x4] sm:$0xf]
        %v2299 = vunpack.c.l.bf16 %v2297
        %v2300 = vunpack.c.l.bf16 %v2298
        %2301 = vrot.lane.b32.xlu0 %v1418, 96
        %v2302 = vpop.permute.xlu0 %2301
        %2303 = vrot.lane.b32.xlu0 %v1423, 96
        %v2304 = vpop.permute.xlu0 %2303
        %v2306 = vsel %vm1424, %v2302, 0
        %v2309 = vsel %vm1424, %v2304, 0
        %2311 = vmatpush.bf16.xpose.msra.mxu0 0
        %2312 = vmatpush.bf16.xpose.msra.mxu0 0
        %2313 = vmatpush.bf16.xpose.msra.mxu0 0
        %2314 = vmatpush.bf16.xpose.msra.mxu0 0
        %2315 = vmatpush.bf16.xpose.msra.mxu0 0
        %2316 = vmatpush.bf16.xpose.msra.mxu0 0
        %2317 = vmatpush.bf16.xpose.msra.mxu0 0
        %2318 = vmatpush.bf16.xpose.msra.mxu0 %v2309
        %2319 = vmatmul.bf16.gmra.mxu0 %v2306
        %v2320 = vpop.f32.mrf.mxu0
        %v2321 = vadd.f32 %v2299, %v2320
        %v2322 = vpop.f32.mrf.mxu0
        %v2323 = vadd.f32 %v2300, %v2322
        %2324 = vdwg.mxu0
        %2325 = vrot.lane.b32.xlu0 %v1449, 96
        %v2326 = vpop.permute.xlu0 %2325
        %2327 = vrot.lane.b32.xlu0 %v1454, 96
        %v2328 = vpop.permute.xlu0 %2327
        %v2330 = vsel %vm1424, %v2326, 0
        %v2333 = vsel %vm1424, %v2328, 0
        %2335 = vmatpush.bf16.xpose.msra.mxu0 0
        %2336 = vmatpush.bf16.xpose.msra.mxu0 0
        %2337 = vmatpush.bf16.xpose.msra.mxu0 0
        %2338 = vmatpush.bf16.xpose.msra.mxu0 0
        %2339 = vmatpush.bf16.xpose.msra.mxu0 0
        %2340 = vmatpush.bf16.xpose.msra.mxu0 0
        %2341 = vmatpush.bf16.xpose.msra.mxu0 0
        %2342 = vmatpush.bf16.xpose.msra.mxu0 %v2333
        %2343 = vmatmul.bf16.gmra.mxu0 %v2330
        %v2344 = vpop.f32.mrf.mxu0
        %v2345 = vadd.f32 %v2299, %v2344
        %v2346 = vpop.f32.mrf.mxu0
        %v2347 = vadd.f32 %v2300, %v2346
        %2348 = vdwg.mxu0
        %2349 = vrot.lane.b32.xlu0 %v1479, 96
        %v2350 = vpop.permute.xlu0 %2349
        %2351 = vrot.lane.b32.xlu0 %v1484, 96
        %v2352 = vpop.permute.xlu0 %2351
        %v2354 = vsel %vm1424, %v2350, 0
        %v2357 = vsel %vm1424, %v2352, 0
        %2359 = vmatpush.bf16.xpose.msra.mxu0 0
        %2360 = vmatpush.bf16.xpose.msra.mxu0 0
        %2361 = vmatpush.bf16.xpose.msra.mxu0 0
        %2362 = vmatpush.bf16.xpose.msra.mxu0 0
        %2363 = vmatpush.bf16.xpose.msra.mxu0 0
        %2364 = vmatpush.bf16.xpose.msra.mxu0 0
        %2365 = vmatpush.bf16.xpose.msra.mxu0 0
        %2366 = vmatpush.bf16.xpose.msra.mxu0 %v2357
        %2367 = vmatmul.bf16.gmra.mxu0 %v2354
        %v2368 = vpop.f32.mrf.mxu0
        %v2369 = vadd.f32 %v2299, %v2368
        %v2370 = vpop.f32.mrf.mxu0
        %v2371 = vadd.f32 %v2300, %v2370
        %2372 = vdwg.mxu0
        %2373 = vrot.lane.b32.xlu0 %v1509, 96
        %v2374 = vpop.permute.xlu0 %2373
        %2375 = vrot.lane.b32.xlu0 %v1514, 96
        %v2376 = vpop.permute.xlu0 %2375
        %v2378 = vsel %vm1424, %v2374, 0
        %v2381 = vsel %vm1424, %v2376, 0
        %2383 = vmatpush.bf16.xpose.msra.mxu0 0
        %2384 = vmatpush.bf16.xpose.msra.mxu0 0
        %2385 = vmatpush.bf16.xpose.msra.mxu0 0
        %2386 = vmatpush.bf16.xpose.msra.mxu0 0
        %2387 = vmatpush.bf16.xpose.msra.mxu0 0
        %2388 = vmatpush.bf16.xpose.msra.mxu0 0
        %2389 = vmatpush.bf16.xpose.msra.mxu0 0
        %2390 = vmatpush.bf16.xpose.msra.mxu0 %v2381
        %2391 = vmatmul.bf16.gmra.mxu0 %v2378
        %v2392 = vpop.f32.mrf.mxu0
        %v2393 = vadd.f32 %v2299, %v2392
        %v2394 = vpop.f32.mrf.mxu0
        %v2395 = vadd.f32 %v2300, %v2394
        %2396 = vdwg.mxu0
        %2397 = vrot.lane.b32.xlu0 %v1539, 96
        %v2398 = vpop.permute.xlu0 %2397
        %2399 = vrot.lane.b32.xlu0 %v1544, 96
        %v2400 = vpop.permute.xlu0 %2399
        %v2402 = vsel %vm1424, %v2398, 0
        %v2405 = vsel %vm1424, %v2400, 0
        %2407 = vmatpush.bf16.xpose.msra.mxu0 0
        %2408 = vmatpush.bf16.xpose.msra.mxu0 0
        %2409 = vmatpush.bf16.xpose.msra.mxu0 0
        %2410 = vmatpush.bf16.xpose.msra.mxu0 0
        %2411 = vmatpush.bf16.xpose.msra.mxu0 0
        %2412 = vmatpush.bf16.xpose.msra.mxu0 0
        %2413 = vmatpush.bf16.xpose.msra.mxu0 0
        %2414 = vmatpush.bf16.xpose.msra.mxu0 %v2405
        %2415 = vmatmul.bf16.gmra.mxu0 %v2402
        %v2416 = vpop.f32.mrf.mxu0
        %v2417 = vadd.f32 %v2299, %v2416
        %v2418 = vpop.f32.mrf.mxu0
        %v2419 = vadd.f32 %v2300, %v2418
        %2420 = vdwg.mxu0
        %2421 = vrot.lane.b32.xlu0 %v1569, 96
        %v2422 = vpop.permute.xlu0 %2421
        %2423 = vrot.lane.b32.xlu0 %v1574, 96
        %v2424 = vpop.permute.xlu0 %2423
        %v2426 = vsel %vm1424, %v2422, 0
        %v2429 = vsel %vm1424, %v2424, 0
        %2431 = vmatpush.bf16.xpose.msra.mxu0 0
        %2432 = vmatpush.bf16.xpose.msra.mxu0 0
        %2433 = vmatpush.bf16.xpose.msra.mxu0 0
        %2434 = vmatpush.bf16.xpose.msra.mxu0 0
        %2435 = vmatpush.bf16.xpose.msra.mxu0 0
        %2436 = vmatpush.bf16.xpose.msra.mxu0 0
        %2437 = vmatpush.bf16.xpose.msra.mxu0 0
        %2438 = vmatpush.bf16.xpose.msra.mxu0 %v2429
        %2439 = vmatmul.bf16.gmra.mxu0 %v2426
        %v2440 = vpop.f32.mrf.mxu0
        %v2441 = vadd.f32 %v2299, %v2440
        %v2442 = vpop.f32.mrf.mxu0
        %v2443 = vadd.f32 %v2300, %v2442
        %2444 = vdwg.mxu0
        %2445 = vrot.lane.b32.xlu0 %v1599, 96
        %v2446 = vpop.permute.xlu0 %2445
        %2447 = vrot.lane.b32.xlu0 %v1604, 96
        %v2448 = vpop.permute.xlu0 %2447
        %v2450 = vsel %vm1424, %v2446, 0
        %v2453 = vsel %vm1424, %v2448, 0
        %2455 = vmatpush.bf16.xpose.msra.mxu0 0
        %2456 = vmatpush.bf16.xpose.msra.mxu0 0
        %2457 = vmatpush.bf16.xpose.msra.mxu0 0
        %2458 = vmatpush.bf16.xpose.msra.mxu0 0
        %2459 = vmatpush.bf16.xpose.msra.mxu0 0
        %2460 = vmatpush.bf16.xpose.msra.mxu0 0
        %2461 = vmatpush.bf16.xpose.msra.mxu0 0
        %2462 = vmatpush.bf16.xpose.msra.mxu0 %v2453
        %2463 = vmatmul.bf16.gmra.mxu0 %v2450
        %v2464 = vpop.f32.mrf.mxu0
        %v2465 = vadd.f32 %v2299, %v2464
        %v2466 = vpop.f32.mrf.mxu0
        %v2467 = vadd.f32 %v2300, %v2466
        %2468 = vdwg.mxu0
        %2469 = vrot.lane.b32.xlu0 %v1629, 96
        %v2470 = vpop.permute.xlu0 %2469
        %2471 = vrot.lane.b32.xlu0 %v1634, 96
        %v2472 = vpop.permute.xlu0 %2471
        %v2474 = vsel %vm1424, %v2470, 0
        %v2477 = vsel %vm1424, %v2472, 0
        %2479 = vmatpush.bf16.xpose.msra.mxu0 0
        %2480 = vmatpush.bf16.xpose.msra.mxu0 0
        %2481 = vmatpush.bf16.xpose.msra.mxu0 0
        %2482 = vmatpush.bf16.xpose.msra.mxu0 0
        %2483 = vmatpush.bf16.xpose.msra.mxu0 0
        %2484 = vmatpush.bf16.xpose.msra.mxu0 0
        %2485 = vmatpush.bf16.xpose.msra.mxu0 0
        %2486 = vmatpush.bf16.xpose.msra.mxu0 %v2477
        %2487 = vmatmul.bf16.gmra.mxu0 %v2474
        %v2488 = vpop.f32.mrf.mxu0
        %v2489 = vadd.f32 %v2299, %v2488
        %v2490 = vpop.f32.mrf.mxu0
        %v2491 = vadd.f32 %v2300, %v2490
        %2492 = vdwg.mxu0
        %v2493 = vsel %vm1655, %v2321, -inf
        %2494 = vmax.xlane.f32.xlu0 %v2493
        %v2495 = vpop.xlane.xlu0 %2494
        %v2496 = vsel %vm1655, %v2323, -inf
        %2497 = vmax.xlane.f32.xlu0 %v2496
        %v2498 = vpop.xlane.xlu0 %2497
        %v2499 = vsel %vm1655, %v2345, -inf
        %2500 = vmax.xlane.f32.xlu0 %v2499
        %v2501 = vpop.xlane.xlu0 %2500
        %v2502 = vsel %vm1655, %v2347, -inf
        %2503 = vmax.xlane.f32.xlu0 %v2502
        %v2504 = vpop.xlane.xlu0 %2503
        %v2505 = vsel %vm1655, %v2369, -inf
        %2506 = vmax.xlane.f32.xlu0 %v2505
        %v2507 = vpop.xlane.xlu0 %2506
        %v2508 = vsel %vm1655, %v2371, -inf
        %2509 = vmax.xlane.f32.xlu0 %v2508
        %v2510 = vpop.xlane.xlu0 %2509
        %v2511 = vsel %vm1655, %v2393, -inf
        %2512 = vmax.xlane.f32.xlu0 %v2511
        %v2513 = vpop.xlane.xlu0 %2512
        %v2514 = vsel %vm1655, %v2395, -inf
        %2515 = vmax.xlane.f32.xlu0 %v2514
        %v2516 = vpop.xlane.xlu0 %2515
        %v2517 = vsel %vm1655, %v2417, -inf
        %2518 = vmax.xlane.f32.xlu0 %v2517
        %v2519 = vpop.xlane.xlu0 %2518
        %v2520 = vsel %vm1655, %v2419, -inf
        %2521 = vmax.xlane.f32.xlu0 %v2520
        %v2522 = vpop.xlane.xlu0 %2521
        %v2523 = vsel %vm1655, %v2441, -inf
        %2524 = vmax.xlane.f32.xlu0 %v2523
        %v2525 = vpop.xlane.xlu0 %2524
        %v2526 = vsel %vm1655, %v2443, -inf
        %2527 = vmax.xlane.f32.xlu0 %v2526
        %v2528 = vpop.xlane.xlu0 %2527
        %v2529 = vsel %vm1655, %v2465, -inf
        %2530 = vmax.xlane.f32.xlu0 %v2529
        %v2531 = vpop.xlane.xlu0 %2530
        %v2532 = vsel %vm1655, %v2467, -inf
        %2533 = vmax.xlane.f32.xlu0 %v2532
        %v2534 = vpop.xlane.xlu0 %2533
        %v2535 = vsel %vm1655, %v2489, -inf
        %2536 = vmax.xlane.f32.xlu0 %v2535
        %v2537 = vpop.xlane.xlu0 %2536
        %v2538 = vsel %vm1655, %v2491, -inf
        %2539 = vmax.xlane.f32.xlu0 %v2538
        %v2540 = vpop.xlane.xlu0 %2539
        %v2541 = vsub.f32 %v2321, %v2495
        %v2542 = vsub.f32 %v2323, %v2498
        %v2543 = vsub.f32 %v2345, %v2501
        %v2544 = vsub.f32 %v2347, %v2504
        %v2545 = vsub.f32 %v2369, %v2507
        %v2546 = vsub.f32 %v2371, %v2510
        %v2547 = vsub.f32 %v2393, %v2513
        %v2548 = vsub.f32 %v2395, %v2516
        %v2549 = vsub.f32 %v2417, %v2519
        %v2550 = vsub.f32 %v2419, %v2522
        %v2551 = vsub.f32 %v2441, %v2525
        %v2552 = vsub.f32 %v2443, %v2528
        %v2553 = vsub.f32 %v2465, %v2531
        %v2554 = vsub.f32 %v2467, %v2534
        %v2555 = vsub.f32 %v2489, %v2537
        %v2556 = vsub.f32 %v2491, %v2540
        %v2557 = vmul.f32 %v2541, 1.442695
        %v2558 = vpow.pop %v2557
        %v2559 = vmul.f32 %v2542, 1.442695
        %v2560 = vpow.pop %v2559
        %v2561 = vmul.f32 %v2543, 1.442695
        %v2562 = vpow.pop %v2561
        %v2563 = vmul.f32 %v2544, 1.442695
        %v2564 = vpow.pop %v2563
        %v2565 = vmul.f32 %v2545, 1.442695
        %v2566 = vpow.pop %v2565
        %v2567 = vmul.f32 %v2546, 1.442695
        %v2568 = vpow.pop %v2567
        %v2569 = vmul.f32 %v2547, 1.442695
        %v2570 = vpow.pop %v2569
        %v2571 = vmul.f32 %v2548, 1.442695
        %v2572 = vpow.pop %v2571
        %v2573 = vmul.f32 %v2549, 1.442695
        %v2574 = vpow.pop %v2573
        %v2575 = vmul.f32 %v2550, 1.442695
        %v2576 = vpow.pop %v2575
        %v2577 = vmul.f32 %v2551, 1.442695
        %v2578 = vpow.pop %v2577
        %v2579 = vmul.f32 %v2552, 1.442695
        %v2580 = vpow.pop %v2579
        %v2581 = vmul.f32 %v2553, 1.442695
        %v2582 = vpow.pop %v2581
        %v2583 = vmul.f32 %v2554, 1.442695
        %v2584 = vpow.pop %v2583
        %v2585 = vmul.f32 %v2555, 1.442695
        %v2586 = vpow.pop %v2585
        %v2587 = vmul.f32 %v2556, 1.442695
        %v2588 = vpow.pop %v2587
        %v2589 = vsel %vm1655, %v2558, 0.0
        %2590 = vadd.xlane.f32.xlu0 %v2589
        %v2591 = vpop.xlane.xlu0 %2590
        %v2592 = vsel %vm1655, %v2560, 0.0
        %2593 = vadd.xlane.f32.xlu0 %v2592
        %v2594 = vpop.xlane.xlu0 %2593
        %v2595 = vsel %vm1655, %v2562, 0.0
        %2596 = vadd.xlane.f32.xlu0 %v2595
        %v2597 = vpop.xlane.xlu0 %2596
        %v2598 = vsel %vm1655, %v2564, 0.0
        %2599 = vadd.xlane.f32.xlu0 %v2598
        %v2600 = vpop.xlane.xlu0 %2599
        %v2601 = vsel %vm1655, %v2566, 0.0
        %2602 = vadd.xlane.f32.xlu0 %v2601
        %v2603 = vpop.xlane.xlu0 %2602
        %v2604 = vsel %vm1655, %v2568, 0.0
        %2605 = vadd.xlane.f32.xlu0 %v2604
        %v2606 = vpop.xlane.xlu0 %2605
        %v2607 = vsel %vm1655, %v2570, 0.0
        %2608 = vadd.xlane.f32.xlu0 %v2607
        %v2609 = vpop.xlane.xlu0 %2608
        %v2610 = vsel %vm1655, %v2572, 0.0
        %2611 = vadd.xlane.f32.xlu0 %v2610
        %v2612 = vpop.xlane.xlu0 %2611
        %v2613 = vsel %vm1655, %v2574, 0.0
        %2614 = vadd.xlane.f32.xlu0 %v2613
        %v2615 = vpop.xlane.xlu0 %2614
        %v2616 = vsel %vm1655, %v2576, 0.0
        %2617 = vadd.xlane.f32.xlu0 %v2616
        %v2618 = vpop.xlane.xlu0 %2617
        %v2619 = vsel %vm1655, %v2578, 0.0
        %2620 = vadd.xlane.f32.xlu0 %v2619
        %v2621 = vpop.xlane.xlu0 %2620
        %v2622 = vsel %vm1655, %v2580, 0.0
        %2623 = vadd.xlane.f32.xlu0 %v2622
        %v2624 = vpop.xlane.xlu0 %2623
        %v2625 = vsel %vm1655, %v2582, 0.0
        %2626 = vadd.xlane.f32.xlu0 %v2625
        %v2627 = vpop.xlane.xlu0 %2626
        %v2628 = vsel %vm1655, %v2584, 0.0
        %2629 = vadd.xlane.f32.xlu0 %v2628
        %v2630 = vpop.xlane.xlu0 %2629
        %v2631 = vsel %vm1655, %v2586, 0.0
        %2632 = vadd.xlane.f32.xlu0 %v2631
        %v2633 = vpop.xlane.xlu0 %2632
        %v2634 = vsel %vm1655, %v2588, 0.0
        %2635 = vadd.xlane.f32.xlu0 %v2634
        %v2636 = vpop.xlane.xlu0 %2635
        %v2637 = vpack.c.bf16 %v2558, %v2558
        %v2638 = vpack.c.bf16 %v2560, %v2560
        %v2639 = vpack.c.bf16 %v2562, %v2562
        %v2640 = vpack.c.bf16 %v2564, %v2564
        %v2641 = vpack.c.bf16 %v2566, %v2566
        %v2642 = vpack.c.bf16 %v2568, %v2568
        %v2643 = vpack.c.bf16 %v2570, %v2570
        %v2644 = vpack.c.bf16 %v2572, %v2572
        %v2645 = vpack.c.bf16 %v2574, %v2574
        %v2646 = vpack.c.bf16 %v2576, %v2576
        %v2647 = vpack.c.bf16 %v2578, %v2578
        %v2648 = vpack.c.bf16 %v2580, %v2580
        %v2649 = vpack.c.bf16 %v2582, %v2582
        %v2650 = vpack.c.bf16 %v2584, %v2584
        %v2651 = vpack.c.bf16 %v2586, %v2586
        %v2652 = vpack.c.bf16 %v2588, %v2588
        %v2653 = vrot.slane %v1378, 4
        %v2654 = vrot.slane %v1380, 4
        %v2657 = vunpack.c.l.b16 %v2637
        %v2658 = vunpack.c.l.b16 %v2638
        %v2659 = vpack.c.b16 %v2658, %v2657
        %v2660 = vunpack.c.l.b16 %v2653
        %v2661 = vunpack.c.l.b16 %v2654
        %v2662 = vpack.c.b16 %v2661, %v2660
        %v2665 = vsel %vm1655, %v2659, 0
        %2667 = vmatpush.bf16.msra.mxu0 0
        %2668 = vmatpush.bf16.msra.mxu0 0
        %2669 = vmatpush.bf16.msra.mxu0 0
        %2670 = vmatpush.bf16.msra.mxu0 0
        %2671 = vmatpush.bf16.msra.mxu0 0
        %2672 = vmatpush.bf16.msra.mxu0 0
        %2673 = vmatpush.bf16.msra.mxu0 0
        %2674 = vmatpush.bf16.msra.mxu0 %v2662
        %2675 = vmatmul.bf16.gmra.mxu0 %v2665
        %v2676 = vpop.f32.mrf.mxu0
        %v2677 = vadd.f32 0.0, %v2676
        %v2678 = vpop.f32.mrf.mxu0
        %v2679 = vadd.f32 0.0, %v2678
        %2680 = vdwg.mxu0
        %v2681 = vrot.slane %v1382, 4
        %v2682 = vrot.slane %v1384, 4
        %v2685 = vunpack.c.l.b16 %v2639
        %v2686 = vunpack.c.l.b16 %v2640
        %v2687 = vpack.c.b16 %v2686, %v2685
        %v2688 = vunpack.c.l.b16 %v2681
        %v2689 = vunpack.c.l.b16 %v2682
        %v2690 = vpack.c.b16 %v2689, %v2688
        %v2693 = vsel %vm1655, %v2687, 0
        %2695 = vmatpush.bf16.msra.mxu0 0
        %2696 = vmatpush.bf16.msra.mxu0 0
        %2697 = vmatpush.bf16.msra.mxu0 0
        %2698 = vmatpush.bf16.msra.mxu0 0
        %2699 = vmatpush.bf16.msra.mxu0 0
        %2700 = vmatpush.bf16.msra.mxu0 0
        %2701 = vmatpush.bf16.msra.mxu0 0
        %2702 = vmatpush.bf16.msra.mxu0 %v2690
        %2703 = vmatmul.bf16.gmra.mxu0 %v2693
        %v2704 = vpop.f32.mrf.mxu0
        %v2705 = vadd.f32 0.0, %v2704
        %v2706 = vpop.f32.mrf.mxu0
        %v2707 = vadd.f32 0.0, %v2706
        %2708 = vdwg.mxu0
        %v2709 = vrot.slane %v1386, 4
        %v2710 = vrot.slane %v1388, 4
        %v2713 = vunpack.c.l.b16 %v2641
        %v2714 = vunpack.c.l.b16 %v2642
        %v2715 = vpack.c.b16 %v2714, %v2713
        %v2716 = vunpack.c.l.b16 %v2709
        %v2717 = vunpack.c.l.b16 %v2710
        %v2718 = vpack.c.b16 %v2717, %v2716
        %v2721 = vsel %vm1655, %v2715, 0
        %2723 = vmatpush.bf16.msra.mxu0 0
        %2724 = vmatpush.bf16.msra.mxu0 0
        %2725 = vmatpush.bf16.msra.mxu0 0
        %2726 = vmatpush.bf16.msra.mxu0 0
        %2727 = vmatpush.bf16.msra.mxu0 0
        %2728 = vmatpush.bf16.msra.mxu0 0
        %2729 = vmatpush.bf16.msra.mxu0 0
        %2730 = vmatpush.bf16.msra.mxu0 %v2718
        %2731 = vmatmul.bf16.gmra.mxu0 %v2721
        %v2732 = vpop.f32.mrf.mxu0
        %v2733 = vadd.f32 0.0, %v2732
        %v2734 = vpop.f32.mrf.mxu0
        %v2735 = vadd.f32 0.0, %v2734
        %2736 = vdwg.mxu0
        %v2737 = vrot.slane %v1390, 4
        %v2738 = vrot.slane %v1392, 4
        %v2741 = vunpack.c.l.b16 %v2643
        %v2742 = vunpack.c.l.b16 %v2644
        %v2743 = vpack.c.b16 %v2742, %v2741
        %v2744 = vunpack.c.l.b16 %v2737
        %v2745 = vunpack.c.l.b16 %v2738
        %v2746 = vpack.c.b16 %v2745, %v2744
        %v2749 = vsel %vm1655, %v2743, 0
        %2751 = vmatpush.bf16.msra.mxu0 0
        %2752 = vmatpush.bf16.msra.mxu0 0
        %2753 = vmatpush.bf16.msra.mxu0 0
        %2754 = vmatpush.bf16.msra.mxu0 0
        %2755 = vmatpush.bf16.msra.mxu0 0
        %2756 = vmatpush.bf16.msra.mxu0 0
        %2757 = vmatpush.bf16.msra.mxu0 0
        %2758 = vmatpush.bf16.msra.mxu0 %v2746
        %2759 = vmatmul.bf16.gmra.mxu0 %v2749
        %v2760 = vpop.f32.mrf.mxu0
        %v2761 = vadd.f32 0.0, %v2760
        %v2762 = vpop.f32.mrf.mxu0
        %v2763 = vadd.f32 0.0, %v2762
        %2764 = vdwg.mxu0
        %v2765 = vrot.slane %v1394, 4
        %v2766 = vrot.slane %v1396, 4
        %v2769 = vunpack.c.l.b16 %v2645
        %v2770 = vunpack.c.l.b16 %v2646
        %v2771 = vpack.c.b16 %v2770, %v2769
        %v2772 = vunpack.c.l.b16 %v2765
        %v2773 = vunpack.c.l.b16 %v2766
        %v2774 = vpack.c.b16 %v2773, %v2772
        %v2777 = vsel %vm1655, %v2771, 0
        %2779 = vmatpush.bf16.msra.mxu0 0
        %2780 = vmatpush.bf16.msra.mxu0 0
        %2781 = vmatpush.bf16.msra.mxu0 0
        %2782 = vmatpush.bf16.msra.mxu0 0
        %2783 = vmatpush.bf16.msra.mxu0 0
        %2784 = vmatpush.bf16.msra.mxu0 0
        %2785 = vmatpush.bf16.msra.mxu0 0
        %2786 = vmatpush.bf16.msra.mxu0 %v2774
        %2787 = vmatmul.bf16.gmra.mxu0 %v2777
        %v2788 = vpop.f32.mrf.mxu0
        %v2789 = vadd.f32 0.0, %v2788
        %v2790 = vpop.f32.mrf.mxu0
        %v2791 = vadd.f32 0.0, %v2790
        %2792 = vdwg.mxu0
        %v2793 = vrot.slane %v1398, 4
        %v2794 = vrot.slane %v1400, 4
        %v2797 = vunpack.c.l.b16 %v2647
        %v2798 = vunpack.c.l.b16 %v2648
        %v2799 = vpack.c.b16 %v2798, %v2797
        %v2800 = vunpack.c.l.b16 %v2793
        %v2801 = vunpack.c.l.b16 %v2794
        %v2802 = vpack.c.b16 %v2801, %v2800
        %v2805 = vsel %vm1655, %v2799, 0
        %2807 = vmatpush.bf16.msra.mxu0 0
        %2808 = vmatpush.bf16.msra.mxu0 0
        %2809 = vmatpush.bf16.msra.mxu0 0
        %2810 = vmatpush.bf16.msra.mxu0 0
        %2811 = vmatpush.bf16.msra.mxu0 0
        %2812 = vmatpush.bf16.msra.mxu0 0
        %2813 = vmatpush.bf16.msra.mxu0 0
        %2814 = vmatpush.bf16.msra.mxu0 %v2802
        %2815 = vmatmul.bf16.gmra.mxu0 %v2805
        %v2816 = vpop.f32.mrf.mxu0
        %v2817 = vadd.f32 0.0, %v2816
        %v2818 = vpop.f32.mrf.mxu0
        %v2819 = vadd.f32 0.0, %v2818
        %2820 = vdwg.mxu0
        %v2821 = vrot.slane %v1402, 4
        %v2822 = vrot.slane %v1404, 4
        %v2825 = vunpack.c.l.b16 %v2649
        %v2826 = vunpack.c.l.b16 %v2650
        %v2827 = vpack.c.b16 %v2826, %v2825
        %v2828 = vunpack.c.l.b16 %v2821
        %v2829 = vunpack.c.l.b16 %v2822
        %v2830 = vpack.c.b16 %v2829, %v2828
        %v2833 = vsel %vm1655, %v2827, 0
        %2835 = vmatpush.bf16.msra.mxu0 0
        %2836 = vmatpush.bf16.msra.mxu0 0
        %2837 = vmatpush.bf16.msra.mxu0 0
        %2838 = vmatpush.bf16.msra.mxu0 0
        %2839 = vmatpush.bf16.msra.mxu0 0
        %2840 = vmatpush.bf16.msra.mxu0 0
        %2841 = vmatpush.bf16.msra.mxu0 0
        %2842 = vmatpush.bf16.msra.mxu0 %v2830
        %2843 = vmatmul.bf16.gmra.mxu0 %v2833
        %v2844 = vpop.f32.mrf.mxu0
        %v2845 = vadd.f32 0.0, %v2844
        %v2846 = vpop.f32.mrf.mxu0
        %v2847 = vadd.f32 0.0, %v2846
        %2848 = vdwg.mxu0
        %v2849 = vrot.slane %v1406, 4
        %v2850 = vrot.slane %v1408, 4
        %v2853 = vunpack.c.l.b16 %v2651
        %v2854 = vunpack.c.l.b16 %v2652
        %v2855 = vpack.c.b16 %v2854, %v2853
        %v2856 = vunpack.c.l.b16 %v2849
        %v2857 = vunpack.c.l.b16 %v2850
        %v2858 = vpack.c.b16 %v2857, %v2856
        %v2861 = vsel %vm1655, %v2855, 0
        %2863 = vmatpush.bf16.msra.mxu0 0
        %2864 = vmatpush.bf16.msra.mxu0 0
        %2865 = vmatpush.bf16.msra.mxu0 0
        %2866 = vmatpush.bf16.msra.mxu0 0
        %2867 = vmatpush.bf16.msra.mxu0 0
        %2868 = vmatpush.bf16.msra.mxu0 0
        %2869 = vmatpush.bf16.msra.mxu0 0
        %2870 = vmatpush.bf16.msra.mxu0 %v2858
        %2871 = vmatmul.bf16.gmra.mxu0 %v2861
        %v2872 = vpop.f32.mrf.mxu0
        %v2873 = vadd.f32 0.0, %v2872
        %v2874 = vpop.f32.mrf.mxu0
        %v2875 = vadd.f32 0.0, %v2874
        %2876 = vdwg.mxu0
        %v2877 = vrcp.pop %v2591
        %v2878 = vmul.f32 %v2591, %v2877
        %v2879 = vsub.f32 1.0, %v2878
        %v2880 = vmul.f32 %v2877, %v2879
        %v2881 = vadd.f32 %v2877, %v2880
        %vm2882 = vweird.f32 %v2591
        %vm2883 = vweird.f32 %v2877
        %vm2884 = vmor %vm2882, %vm2883
        %v2885 = vsel %vm2884, %v2877, %v2881
        %v2886 = vand.u32 2147483647, %v2591
        %vm2887 = vcmp.eq.f32.partialorder %v2886, 8.507059e+37
        %v2888 = vand.u32 %v2591, 2147483648
        %v2889 = vor.u32 1.1754944e-38, %v2888
        %v2890 = vsel %vm2887, %v2889, %v2885
        %v2891 = vrcp.pop %v2594
        %v2892 = vmul.f32 %v2594, %v2891
        %v2893 = vsub.f32 1.0, %v2892
        %v2894 = vmul.f32 %v2891, %v2893
        %v2895 = vadd.f32 %v2891, %v2894
        %vm2896 = vweird.f32 %v2594
        %vm2897 = vweird.f32 %v2891
        %vm2898 = vmor %vm2896, %vm2897
        %v2899 = vsel %vm2898, %v2891, %v2895
        %v2900 = vand.u32 2147483647, %v2594
        %vm2901 = vcmp.eq.f32.partialorder %v2900, 8.507059e+37
        %v2902 = vand.u32 %v2594, 2147483648
        %v2903 = vor.u32 1.1754944e-38, %v2902
        %v2904 = vsel %vm2901, %v2903, %v2899
        %v2905 = vrcp.pop %v2597
        %v2906 = vmul.f32 %v2597, %v2905
        %v2907 = vsub.f32 1.0, %v2906
        %v2908 = vmul.f32 %v2905, %v2907
        %v2909 = vadd.f32 %v2905, %v2908
        %vm2910 = vweird.f32 %v2597
        %vm2911 = vweird.f32 %v2905
        %vm2912 = vmor %vm2910, %vm2911
        %v2913 = vsel %vm2912, %v2905, %v2909
        %v2914 = vand.u32 2147483647, %v2597
        %vm2915 = vcmp.eq.f32.partialorder %v2914, 8.507059e+37
        %v2916 = vand.u32 %v2597, 2147483648
        %v2917 = vor.u32 1.1754944e-38, %v2916
        %v2918 = vsel %vm2915, %v2917, %v2913
        %v2919 = vrcp.pop %v2600
        %v2920 = vmul.f32 %v2600, %v2919
        %v2921 = vsub.f32 1.0, %v2920
        %v2922 = vmul.f32 %v2919, %v2921
        %v2923 = vadd.f32 %v2919, %v2922
        %vm2924 = vweird.f32 %v2600
        %vm2925 = vweird.f32 %v2919
        %vm2926 = vmor %vm2924, %vm2925
        %v2927 = vsel %vm2926, %v2919, %v2923
        %v2928 = vand.u32 2147483647, %v2600
        %vm2929 = vcmp.eq.f32.partialorder %v2928, 8.507059e+37
        %v2930 = vand.u32 %v2600, 2147483648
        %v2931 = vor.u32 1.1754944e-38, %v2930
        %v2932 = vsel %vm2929, %v2931, %v2927
        %v2933 = vrcp.pop %v2603
        %v2934 = vmul.f32 %v2603, %v2933
        %v2935 = vsub.f32 1.0, %v2934
        %v2936 = vmul.f32 %v2933, %v2935
        %v2937 = vadd.f32 %v2933, %v2936
        %vm2938 = vweird.f32 %v2603
        %vm2939 = vweird.f32 %v2933
        %vm2940 = vmor %vm2938, %vm2939
        %v2941 = vsel %vm2940, %v2933, %v2937
        %v2942 = vand.u32 2147483647, %v2603
        %vm2943 = vcmp.eq.f32.partialorder %v2942, 8.507059e+37
        %v2944 = vand.u32 %v2603, 2147483648
        %v2945 = vor.u32 1.1754944e-38, %v2944
        %v2946 = vsel %vm2943, %v2945, %v2941
        %v2947 = vrcp.pop %v2606
        %v2948 = vmul.f32 %v2606, %v2947
        %v2949 = vsub.f32 1.0, %v2948
        %v2950 = vmul.f32 %v2947, %v2949
        %v2951 = vadd.f32 %v2947, %v2950
        %vm2952 = vweird.f32 %v2606
        %vm2953 = vweird.f32 %v2947
        %vm2954 = vmor %vm2952, %vm2953
        %v2955 = vsel %vm2954, %v2947, %v2951
        %v2956 = vand.u32 2147483647, %v2606
        %vm2957 = vcmp.eq.f32.partialorder %v2956, 8.507059e+37
        %v2958 = vand.u32 %v2606, 2147483648
        %v2959 = vor.u32 1.1754944e-38, %v2958
        %v2960 = vsel %vm2957, %v2959, %v2955
        %v2961 = vrcp.pop %v2609
        %v2962 = vmul.f32 %v2609, %v2961
        %v2963 = vsub.f32 1.0, %v2962
        %v2964 = vmul.f32 %v2961, %v2963
        %v2965 = vadd.f32 %v2961, %v2964
        %vm2966 = vweird.f32 %v2609
        %vm2967 = vweird.f32 %v2961
        %vm2968 = vmor %vm2966, %vm2967
        %v2969 = vsel %vm2968, %v2961, %v2965
        %v2970 = vand.u32 2147483647, %v2609
        %vm2971 = vcmp.eq.f32.partialorder %v2970, 8.507059e+37
        %v2972 = vand.u32 %v2609, 2147483648
        %v2973 = vor.u32 1.1754944e-38, %v2972
        %v2974 = vsel %vm2971, %v2973, %v2969
        %v2975 = vrcp.pop %v2612
        %v2976 = vmul.f32 %v2612, %v2975
        %v2977 = vsub.f32 1.0, %v2976
        %v2978 = vmul.f32 %v2975, %v2977
        %v2979 = vadd.f32 %v2975, %v2978
        %vm2980 = vweird.f32 %v2612
        %vm2981 = vweird.f32 %v2975
        %vm2982 = vmor %vm2980, %vm2981
        %v2983 = vsel %vm2982, %v2975, %v2979
        %v2984 = vand.u32 2147483647, %v2612
        %vm2985 = vcmp.eq.f32.partialorder %v2984, 8.507059e+37
        %v2986 = vand.u32 %v2612, 2147483648
        %v2987 = vor.u32 1.1754944e-38, %v2986
        %v2988 = vsel %vm2985, %v2987, %v2983
        %v2989 = vrcp.pop %v2615
        %v2990 = vmul.f32 %v2615, %v2989
        %v2991 = vsub.f32 1.0, %v2990
        %v2992 = vmul.f32 %v2989, %v2991
        %v2993 = vadd.f32 %v2989, %v2992
        %vm2994 = vweird.f32 %v2615
        %vm2995 = vweird.f32 %v2989
        %vm2996 = vmor %vm2994, %vm2995
        %v2997 = vsel %vm2996, %v2989, %v2993
        %v2998 = vand.u32 2147483647, %v2615
        %vm2999 = vcmp.eq.f32.partialorder %v2998, 8.507059e+37
        %v3000 = vand.u32 %v2615, 2147483648
        %v3001 = vor.u32 1.1754944e-38, %v3000
        %v3002 = vsel %vm2999, %v3001, %v2997
        %v3003 = vrcp.pop %v2618
        %v3004 = vmul.f32 %v2618, %v3003
        %v3005 = vsub.f32 1.0, %v3004
        %v3006 = vmul.f32 %v3003, %v3005
        %v3007 = vadd.f32 %v3003, %v3006
        %vm3008 = vweird.f32 %v2618
        %vm3009 = vweird.f32 %v3003
        %vm3010 = vmor %vm3008, %vm3009
        %v3011 = vsel %vm3010, %v3003, %v3007
        %v3012 = vand.u32 2147483647, %v2618
        %vm3013 = vcmp.eq.f32.partialorder %v3012, 8.507059e+37
        %v3014 = vand.u32 %v2618, 2147483648
        %v3015 = vor.u32 1.1754944e-38, %v3014
        %v3016 = vsel %vm3013, %v3015, %v3011
        %v3017 = vrcp.pop %v2621
        %v3018 = vmul.f32 %v2621, %v3017
        %v3019 = vsub.f32 1.0, %v3018
        %v3020 = vmul.f32 %v3017, %v3019
        %v3021 = vadd.f32 %v3017, %v3020
        %vm3022 = vweird.f32 %v2621
        %vm3023 = vweird.f32 %v3017
        %vm3024 = vmor %vm3022, %vm3023
        %v3025 = vsel %vm3024, %v3017, %v3021
        %v3026 = vand.u32 2147483647, %v2621
        %vm3027 = vcmp.eq.f32.partialorder %v3026, 8.507059e+37
        %v3028 = vand.u32 %v2621, 2147483648
        %v3029 = vor.u32 1.1754944e-38, %v3028
        %v3030 = vsel %vm3027, %v3029, %v3025
        %v3031 = vrcp.pop %v2624
        %v3032 = vmul.f32 %v2624, %v3031
        %v3033 = vsub.f32 1.0, %v3032
        %v3034 = vmul.f32 %v3031, %v3033
        %v3035 = vadd.f32 %v3031, %v3034
        %vm3036 = vweird.f32 %v2624
        %vm3037 = vweird.f32 %v3031
        %vm3038 = vmor %vm3036, %vm3037
        %v3039 = vsel %vm3038, %v3031, %v3035
        %v3040 = vand.u32 2147483647, %v2624
        %vm3041 = vcmp.eq.f32.partialorder %v3040, 8.507059e+37
        %v3042 = vand.u32 %v2624, 2147483648
        %v3043 = vor.u32 1.1754944e-38, %v3042
        %v3044 = vsel %vm3041, %v3043, %v3039
        %v3045 = vrcp.pop %v2627
        %v3046 = vmul.f32 %v2627, %v3045
        %v3047 = vsub.f32 1.0, %v3046
        %v3048 = vmul.f32 %v3045, %v3047
        %v3049 = vadd.f32 %v3045, %v3048
        %vm3050 = vweird.f32 %v2627
        %vm3051 = vweird.f32 %v3045
        %vm3052 = vmor %vm3050, %vm3051
        %v3053 = vsel %vm3052, %v3045, %v3049
        %v3054 = vand.u32 2147483647, %v2627
        %vm3055 = vcmp.eq.f32.partialorder %v3054, 8.507059e+37
        %v3056 = vand.u32 %v2627, 2147483648
        %v3057 = vor.u32 1.1754944e-38, %v3056
        %v3058 = vsel %vm3055, %v3057, %v3053
        %v3059 = vrcp.pop %v2630
        %v3060 = vmul.f32 %v2630, %v3059
        %v3061 = vsub.f32 1.0, %v3060
        %v3062 = vmul.f32 %v3059, %v3061
        %v3063 = vadd.f32 %v3059, %v3062
        %vm3064 = vweird.f32 %v2630
        %vm3065 = vweird.f32 %v3059
        %vm3066 = vmor %vm3064, %vm3065
        %v3067 = vsel %vm3066, %v3059, %v3063
        %v3068 = vand.u32 2147483647, %v2630
        %vm3069 = vcmp.eq.f32.partialorder %v3068, 8.507059e+37
        %v3070 = vand.u32 %v2630, 2147483648
        %v3071 = vor.u32 1.1754944e-38, %v3070
        %v3072 = vsel %vm3069, %v3071, %v3067
        %v3073 = vrcp.pop %v2633
        %v3074 = vmul.f32 %v2633, %v3073
        %v3075 = vsub.f32 1.0, %v3074
        %v3076 = vmul.f32 %v3073, %v3075
        %v3077 = vadd.f32 %v3073, %v3076
        %vm3078 = vweird.f32 %v2633
        %vm3079 = vweird.f32 %v3073
        %vm3080 = vmor %vm3078, %vm3079
        %v3081 = vsel %vm3080, %v3073, %v3077
        %v3082 = vand.u32 2147483647, %v2633
        %vm3083 = vcmp.eq.f32.partialorder %v3082, 8.507059e+37
        %v3084 = vand.u32 %v2633, 2147483648
        %v3085 = vor.u32 1.1754944e-38, %v3084
        %v3086 = vsel %vm3083, %v3085, %v3081
        %v3087 = vrcp.pop %v2636
        %v3088 = vmul.f32 %v2636, %v3087
        %v3089 = vsub.f32 1.0, %v3088
        %v3090 = vmul.f32 %v3087, %v3089
        %v3091 = vadd.f32 %v3087, %v3090
        %vm3092 = vweird.f32 %v2636
        %vm3093 = vweird.f32 %v3087
        %vm3094 = vmor %vm3092, %vm3093
        %v3095 = vsel %vm3094, %v3087, %v3091
        %v3096 = vand.u32 2147483647, %v2636
        %vm3097 = vcmp.eq.f32.partialorder %v3096, 8.507059e+37
        %v3098 = vand.u32 %v2636, 2147483648
        %v3099 = vor.u32 1.1754944e-38, %v3098
        %v3100 = vsel %vm3097, %v3099, %v3095
        %v3101 = vmul.f32 %v2677, %v2890
        %v3102 = vmul.f32 %v2679, %v2904
        %v3103 = vmul.f32 %v2705, %v2918
        %v3104 = vmul.f32 %v2707, %v2932
        %v3105 = vmul.f32 %v2733, %v2946
        %v3106 = vmul.f32 %v2735, %v2960
        %v3107 = vmul.f32 %v2761, %v2974
        %v3108 = vmul.f32 %v2763, %v2988
        %v3109 = vmul.f32 %v2789, %v3002
        %v3110 = vmul.f32 %v2791, %v3016
        %v3111 = vmul.f32 %v2817, %v3030
        %v3112 = vmul.f32 %v2819, %v3044
        %v3113 = vmul.f32 %v2845, %v3058
        %v3114 = vmul.f32 %v2847, %v3072
        %v3115 = vmul.f32 %v2873, %v3086
        %v3116 = vmul.f32 %v2875, %v3100
        %v3117 = vadd.f32 %v2280, %v3101
        %v3118 = vadd.f32 %v2281, %v3102
        %v3119 = vadd.f32 %v2282, %v3103
        %v3120 = vadd.f32 %v2283, %v3104
        %v3121 = vadd.f32 %v2284, %v3105
        %v3122 = vadd.f32 %v2285, %v3106
        %v3123 = vadd.f32 %v2286, %v3107
        %v3124 = vadd.f32 %v2287, %v3108
        %v3125 = vadd.f32 %v2288, %v3109
        %v3126 = vadd.f32 %v2289, %v3110
        %v3127 = vadd.f32 %v2290, %v3111
        %v3128 = vadd.f32 %v2291, %v3112
        %v3129 = vadd.f32 %v2292, %v3113
        %v3130 = vadd.f32 %v2293, %v3114
        %v3131 = vadd.f32 %v2294, %v3115
        %v3132 = vadd.f32 %v2295, %v3116
        %s3133 = scalar_lea.vmem [#allocation8], 16
        %v3134 = vld [vmem:[%s3133] sm:$0xf]
        %v3135 = vld [vmem:[%s3133 + $0x4] sm:$0xf]
        %v3136 = vunpack.c.l.bf16 %v3134
        %v3137 = vunpack.c.l.bf16 %v3135
        %3138 = vrot.lane.b32.xlu0 %v1418, 64
        %v3139 = vpop.permute.xlu0 %3138
        %3140 = vrot.lane.b32.xlu0 %v1423, 64
        %v3141 = vpop.permute.xlu0 %3140
        %v3143 = vsel %vm1424, %v3139, 0
        %v3146 = vsel %vm1424, %v3141, 0
        %3148 = vmatpush.bf16.xpose.msra.mxu0 0
        %3149 = vmatpush.bf16.xpose.msra.mxu0 0
        %3150 = vmatpush.bf16.xpose.msra.mxu0 0
        %3151 = vmatpush.bf16.xpose.msra.mxu0 0
        %3152 = vmatpush.bf16.xpose.msra.mxu0 0
        %3153 = vmatpush.bf16.xpose.msra.mxu0 0
        %3154 = vmatpush.bf16.xpose.msra.mxu0 0
        %3155 = vmatpush.bf16.xpose.msra.mxu0 %v3146
        %3156 = vmatmul.bf16.gmra.mxu0 %v3143
        %v3157 = vpop.f32.mrf.mxu0
        %v3158 = vadd.f32 %v3136, %v3157
        %v3159 = vpop.f32.mrf.mxu0
        %v3160 = vadd.f32 %v3137, %v3159
        %3161 = vdwg.mxu0
        %3162 = vrot.lane.b32.xlu0 %v1449, 64
        %v3163 = vpop.permute.xlu0 %3162
        %3164 = vrot.lane.b32.xlu0 %v1454, 64
        %v3165 = vpop.permute.xlu0 %3164
        %v3167 = vsel %vm1424, %v3163, 0
        %v3170 = vsel %vm1424, %v3165, 0
        %3172 = vmatpush.bf16.xpose.msra.mxu0 0
        %3173 = vmatpush.bf16.xpose.msra.mxu0 0
        %3174 = vmatpush.bf16.xpose.msra.mxu0 0
        %3175 = vmatpush.bf16.xpose.msra.mxu0 0
        %3176 = vmatpush.bf16.xpose.msra.mxu0 0
        %3177 = vmatpush.bf16.xpose.msra.mxu0 0
        %3178 = vmatpush.bf16.xpose.msra.mxu0 0
        %3179 = vmatpush.bf16.xpose.msra.mxu0 %v3170
        %3180 = vmatmul.bf16.gmra.mxu0 %v3167
        %v3181 = vpop.f32.mrf.mxu0
        %v3182 = vadd.f32 %v3136, %v3181
        %v3183 = vpop.f32.mrf.mxu0
        %v3184 = vadd.f32 %v3137, %v3183
        %3185 = vdwg.mxu0
        %3186 = vrot.lane.b32.xlu0 %v1479, 64
        %v3187 = vpop.permute.xlu0 %3186
        %3188 = vrot.lane.b32.xlu0 %v1484, 64
        %v3189 = vpop.permute.xlu0 %3188
        %v3191 = vsel %vm1424, %v3187, 0
        %v3194 = vsel %vm1424, %v3189, 0
        %3196 = vmatpush.bf16.xpose.msra.mxu0 0
        %3197 = vmatpush.bf16.xpose.msra.mxu0 0
        %3198 = vmatpush.bf16.xpose.msra.mxu0 0
        %3199 = vmatpush.bf16.xpose.msra.mxu0 0
        %3200 = vmatpush.bf16.xpose.msra.mxu0 0
        %3201 = vmatpush.bf16.xpose.msra.mxu0 0
        %3202 = vmatpush.bf16.xpose.msra.mxu0 0
        %3203 = vmatpush.bf16.xpose.msra.mxu0 %v3194
        %3204 = vmatmul.bf16.gmra.mxu0 %v3191
        %v3205 = vpop.f32.mrf.mxu0
        %v3206 = vadd.f32 %v3136, %v3205
        %v3207 = vpop.f32.mrf.mxu0
        %v3208 = vadd.f32 %v3137, %v3207
        %3209 = vdwg.mxu0
        %3210 = vrot.lane.b32.xlu0 %v1509, 64
        %v3211 = vpop.permute.xlu0 %3210
        %3212 = vrot.lane.b32.xlu0 %v1514, 64
        %v3213 = vpop.permute.xlu0 %3212
        %v3215 = vsel %vm1424, %v3211, 0
        %v3218 = vsel %vm1424, %v3213, 0
        %3220 = vmatpush.bf16.xpose.msra.mxu0 0
        %3221 = vmatpush.bf16.xpose.msra.mxu0 0
        %3222 = vmatpush.bf16.xpose.msra.mxu0 0
        %3223 = vmatpush.bf16.xpose.msra.mxu0 0
        %3224 = vmatpush.bf16.xpose.msra.mxu0 0
        %3225 = vmatpush.bf16.xpose.msra.mxu0 0
        %3226 = vmatpush.bf16.xpose.msra.mxu0 0
        %3227 = vmatpush.bf16.xpose.msra.mxu0 %v3218
        %3228 = vmatmul.bf16.gmra.mxu0 %v3215
        %v3229 = vpop.f32.mrf.mxu0
        %v3230 = vadd.f32 %v3136, %v3229
        %v3231 = vpop.f32.mrf.mxu0
        %v3232 = vadd.f32 %v3137, %v3231
        %3233 = vdwg.mxu0
        %3234 = vrot.lane.b32.xlu0 %v1539, 64
        %v3235 = vpop.permute.xlu0 %3234
        %3236 = vrot.lane.b32.xlu0 %v1544, 64
        %v3237 = vpop.permute.xlu0 %3236
        %v3239 = vsel %vm1424, %v3235, 0
        %v3242 = vsel %vm1424, %v3237, 0
        %3244 = vmatpush.bf16.xpose.msra.mxu0 0
        %3245 = vmatpush.bf16.xpose.msra.mxu0 0
        %3246 = vmatpush.bf16.xpose.msra.mxu0 0
        %3247 = vmatpush.bf16.xpose.msra.mxu0 0
        %3248 = vmatpush.bf16.xpose.msra.mxu0 0
        %3249 = vmatpush.bf16.xpose.msra.mxu0 0
        %3250 = vmatpush.bf16.xpose.msra.mxu0 0
        %3251 = vmatpush.bf16.xpose.msra.mxu0 %v3242
        %3252 = vmatmul.bf16.gmra.mxu0 %v3239
        %v3253 = vpop.f32.mrf.mxu0
        %v3254 = vadd.f32 %v3136, %v3253
        %v3255 = vpop.f32.mrf.mxu0
        %v3256 = vadd.f32 %v3137, %v3255
        %3257 = vdwg.mxu0
        %3258 = vrot.lane.b32.xlu0 %v1569, 64
        %v3259 = vpop.permute.xlu0 %3258
        %3260 = vrot.lane.b32.xlu0 %v1574, 64
        %v3261 = vpop.permute.xlu0 %3260
        %v3263 = vsel %vm1424, %v3259, 0
        %v3266 = vsel %vm1424, %v3261, 0
        %3268 = vmatpush.bf16.xpose.msra.mxu0 0
        %3269 = vmatpush.bf16.xpose.msra.mxu0 0
        %3270 = vmatpush.bf16.xpose.msra.mxu0 0
        %3271 = vmatpush.bf16.xpose.msra.mxu0 0
        %3272 = vmatpush.bf16.xpose.msra.mxu0 0
        %3273 = vmatpush.bf16.xpose.msra.mxu0 0
        %3274 = vmatpush.bf16.xpose.msra.mxu0 0
        %3275 = vmatpush.bf16.xpose.msra.mxu0 %v3266
        %3276 = vmatmul.bf16.gmra.mxu0 %v3263
        %v3277 = vpop.f32.mrf.mxu0
        %v3278 = vadd.f32 %v3136, %v3277
        %v3279 = vpop.f32.mrf.mxu0
        %v3280 = vadd.f32 %v3137, %v3279
        %3281 = vdwg.mxu0
        %3282 = vrot.lane.b32.xlu0 %v1599, 64
        %v3283 = vpop.permute.xlu0 %3282
        %3284 = vrot.lane.b32.xlu0 %v1604, 64
        %v3285 = vpop.permute.xlu0 %3284
        %v3287 = vsel %vm1424, %v3283, 0
        %v3290 = vsel %vm1424, %v3285, 0
        %3292 = vmatpush.bf16.xpose.msra.mxu0 0
        %3293 = vmatpush.bf16.xpose.msra.mxu0 0
        %3294 = vmatpush.bf16.xpose.msra.mxu0 0
        %3295 = vmatpush.bf16.xpose.msra.mxu0 0
        %3296 = vmatpush.bf16.xpose.msra.mxu0 0
        %3297 = vmatpush.bf16.xpose.msra.mxu0 0
        %3298 = vmatpush.bf16.xpose.msra.mxu0 0
        %3299 = vmatpush.bf16.xpose.msra.mxu0 %v3290
        %3300 = vmatmul.bf16.gmra.mxu0 %v3287
        %v3301 = vpop.f32.mrf.mxu0
        %v3302 = vadd.f32 %v3136, %v3301
        %v3303 = vpop.f32.mrf.mxu0
        %v3304 = vadd.f32 %v3137, %v3303
        %3305 = vdwg.mxu0
        %3306 = vrot.lane.b32.xlu0 %v1629, 64
        %v3307 = vpop.permute.xlu0 %3306
        %3308 = vrot.lane.b32.xlu0 %v1634, 64
        %v3309 = vpop.permute.xlu0 %3308
        %v3311 = vsel %vm1424, %v3307, 0
        %v3314 = vsel %vm1424, %v3309, 0
        %3316 = vmatpush.bf16.xpose.msra.mxu0 0
        %3317 = vmatpush.bf16.xpose.msra.mxu0 0
        %3318 = vmatpush.bf16.xpose.msra.mxu0 0
        %3319 = vmatpush.bf16.xpose.msra.mxu0 0
        %3320 = vmatpush.bf16.xpose.msra.mxu0 0
        %3321 = vmatpush.bf16.xpose.msra.mxu0 0
        %3322 = vmatpush.bf16.xpose.msra.mxu0 0
        %3323 = vmatpush.bf16.xpose.msra.mxu0 %v3314
        %3324 = vmatmul.bf16.gmra.mxu0 %v3311
        %v3325 = vpop.f32.mrf.mxu0
        %v3326 = vadd.f32 %v3136, %v3325
        %v3327 = vpop.f32.mrf.mxu0
        %v3328 = vadd.f32 %v3137, %v3327
        %3329 = vdwg.mxu0
        %v3330 = vsel %vm1655, %v3158, -inf
        %3331 = vmax.xlane.f32.xlu0 %v3330
        %v3332 = vpop.xlane.xlu0 %3331
        %v3333 = vsel %vm1655, %v3160, -inf
        %3334 = vmax.xlane.f32.xlu0 %v3333
        %v3335 = vpop.xlane.xlu0 %3334
        %v3336 = vsel %vm1655, %v3182, -inf
        %3337 = vmax.xlane.f32.xlu0 %v3336
        %v3338 = vpop.xlane.xlu0 %3337
        %v3339 = vsel %vm1655, %v3184, -inf
        %3340 = vmax.xlane.f32.xlu0 %v3339
        %v3341 = vpop.xlane.xlu0 %3340
        %v3342 = vsel %vm1655, %v3206, -inf
        %3343 = vmax.xlane.f32.xlu0 %v3342
        %v3344 = vpop.xlane.xlu0 %3343
        %v3345 = vsel %vm1655, %v3208, -inf
        %3346 = vmax.xlane.f32.xlu0 %v3345
        %v3347 = vpop.xlane.xlu0 %3346
        %v3348 = vsel %vm1655, %v3230, -inf
        %3349 = vmax.xlane.f32.xlu0 %v3348
        %v3350 = vpop.xlane.xlu0 %3349
        %v3351 = vsel %vm1655, %v3232, -inf
        %3352 = vmax.xlane.f32.xlu0 %v3351
        %v3353 = vpop.xlane.xlu0 %3352
        %v3354 = vsel %vm1655, %v3254, -inf
        %3355 = vmax.xlane.f32.xlu0 %v3354
        %v3356 = vpop.xlane.xlu0 %3355
        %v3357 = vsel %vm1655, %v3256, -inf
        %3358 = vmax.xlane.f32.xlu0 %v3357
        %v3359 = vpop.xlane.xlu0 %3358
        %v3360 = vsel %vm1655, %v3278, -inf
        %3361 = vmax.xlane.f32.xlu0 %v3360
        %v3362 = vpop.xlane.xlu0 %3361
        %v3363 = vsel %vm1655, %v3280, -inf
        %3364 = vmax.xlane.f32.xlu0 %v3363
        %v3365 = vpop.xlane.xlu0 %3364
        %v3366 = vsel %vm1655, %v3302, -inf
        %3367 = vmax.xlane.f32.xlu0 %v3366
        %v3368 = vpop.xlane.xlu0 %3367
        %v3369 = vsel %vm1655, %v3304, -inf
        %3370 = vmax.xlane.f32.xlu0 %v3369
        %v3371 = vpop.xlane.xlu0 %3370
        %v3372 = vsel %vm1655, %v3326, -inf
        %3373 = vmax.xlane.f32.xlu0 %v3372
        %v3374 = vpop.xlane.xlu0 %3373
        %v3375 = vsel %vm1655, %v3328, -inf
        %3376 = vmax.xlane.f32.xlu0 %v3375
        %v3377 = vpop.xlane.xlu0 %3376
        %v3378 = vsub.f32 %v3158, %v3332
        %v3379 = vsub.f32 %v3160, %v3335
        %v3380 = vsub.f32 %v3182, %v3338
        %v3381 = vsub.f32 %v3184, %v3341
        %v3382 = vsub.f32 %v3206, %v3344
        %v3383 = vsub.f32 %v3208, %v3347
        %v3384 = vsub.f32 %v3230, %v3350
        %v3385 = vsub.f32 %v3232, %v3353
        %v3386 = vsub.f32 %v3254, %v3356
        %v3387 = vsub.f32 %v3256, %v3359
        %v3388 = vsub.f32 %v3278, %v3362
        %v3389 = vsub.f32 %v3280, %v3365
        %v3390 = vsub.f32 %v3302, %v3368
        %v3391 = vsub.f32 %v3304, %v3371
        %v3392 = vsub.f32 %v3326, %v3374
        %v3393 = vsub.f32 %v3328, %v3377
        %v3394 = vmul.f32 %v3378, 1.442695
        %v3395 = vpow.pop %v3394
        %v3396 = vmul.f32 %v3379, 1.442695
        %v3397 = vpow.pop %v3396
        %v3398 = vmul.f32 %v3380, 1.442695
        %v3399 = vpow.pop %v3398
        %v3400 = vmul.f32 %v3381, 1.442695
        %v3401 = vpow.pop %v3400
        %v3402 = vmul.f32 %v3382, 1.442695
        %v3403 = vpow.pop %v3402
        %v3404 = vmul.f32 %v3383, 1.442695
        %v3405 = vpow.pop %v3404
        %v3406 = vmul.f32 %v3384, 1.442695
        %v3407 = vpow.pop %v3406
        %v3408 = vmul.f32 %v3385, 1.442695
        %v3409 = vpow.pop %v3408
        %v3410 = vmul.f32 %v3386, 1.442695
        %v3411 = vpow.pop %v3410
        %v3412 = vmul.f32 %v3387, 1.442695
        %v3413 = vpow.pop %v3412
        %v3414 = vmul.f32 %v3388, 1.442695
        %v3415 = vpow.pop %v3414
        %v3416 = vmul.f32 %v3389, 1.442695
        %v3417 = vpow.pop %v3416
        %v3418 = vmul.f32 %v3390, 1.442695
        %v3419 = vpow.pop %v3418
        %v3420 = vmul.f32 %v3391, 1.442695
        %v3421 = vpow.pop %v3420
        %v3422 = vmul.f32 %v3392, 1.442695
        %v3423 = vpow.pop %v3422
        %v3424 = vmul.f32 %v3393, 1.442695
        %v3425 = vpow.pop %v3424
        %v3426 = vsel %vm1655, %v3395, 0.0
        %3427 = vadd.xlane.f32.xlu0 %v3426
        %v3428 = vpop.xlane.xlu0 %3427
        %v3429 = vsel %vm1655, %v3397, 0.0
        %3430 = vadd.xlane.f32.xlu0 %v3429
        %v3431 = vpop.xlane.xlu0 %3430
        %v3432 = vsel %vm1655, %v3399, 0.0
        %3433 = vadd.xlane.f32.xlu0 %v3432
        %v3434 = vpop.xlane.xlu0 %3433
        %v3435 = vsel %vm1655, %v3401, 0.0
        %3436 = vadd.xlane.f32.xlu0 %v3435
        %v3437 = vpop.xlane.xlu0 %3436
        %v3438 = vsel %vm1655, %v3403, 0.0
        %3439 = vadd.xlane.f32.xlu0 %v3438
        %v3440 = vpop.xlane.xlu0 %3439
        %v3441 = vsel %vm1655, %v3405, 0.0
        %3442 = vadd.xlane.f32.xlu0 %v3441
        %v3443 = vpop.xlane.xlu0 %3442
        %v3444 = vsel %vm1655, %v3407, 0.0
        %3445 = vadd.xlane.f32.xlu0 %v3444
        %v3446 = vpop.xlane.xlu0 %3445
        %v3447 = vsel %vm1655, %v3409, 0.0
        %3448 = vadd.xlane.f32.xlu0 %v3447
        %v3449 = vpop.xlane.xlu0 %3448
        %v3450 = vsel %vm1655, %v3411, 0.0
        %3451 = vadd.xlane.f32.xlu0 %v3450
        %v3452 = vpop.xlane.xlu0 %3451
        %v3453 = vsel %vm1655, %v3413, 0.0
        %3454 = vadd.xlane.f32.xlu0 %v3453
        %v3455 = vpop.xlane.xlu0 %3454
        %v3456 = vsel %vm1655, %v3415, 0.0
        %3457 = vadd.xlane.f32.xlu0 %v3456
        %v3458 = vpop.xlane.xlu0 %3457
        %v3459 = vsel %vm1655, %v3417, 0.0
        %3460 = vadd.xlane.f32.xlu0 %v3459
        %v3461 = vpop.xlane.xlu0 %3460
        %v3462 = vsel %vm1655, %v3419, 0.0
        %3463 = vadd.xlane.f32.xlu0 %v3462
        %v3464 = vpop.xlane.xlu0 %3463
        %v3465 = vsel %vm1655, %v3421, 0.0
        %3466 = vadd.xlane.f32.xlu0 %v3465
        %v3467 = vpop.xlane.xlu0 %3466
        %v3468 = vsel %vm1655, %v3423, 0.0
        %3469 = vadd.xlane.f32.xlu0 %v3468
        %v3470 = vpop.xlane.xlu0 %3469
        %v3471 = vsel %vm1655, %v3425, 0.0
        %3472 = vadd.xlane.f32.xlu0 %v3471
        %v3473 = vpop.xlane.xlu0 %3472
        %v3474 = vpack.c.bf16 %v3395, %v3395
        %v3475 = vpack.c.bf16 %v3397, %v3397
        %v3476 = vpack.c.bf16 %v3399, %v3399
        %v3477 = vpack.c.bf16 %v3401, %v3401
        %v3478 = vpack.c.bf16 %v3403, %v3403
        %v3479 = vpack.c.bf16 %v3405, %v3405
        %v3480 = vpack.c.bf16 %v3407, %v3407
        %v3481 = vpack.c.bf16 %v3409, %v3409
        %v3482 = vpack.c.bf16 %v3411, %v3411
        %v3483 = vpack.c.bf16 %v3413, %v3413
        %v3484 = vpack.c.bf16 %v3415, %v3415
        %v3485 = vpack.c.bf16 %v3417, %v3417
        %v3486 = vpack.c.bf16 %v3419, %v3419
        %v3487 = vpack.c.bf16 %v3421, %v3421
        %v3488 = vpack.c.bf16 %v3423, %v3423
        %v3489 = vpack.c.bf16 %v3425, %v3425
        %v3492 = vunpack.c.l.b16 %v3474
        %v3493 = vunpack.c.l.b16 %v3475
        %v3494 = vpack.c.b16 %v3493, %v3492
        %v3497 = vunpack.c.l.b16 %v1379
        %v3498 = vunpack.c.l.b16 %v1381
        %v3499 = vpack.c.b16 %v3498, %v3497
        %v3502 = vsel %vm1655, %v3494, 0
        %3504 = vmatpush.bf16.msra.mxu0 0
        %3505 = vmatpush.bf16.msra.mxu0 0
        %3506 = vmatpush.bf16.msra.mxu0 0
        %3507 = vmatpush.bf16.msra.mxu0 0
        %3508 = vmatpush.bf16.msra.mxu0 0
        %3509 = vmatpush.bf16.msra.mxu0 0
        %3510 = vmatpush.bf16.msra.mxu0 0
        %3511 = vmatpush.bf16.msra.mxu0 %v3499
        %3512 = vmatmul.bf16.gmra.mxu0 %v3502
        %v3513 = vpop.f32.mrf.mxu0
        %v3514 = vadd.f32 0.0, %v3513
        %v3515 = vpop.f32.mrf.mxu0
        %v3516 = vadd.f32 0.0, %v3515
        %3517 = vdwg.mxu0
        %v3520 = vunpack.c.l.b16 %v3476
        %v3521 = vunpack.c.l.b16 %v3477
        %v3522 = vpack.c.b16 %v3521, %v3520
        %v3525 = vunpack.c.l.b16 %v1383
        %v3526 = vunpack.c.l.b16 %v1385
        %v3527 = vpack.c.b16 %v3526, %v3525
        %v3530 = vsel %vm1655, %v3522, 0
        %3532 = vmatpush.bf16.msra.mxu0 0
        %3533 = vmatpush.bf16.msra.mxu0 0
        %3534 = vmatpush.bf16.msra.mxu0 0
        %3535 = vmatpush.bf16.msra.mxu0 0
        %3536 = vmatpush.bf16.msra.mxu0 0
        %3537 = vmatpush.bf16.msra.mxu0 0
        %3538 = vmatpush.bf16.msra.mxu0 0
        %3539 = vmatpush.bf16.msra.mxu0 %v3527
        %3540 = vmatmul.bf16.gmra.mxu0 %v3530
        %v3541 = vpop.f32.mrf.mxu0
        %v3542 = vadd.f32 0.0, %v3541
        %v3543 = vpop.f32.mrf.mxu0
        %v3544 = vadd.f32 0.0, %v3543
        %3545 = vdwg.mxu0
        %v3548 = vunpack.c.l.b16 %v3478
        %v3549 = vunpack.c.l.b16 %v3479
        %v3550 = vpack.c.b16 %v3549, %v3548
        %v3553 = vunpack.c.l.b16 %v1387
        %v3554 = vunpack.c.l.b16 %v1389
        %v3555 = vpack.c.b16 %v3554, %v3553
        %v3558 = vsel %vm1655, %v3550, 0
        %3560 = vmatpush.bf16.msra.mxu0 0
        %3561 = vmatpush.bf16.msra.mxu0 0
        %3562 = vmatpush.bf16.msra.mxu0 0
        %3563 = vmatpush.bf16.msra.mxu0 0
        %3564 = vmatpush.bf16.msra.mxu0 0
        %3565 = vmatpush.bf16.msra.mxu0 0
        %3566 = vmatpush.bf16.msra.mxu0 0
        %3567 = vmatpush.bf16.msra.mxu0 %v3555
        %3568 = vmatmul.bf16.gmra.mxu0 %v3558
        %v3569 = vpop.f32.mrf.mxu0
        %v3570 = vadd.f32 0.0, %v3569
        %v3571 = vpop.f32.mrf.mxu0
        %v3572 = vadd.f32 0.0, %v3571
        %3573 = vdwg.mxu0
        %v3576 = vunpack.c.l.b16 %v3480
        %v3577 = vunpack.c.l.b16 %v3481
        %v3578 = vpack.c.b16 %v3577, %v3576
        %v3581 = vunpack.c.l.b16 %v1391
        %v3582 = vunpack.c.l.b16 %v1393
        %v3583 = vpack.c.b16 %v3582, %v3581
        %v3586 = vsel %vm1655, %v3578, 0
        %3588 = vmatpush.bf16.msra.mxu0 0
        %3589 = vmatpush.bf16.msra.mxu0 0
        %3590 = vmatpush.bf16.msra.mxu0 0
        %3591 = vmatpush.bf16.msra.mxu0 0
        %3592 = vmatpush.bf16.msra.mxu0 0
        %3593 = vmatpush.bf16.msra.mxu0 0
        %3594 = vmatpush.bf16.msra.mxu0 0
        %3595 = vmatpush.bf16.msra.mxu0 %v3583
        %3596 = vmatmul.bf16.gmra.mxu0 %v3586
        %v3597 = vpop.f32.mrf.mxu0
        %v3598 = vadd.f32 0.0, %v3597
        %v3599 = vpop.f32.mrf.mxu0
        %v3600 = vadd.f32 0.0, %v3599
        %3601 = vdwg.mxu0
        %v3604 = vunpack.c.l.b16 %v3482
        %v3605 = vunpack.c.l.b16 %v3483
        %v3606 = vpack.c.b16 %v3605, %v3604
        %v3609 = vunpack.c.l.b16 %v1395
        %v3610 = vunpack.c.l.b16 %v1397
        %v3611 = vpack.c.b16 %v3610, %v3609
        %v3614 = vsel %vm1655, %v3606, 0
        %3616 = vmatpush.bf16.msra.mxu0 0
        %3617 = vmatpush.bf16.msra.mxu0 0
        %3618 = vmatpush.bf16.msra.mxu0 0
        %3619 = vmatpush.bf16.msra.mxu0 0
        %3620 = vmatpush.bf16.msra.mxu0 0
        %3621 = vmatpush.bf16.msra.mxu0 0
        %3622 = vmatpush.bf16.msra.mxu0 0
        %3623 = vmatpush.bf16.msra.mxu0 %v3611
        %3624 = vmatmul.bf16.gmra.mxu0 %v3614
        %v3625 = vpop.f32.mrf.mxu0
        %v3626 = vadd.f32 0.0, %v3625
        %v3627 = vpop.f32.mrf.mxu0
        %v3628 = vadd.f32 0.0, %v3627
        %3629 = vdwg.mxu0
        %v3632 = vunpack.c.l.b16 %v3484
        %v3633 = vunpack.c.l.b16 %v3485
        %v3634 = vpack.c.b16 %v3633, %v3632
        %v3637 = vunpack.c.l.b16 %v1399
        %v3638 = vunpack.c.l.b16 %v1401
        %v3639 = vpack.c.b16 %v3638, %v3637
        %v3642 = vsel %vm1655, %v3634, 0
        %3644 = vmatpush.bf16.msra.mxu0 0
        %3645 = vmatpush.bf16.msra.mxu0 0
        %3646 = vmatpush.bf16.msra.mxu0 0
        %3647 = vmatpush.bf16.msra.mxu0 0
        %3648 = vmatpush.bf16.msra.mxu0 0
        %3649 = vmatpush.bf16.msra.mxu0 0
        %3650 = vmatpush.bf16.msra.mxu0 0
        %3651 = vmatpush.bf16.msra.mxu0 %v3639
        %3652 = vmatmul.bf16.gmra.mxu0 %v3642
        %v3653 = vpop.f32.mrf.mxu0
        %v3654 = vadd.f32 0.0, %v3653
        %v3655 = vpop.f32.mrf.mxu0
        %v3656 = vadd.f32 0.0, %v3655
        %3657 = vdwg.mxu0
        %v3660 = vunpack.c.l.b16 %v3486
        %v3661 = vunpack.c.l.b16 %v3487
        %v3662 = vpack.c.b16 %v3661, %v3660
        %v3665 = vunpack.c.l.b16 %v1403
        %v3666 = vunpack.c.l.b16 %v1405
        %v3667 = vpack.c.b16 %v3666, %v3665
        %v3670 = vsel %vm1655, %v3662, 0
        %3672 = vmatpush.bf16.msra.mxu0 0
        %3673 = vmatpush.bf16.msra.mxu0 0
        %3674 = vmatpush.bf16.msra.mxu0 0
        %3675 = vmatpush.bf16.msra.mxu0 0
        %3676 = vmatpush.bf16.msra.mxu0 0
        %3677 = vmatpush.bf16.msra.mxu0 0
        %3678 = vmatpush.bf16.msra.mxu0 0
        %3679 = vmatpush.bf16.msra.mxu0 %v3667
        %3680 = vmatmul.bf16.gmra.mxu0 %v3670
        %v3681 = vpop.f32.mrf.mxu0
        %v3682 = vadd.f32 0.0, %v3681
        %v3683 = vpop.f32.mrf.mxu0
        %v3684 = vadd.f32 0.0, %v3683
        %3685 = vdwg.mxu0
        %v3688 = vunpack.c.l.b16 %v3488
        %v3689 = vunpack.c.l.b16 %v3489
        %v3690 = vpack.c.b16 %v3689, %v3688
        %v3693 = vunpack.c.l.b16 %v1407
        %v3694 = vunpack.c.l.b16 %v1409
        %v3695 = vpack.c.b16 %v3694, %v3693
        %v3698 = vsel %vm1655, %v3690, 0
        %3700 = vmatpush.bf16.msra.mxu0 0
        %3701 = vmatpush.bf16.msra.mxu0 0
        %3702 = vmatpush.bf16.msra.mxu0 0
        %3703 = vmatpush.bf16.msra.mxu0 0
        %3704 = vmatpush.bf16.msra.mxu0 0
        %3705 = vmatpush.bf16.msra.mxu0 0
        %3706 = vmatpush.bf16.msra.mxu0 0
        %3707 = vmatpush.bf16.msra.mxu0 %v3695
        %3708 = vmatmul.bf16.gmra.mxu0 %v3698
        %v3709 = vpop.f32.mrf.mxu0
        %v3710 = vadd.f32 0.0, %v3709
        %v3711 = vpop.f32.mrf.mxu0
        %v3712 = vadd.f32 0.0, %v3711
        %3713 = vdwg.mxu0
        %v3714 = vrcp.pop %v3428
        %v3715 = vmul.f32 %v3428, %v3714
        %v3716 = vsub.f32 1.0, %v3715
        %v3717 = vmul.f32 %v3714, %v3716
        %v3718 = vadd.f32 %v3714, %v3717
        %vm3719 = vweird.f32 %v3428
        %vm3720 = vweird.f32 %v3714
        %vm3721 = vmor %vm3719, %vm3720
        %v3722 = vsel %vm3721, %v3714, %v3718
        %v3723 = vand.u32 2147483647, %v3428
        %vm3724 = vcmp.eq.f32.partialorder %v3723, 8.507059e+37
        %v3725 = vand.u32 %v3428, 2147483648
        %v3726 = vor.u32 1.1754944e-38, %v3725
        %v3727 = vsel %vm3724, %v3726, %v3722
        %v3728 = vrcp.pop %v3431
        %v3729 = vmul.f32 %v3431, %v3728
        %v3730 = vsub.f32 1.0, %v3729
        %v3731 = vmul.f32 %v3728, %v3730
        %v3732 = vadd.f32 %v3728, %v3731
        %vm3733 = vweird.f32 %v3431
        %vm3734 = vweird.f32 %v3728
        %vm3735 = vmor %vm3733, %vm3734
        %v3736 = vsel %vm3735, %v3728, %v3732
        %v3737 = vand.u32 2147483647, %v3431
        %vm3738 = vcmp.eq.f32.partialorder %v3737, 8.507059e+37
        %v3739 = vand.u32 %v3431, 2147483648
        %v3740 = vor.u32 1.1754944e-38, %v3739
        %v3741 = vsel %vm3738, %v3740, %v3736
        %v3742 = vrcp.pop %v3434
        %v3743 = vmul.f32 %v3434, %v3742
        %v3744 = vsub.f32 1.0, %v3743
        %v3745 = vmul.f32 %v3742, %v3744
        %v3746 = vadd.f32 %v3742, %v3745
        %vm3747 = vweird.f32 %v3434
        %vm3748 = vweird.f32 %v3742
        %vm3749 = vmor %vm3747, %vm3748
        %v3750 = vsel %vm3749, %v3742, %v3746
        %v3751 = vand.u32 2147483647, %v3434
        %vm3752 = vcmp.eq.f32.partialorder %v3751, 8.507059e+37
        %v3753 = vand.u32 %v3434, 2147483648
        %v3754 = vor.u32 1.1754944e-38, %v3753
        %v3755 = vsel %vm3752, %v3754, %v3750
        %v3756 = vrcp.pop %v3437
        %v3757 = vmul.f32 %v3437, %v3756
        %v3758 = vsub.f32 1.0, %v3757
        %v3759 = vmul.f32 %v3756, %v3758
        %v3760 = vadd.f32 %v3756, %v3759
        %vm3761 = vweird.f32 %v3437
        %vm3762 = vweird.f32 %v3756
        %vm3763 = vmor %vm3761, %vm3762
        %v3764 = vsel %vm3763, %v3756, %v3760
        %v3765 = vand.u32 2147483647, %v3437
        %vm3766 = vcmp.eq.f32.partialorder %v3765, 8.507059e+37
        %v3767 = vand.u32 %v3437, 2147483648
        %v3768 = vor.u32 1.1754944e-38, %v3767
        %v3769 = vsel %vm3766, %v3768, %v3764
        %v3770 = vrcp.pop %v3440
        %v3771 = vmul.f32 %v3440, %v3770
        %v3772 = vsub.f32 1.0, %v3771
        %v3773 = vmul.f32 %v3770, %v3772
        %v3774 = vadd.f32 %v3770, %v3773
        %vm3775 = vweird.f32 %v3440
        %vm3776 = vweird.f32 %v3770
        %vm3777 = vmor %vm3775, %vm3776
        %v3778 = vsel %vm3777, %v3770, %v3774
        %v3779 = vand.u32 2147483647, %v3440
        %vm3780 = vcmp.eq.f32.partialorder %v3779, 8.507059e+37
        %v3781 = vand.u32 %v3440, 2147483648
        %v3782 = vor.u32 1.1754944e-38, %v3781
        %v3783 = vsel %vm3780, %v3782, %v3778
        %v3784 = vrcp.pop %v3443
        %v3785 = vmul.f32 %v3443, %v3784
        %v3786 = vsub.f32 1.0, %v3785
        %v3787 = vmul.f32 %v3784, %v3786
        %v3788 = vadd.f32 %v3784, %v3787
        %vm3789 = vweird.f32 %v3443
        %vm3790 = vweird.f32 %v3784
        %vm3791 = vmor %vm3789, %vm3790
        %v3792 = vsel %vm3791, %v3784, %v3788
        %v3793 = vand.u32 2147483647, %v3443
        %vm3794 = vcmp.eq.f32.partialorder %v3793, 8.507059e+37
        %v3795 = vand.u32 %v3443, 2147483648
        %v3796 = vor.u32 1.1754944e-38, %v3795
        %v3797 = vsel %vm3794, %v3796, %v3792
        %v3798 = vrcp.pop %v3446
        %v3799 = vmul.f32 %v3446, %v3798
        %v3800 = vsub.f32 1.0, %v3799
        %v3801 = vmul.f32 %v3798, %v3800
        %v3802 = vadd.f32 %v3798, %v3801
        %vm3803 = vweird.f32 %v3446
        %vm3804 = vweird.f32 %v3798
        %vm3805 = vmor %vm3803, %vm3804
        %v3806 = vsel %vm3805, %v3798, %v3802
        %v3807 = vand.u32 2147483647, %v3446
        %vm3808 = vcmp.eq.f32.partialorder %v3807, 8.507059e+37
        %v3809 = vand.u32 %v3446, 2147483648
        %v3810 = vor.u32 1.1754944e-38, %v3809
        %v3811 = vsel %vm3808, %v3810, %v3806
        %v3812 = vrcp.pop %v3449
        %v3813 = vmul.f32 %v3449, %v3812
        %v3814 = vsub.f32 1.0, %v3813
        %v3815 = vmul.f32 %v3812, %v3814
        %v3816 = vadd.f32 %v3812, %v3815
        %vm3817 = vweird.f32 %v3449
        %vm3818 = vweird.f32 %v3812
        %vm3819 = vmor %vm3817, %vm3818
        %v3820 = vsel %vm3819, %v3812, %v3816
        %v3821 = vand.u32 2147483647, %v3449
        %vm3822 = vcmp.eq.f32.partialorder %v3821, 8.507059e+37
        %v3823 = vand.u32 %v3449, 2147483648
        %v3824 = vor.u32 1.1754944e-38, %v3823
        %v3825 = vsel %vm3822, %v3824, %v3820
        %v3826 = vrcp.pop %v3452
        %v3827 = vmul.f32 %v3452, %v3826
        %v3828 = vsub.f32 1.0, %v3827
        %v3829 = vmul.f32 %v3826, %v3828
        %v3830 = vadd.f32 %v3826, %v3829
        %vm3831 = vweird.f32 %v3452
        %vm3832 = vweird.f32 %v3826
        %vm3833 = vmor %vm3831, %vm3832
        %v3834 = vsel %vm3833, %v3826, %v3830
        %v3835 = vand.u32 2147483647, %v3452
        %vm3836 = vcmp.eq.f32.partialorder %v3835, 8.507059e+37
        %v3837 = vand.u32 %v3452, 2147483648
        %v3838 = vor.u32 1.1754944e-38, %v3837
        %v3839 = vsel %vm3836, %v3838, %v3834
        %v3840 = vrcp.pop %v3455
        %v3841 = vmul.f32 %v3455, %v3840
        %v3842 = vsub.f32 1.0, %v3841
        %v3843 = vmul.f32 %v3840, %v3842
        %v3844 = vadd.f32 %v3840, %v3843
        %vm3845 = vweird.f32 %v3455
        %vm3846 = vweird.f32 %v3840
        %vm3847 = vmor %vm3845, %vm3846
        %v3848 = vsel %vm3847, %v3840, %v3844
        %v3849 = vand.u32 2147483647, %v3455
        %vm3850 = vcmp.eq.f32.partialorder %v3849, 8.507059e+37
        %v3851 = vand.u32 %v3455, 2147483648
        %v3852 = vor.u32 1.1754944e-38, %v3851
        %v3853 = vsel %vm3850, %v3852, %v3848
        %v3854 = vrcp.pop %v3458
        %v3855 = vmul.f32 %v3458, %v3854
        %v3856 = vsub.f32 1.0, %v3855
        %v3857 = vmul.f32 %v3854, %v3856
        %v3858 = vadd.f32 %v3854, %v3857
        %vm3859 = vweird.f32 %v3458
        %vm3860 = vweird.f32 %v3854
        %vm3861 = vmor %vm3859, %vm3860
        %v3862 = vsel %vm3861, %v3854, %v3858
        %v3863 = vand.u32 2147483647, %v3458
        %vm3864 = vcmp.eq.f32.partialorder %v3863, 8.507059e+37
        %v3865 = vand.u32 %v3458, 2147483648
        %v3866 = vor.u32 1.1754944e-38, %v3865
        %v3867 = vsel %vm3864, %v3866, %v3862
        %v3868 = vrcp.pop %v3461
        %v3869 = vmul.f32 %v3461, %v3868
        %v3870 = vsub.f32 1.0, %v3869
        %v3871 = vmul.f32 %v3868, %v3870
        %v3872 = vadd.f32 %v3868, %v3871
        %vm3873 = vweird.f32 %v3461
        %vm3874 = vweird.f32 %v3868
        %vm3875 = vmor %vm3873, %vm3874
        %v3876 = vsel %vm3875, %v3868, %v3872
        %v3877 = vand.u32 2147483647, %v3461
        %vm3878 = vcmp.eq.f32.partialorder %v3877, 8.507059e+37
        %v3879 = vand.u32 %v3461, 2147483648
        %v3880 = vor.u32 1.1754944e-38, %v3879
        %v3881 = vsel %vm3878, %v3880, %v3876
        %v3882 = vrcp.pop %v3464
        %v3883 = vmul.f32 %v3464, %v3882
        %v3884 = vsub.f32 1.0, %v3883
        %v3885 = vmul.f32 %v3882, %v3884
        %v3886 = vadd.f32 %v3882, %v3885
        %vm3887 = vweird.f32 %v3464
        %vm3888 = vweird.f32 %v3882
        %vm3889 = vmor %vm3887, %vm3888
        %v3890 = vsel %vm3889, %v3882, %v3886
        %v3891 = vand.u32 2147483647, %v3464
        %vm3892 = vcmp.eq.f32.partialorder %v3891, 8.507059e+37
        %v3893 = vand.u32 %v3464, 2147483648
        %v3894 = vor.u32 1.1754944e-38, %v3893
        %v3895 = vsel %vm3892, %v3894, %v3890
        %v3896 = vrcp.pop %v3467
        %v3897 = vmul.f32 %v3467, %v3896
        %v3898 = vsub.f32 1.0, %v3897
        %v3899 = vmul.f32 %v3896, %v3898
        %v3900 = vadd.f32 %v3896, %v3899
        %vm3901 = vweird.f32 %v3467
        %vm3902 = vweird.f32 %v3896
        %vm3903 = vmor %vm3901, %vm3902
        %v3904 = vsel %vm3903, %v3896, %v3900
        %v3905 = vand.u32 2147483647, %v3467
        %vm3906 = vcmp.eq.f32.partialorder %v3905, 8.507059e+37
        %v3907 = vand.u32 %v3467, 2147483648
        %v3908 = vor.u32 1.1754944e-38, %v3907
        %v3909 = vsel %vm3906, %v3908, %v3904
        %v3910 = vrcp.pop %v3470
        %v3911 = vmul.f32 %v3470, %v3910
        %v3912 = vsub.f32 1.0, %v3911
        %v3913 = vmul.f32 %v3910, %v3912
        %v3914 = vadd.f32 %v3910, %v3913
        %vm3915 = vweird.f32 %v3470
        %vm3916 = vweird.f32 %v3910
        %vm3917 = vmor %vm3915, %vm3916
        %v3918 = vsel %vm3917, %v3910, %v3914
        %v3919 = vand.u32 2147483647, %v3470
        %vm3920 = vcmp.eq.f32.partialorder %v3919, 8.507059e+37
        %v3921 = vand.u32 %v3470, 2147483648
        %v3922 = vor.u32 1.1754944e-38, %v3921
        %v3923 = vsel %vm3920, %v3922, %v3918
        %v3924 = vrcp.pop %v3473
        %v3925 = vmul.f32 %v3473, %v3924
        %v3926 = vsub.f32 1.0, %v3925
        %v3927 = vmul.f32 %v3924, %v3926
        %v3928 = vadd.f32 %v3924, %v3927
        %vm3929 = vweird.f32 %v3473
        %vm3930 = vweird.f32 %v3924
        %vm3931 = vmor %vm3929, %vm3930
        %v3932 = vsel %vm3931, %v3924, %v3928
        %v3933 = vand.u32 2147483647, %v3473
        %vm3934 = vcmp.eq.f32.partialorder %v3933, 8.507059e+37
        %v3935 = vand.u32 %v3473, 2147483648
        %v3936 = vor.u32 1.1754944e-38, %v3935
        %v3937 = vsel %vm3934, %v3936, %v3932
        %v3938 = vmul.f32 %v3514, %v3727
        %v3939 = vmul.f32 %v3516, %v3741
        %v3940 = vmul.f32 %v3542, %v3755
        %v3941 = vmul.f32 %v3544, %v3769
        %v3942 = vmul.f32 %v3570, %v3783
        %v3943 = vmul.f32 %v3572, %v3797
        %v3944 = vmul.f32 %v3598, %v3811
        %v3945 = vmul.f32 %v3600, %v3825
        %v3946 = vmul.f32 %v3626, %v3839
        %v3947 = vmul.f32 %v3628, %v3853
        %v3948 = vmul.f32 %v3654, %v3867
        %v3949 = vmul.f32 %v3656, %v3881
        %v3950 = vmul.f32 %v3682, %v3895
        %v3951 = vmul.f32 %v3684, %v3909
        %v3952 = vmul.f32 %v3710, %v3923
        %v3953 = vmul.f32 %v3712, %v3937
        %v3954 = vadd.f32 %v3117, %v3938
        %v3955 = vadd.f32 %v3118, %v3939
        %v3956 = vadd.f32 %v3119, %v3940
        %v3957 = vadd.f32 %v3120, %v3941
        %v3958 = vadd.f32 %v3121, %v3942
        %v3959 = vadd.f32 %v3122, %v3943
        %v3960 = vadd.f32 %v3123, %v3944
        %v3961 = vadd.f32 %v3124, %v3945
        %v3962 = vadd.f32 %v3125, %v3946
        %v3963 = vadd.f32 %v3126, %v3947
        %v3964 = vadd.f32 %v3127, %v3948
        %v3965 = vadd.f32 %v3128, %v3949
        %v3966 = vadd.f32 %v3129, %v3950
        %v3967 = vadd.f32 %v3130, %v3951
        %v3968 = vadd.f32 %v3131, %v3952
        %v3969 = vadd.f32 %v3132, %v3953
        %s3970 = scalar_lea.vmem [#allocation8], 24
        %v3971 = vld [vmem:[%s3970] sm:$0xf]
        %v3972 = vld [vmem:[%s3970 + $0x4] sm:$0xf]
        %v3973 = vunpack.c.l.bf16 %v3971
        %v3974 = vunpack.c.l.bf16 %v3972
        %3975 = vrot.lane.b32.xlu0 %v1418, 32
        %v3976 = vpop.permute.xlu0 %3975
        %3977 = vrot.lane.b32.xlu0 %v1423, 32
        %v3978 = vpop.permute.xlu0 %3977
        %v3980 = vsel %vm1424, %v3976, 0
        %v3983 = vsel %vm1424, %v3978, 0
        %3985 = vmatpush.bf16.xpose.msra.mxu0 0
        %3986 = vmatpush.bf16.xpose.msra.mxu0 0
        %3987 = vmatpush.bf16.xpose.msra.mxu0 0
        %3988 = vmatpush.bf16.xpose.msra.mxu0 0
        %3989 = vmatpush.bf16.xpose.msra.mxu0 0
        %3990 = vmatpush.bf16.xpose.msra.mxu0 0
        %3991 = vmatpush.bf16.xpose.msra.mxu0 0
        %3992 = vmatpush.bf16.xpose.msra.mxu0 %v3983
        %3993 = vmatmul.bf16.gmra.mxu0 %v3980
        %v3994 = vpop.f32.mrf.mxu0
        %v3995 = vadd.f32 %v3973, %v3994
        %v3996 = vpop.f32.mrf.mxu0
        %v3997 = vadd.f32 %v3974, %v3996
        %3998 = vdwg.mxu0
        %3999 = vrot.lane.b32.xlu0 %v1449, 32
        %v4000 = vpop.permute.xlu0 %3999
        %4001 = vrot.lane.b32.xlu0 %v1454, 32
        %v4002 = vpop.permute.xlu0 %4001
        %v4004 = vsel %vm1424, %v4000, 0
        %v4007 = vsel %vm1424, %v4002, 0
        %4009 = vmatpush.bf16.xpose.msra.mxu0 0
        %4010 = vmatpush.bf16.xpose.msra.mxu0 0
        %4011 = vmatpush.bf16.xpose.msra.mxu0 0
        %4012 = vmatpush.bf16.xpose.msra.mxu0 0
        %4013 = vmatpush.bf16.xpose.msra.mxu0 0
        %4014 = vmatpush.bf16.xpose.msra.mxu0 0
        %4015 = vmatpush.bf16.xpose.msra.mxu0 0
        %4016 = vmatpush.bf16.xpose.msra.mxu0 %v4007
        %4017 = vmatmul.bf16.gmra.mxu0 %v4004
        %v4018 = vpop.f32.mrf.mxu0
        %v4019 = vadd.f32 %v3973, %v4018
        %v4020 = vpop.f32.mrf.mxu0
        %v4021 = vadd.f32 %v3974, %v4020
        %4022 = vdwg.mxu0
        %4023 = vrot.lane.b32.xlu0 %v1479, 32
        %v4024 = vpop.permute.xlu0 %4023
        %4025 = vrot.lane.b32.xlu0 %v1484, 32
        %v4026 = vpop.permute.xlu0 %4025
        %v4028 = vsel %vm1424, %v4024, 0
        %v4031 = vsel %vm1424, %v4026, 0
        %4033 = vmatpush.bf16.xpose.msra.mxu0 0
        %4034 = vmatpush.bf16.xpose.msra.mxu0 0
        %4035 = vmatpush.bf16.xpose.msra.mxu0 0
        %4036 = vmatpush.bf16.xpose.msra.mxu0 0
        %4037 = vmatpush.bf16.xpose.msra.mxu0 0
        %4038 = vmatpush.bf16.xpose.msra.mxu0 0
        %4039 = vmatpush.bf16.xpose.msra.mxu0 0
        %4040 = vmatpush.bf16.xpose.msra.mxu0 %v4031
        %4041 = vmatmul.bf16.gmra.mxu0 %v4028
        %v4042 = vpop.f32.mrf.mxu0
        %v4043 = vadd.f32 %v3973, %v4042
        %v4044 = vpop.f32.mrf.mxu0
        %v4045 = vadd.f32 %v3974, %v4044
        %4046 = vdwg.mxu0
        %4047 = vrot.lane.b32.xlu0 %v1509, 32
        %v4048 = vpop.permute.xlu0 %4047
        %4049 = vrot.lane.b32.xlu0 %v1514, 32
        %v4050 = vpop.permute.xlu0 %4049
        %v4052 = vsel %vm1424, %v4048, 0
        %v4055 = vsel %vm1424, %v4050, 0
        %4057 = vmatpush.bf16.xpose.msra.mxu0 0
        %4058 = vmatpush.bf16.xpose.msra.mxu0 0
        %4059 = vmatpush.bf16.xpose.msra.mxu0 0
        %4060 = vmatpush.bf16.xpose.msra.mxu0 0
        %4061 = vmatpush.bf16.xpose.msra.mxu0 0
        %4062 = vmatpush.bf16.xpose.msra.mxu0 0
        %4063 = vmatpush.bf16.xpose.msra.mxu0 0
        %4064 = vmatpush.bf16.xpose.msra.mxu0 %v4055
        %4065 = vmatmul.bf16.gmra.mxu0 %v4052
        %v4066 = vpop.f32.mrf.mxu0
        %v4067 = vadd.f32 %v3973, %v4066
        %v4068 = vpop.f32.mrf.mxu0
        %v4069 = vadd.f32 %v3974, %v4068
        %4070 = vdwg.mxu0
        %4071 = vrot.lane.b32.xlu0 %v1539, 32
        %v4072 = vpop.permute.xlu0 %4071
        %4073 = vrot.lane.b32.xlu0 %v1544, 32
        %v4074 = vpop.permute.xlu0 %4073
        %v4076 = vsel %vm1424, %v4072, 0
        %v4079 = vsel %vm1424, %v4074, 0
        %4081 = vmatpush.bf16.xpose.msra.mxu0 0
        %4082 = vmatpush.bf16.xpose.msra.mxu0 0
        %4083 = vmatpush.bf16.xpose.msra.mxu0 0
        %4084 = vmatpush.bf16.xpose.msra.mxu0 0
        %4085 = vmatpush.bf16.xpose.msra.mxu0 0
        %4086 = vmatpush.bf16.xpose.msra.mxu0 0
        %4087 = vmatpush.bf16.xpose.msra.mxu0 0
        %4088 = vmatpush.bf16.xpose.msra.mxu0 %v4079
        %4089 = vmatmul.bf16.gmra.mxu0 %v4076
        %v4090 = vpop.f32.mrf.mxu0
        %v4091 = vadd.f32 %v3973, %v4090
        %v4092 = vpop.f32.mrf.mxu0
        %v4093 = vadd.f32 %v3974, %v4092
        %4094 = vdwg.mxu0
        %4095 = vrot.lane.b32.xlu0 %v1569, 32
        %v4096 = vpop.permute.xlu0 %4095
        %4097 = vrot.lane.b32.xlu0 %v1574, 32
        %v4098 = vpop.permute.xlu0 %4097
        %v4100 = vsel %vm1424, %v4096, 0
        %v4103 = vsel %vm1424, %v4098, 0
        %4105 = vmatpush.bf16.xpose.msra.mxu0 0
        %4106 = vmatpush.bf16.xpose.msra.mxu0 0
        %4107 = vmatpush.bf16.xpose.msra.mxu0 0
        %4108 = vmatpush.bf16.xpose.msra.mxu0 0
        %4109 = vmatpush.bf16.xpose.msra.mxu0 0
        %4110 = vmatpush.bf16.xpose.msra.mxu0 0
        %4111 = vmatpush.bf16.xpose.msra.mxu0 0
        %4112 = vmatpush.bf16.xpose.msra.mxu0 %v4103
        %4113 = vmatmul.bf16.gmra.mxu0 %v4100
        %v4114 = vpop.f32.mrf.mxu0
        %v4115 = vadd.f32 %v3973, %v4114
        %v4116 = vpop.f32.mrf.mxu0
        %v4117 = vadd.f32 %v3974, %v4116
        %4118 = vdwg.mxu0
        %4119 = vrot.lane.b32.xlu0 %v1599, 32
        %v4120 = vpop.permute.xlu0 %4119
        %4121 = vrot.lane.b32.xlu0 %v1604, 32
        %v4122 = vpop.permute.xlu0 %4121
        %v4124 = vsel %vm1424, %v4120, 0
        %v4127 = vsel %vm1424, %v4122, 0
        %4129 = vmatpush.bf16.xpose.msra.mxu0 0
        %4130 = vmatpush.bf16.xpose.msra.mxu0 0
        %4131 = vmatpush.bf16.xpose.msra.mxu0 0
        %4132 = vmatpush.bf16.xpose.msra.mxu0 0
        %4133 = vmatpush.bf16.xpose.msra.mxu0 0
        %4134 = vmatpush.bf16.xpose.msra.mxu0 0
        %4135 = vmatpush.bf16.xpose.msra.mxu0 0
        %4136 = vmatpush.bf16.xpose.msra.mxu0 %v4127
        %4137 = vmatmul.bf16.gmra.mxu0 %v4124
        %v4138 = vpop.f32.mrf.mxu0
        %v4139 = vadd.f32 %v3973, %v4138
        %v4140 = vpop.f32.mrf.mxu0
        %v4141 = vadd.f32 %v3974, %v4140
        %4142 = vdwg.mxu0
        %4143 = vrot.lane.b32.xlu0 %v1629, 32
        %v4144 = vpop.permute.xlu0 %4143
        %4145 = vrot.lane.b32.xlu0 %v1634, 32
        %v4146 = vpop.permute.xlu0 %4145
        %v4148 = vsel %vm1424, %v4144, 0
        %v4151 = vsel %vm1424, %v4146, 0
        %4153 = vmatpush.bf16.xpose.msra.mxu0 0
        %4154 = vmatpush.bf16.xpose.msra.mxu0 0
        %4155 = vmatpush.bf16.xpose.msra.mxu0 0
        %4156 = vmatpush.bf16.xpose.msra.mxu0 0
        %4157 = vmatpush.bf16.xpose.msra.mxu0 0
        %4158 = vmatpush.bf16.xpose.msra.mxu0 0
        %4159 = vmatpush.bf16.xpose.msra.mxu0 0
        %4160 = vmatpush.bf16.xpose.msra.mxu0 %v4151
        %4161 = vmatmul.bf16.gmra.mxu0 %v4148
        %v4162 = vpop.f32.mrf.mxu0
        %v4163 = vadd.f32 %v3973, %v4162
        %v4164 = vpop.f32.mrf.mxu0
        %v4165 = vadd.f32 %v3974, %v4164
        %4166 = vdwg.mxu0
        %v4167 = vsel %vm1655, %v3995, -inf
        %4168 = vmax.xlane.f32.xlu0 %v4167
        %v4169 = vpop.xlane.xlu0 %4168
        %v4170 = vsel %vm1655, %v3997, -inf
        %4171 = vmax.xlane.f32.xlu0 %v4170
        %v4172 = vpop.xlane.xlu0 %4171
        %v4173 = vsel %vm1655, %v4019, -inf
        %4174 = vmax.xlane.f32.xlu0 %v4173
        %v4175 = vpop.xlane.xlu0 %4174
        %v4176 = vsel %vm1655, %v4021, -inf
        %4177 = vmax.xlane.f32.xlu0 %v4176
        %v4178 = vpop.xlane.xlu0 %4177
        %v4179 = vsel %vm1655, %v4043, -inf
        %4180 = vmax.xlane.f32.xlu0 %v4179
        %v4181 = vpop.xlane.xlu0 %4180
        %v4182 = vsel %vm1655, %v4045, -inf
        %4183 = vmax.xlane.f32.xlu0 %v4182
        %v4184 = vpop.xlane.xlu0 %4183
        %v4185 = vsel %vm1655, %v4067, -inf
        %4186 = vmax.xlane.f32.xlu0 %v4185
        %v4187 = vpop.xlane.xlu0 %4186
        %v4188 = vsel %vm1655, %v4069, -inf
        %4189 = vmax.xlane.f32.xlu0 %v4188
        %v4190 = vpop.xlane.xlu0 %4189
        %v4191 = vsel %vm1655, %v4091, -inf
        %4192 = vmax.xlane.f32.xlu0 %v4191
        %v4193 = vpop.xlane.xlu0 %4192
        %v4194 = vsel %vm1655, %v4093, -inf
        %4195 = vmax.xlane.f32.xlu0 %v4194
        %v4196 = vpop.xlane.xlu0 %4195
        %v4197 = vsel %vm1655, %v4115, -inf
        %4198 = vmax.xlane.f32.xlu0 %v4197
        %v4199 = vpop.xlane.xlu0 %4198
        %v4200 = vsel %vm1655, %v4117, -inf
        %4201 = vmax.xlane.f32.xlu0 %v4200
        %v4202 = vpop.xlane.xlu0 %4201
        %v4203 = vsel %vm1655, %v4139, -inf
        %4204 = vmax.xlane.f32.xlu0 %v4203
        %v4205 = vpop.xlane.xlu0 %4204
        %v4206 = vsel %vm1655, %v4141, -inf
        %4207 = vmax.xlane.f32.xlu0 %v4206
        %v4208 = vpop.xlane.xlu0 %4207
        %v4209 = vsel %vm1655, %v4163, -inf
        %4210 = vmax.xlane.f32.xlu0 %v4209
        %v4211 = vpop.xlane.xlu0 %4210
        %v4212 = vsel %vm1655, %v4165, -inf
        %4213 = vmax.xlane.f32.xlu0 %v4212
        %v4214 = vpop.xlane.xlu0 %4213
        %v4215 = vsub.f32 %v3995, %v4169
        %v4216 = vsub.f32 %v3997, %v4172
        %v4217 = vsub.f32 %v4019, %v4175
        %v4218 = vsub.f32 %v4021, %v4178
        %v4219 = vsub.f32 %v4043, %v4181
        %v4220 = vsub.f32 %v4045, %v4184
        %v4221 = vsub.f32 %v4067, %v4187
        %v4222 = vsub.f32 %v4069, %v4190
        %v4223 = vsub.f32 %v4091, %v4193
        %v4224 = vsub.f32 %v4093, %v4196
        %v4225 = vsub.f32 %v4115, %v4199
        %v4226 = vsub.f32 %v4117, %v4202
        %v4227 = vsub.f32 %v4139, %v4205
        %v4228 = vsub.f32 %v4141, %v4208
        %v4229 = vsub.f32 %v4163, %v4211
        %v4230 = vsub.f32 %v4165, %v4214
        %v4231 = vmul.f32 %v4215, 1.442695
        %v4232 = vpow.pop %v4231
        %v4233 = vmul.f32 %v4216, 1.442695
        %v4234 = vpow.pop %v4233
        %v4235 = vmul.f32 %v4217, 1.442695
        %v4236 = vpow.pop %v4235
        %v4237 = vmul.f32 %v4218, 1.442695
        %v4238 = vpow.pop %v4237
        %v4239 = vmul.f32 %v4219, 1.442695
        %v4240 = vpow.pop %v4239
        %v4241 = vmul.f32 %v4220, 1.442695
        %v4242 = vpow.pop %v4241
        %v4243 = vmul.f32 %v4221, 1.442695
        %v4244 = vpow.pop %v4243
        %v4245 = vmul.f32 %v4222, 1.442695
        %v4246 = vpow.pop %v4245
        %v4247 = vmul.f32 %v4223, 1.442695
        %v4248 = vpow.pop %v4247
        %v4249 = vmul.f32 %v4224, 1.442695
        %v4250 = vpow.pop %v4249
        %v4251 = vmul.f32 %v4225, 1.442695
        %v4252 = vpow.pop %v4251
        %v4253 = vmul.f32 %v4226, 1.442695
        %v4254 = vpow.pop %v4253
        %v4255 = vmul.f32 %v4227, 1.442695
        %v4256 = vpow.pop %v4255
        %v4257 = vmul.f32 %v4228, 1.442695
        %v4258 = vpow.pop %v4257
        %v4259 = vmul.f32 %v4229, 1.442695
        %v4260 = vpow.pop %v4259
        %v4261 = vmul.f32 %v4230, 1.442695
        %v4262 = vpow.pop %v4261
        %v4263 = vsel %vm1655, %v4232, 0.0
        %4264 = vadd.xlane.f32.xlu0 %v4263
        %v4265 = vpop.xlane.xlu0 %4264
        %v4266 = vsel %vm1655, %v4234, 0.0
        %4267 = vadd.xlane.f32.xlu0 %v4266
        %v4268 = vpop.xlane.xlu0 %4267
        %v4269 = vsel %vm1655, %v4236, 0.0
        %4270 = vadd.xlane.f32.xlu0 %v4269
        %v4271 = vpop.xlane.xlu0 %4270
        %v4272 = vsel %vm1655, %v4238, 0.0
        %4273 = vadd.xlane.f32.xlu0 %v4272
        %v4274 = vpop.xlane.xlu0 %4273
        %v4275 = vsel %vm1655, %v4240, 0.0
        %4276 = vadd.xlane.f32.xlu0 %v4275
        %v4277 = vpop.xlane.xlu0 %4276
        %v4278 = vsel %vm1655, %v4242, 0.0
        %4279 = vadd.xlane.f32.xlu0 %v4278
        %v4280 = vpop.xlane.xlu0 %4279
        %v4281 = vsel %vm1655, %v4244, 0.0
        %4282 = vadd.xlane.f32.xlu0 %v4281
        %v4283 = vpop.xlane.xlu0 %4282
        %v4284 = vsel %vm1655, %v4246, 0.0
        %4285 = vadd.xlane.f32.xlu0 %v4284
        %v4286 = vpop.xlane.xlu0 %4285
        %v4287 = vsel %vm1655, %v4248, 0.0
        %4288 = vadd.xlane.f32.xlu0 %v4287
        %v4289 = vpop.xlane.xlu0 %4288
        %v4290 = vsel %vm1655, %v4250, 0.0
        %4291 = vadd.xlane.f32.xlu0 %v4290
        %v4292 = vpop.xlane.xlu0 %4291
        %v4293 = vsel %vm1655, %v4252, 0.0
        %4294 = vadd.xlane.f32.xlu0 %v4293
        %v4295 = vpop.xlane.xlu0 %4294
        %v4296 = vsel %vm1655, %v4254, 0.0
        %4297 = vadd.xlane.f32.xlu0 %v4296
        %v4298 = vpop.xlane.xlu0 %4297
        %v4299 = vsel %vm1655, %v4256, 0.0
        %4300 = vadd.xlane.f32.xlu0 %v4299
        %v4301 = vpop.xlane.xlu0 %4300
        %v4302 = vsel %vm1655, %v4258, 0.0
        %4303 = vadd.xlane.f32.xlu0 %v4302
        %v4304 = vpop.xlane.xlu0 %4303
        %v4305 = vsel %vm1655, %v4260, 0.0
        %4306 = vadd.xlane.f32.xlu0 %v4305
        %v4307 = vpop.xlane.xlu0 %4306
        %v4308 = vsel %vm1655, %v4262, 0.0
        %4309 = vadd.xlane.f32.xlu0 %v4308
        %v4310 = vpop.xlane.xlu0 %4309
        %v4311 = vpack.c.bf16 %v4232, %v4232
        %v4312 = vpack.c.bf16 %v4234, %v4234
        %v4313 = vpack.c.bf16 %v4236, %v4236
        %v4314 = vpack.c.bf16 %v4238, %v4238
        %v4315 = vpack.c.bf16 %v4240, %v4240
        %v4316 = vpack.c.bf16 %v4242, %v4242
        %v4317 = vpack.c.bf16 %v4244, %v4244
        %v4318 = vpack.c.bf16 %v4246, %v4246
        %v4319 = vpack.c.bf16 %v4248, %v4248
        %v4320 = vpack.c.bf16 %v4250, %v4250
        %v4321 = vpack.c.bf16 %v4252, %v4252
        %v4322 = vpack.c.bf16 %v4254, %v4254
        %v4323 = vpack.c.bf16 %v4256, %v4256
        %v4324 = vpack.c.bf16 %v4258, %v4258
        %v4325 = vpack.c.bf16 %v4260, %v4260
        %v4326 = vpack.c.bf16 %v4262, %v4262
        %v4327 = vrot.slane %v1379, 4
        %v4328 = vrot.slane %v1381, 4
        %v4331 = vunpack.c.l.b16 %v4311
        %v4332 = vunpack.c.l.b16 %v4312
        %v4333 = vpack.c.b16 %v4332, %v4331
        %v4334 = vunpack.c.l.b16 %v4327
        %v4335 = vunpack.c.l.b16 %v4328
        %v4336 = vpack.c.b16 %v4335, %v4334
        %v4339 = vsel %vm1655, %v4333, 0
        %4341 = vmatpush.bf16.msra.mxu0 0
        %4342 = vmatpush.bf16.msra.mxu0 0
        %4343 = vmatpush.bf16.msra.mxu0 0
        %4344 = vmatpush.bf16.msra.mxu0 0
        %4345 = vmatpush.bf16.msra.mxu0 0
        %4346 = vmatpush.bf16.msra.mxu0 0
        %4347 = vmatpush.bf16.msra.mxu0 0
        %4348 = vmatpush.bf16.msra.mxu0 %v4336
        %4349 = vmatmul.bf16.gmra.mxu0 %v4339
        %v4350 = vpop.f32.mrf.mxu0
        %v4351 = vadd.f32 0.0, %v4350
        %v4352 = vpop.f32.mrf.mxu0
        %v4353 = vadd.f32 0.0, %v4352
        %4354 = vdwg.mxu0
        %v4355 = vrot.slane %v1383, 4
        %v4356 = vrot.slane %v1385, 4
        %v4359 = vunpack.c.l.b16 %v4313
        %v4360 = vunpack.c.l.b16 %v4314
        %v4361 = vpack.c.b16 %v4360, %v4359
        %v4362 = vunpack.c.l.b16 %v4355
        %v4363 = vunpack.c.l.b16 %v4356
        %v4364 = vpack.c.b16 %v4363, %v4362
        %v4367 = vsel %vm1655, %v4361, 0
        %4369 = vmatpush.bf16.msra.mxu0 0
        %4370 = vmatpush.bf16.msra.mxu0 0
        %4371 = vmatpush.bf16.msra.mxu0 0
        %4372 = vmatpush.bf16.msra.mxu0 0
        %4373 = vmatpush.bf16.msra.mxu0 0
        %4374 = vmatpush.bf16.msra.mxu0 0
        %4375 = vmatpush.bf16.msra.mxu0 0
        %4376 = vmatpush.bf16.msra.mxu0 %v4364
        %4377 = vmatmul.bf16.gmra.mxu0 %v4367
        %v4378 = vpop.f32.mrf.mxu0
        %v4379 = vadd.f32 0.0, %v4378
        %v4380 = vpop.f32.mrf.mxu0
        %v4381 = vadd.f32 0.0, %v4380
        %4382 = vdwg.mxu0
        %v4383 = vrot.slane %v1387, 4
        %v4384 = vrot.slane %v1389, 4
        %v4387 = vunpack.c.l.b16 %v4315
        %v4388 = vunpack.c.l.b16 %v4316
        %v4389 = vpack.c.b16 %v4388, %v4387
        %v4390 = vunpack.c.l.b16 %v4383
        %v4391 = vunpack.c.l.b16 %v4384
        %v4392 = vpack.c.b16 %v4391, %v4390
        %v4395 = vsel %vm1655, %v4389, 0
        %4397 = vmatpush.bf16.msra.mxu0 0
        %4398 = vmatpush.bf16.msra.mxu0 0
        %4399 = vmatpush.bf16.msra.mxu0 0
        %4400 = vmatpush.bf16.msra.mxu0 0
        %4401 = vmatpush.bf16.msra.mxu0 0
        %4402 = vmatpush.bf16.msra.mxu0 0
        %4403 = vmatpush.bf16.msra.mxu0 0
        %4404 = vmatpush.bf16.msra.mxu0 %v4392
        %4405 = vmatmul.bf16.gmra.mxu0 %v4395
        %v4406 = vpop.f32.mrf.mxu0
        %v4407 = vadd.f32 0.0, %v4406
        %v4408 = vpop.f32.mrf.mxu0
        %v4409 = vadd.f32 0.0, %v4408
        %4410 = vdwg.mxu0
        %v4411 = vrot.slane %v1391, 4
        %v4412 = vrot.slane %v1393, 4
        %v4415 = vunpack.c.l.b16 %v4317
        %v4416 = vunpack.c.l.b16 %v4318
        %v4417 = vpack.c.b16 %v4416, %v4415
        %v4418 = vunpack.c.l.b16 %v4411
        %v4419 = vunpack.c.l.b16 %v4412
        %v4420 = vpack.c.b16 %v4419, %v4418
        %v4423 = vsel %vm1655, %v4417, 0
        %4425 = vmatpush.bf16.msra.mxu0 0
        %4426 = vmatpush.bf16.msra.mxu0 0
        %4427 = vmatpush.bf16.msra.mxu0 0
        %4428 = vmatpush.bf16.msra.mxu0 0
        %4429 = vmatpush.bf16.msra.mxu0 0
        %4430 = vmatpush.bf16.msra.mxu0 0
        %4431 = vmatpush.bf16.msra.mxu0 0
        %4432 = vmatpush.bf16.msra.mxu0 %v4420
        %4433 = vmatmul.bf16.gmra.mxu0 %v4423
        %v4434 = vpop.f32.mrf.mxu0
        %v4435 = vadd.f32 0.0, %v4434
        %v4436 = vpop.f32.mrf.mxu0
        %v4437 = vadd.f32 0.0, %v4436
        %4438 = vdwg.mxu0
        %v4439 = vrot.slane %v1395, 4
        %v4440 = vrot.slane %v1397, 4
        %v4443 = vunpack.c.l.b16 %v4319
        %v4444 = vunpack.c.l.b16 %v4320
        %v4445 = vpack.c.b16 %v4444, %v4443
        %v4446 = vunpack.c.l.b16 %v4439
        %v4447 = vunpack.c.l.b16 %v4440
        %v4448 = vpack.c.b16 %v4447, %v4446
        %v4451 = vsel %vm1655, %v4445, 0
        %4453 = vmatpush.bf16.msra.mxu0 0
        %4454 = vmatpush.bf16.msra.mxu0 0
        %4455 = vmatpush.bf16.msra.mxu0 0
        %4456 = vmatpush.bf16.msra.mxu0 0
        %4457 = vmatpush.bf16.msra.mxu0 0
        %4458 = vmatpush.bf16.msra.mxu0 0
        %4459 = vmatpush.bf16.msra.mxu0 0
        %4460 = vmatpush.bf16.msra.mxu0 %v4448
        %4461 = vmatmul.bf16.gmra.mxu0 %v4451
        %v4462 = vpop.f32.mrf.mxu0
        %v4463 = vadd.f32 0.0, %v4462
        %v4464 = vpop.f32.mrf.mxu0
        %v4465 = vadd.f32 0.0, %v4464
        %4466 = vdwg.mxu0
        %v4467 = vrot.slane %v1399, 4
        %v4468 = vrot.slane %v1401, 4
        %v4471 = vunpack.c.l.b16 %v4321
        %v4472 = vunpack.c.l.b16 %v4322
        %v4473 = vpack.c.b16 %v4472, %v4471
        %v4474 = vunpack.c.l.b16 %v4467
        %v4475 = vunpack.c.l.b16 %v4468
        %v4476 = vpack.c.b16 %v4475, %v4474
        %v4479 = vsel %vm1655, %v4473, 0
        %4481 = vmatpush.bf16.msra.mxu0 0
        %4482 = vmatpush.bf16.msra.mxu0 0
        %4483 = vmatpush.bf16.msra.mxu0 0
        %4484 = vmatpush.bf16.msra.mxu0 0
        %4485 = vmatpush.bf16.msra.mxu0 0
        %4486 = vmatpush.bf16.msra.mxu0 0
        %4487 = vmatpush.bf16.msra.mxu0 0
        %4488 = vmatpush.bf16.msra.mxu0 %v4476
        %4489 = vmatmul.bf16.gmra.mxu0 %v4479
        %v4490 = vpop.f32.mrf.mxu0
        %v4491 = vadd.f32 0.0, %v4490
        %v4492 = vpop.f32.mrf.mxu0
        %v4493 = vadd.f32 0.0, %v4492
        %4494 = vdwg.mxu0
        %v4495 = vrot.slane %v1403, 4
        %v4496 = vrot.slane %v1405, 4
        %v4499 = vunpack.c.l.b16 %v4323
        %v4500 = vunpack.c.l.b16 %v4324
        %v4501 = vpack.c.b16 %v4500, %v4499
        %v4502 = vunpack.c.l.b16 %v4495
        %v4503 = vunpack.c.l.b16 %v4496
        %v4504 = vpack.c.b16 %v4503, %v4502
        %v4507 = vsel %vm1655, %v4501, 0
        %4509 = vmatpush.bf16.msra.mxu0 0
        %4510 = vmatpush.bf16.msra.mxu0 0
        %4511 = vmatpush.bf16.msra.mxu0 0
        %4512 = vmatpush.bf16.msra.mxu0 0
        %4513 = vmatpush.bf16.msra.mxu0 0
        %4514 = vmatpush.bf16.msra.mxu0 0
        %4515 = vmatpush.bf16.msra.mxu0 0
        %4516 = vmatpush.bf16.msra.mxu0 %v4504
        %4517 = vmatmul.bf16.gmra.mxu0 %v4507
        %v4518 = vpop.f32.mrf.mxu0
        %v4519 = vadd.f32 0.0, %v4518
        %v4520 = vpop.f32.mrf.mxu0
        %v4521 = vadd.f32 0.0, %v4520
        %4522 = vdwg.mxu0
        %v4523 = vrot.slane %v1407, 4
        %v4524 = vrot.slane %v1409, 4
        %v4527 = vunpack.c.l.b16 %v4325
        %v4528 = vunpack.c.l.b16 %v4326
        %v4529 = vpack.c.b16 %v4528, %v4527
        %v4530 = vunpack.c.l.b16 %v4523
        %v4531 = vunpack.c.l.b16 %v4524
        %v4532 = vpack.c.b16 %v4531, %v4530
        %v4535 = vsel %vm1655, %v4529, 0
        %4537 = vmatpush.bf16.msra.mxu0 0
        %4538 = vmatpush.bf16.msra.mxu0 0
        %4539 = vmatpush.bf16.msra.mxu0 0
        %4540 = vmatpush.bf16.msra.mxu0 0
        %4541 = vmatpush.bf16.msra.mxu0 0
        %4542 = vmatpush.bf16.msra.mxu0 0
        %4543 = vmatpush.bf16.msra.mxu0 0
        %4544 = vmatpush.bf16.msra.mxu0 %v4532
        %4545 = vmatmul.bf16.gmra.mxu0 %v4535
        %v4546 = vpop.f32.mrf.mxu0
        %v4547 = vadd.f32 0.0, %v4546
        %v4548 = vpop.f32.mrf.mxu0
        %v4549 = vadd.f32 0.0, %v4548
        %4550 = vdwg.mxu0
        %v4551 = vrcp.pop %v4265
        %v4552 = vmul.f32 %v4265, %v4551
        %v4553 = vsub.f32 1.0, %v4552
        %v4554 = vmul.f32 %v4551, %v4553
        %v4555 = vadd.f32 %v4551, %v4554
        %vm4556 = vweird.f32 %v4265
        %vm4557 = vweird.f32 %v4551
        %vm4558 = vmor %vm4556, %vm4557
        %v4559 = vsel %vm4558, %v4551, %v4555
        %v4560 = vand.u32 2147483647, %v4265
        %vm4561 = vcmp.eq.f32.partialorder %v4560, 8.507059e+37
        %v4562 = vand.u32 %v4265, 2147483648
        %v4563 = vor.u32 1.1754944e-38, %v4562
        %v4564 = vsel %vm4561, %v4563, %v4559
        %v4565 = vrcp.pop %v4268
        %v4566 = vmul.f32 %v4268, %v4565
        %v4567 = vsub.f32 1.0, %v4566
        %v4568 = vmul.f32 %v4565, %v4567
        %v4569 = vadd.f32 %v4565, %v4568
        %vm4570 = vweird.f32 %v4268
        %vm4571 = vweird.f32 %v4565
        %vm4572 = vmor %vm4570, %vm4571
        %v4573 = vsel %vm4572, %v4565, %v4569
        %v4574 = vand.u32 2147483647, %v4268
        %vm4575 = vcmp.eq.f32.partialorder %v4574, 8.507059e+37
        %v4576 = vand.u32 %v4268, 2147483648
        %v4577 = vor.u32 1.1754944e-38, %v4576
        %v4578 = vsel %vm4575, %v4577, %v4573
        %v4579 = vrcp.pop %v4271
        %v4580 = vmul.f32 %v4271, %v4579
        %v4581 = vsub.f32 1.0, %v4580
        %v4582 = vmul.f32 %v4579, %v4581
        %v4583 = vadd.f32 %v4579, %v4582
        %vm4584 = vweird.f32 %v4271
        %vm4585 = vweird.f32 %v4579
        %vm4586 = vmor %vm4584, %vm4585
        %v4587 = vsel %vm4586, %v4579, %v4583
        %v4588 = vand.u32 2147483647, %v4271
        %vm4589 = vcmp.eq.f32.partialorder %v4588, 8.507059e+37
        %v4590 = vand.u32 %v4271, 2147483648
        %v4591 = vor.u32 1.1754944e-38, %v4590
        %v4592 = vsel %vm4589, %v4591, %v4587
        %v4593 = vrcp.pop %v4274
        %v4594 = vmul.f32 %v4274, %v4593
        %v4595 = vsub.f32 1.0, %v4594
        %v4596 = vmul.f32 %v4593, %v4595
        %v4597 = vadd.f32 %v4593, %v4596
        %vm4598 = vweird.f32 %v4274
        %vm4599 = vweird.f32 %v4593
        %vm4600 = vmor %vm4598, %vm4599
        %v4601 = vsel %vm4600, %v4593, %v4597
        %v4602 = vand.u32 2147483647, %v4274
        %vm4603 = vcmp.eq.f32.partialorder %v4602, 8.507059e+37
        %v4604 = vand.u32 %v4274, 2147483648
        %v4605 = vor.u32 1.1754944e-38, %v4604
        %v4606 = vsel %vm4603, %v4605, %v4601
        %v4607 = vrcp.pop %v4277
        %v4608 = vmul.f32 %v4277, %v4607
        %v4609 = vsub.f32 1.0, %v4608
        %v4610 = vmul.f32 %v4607, %v4609
        %v4611 = vadd.f32 %v4607, %v4610
        %vm4612 = vweird.f32 %v4277
        %vm4613 = vweird.f32 %v4607
        %vm4614 = vmor %vm4612, %vm4613
        %v4615 = vsel %vm4614, %v4607, %v4611
        %v4616 = vand.u32 2147483647, %v4277
        %vm4617 = vcmp.eq.f32.partialorder %v4616, 8.507059e+37
        %v4618 = vand.u32 %v4277, 2147483648
        %v4619 = vor.u32 1.1754944e-38, %v4618
        %v4620 = vsel %vm4617, %v4619, %v4615
        %v4621 = vrcp.pop %v4280
        %v4622 = vmul.f32 %v4280, %v4621
        %v4623 = vsub.f32 1.0, %v4622
        %v4624 = vmul.f32 %v4621, %v4623
        %v4625 = vadd.f32 %v4621, %v4624
        %vm4626 = vweird.f32 %v4280
        %vm4627 = vweird.f32 %v4621
        %vm4628 = vmor %vm4626, %vm4627
        %v4629 = vsel %vm4628, %v4621, %v4625
        %v4630 = vand.u32 2147483647, %v4280
        %vm4631 = vcmp.eq.f32.partialorder %v4630, 8.507059e+37
        %v4632 = vand.u32 %v4280, 2147483648
        %v4633 = vor.u32 1.1754944e-38, %v4632
        %v4634 = vsel %vm4631, %v4633, %v4629
        %v4635 = vrcp.pop %v4283
        %v4636 = vmul.f32 %v4283, %v4635
        %v4637 = vsub.f32 1.0, %v4636
        %v4638 = vmul.f32 %v4635, %v4637
        %v4639 = vadd.f32 %v4635, %v4638
        %vm4640 = vweird.f32 %v4283
        %vm4641 = vweird.f32 %v4635
        %vm4642 = vmor %vm4640, %vm4641
        %v4643 = vsel %vm4642, %v4635, %v4639
        %v4644 = vand.u32 2147483647, %v4283
        %vm4645 = vcmp.eq.f32.partialorder %v4644, 8.507059e+37
        %v4646 = vand.u32 %v4283, 2147483648
        %v4647 = vor.u32 1.1754944e-38, %v4646
        %v4648 = vsel %vm4645, %v4647, %v4643
        %v4649 = vrcp.pop %v4286
        %v4650 = vmul.f32 %v4286, %v4649
        %v4651 = vsub.f32 1.0, %v4650
        %v4652 = vmul.f32 %v4649, %v4651
        %v4653 = vadd.f32 %v4649, %v4652
        %vm4654 = vweird.f32 %v4286
        %vm4655 = vweird.f32 %v4649
        %vm4656 = vmor %vm4654, %vm4655
        %v4657 = vsel %vm4656, %v4649, %v4653
        %v4658 = vand.u32 2147483647, %v4286
        %vm4659 = vcmp.eq.f32.partialorder %v4658, 8.507059e+37
        %v4660 = vand.u32 %v4286, 2147483648
        %v4661 = vor.u32 1.1754944e-38, %v4660
        %v4662 = vsel %vm4659, %v4661, %v4657
        %v4663 = vrcp.pop %v4289
        %v4664 = vmul.f32 %v4289, %v4663
        %v4665 = vsub.f32 1.0, %v4664
        %v4666 = vmul.f32 %v4663, %v4665
        %v4667 = vadd.f32 %v4663, %v4666
        %vm4668 = vweird.f32 %v4289
        %vm4669 = vweird.f32 %v4663
        %vm4670 = vmor %vm4668, %vm4669
        %v4671 = vsel %vm4670, %v4663, %v4667
        %v4672 = vand.u32 2147483647, %v4289
        %vm4673 = vcmp.eq.f32.partialorder %v4672, 8.507059e+37
        %v4674 = vand.u32 %v4289, 2147483648
        %v4675 = vor.u32 1.1754944e-38, %v4674
        %v4676 = vsel %vm4673, %v4675, %v4671
        %v4677 = vrcp.pop %v4292
        %v4678 = vmul.f32 %v4292, %v4677
        %v4679 = vsub.f32 1.0, %v4678
        %v4680 = vmul.f32 %v4677, %v4679
        %v4681 = vadd.f32 %v4677, %v4680
        %vm4682 = vweird.f32 %v4292
        %vm4683 = vweird.f32 %v4677
        %vm4684 = vmor %vm4682, %vm4683
        %v4685 = vsel %vm4684, %v4677, %v4681
        %v4686 = vand.u32 2147483647, %v4292
        %vm4687 = vcmp.eq.f32.partialorder %v4686, 8.507059e+37
        %v4688 = vand.u32 %v4292, 2147483648
        %v4689 = vor.u32 1.1754944e-38, %v4688
        %v4690 = vsel %vm4687, %v4689, %v4685
        %v4691 = vrcp.pop %v4295
        %v4692 = vmul.f32 %v4295, %v4691
        %v4693 = vsub.f32 1.0, %v4692
        %v4694 = vmul.f32 %v4691, %v4693
        %v4695 = vadd.f32 %v4691, %v4694
        %vm4696 = vweird.f32 %v4295
        %vm4697 = vweird.f32 %v4691
        %vm4698 = vmor %vm4696, %vm4697
        %v4699 = vsel %vm4698, %v4691, %v4695
        %v4700 = vand.u32 2147483647, %v4295
        %vm4701 = vcmp.eq.f32.partialorder %v4700, 8.507059e+37
        %v4702 = vand.u32 %v4295, 2147483648
        %v4703 = vor.u32 1.1754944e-38, %v4702
        %v4704 = vsel %vm4701, %v4703, %v4699
        %v4705 = vrcp.pop %v4298
        %v4706 = vmul.f32 %v4298, %v4705
        %v4707 = vsub.f32 1.0, %v4706
        %v4708 = vmul.f32 %v4705, %v4707
        %v4709 = vadd.f32 %v4705, %v4708
        %vm4710 = vweird.f32 %v4298
        %vm4711 = vweird.f32 %v4705
        %vm4712 = vmor %vm4710, %vm4711
        %v4713 = vsel %vm4712, %v4705, %v4709
        %v4714 = vand.u32 2147483647, %v4298
        %vm4715 = vcmp.eq.f32.partialorder %v4714, 8.507059e+37
        %v4716 = vand.u32 %v4298, 2147483648
        %v4717 = vor.u32 1.1754944e-38, %v4716
        %v4718 = vsel %vm4715, %v4717, %v4713
        %v4719 = vrcp.pop %v4301
        %v4720 = vmul.f32 %v4301, %v4719
        %v4721 = vsub.f32 1.0, %v4720
        %v4722 = vmul.f32 %v4719, %v4721
        %v4723 = vadd.f32 %v4719, %v4722
        %vm4724 = vweird.f32 %v4301
        %vm4725 = vweird.f32 %v4719
        %vm4726 = vmor %vm4724, %vm4725
        %v4727 = vsel %vm4726, %v4719, %v4723
        %v4728 = vand.u32 2147483647, %v4301
        %vm4729 = vcmp.eq.f32.partialorder %v4728, 8.507059e+37
        %v4730 = vand.u32 %v4301, 2147483648
        %v4731 = vor.u32 1.1754944e-38, %v4730
        %v4732 = vsel %vm4729, %v4731, %v4727
        %v4733 = vrcp.pop %v4304
        %v4734 = vmul.f32 %v4304, %v4733
        %v4735 = vsub.f32 1.0, %v4734
        %v4736 = vmul.f32 %v4733, %v4735
        %v4737 = vadd.f32 %v4733, %v4736
        %vm4738 = vweird.f32 %v4304
        %vm4739 = vweird.f32 %v4733
        %vm4740 = vmor %vm4738, %vm4739
        %v4741 = vsel %vm4740, %v4733, %v4737
        %v4742 = vand.u32 2147483647, %v4304
        %vm4743 = vcmp.eq.f32.partialorder %v4742, 8.507059e+37
        %v4744 = vand.u32 %v4304, 2147483648
        %v4745 = vor.u32 1.1754944e-38, %v4744
        %v4746 = vsel %vm4743, %v4745, %v4741
        %v4747 = vrcp.pop %v4307
        %v4748 = vmul.f32 %v4307, %v4747
        %v4749 = vsub.f32 1.0, %v4748
        %v4750 = vmul.f32 %v4747, %v4749
        %v4751 = vadd.f32 %v4747, %v4750
        %vm4752 = vweird.f32 %v4307
        %vm4753 = vweird.f32 %v4747
        %vm4754 = vmor %vm4752, %vm4753
        %v4755 = vsel %vm4754, %v4747, %v4751
        %v4756 = vand.u32 2147483647, %v4307
        %vm4757 = vcmp.eq.f32.partialorder %v4756, 8.507059e+37
        %v4758 = vand.u32 %v4307, 2147483648
        %v4759 = vor.u32 1.1754944e-38, %v4758
        %v4760 = vsel %vm4757, %v4759, %v4755
        %v4761 = vrcp.pop %v4310
        %v4762 = vmul.f32 %v4310, %v4761
        %v4763 = vsub.f32 1.0, %v4762
        %v4764 = vmul.f32 %v4761, %v4763
        %v4765 = vadd.f32 %v4761, %v4764
        %vm4766 = vweird.f32 %v4310
        %vm4767 = vweird.f32 %v4761
        %vm4768 = vmor %vm4766, %vm4767
        %v4769 = vsel %vm4768, %v4761, %v4765
        %v4770 = vand.u32 2147483647, %v4310
        %vm4771 = vcmp.eq.f32.partialorder %v4770, 8.507059e+37
        %v4772 = vand.u32 %v4310, 2147483648
        %v4773 = vor.u32 1.1754944e-38, %v4772
        %v4774 = vsel %vm4771, %v4773, %v4769
        %v4775 = vmul.f32 %v4351, %v4564
        %v4776 = vmul.f32 %v4353, %v4578
        %v4777 = vmul.f32 %v4379, %v4592
        %v4778 = vmul.f32 %v4381, %v4606
        %v4779 = vmul.f32 %v4407, %v4620
        %v4780 = vmul.f32 %v4409, %v4634
        %v4781 = vmul.f32 %v4435, %v4648
        %v4782 = vmul.f32 %v4437, %v4662
        %v4783 = vmul.f32 %v4463, %v4676
        %v4784 = vmul.f32 %v4465, %v4690
        %v4785 = vmul.f32 %v4491, %v4704
        %v4786 = vmul.f32 %v4493, %v4718
        %v4787 = vmul.f32 %v4519, %v4732
        %v4788 = vmul.f32 %v4521, %v4746
        %v4789 = vmul.f32 %v4547, %v4760
        %v4790 = vmul.f32 %v4549, %v4774
        %v4791 = vadd.f32 %v3954, %v4775
        %v4792 = vadd.f32 %v3955, %v4776
        %v4793 = vadd.f32 %v3956, %v4777
        %v4794 = vadd.f32 %v3957, %v4778
        %v4795 = vadd.f32 %v3958, %v4779
        %v4796 = vadd.f32 %v3959, %v4780
        %v4797 = vadd.f32 %v3960, %v4781
        %v4798 = vadd.f32 %v3961, %v4782
        %v4799 = vadd.f32 %v3962, %v4783
        %v4800 = vadd.f32 %v3963, %v4784
        %v4801 = vadd.f32 %v3964, %v4785
        %v4802 = vadd.f32 %v3965, %v4786
        %v4803 = vadd.f32 %v3966, %v4787
        %v4804 = vadd.f32 %v3967, %v4788
        %v4805 = vadd.f32 %v3968, %v4789
        %v4806 = vadd.f32 %v3969, %v4790
        %v4807 = vld [vmem:[%s4] sm:$0x1]
        %v4809 = vperm.slane %v4807, 0
        %v4811 = vadd.f32 %v4791, %v4809
        %v4812 = vadd.f32 %v4792, %v4809
        %v4813 = vadd.f32 %v4793, %v4809
        %v4814 = vadd.f32 %v4794, %v4809
        %v4815 = vadd.f32 %v4795, %v4809
        %v4816 = vadd.f32 %v4796, %v4809
        %v4817 = vadd.f32 %v4797, %v4809
        %v4818 = vadd.f32 %v4798, %v4809
        %v4819 = vadd.f32 %v4799, %v4809
        %v4820 = vadd.f32 %v4800, %v4809
        %v4821 = vadd.f32 %v4801, %v4809
        %v4822 = vadd.f32 %v4802, %v4809
        %v4823 = vadd.f32 %v4803, %v4809
        %v4824 = vadd.f32 %v4804, %v4809
        %v4825 = vadd.f32 %v4805, %v4809
        %v4826 = vadd.f32 %v4806, %v4809
        %v4827 = vmul.f32 %v4811, %v1362
        %v4828 = vmul.f32 %v4812, %v1363
        %v4829 = vmul.f32 %v4813, %v1364
        %v4830 = vmul.f32 %v4814, %v1365
        %v4831 = vmul.f32 %v4815, %v1366
        %v4832 = vmul.f32 %v4816, %v1367
        %v4833 = vmul.f32 %v4817, %v1368
        %v4834 = vmul.f32 %v4818, %v1369
        %v4835 = vmul.f32 %v4819, %v1370
        %v4836 = vmul.f32 %v4820, %v1371
        %v4837 = vmul.f32 %v4821, %v1372
        %v4838 = vmul.f32 %v4822, %v1373
        %v4839 = vmul.f32 %v4823, %v1374
        %v4840 = vmul.f32 %v4824, %v1375
        %v4841 = vmul.f32 %v4825, %v1376
        %v4842 = vmul.f32 %v4826, %v1377
        %4843 = vst [vmem:[%s320] sm:$0xff] %v4827
        %4844 = vst [vmem:[%s320 + $0x8] sm:$0xff] %v4828
        %4845 = vst [vmem:[%s320 + $0x10] sm:$0xff] %v4829
        %4846 = vst [vmem:[%s320 + $0x18] sm:$0xff] %v4830
        %4847 = vst [vmem:[%s320 + $0x20] sm:$0xff] %v4831
        %4848 = vst [vmem:[%s320 + $0x28] sm:$0xff] %v4832
        %4849 = vst [vmem:[%s320 + $0x30] sm:$0xff] %v4833
        %4850 = vst [vmem:[%s320 + $0x38] sm:$0xff] %v4834
        %4851 = vst [vmem:[%s320 + $0x40] sm:$0xff] %v4835
        %4852 = vst [vmem:[%s320 + $0x48] sm:$0xff] %v4836
        %4853 = vst [vmem:[%s320 + $0x50] sm:$0xff] %v4837
        %4854 = vst [vmem:[%s320 + $0x58] sm:$0xff] %v4838
        %4855 = vst [vmem:[%s320 + $0x60] sm:$0xff] %v4839
        %4856 = vst [vmem:[%s320 + $0x68] sm:$0xff] %v4840
        %4857 = vst [vmem:[%s320 + $0x70] sm:$0xff] %v4841
        %4858 = vst [vmem:[%s320 + $0x78] sm:$0xff] %v4842
        %s4859 = sand.u32 %s164, 1
        %s4860 = scalar_lea.sflag [#allocation4], %s4859
        %s4861 = sand.u32 %s164, 1
        %s4862 = smul.addr %s4861, 128
        %s4863 = scalar_lea.vmem [#allocation10], %s4862
        // Predicated region
        $region61: #{tpu_custom_call.1} parent=43 // pred_check
          %p4864 = pneg %p174
        $region62: #{tpu_custom_call.1} parent=43 // pred_check_branch
          %4866 = sbr.rel (%p4864) target = $region64
        $region63: #{tpu_custom_call.1} parent=43 // pred_region
          %s4867 = smul.u32 8, %s25
          %4869 = vsyncadd %s4860, 0
          %s4870 = smul.addr %s4867, 2
          %s4871 = smul.addr %s4870, 8
          %s4872 = scalar_lea.hbm %s6, %s4871
          %s4873 = sshll.u32 %s4863, 4
          %s4874 = int_to_ptr.vmem [resolvable:$true] %s4873
          %s4875 = sshll.u32 %s4872, 4
          %s4876 = int_to_ptr.hbm [resolvable:$true] %s4875
          %4881 = dma.vmem_to_hbm [thread:$0]  %s4874, 2048, %s4876, %s4860, 128, 128, 8
        $region64: #{tpu_custom_call.1} parent=43 // pred_fallthru
          _
      $region44: #{tpu_custom_call.1} parent=5 // pred_fallthru
        _
      %p4882 = scmp.le.s32.totalorder 2, %s20
      // Predicated region
      $region65: #{tpu_custom_call.1} parent=5 // pred_check
        %p4883 = pneg %p4882
      $region66: #{tpu_custom_call.1} parent=5 // pred_check_branch
        %4885 = sbr.rel (%p4883) target = $region68
      $region67: #{tpu_custom_call.1} parent=5 // pred_region
        %s4886 = ssub.s32 %s20, 2
        // Predicated region
        $region69: #{tpu_custom_call.1} parent=67 // pred_check
          %p4887 = pneg %p180
        $region70: #{tpu_custom_call.1} parent=67 // pred_check_branch
          %4889 = sbr.rel (%p4887) target = $region72
        $region71: #{tpu_custom_call.1} parent=67 // pred_region
          %s4890 = sand.u32 %s165, 1
          %s4891 = scalar_lea.sflag [#allocation4], %s4890
          %s4892 = sand.u32 %s165, 1
          %s4893 = smul.addr %s4892, 128
          %s4894 = scalar_lea.vmem [#allocation10], %s4893
          %4896 = dma.done %s4891, 2048
        $region72: #{tpu_custom_call.1} parent=67 // pred_fallthru
          _
      $region68: #{tpu_custom_call.1} parent=5 // pred_fallthru
        _
    $region6: #{tpu_custom_call.1} parent=1 // loop_footer
      %s24 = sadd.s32 1, %s20
    $region7: #{tpu_custom_call.1} parent=1 // loop_footer_branch
      %19 = sbr.rel target = $region3
    $region8: #{tpu_custom_call.1} parent=1 // loop_exit
      _
    %4897 = vsyncpa [#allocation3], 1
    %s4898 = scalar_lea.sflag [#allocation3], 1
    %4899 = vsyncpa %s4898, 1
    %4900 = vsyncpa [#allocation6], 1
    %4901 = vsyncpa [#allocation9], 1
    %4902 = vsyncpa [#allocation4], 1
    %s4903 = scalar_lea.sflag [#allocation4], 1
    %4904 = vsyncpa %s4903, 1

// kernel: tpu_custom_call.1
$region0: #{tpu_custom_call.1}
  #allocation0 [shape = 'u32[]', space=smem, size = 0x4, offset = 0x4, fixed_abs, tag = 'smem constant byte address 0x4 - core index']
  #allocation1 [shape = 'u32[72,128]{1,0:T(1,128)}', space=vmem, size = 0x9000, scoped, tag = 'internal scratch']
  %s0 = inlined_call_operand.hbm [shape: f32[16,16,128], index: 0, kind: input, shape index: {}]
  %s1 = inlined_call_operand.hbm [shape: f32[1,128], index: 1, kind: input, shape index: {}]
  %s2 = inlined_call_operand.hbm [shape: bf16[128,896], index: 2, kind: input, shape index: {}]
  %s3 = inlined_call_operand.vmem [shape: f32[1,128], index: 3, kind: input, shape index: {}]
  %s4 = inlined_call_operand.vmem [shape: f32[1,128], index: 4, kind: input, shape index: {}]
  %s5 = inlined_call_operand.hbm [shape: bf16[4,16,16], index: 5, kind: input, shape index: {}]
  %s6 = inlined_call_operand.hbm [shape: f32[16,16,128], index: 6, kind: output, shape index: {}]
  %s7 = sld [smem:[#allocation0]]
  $region73: #{tpu_custom_call.1} parent=0
    _
  %s9 = ssub.s32 1, %s7
  %s10 = scalar_select 0, %s9, %s7
  $region1: #{tpu_custom_call.1} parent=0
    #allocation2 [shape = 'u8[131072]{0}', space=vmem, size = 0x20000, scoped, tag = 'input window, operand 0']
    #allocation3 [shape = 's32[2]{0}', space=sflag, size = 0x8, scoped, tag = 'scoped memory for tpu_custom_call.1']
    #allocation4 [shape = 's32[2]{0}', space=sflag, size = 0x8, scoped, tag = 'scoped memory for tpu_custom_call.1']
    #allocation5 [shape = 'u8[512]{0}', space=vmem, size = 0x400, scoped, tag = 'input window, operand 1, single buffered']
    #allocation6 [shape = 's32[1]{0}', space=sflag, size = 0x4, scoped, tag = 'scoped memory for tpu_custom_call.1']
    #allocation7 [shape = 'u8[229376]{0}', space=vmem, size = 0x38000, scoped, tag = 'input window, operand 2, single buffered']
    #allocation8 [shape = 'u8[16384]{0}', space=vmem, size = 0x4000, scoped, tag = 'input window, operand 5, single buffered']
    #allocation9 [shape = 's32[1]{0}', space=sflag, size = 0x4, scoped, tag = 'scoped memory for tpu_custom_call.1']
    #allocation10 [shape = 'u8[131072]{0}', space=vmem, size = 0x20000, scoped, tag = 'output window, operand 0']
    %11 = vsyncpa [#allocation3], 0
    %s12 = scalar_lea.sflag [#allocation3], 1
    %13 = vsyncpa %s12, 0
    %14 = vsyncpa [#allocation6], 0
    %15 = vsyncpa [#allocation9], 0
    %16 = vsyncpa [#allocation4], 0
    %s17 = scalar_lea.sflag [#allocation4], 1
    %18 = vsyncpa %s17, 0
    loop: start=0, step=1, limit=4
    $region2: #{tpu_custom_call.1} parent=1 // loop_pre_header
      _
    $region3: #{tpu_custom_call.1} parent=1 // loop_header
      %s20 = sphi 0, %s24
      %p21 = scmp.ge.s32.totalorder %s20, 4
      %s30 = sphi 0, %s32
      %s33 = sphi 0, %s30
      %s34 = sphi 0, %s33
      %s50 = sphi 0, %s34
      %s54 = sphi 0, %s54
      %s56 = sphi 0, %s54
      %s57 = sphi 0, %s56
      %s71 = sphi 0, %s57
      %s75 = sphi 0, %s75
      %s77 = sphi 0, %s75
      %s78 = sphi 0, %s77
      %s92 = sphi 0, %s78
      %s96 = sphi 0, %s96
      %s98 = sphi 0, %s96
      %s99 = sphi 0, %s98
      %s113 = sphi 0, %s99
      %s117 = sphi 0, %s117
      %s119 = sphi 0, %s117
      %s120 = sphi 0, %s119
      %s134 = sphi 0, %s120
      %s138 = sphi 0, %s138
      %s140 = sphi 0, %s138
      %s141 = sphi 0, %s140
      %s155 = sphi 0, %s141
      %s161 = sphi 0, %s163
      %s164 = sphi 0, %s161
      %s165 = sphi 0, %s164
      %s181 = sphi 0, %s165
    $region4: #{tpu_custom_call.1} parent=1 // loop_header_branch
      %23 = sbr.rel (%p21) target = $region8
    $region5: #{tpu_custom_call.1} parent=1 // loop_body
      %s25 = ssub.s32 %s20, 1
      %s26 = ssub.s32 %s20, 2
      %s27 = sadd.s32 %s20, 1
      %s28 = ssub.s32 %s20, %s27
      %p29 = scmp.eq.s32.totalorder %s28, 0
      %s31 = sadd.s32 %s30, 1
      %s32 = scalar_select %p29, %s30, %s31
      %p35 = pneg %p29
      %p36 = scmp.eq.s32.totalorder %s20, 1
      %p37 = por %p35, %p36
      %p38 = scmp.ne.s32.totalorder %s30, %s33
      %p39 = scmp.eq.s32.totalorder %s20, 0
      %p40 = por %p38, %p39
      %p41 = scmp.ne.s32.totalorder %s30, %s33
      %p42 = scmp.eq.s32.totalorder %s25, 1
      %p43 = por %p41, %p42
      %p44 = scmp.ne.s32.totalorder %s33, %s34
      %p45 = scmp.eq.s32.totalorder %s25, 0
      %p46 = por %p44, %p45
      %p47 = scmp.ne.s32.totalorder %s33, %s34
      %p48 = scmp.eq.s32.totalorder %s26, 1
      %p49 = por %p47, %p48
      %p51 = scmp.ne.s32.totalorder %s34, %s50
      %p52 = scmp.eq.s32.totalorder %s26, 0
      %p53 = por %p51, %p52
      %s55 = sadd.s32 %s54, 1
      %p58 = scmp.eq.s32.totalorder %s20, 1
      %p59 = scmp.ne.s32.totalorder %s54, %s56
      %p60 = scmp.eq.s32.totalorder %s20, 0
      %p61 = por %p59, %p60
      %p62 = scmp.ne.s32.totalorder %s54, %s56
      %p63 = scmp.eq.s32.totalorder %s25, 1
      %p64 = por %p62, %p63
      %p65 = scmp.ne.s32.totalorder %s56, %s57
      %p66 = scmp.eq.s32.totalorder %s25, 0
      %p67 = por %p65, %p66
      %p68 = scmp.ne.s32.totalorder %s56, %s57
      %p69 = scmp.eq.s32.totalorder %s26, 1
      %p70 = por %p68, %p69
      %p72 = scmp.ne.s32.totalorder %s57, %s71
      %p73 = scmp.eq.s32.totalorder %s26, 0
      %p74 = por %p72, %p73
      %s76 = sadd.s32 %s75, 1
      %p79 = scmp.eq.s32.totalorder %s20, 1
      %p80 = scmp.ne.s32.totalorder %s75, %s77
      %p81 = scmp.eq.s32.totalorder %s20, 0
      %p82 = por %p80, %p81
      %p83 = scmp.ne.s32.totalorder %s75, %s77
      %p84 = scmp.eq.s32.totalorder %s25, 1
      %p85 = por %p83, %p84
      %p86 = scmp.ne.s32.totalorder %s77, %s78
      %p87 = scmp.eq.s32.totalorder %s25, 0
      %p88 = por %p86, %p87
      %p89 = scmp.ne.s32.totalorder %s77, %s78
      %p90 = scmp.eq.s32.totalorder %s26, 1
      %p91 = por %p89, %p90
      %p93 = scmp.ne.s32.totalorder %s78, %s92
      %p94 = scmp.eq.s32.totalorder %s26, 0
      %p95 = por %p93, %p94
      %s97 = sadd.s32 %s96, 1
      %p100 = scmp.eq.s32.totalorder %s20, 1
      %p101 = scmp.ne.s32.totalorder %s96, %s98
      %p102 = scmp.eq.s32.totalorder %s20, 0
      %p103 = por %p101, %p102
      %p104 = scmp.ne.s32.totalorder %s96, %s98
      %p105 = scmp.eq.s32.totalorder %s25, 1
      %p106 = por %p104, %p105
      %p107 = scmp.ne.s32.totalorder %s98, %s99
      %p108 = scmp.eq.s32.totalorder %s25, 0
      %p109 = por %p107, %p108
      %p110 = scmp.ne.s32.totalorder %s98, %s99
      %p111 = scmp.eq.s32.totalorder %s26, 1
      %p112 = por %p110, %p111
      %p114 = scmp.ne.s32.totalorder %s99, %s113
      %p115 = scmp.eq.s32.totalorder %s26, 0
      %p116 = por %p114, %p115
      %s118 = sadd.s32 %s117, 1
      %p121 = scmp.eq.s32.totalorder %s20, 1
      %p122 = scmp.ne.s32.totalorder %s117, %s119
      %p123 = scmp.eq.s32.totalorder %s20, 0
      %p124 = por %p122, %p123
      %p125 = scmp.ne.s32.totalorder %s117, %s119
      %p126 = scmp.eq.s32.totalorder %s25, 1
      %p127 = por %p125, %p126
      %p128 = scmp.ne.s32.totalorder %s119, %s120
      %p129 = scmp.eq.s32.totalorder %s25, 0
      %p130 = por %p128, %p129
      %p131 = scmp.ne.s32.totalorder %s119, %s120
      %p132 = scmp.eq.s32.totalorder %s26, 1
      %p133 = por %p131, %p132
      %p135 = scmp.ne.s32.totalorder %s120, %s134
      %p136 = scmp.eq.s32.totalorder %s26, 0
      %p137 = por %p135, %p136
      %s139 = sadd.s32 %s138, 1
      %p142 = scmp.eq.s32.totalorder %s20, 1
      %p143 = scmp.ne.s32.totalorder %s138, %s140
      %p144 = scmp.eq.s32.totalorder %s20, 0
      %p145 = por %p143, %p144
      %p146 = scmp.ne.s32.totalorder %s138, %s140
      %p147 = scmp.eq.s32.totalorder %s25, 1
      %p148 = por %p146, %p147
      %p149 = scmp.ne.s32.totalorder %s140, %s141
      %p150 = scmp.eq.s32.totalorder %s25, 0
      %p151 = por %p149, %p150
      %p152 = scmp.ne.s32.totalorder %s140, %s141
      %p153 = scmp.eq.s32.totalorder %s26, 1
      %p154 = por %p152, %p153
      %p156 = scmp.ne.s32.totalorder %s141, %s155
      %p157 = scmp.eq.s32.totalorder %s26, 0
      %p158 = por %p156, %p157
      %s159 = ssub.s32 %s20, %s27
      %p160 = scmp.eq.s32.totalorder %s159, 0
      %s162 = sadd.s32 %s161, 1
      %s163 = scalar_select %p160, %s161, %s162
      %p166 = pneg %p160
      %p167 = scmp.eq.s32.totalorder %s20, 1
      %p168 = por %p166, %p167
      %p169 = scmp.ne.s32.totalorder %s161, %s164
      %p170 = scmp.eq.s32.totalorder %s20, 0
      %p171 = por %p169, %p170
      %p172 = scmp.ne.s32.totalorder %s161, %s164
      %p173 = scmp.eq.s32.totalorder %s25, 1
      %p174 = por %p172, %p173
      %p175 = scmp.ne.s32.totalorder %s164, %s165
      %p176 = scmp.eq.s32.totalorder %s25, 0
      %p177 = por %p175, %p176
      %p178 = scmp.ne.s32.totalorder %s164, %s165
      %p179 = scmp.eq.s32.totalorder %s26, 1
      %p180 = por %p178, %p179
      %p182 = scmp.ne.s32.totalorder %s165, %s181
      %p183 = scmp.eq.s32.totalorder %s26, 0
      %p184 = por %p182, %p183
      %p185 = scmp.le.s32.totalorder 1, %s20
      %p186 = scmp.lt.s32.totalorder %s20, 3
      %p187 = pnand %p185, %p186
      %p188 = pneg %p187
      // Predicated region
      $region9: #{tpu_custom_call.1} parent=5 // pred_check
        _
      $region10: #{tpu_custom_call.1} parent=5 // pred_check_branch
        %190 = sbr.rel (%p187) target = $region12
      $region11: #{tpu_custom_call.1} parent=5 // pred_region
        %s191 = ssub.s32 %s20, 1
        // Predicated region
        $region13: #{tpu_custom_call.1} parent=11 // pred_check
          %p192 = pneg %p67
        $region14: #{tpu_custom_call.1} parent=11 // pred_check_branch
          %194 = sbr.rel (%p192) target = $region16
        $region15: #{tpu_custom_call.1} parent=11 // pred_region
          %196 = vsyncadd [#allocation6], 0
          %s198 = sshll.u32 %s1, 4
          %s199 = int_to_ptr.hbm [resolvable:$true] %s198
          %s200 = sshll.u32 [#allocation5], 4
          %s201 = int_to_ptr.vmem [resolvable:$true] %s200
          %203 = dma.hbm_to_vmem [thread:$0]  %s199, 16, %s201, [#allocation6]
        $region16: #{tpu_custom_call.1} parent=11 // pred_fallthru
          _
        // Predicated region
        $region17: #{tpu_custom_call.1} parent=11 // pred_check
          %p204 = pneg %p88
        $region18: #{tpu_custom_call.1} parent=11 // pred_check_branch
          %206 = sbr.rel (%p204) target = $region20
        $region19: #{tpu_custom_call.1} parent=11 // pred_region
          %208 = vsyncadd [#allocation6], 0
          %s209 = sshll.u32 %s2, 4
          %s210 = int_to_ptr.hbm [resolvable:$true] %s209
          %s211 = sshll.u32 [#allocation7], 4
          %s212 = int_to_ptr.vmem [resolvable:$true] %s211
          %217 = dma.hbm_to_vmem [thread:$0]  %s210, 7168, %s212, [#allocation6], 448, 448, 28
        $region20: #{tpu_custom_call.1} parent=11 // pred_fallthru
          _
        // Predicated region
        $region21: #{tpu_custom_call.1} parent=11 // pred_check
          %p218 = pneg %p109
        $region22: #{tpu_custom_call.1} parent=11 // pred_check_branch
          %220 = sbr.rel (%p218) target = $region24
        $region23: #{tpu_custom_call.1} parent=11 // pred_region
          _
        $region24: #{tpu_custom_call.1} parent=11 // pred_fallthru
          _
        // Predicated region
        $region25: #{tpu_custom_call.1} parent=11 // pred_check
          %p221 = pneg %p130
        $region26: #{tpu_custom_call.1} parent=11 // pred_check_branch
          %223 = sbr.rel (%p221) target = $region28
        $region27: #{tpu_custom_call.1} parent=11 // pred_region
          _
        $region28: #{tpu_custom_call.1} parent=11 // pred_fallthru
          _
        // Predicated region
        $region29: #{tpu_custom_call.1} parent=11 // pred_check
          %p224 = pneg %p151
        $region30: #{tpu_custom_call.1} parent=11 // pred_check_branch
          %226 = sbr.rel (%p224) target = $region32
        $region31: #{tpu_custom_call.1} parent=11 // pred_region
          %228 = vsyncadd [#allocation9], 0
          %s229 = sshll.u32 %s5, 4
          %s230 = int_to_ptr.hbm [resolvable:$true] %s229
          %s231 = sshll.u32 [#allocation8], 4
          %s232 = int_to_ptr.vmem [resolvable:$true] %s231
          %237 = dma.hbm_to_vmem [thread:$0]  %s230, 512, %s232, [#allocation9], 64, 64, 4
        $region32: #{tpu_custom_call.1} parent=11 // pred_fallthru
          _
      $region12: #{tpu_custom_call.1} parent=5 // pred_fallthru
        _
      %p238 = scmp.lt.s32.totalorder %s20, 2
      // Predicated region
      $region33: #{tpu_custom_call.1} parent=5 // pred_check
        %p239 = pneg %p238
      $region34: #{tpu_custom_call.1} parent=5 // pred_check_branch
        %241 = sbr.rel (%p239) target = $region36
      $region35: #{tpu_custom_call.1} parent=5 // pred_region
        // Predicated region
        $region37: #{tpu_custom_call.1} parent=35 // pred_check
          %p242 = pneg %p40
        $region38: #{tpu_custom_call.1} parent=35 // pred_check_branch
          %244 = sbr.rel (%p242) target = $region40
        $region39: #{tpu_custom_call.1} parent=35 // pred_region
          %s245 = sand.u32 %s30, 1
          %s246 = scalar_lea.sflag [#allocation3], %s245
          %s247 = sand.u32 %s30, 1
          %s248 = smul.addr %s247, 128
          %s249 = scalar_lea.vmem [#allocation2], %s248
          %s250 = smul.u32 8, %s20
          %252 = vsyncadd %s246, 0
          %s253 = smul.addr %s250, 2
          %s254 = smul.addr %s253, 8
          %s255 = scalar_lea.hbm %s0, %s254
          %s256 = sshll.u32 %s255, 4
          %s257 = int_to_ptr.hbm [resolvable:$true] %s256
          %s258 = sshll.u32 %s249, 4
          %s259 = int_to_ptr.vmem [resolvable:$true] %s258
          %264 = dma.hbm_to_vmem [thread:$0]  %s257, 2048, %s259, %s246, 128, 128, 8
        $region40: #{tpu_custom_call.1} parent=35 // pred_fallthru
          _
      $region36: #{tpu_custom_call.1} parent=5 // pred_fallthru
        _
      %p265 = scmp.le.s32.totalorder 1, %s20
      %p266 = scmp.lt.s32.totalorder %s20, 3
      %p267 = pnand %p265, %p266
      %p268 = pneg %p267
      // Predicated region
      $region41: #{tpu_custom_call.1} parent=5 // pred_check
        _
      $region42: #{tpu_custom_call.1} parent=5 // pred_check_branch
        %270 = sbr.rel (%p267) target = $region44
      $region43: #{tpu_custom_call.1} parent=5 // pred_region
        %s271 = ssub.s32 %s20, 1
        %s272 = sand.u32 %s33, 1
        %s273 = scalar_lea.sflag [#allocation3], %s272
        %s274 = sand.u32 %s33, 1
        %s275 = smul.addr %s274, 128
        %s276 = scalar_lea.vmem [#allocation2], %s275
        // Predicated region
        $region45: #{tpu_custom_call.1} parent=43 // pred_check
          %p277 = pneg %p46
        $region46: #{tpu_custom_call.1} parent=43 // pred_check_branch
          %279 = sbr.rel (%p277) target = $region48
        $region47: #{tpu_custom_call.1} parent=43 // pred_region
          %281 = dma.done %s273, 2048
        $region48: #{tpu_custom_call.1} parent=43 // pred_fallthru
          _
        // Predicated region
        $region49: #{tpu_custom_call.1} parent=43 // pred_check
          %p282 = pneg %p67
        $region50: #{tpu_custom_call.1} parent=43 // pred_check_branch
          %284 = sbr.rel (%p282) target = $region52
        $region51: #{tpu_custom_call.1} parent=43 // pred_region
          %286 = dma.done [#allocation6], 16
        $region52: #{tpu_custom_call.1} parent=43 // pred_fallthru
          _
        // Predicated region
        $region53: #{tpu_custom_call.1} parent=43 // pred_check
          %p287 = pneg %p88
        $region54: #{tpu_custom_call.1} parent=43 // pred_check_branch
          %289 = sbr.rel (%p287) target = $region56
        $region55: #{tpu_custom_call.1} parent=43 // pred_region
          %291 = dma.done [#allocation6], 7168
        $region56: #{tpu_custom_call.1} parent=43 // pred_fallthru
          _
        // Predicated region
        $region57: #{tpu_custom_call.1} parent=43 // pred_check
          %p292 = pneg %p151
        $region58: #{tpu_custom_call.1} parent=43 // pred_check_branch
          %294 = sbr.rel (%p292) target = $region60
        $region59: #{tpu_custom_call.1} parent=43 // pred_region
          %296 = dma.done [#allocation9], 512
        $region60: #{tpu_custom_call.1} parent=43 // pred_fallthru
          _
        %s297 = sand.u32 %s33, 1
        %s298 = scalar_lea.sflag [#allocation3], %s297
        %s299 = sand.u32 %s33, 1
        %s300 = smul.addr %s299, 128
        %s301 = scalar_lea.vmem [#allocation2], %s300
        %p302 = pneg %p46
        %p303 = pneg %p43
        %p304 = pneg %p67
        %p305 = pneg %p64
        %p306 = pneg %p88
        %p307 = pneg %p85
        %p308 = pneg %p109
        %p309 = pneg %p106
        %p310 = pneg %p130
        %p311 = pneg %p127
        %p312 = pneg %p151
        %p313 = pneg %p148
        %p314 = pneg %p177
        %p315 = pneg %p174
        %s316 = sand.u32 %s164, 1
        %s317 = scalar_lea.sflag [#allocation4], %s316
        %s318 = sand.u32 %s164, 1
        %s319 = smul.addr %s318, 128
        %s320 = scalar_lea.vmem [#allocation10], %s319
        %s321 = smul.u32 8, %s25
        %s322 = smul.u32 8, %s25
        %v324 = vld [vmem:[%s276] sm:$0xff]
        %v325 = vld [vmem:[%s276 + $0x8] sm:$0xff]
        %v326 = vld [vmem:[%s276 + $0x10] sm:$0xff]
        %v327 = vld [vmem:[%s276 + $0x18] sm:$0xff]
        %v328 = vld [vmem:[%s276 + $0x20] sm:$0xff]
        %v329 = vld [vmem:[%s276 + $0x28] sm:$0xff]
        %v330 = vld [vmem:[%s276 + $0x30] sm:$0xff]
        %v331 = vld [vmem:[%s276 + $0x38] sm:$0xff]
        %v332 = vld [vmem:[%s276 + $0x40] sm:$0xff]
        %v333 = vld [vmem:[%s276 + $0x48] sm:$0xff]
        %v334 = vld [vmem:[%s276 + $0x50] sm:$0xff]
        %v335 = vld [vmem:[%s276 + $0x58] sm:$0xff]
        %v336 = vld [vmem:[%s276 + $0x60] sm:$0xff]
        %v337 = vld [vmem:[%s276 + $0x68] sm:$0xff]
        %v338 = vld [vmem:[%s276 + $0x70] sm:$0xff]
        %v339 = vld [vmem:[%s276 + $0x78] sm:$0xff]
        %v340 = vmul.f32 %v324, %v324
        %v341 = vmul.f32 %v325, %v325
        %v342 = vmul.f32 %v326, %v326
        %v343 = vmul.f32 %v327, %v327
        %v344 = vmul.f32 %v328, %v328
        %v345 = vmul.f32 %v329, %v329
        %v346 = vmul.f32 %v330, %v330
        %v347 = vmul.f32 %v331, %v331
        %v348 = vmul.f32 %v332, %v332
        %v349 = vmul.f32 %v333, %v333
        %v350 = vmul.f32 %v334, %v334
        %v351 = vmul.f32 %v335, %v335
        %v352 = vmul.f32 %v336, %v336
        %v353 = vmul.f32 %v337, %v337
        %v354 = vmul.f32 %v338, %v338
        %v355 = vmul.f32 %v339, %v339
        %356 = vadd.xlane.f32.xlu0 %v340
        %v357 = vpop.xlane.xlu0 %356
        %358 = vadd.xlane.f32.xlu0 %v341
        %v359 = vpop.xlane.xlu0 %358
        %360 = vadd.xlane.f32.xlu0 %v342
        %v361 = vpop.xlane.xlu0 %360
        %362 = vadd.xlane.f32.xlu0 %v343
        %v363 = vpop.xlane.xlu0 %362
        %364 = vadd.xlane.f32.xlu0 %v344
        %v365 = vpop.xlane.xlu0 %364
        %366 = vadd.xlane.f32.xlu0 %v345
        %v367 = vpop.xlane.xlu0 %366
        %368 = vadd.xlane.f32.xlu0 %v346
        %v369 = vpop.xlane.xlu0 %368
        %370 = vadd.xlane.f32.xlu0 %v347
        %v371 = vpop.xlane.xlu0 %370
        %372 = vadd.xlane.f32.xlu0 %v348
        %v373 = vpop.xlane.xlu0 %372
        %374 = vadd.xlane.f32.xlu0 %v349
        %v375 = vpop.xlane.xlu0 %374
        %376 = vadd.xlane.f32.xlu0 %v350
        %v377 = vpop.xlane.xlu0 %376
        %378 = vadd.xlane.f32.xlu0 %v351
        %v379 = vpop.xlane.xlu0 %378
        %380 = vadd.xlane.f32.xlu0 %v352
        %v381 = vpop.xlane.xlu0 %380
        %382 = vadd.xlane.f32.xlu0 %v353
        %v383 = vpop.xlane.xlu0 %382
        %384 = vadd.xlane.f32.xlu0 %v354
        %v385 = vpop.xlane.xlu0 %384
        %386 = vadd.xlane.f32.xlu0 %v355
        %v387 = vpop.xlane.xlu0 %386
        %v388 = vrcp.pop 128.0
        %v389 = vmul.f32 128.0, %v388
        %v390 = vsub.f32 1.0, %v389
        %v391 = vmul.f32 %v388, %v390
        %v392 = vadd.f32 %v388, %v391
        %vm393 = vweird.f32 %v388
        %v394 = vsel %vm393, %v388, %v392
        %v395 = vmul.f32 %v357, %v394
        %v396 = vmul.f32 %v359, %v394
        %v397 = vmul.f32 %v361, %v394
        %v398 = vmul.f32 %v363, %v394
        %v399 = vmul.f32 %v365, %v394
        %v400 = vmul.f32 %v367, %v394
        %v401 = vmul.f32 %v369, %v394
        %v402 = vmul.f32 %v371, %v394
        %v403 = vmul.f32 %v373, %v394
        %v404 = vmul.f32 %v375, %v394
        %v405 = vmul.f32 %v377, %v394
        %v406 = vmul.f32 %v379, %v394
        %v407 = vmul.f32 %v381, %v394
        %v408 = vmul.f32 %v383, %v394
        %v409 = vmul.f32 %v385, %v394
        %v410 = vmul.f32 %v387, %v394
        %v411 = vadd.f32 %v395, 1e-06
        %v412 = vadd.f32 %v396, 1e-06
        %v413 = vadd.f32 %v397, 1e-06
        %v414 = vadd.f32 %v398, 1e-06
        %v415 = vadd.f32 %v399, 1e-06
        %v416 = vadd.f32 %v400, 1e-06
        %v417 = vadd.f32 %v401, 1e-06
        %v418 = vadd.f32 %v402, 1e-06
        %v419 = vadd.f32 %v403, 1e-06
        %v420 = vadd.f32 %v404, 1e-06
        %v421 = vadd.f32 %v405, 1e-06
        %v422 = vadd.f32 %v406, 1e-06
        %v423 = vadd.f32 %v407, 1e-06
        %v424 = vadd.f32 %v408, 1e-06
        %v425 = vadd.f32 %v409, 1e-06
        %v426 = vadd.f32 %v410, 1e-06
        %v427 = vrsqrt.pop %v411
        %v428 = vmul.f32 %v427, %v411
        %v429 = vmul.f32 %v428, %v427
        %v430 = vmul.f32 0.5, %v429
        %v431 = vsub.f32 1.5, %v430
        %v432 = vmul.f32 %v427, %v431
        %vm433 = vweird.f32 %v411
        %vm434 = vweird.f32 %v427
        %vm435 = vmor %vm433, %vm434
        %v436 = vsel %vm435, %v427, %v432
        %v437 = vrsqrt.pop %v412
        %v438 = vmul.f32 %v437, %v412
        %v439 = vmul.f32 %v438, %v437
        %v440 = vmul.f32 0.5, %v439
        %v441 = vsub.f32 1.5, %v440
        %v442 = vmul.f32 %v437, %v441
        %vm443 = vweird.f32 %v412
        %vm444 = vweird.f32 %v437
        %vm445 = vmor %vm443, %vm444
        %v446 = vsel %vm445, %v437, %v442
        %v447 = vrsqrt.pop %v413
        %v448 = vmul.f32 %v447, %v413
        %v449 = vmul.f32 %v448, %v447
        %v450 = vmul.f32 0.5, %v449
        %v451 = vsub.f32 1.5, %v450
        %v452 = vmul.f32 %v447, %v451
        %vm453 = vweird.f32 %v413
        %vm454 = vweird.f32 %v447
        %vm455 = vmor %vm453, %vm454
        %v456 = vsel %vm455, %v447, %v452
        %v457 = vrsqrt.pop %v414
        %v458 = vmul.f32 %v457, %v414
        %v459 = vmul.f32 %v458, %v457
        %v460 = vmul.f32 0.5, %v459
        %v461 = vsub.f32 1.5, %v460
        %v462 = vmul.f32 %v457, %v461
        %vm463 = vweird.f32 %v414
        %vm464 = vweird.f32 %v457
        %vm465 = vmor %vm463, %vm464
        %v466 = vsel %vm465, %v457, %v462
        %v467 = vrsqrt.pop %v415
        %v468 = vmul.f32 %v467, %v415
        %v469 = vmul.f32 %v468, %v467
        %v470 = vmul.f32 0.5, %v469
        %v471 = vsub.f32 1.5, %v470
        %v472 = vmul.f32 %v467, %v471
        %vm473 = vweird.f32 %v415
        %vm474 = vweird.f32 %v467
        %vm475 = vmor %vm473, %vm474
        %v476 = vsel %vm475, %v467, %v472
        %v477 = vrsqrt.pop %v416
        %v478 = vmul.f32 %v477, %v416
        %v479 = vmul.f32 %v478, %v477
        %v480 = vmul.f32 0.5, %v479
        %v481 = vsub.f32 1.5, %v480
        %v482 = vmul.f32 %v477, %v481
        %vm483 = vweird.f32 %v416
        %vm484 = vweird.f32 %v477
        %vm485 = vmor %vm483, %vm484
        %v486 = vsel %vm485, %v477, %v482
        %v487 = vrsqrt.pop %v417
        %v488 = vmul.f32 %v487, %v417
        %v489 = vmul.f32 %v488, %v487
        %v490 = vmul.f32 0.5, %v489
        %v491 = vsub.f32 1.5, %v490
        %v492 = vmul.f32 %v487, %v491
        %vm493 = vweird.f32 %v417
        %vm494 = vweird.f32 %v487
        %vm495 = vmor %vm493, %vm494
        %v496 = vsel %vm495, %v487, %v492
        %v497 = vrsqrt.pop %v418
        %v498 = vmul.f32 %v497, %v418
        %v499 = vmul.f32 %v498, %v497
        %v500 = vmul.f32 0.5, %v499
        %v501 = vsub.f32 1.5, %v500
        %v502 = vmul.f32 %v497, %v501
        %vm503 = vweird.f32 %v418
        %vm504 = vweird.f32 %v497
        %vm505 = vmor %vm503, %vm504
        %v506 = vsel %vm505, %v497, %v502
        %v507 = vrsqrt.pop %v419
        %v508 = vmul.f32 %v507, %v419
        %v509 = vmul.f32 %v508, %v507
        %v510 = vmul.f32 0.5, %v509
        %v511 = vsub.f32 1.5, %v510
        %v512 = vmul.f32 %v507, %v511
        %vm513 = vweird.f32 %v419
        %vm514 = vweird.f32 %v507
        %vm515 = vmor %vm513, %vm514
        %v516 = vsel %vm515, %v507, %v512
        %v517 = vrsqrt.pop %v420
        %v518 = vmul.f32 %v517, %v420
        %v519 = vmul.f32 %v518, %v517
        %v520 = vmul.f32 0.5, %v519
        %v521 = vsub.f32 1.5, %v520
        %v522 = vmul.f32 %v517, %v521
        %vm523 = vweird.f32 %v420
        %vm524 = vweird.f32 %v517
        %vm525 = vmor %vm523, %vm524
        %v526 = vsel %vm525, %v517, %v522
        %v527 = vrsqrt.pop %v421
        %v528 = vmul.f32 %v527, %v421
        %v529 = vmul.f32 %v528, %v527
        %v530 = vmul.f32 0.5, %v529
        %v531 = vsub.f32 1.5, %v530
        %v532 = vmul.f32 %v527, %v531
        %vm533 = vweird.f32 %v421
        %vm534 = vweird.f32 %v527
        %vm535 = vmor %vm533, %vm534
        %v536 = vsel %vm535, %v527, %v532
        %v537 = vrsqrt.pop %v422
        %v538 = vmul.f32 %v537, %v422
        %v539 = vmul.f32 %v538, %v537
        %v540 = vmul.f32 0.5, %v539
        %v541 = vsub.f32 1.5, %v540
        %v542 = vmul.f32 %v537, %v541
        %vm543 = vweird.f32 %v422
        %vm544 = vweird.f32 %v537
        %vm545 = vmor %vm543, %vm544
        %v546 = vsel %vm545, %v537, %v542
        %v547 = vrsqrt.pop %v423
        %v548 = vmul.f32 %v547, %v423
        %v549 = vmul.f32 %v548, %v547
        %v550 = vmul.f32 0.5, %v549
        %v551 = vsub.f32 1.5, %v550
        %v552 = vmul.f32 %v547, %v551
        %vm553 = vweird.f32 %v423
        %vm554 = vweird.f32 %v547
        %vm555 = vmor %vm553, %vm554
        %v556 = vsel %vm555, %v547, %v552
        %v557 = vrsqrt.pop %v424
        %v558 = vmul.f32 %v557, %v424
        %v559 = vmul.f32 %v558, %v557
        %v560 = vmul.f32 0.5, %v559
        %v561 = vsub.f32 1.5, %v560
        %v562 = vmul.f32 %v557, %v561
        %vm563 = vweird.f32 %v424
        %vm564 = vweird.f32 %v557
        %vm565 = vmor %vm563, %vm564
        %v566 = vsel %vm565, %v557, %v562
        %v567 = vrsqrt.pop %v425
        %v568 = vmul.f32 %v567, %v425
        %v569 = vmul.f32 %v568, %v567
        %v570 = vmul.f32 0.5, %v569
        %v571 = vsub.f32 1.5, %v570
        %v572 = vmul.f32 %v567, %v571
        %vm573 = vweird.f32 %v425
        %vm574 = vweird.f32 %v567
        %vm575 = vmor %vm573, %vm574
        %v576 = vsel %vm575, %v567, %v572
        %v577 = vrsqrt.pop %v426
        %v578 = vmul.f32 %v577, %v426
        %v579 = vmul.f32 %v578, %v577
        %v580 = vmul.f32 0.5, %v579
        %v581 = vsub.f32 1.5, %v580
        %v582 = vmul.f32 %v577, %v581
        %vm583 = vweird.f32 %v426
        %vm584 = vweird.f32 %v577
        %vm585 = vmor %vm583, %vm584
        %v586 = vsel %vm585, %v577, %v582
        %v587 = vmul.f32 %v324, %v436
        %v588 = vmul.f32 %v325, %v446
        %v589 = vmul.f32 %v326, %v456
        %v590 = vmul.f32 %v327, %v466
        %v591 = vmul.f32 %v328, %v476
        %v592 = vmul.f32 %v329, %v486
        %v593 = vmul.f32 %v330, %v496
        %v594 = vmul.f32 %v331, %v506
        %v595 = vmul.f32 %v332, %v516
        %v596 = vmul.f32 %v333, %v526
        %v597 = vmul.f32 %v334, %v536
        %v598 = vmul.f32 %v335, %v546
        %v599 = vmul.f32 %v336, %v556
        %v600 = vmul.f32 %v337, %v566
        %v601 = vmul.f32 %v338, %v576
        %v602 = vmul.f32 %v339, %v586
        %v603 = vld [vmem:[#allocation5] sm:$0x1]
        %v605 = vperm.slane %v603, 0
        %v607 = vmul.f32 %v587, %v605
        %v608 = vmul.f32 %v588, %v605
        %v609 = vmul.f32 %v589, %v605
        %v610 = vmul.f32 %v590, %v605
        %v611 = vmul.f32 %v591, %v605
        %v612 = vmul.f32 %v592, %v605
        %v613 = vmul.f32 %v593, %v605
        %v614 = vmul.f32 %v594, %v605
        %v615 = vmul.f32 %v595, %v605
        %v616 = vmul.f32 %v596, %v605
        %v617 = vmul.f32 %v597, %v605
        %v618 = vmul.f32 %v598, %v605
        %v619 = vmul.f32 %v599, %v605
        %v620 = vmul.f32 %v600, %v605
        %v621 = vmul.f32 %v601, %v605
        %v622 = vmul.f32 %v602, %v605
        %v623 = vpack.c.bf16 %v608, %v607
        %v624 = vpack.c.bf16 %v610, %v609
        %v625 = vpack.c.bf16 %v612, %v611
        %v626 = vpack.c.bf16 %v614, %v613
        %v627 = vpack.c.bf16 %v616, %v615
        %v628 = vpack.c.bf16 %v618, %v617
        %v629 = vpack.c.bf16 %v620, %v619
        %v630 = vpack.c.bf16 %v622, %v621
        %v631 = vld [vmem:[#allocation7] sm:$0xff]
        %v632 = vld [vmem:[#allocation7 + $0x8] sm:$0xff]
        %v633 = vld [vmem:[#allocation7 + $0x10] sm:$0xff]
        %v634 = vld [vmem:[#allocation7 + $0x18] sm:$0xf]
        %v635 = vld [vmem:[#allocation7 + $0x1c] sm:$0xff]
        %v636 = vld [vmem:[#allocation7 + $0x24] sm:$0xff]
        %v637 = vld [vmem:[#allocation7 + $0x2c] sm:$0xff]
        %v638 = vld [vmem:[#allocation7 + $0x34] sm:$0xf]
        %v639 = vld [vmem:[#allocation7 + $0x38] sm:$0xff]
        %v640 = vld [vmem:[#allocation7 + $0x40] sm:$0xff]
        %v641 = vld [vmem:[#allocation7 + $0x48] sm:$0xff]
        %v642 = vld [vmem:[#allocation7 + $0x50] sm:$0xf]
        %v643 = vld [vmem:[#allocation7 + $0x54] sm:$0xff]
        %v644 = vld [vmem:[#allocation7 + $0x5c] sm:$0xff]
        %v645 = vld [vmem:[#allocation7 + $0x64] sm:$0xff]
        %v646 = vld [vmem:[#allocation7 + $0x6c] sm:$0xf]
        %v647 = vld [vmem:[#allocation7 + $0x70] sm:$0xff]
        %v648 = vld [vmem:[#allocation7 + $0x78] sm:$0xff]
        %v649 = vld [vmem:[#allocation7 + $0x80] sm:$0xff]
        %v650 = vld [vmem:[#allocation7 + $0x88] sm:$0xf]
        %v651 = vld [vmem:[#allocation7 + $0x8c] sm:$0xff]
        %v652 = vld [vmem:[#allocation7 + $0x94] sm:$0xff]
        %v653 = vld [vmem:[#allocation7 + $0x9c] sm:$0xff]
        %v654 = vld [vmem:[#allocation7 + $0xa4] sm:$0xf]
        %v655 = vld [vmem:[#allocation7 + $0xa8] sm:$0xff]
        %v656 = vld [vmem:[#allocation7 + $0xb0] sm:$0xff]
        %v657 = vld [vmem:[#allocation7 + $0xb8] sm:$0xff]
        %v658 = vld [vmem:[#allocation7 + $0xc0] sm:$0xf]
        %v659 = vld [vmem:[#allocation7 + $0xc4] sm:$0xff]
        %v660 = vld [vmem:[#allocation7 + $0xcc] sm:$0xff]
        %v661 = vld [vmem:[#allocation7 + $0xd4] sm:$0xff]
        %v662 = vld [vmem:[#allocation7 + $0xdc] sm:$0xf]
        %v663 = vld [vmem:[#allocation7 + $0xe0] sm:$0xff]
        %v664 = vld [vmem:[#allocation7 + $0xe8] sm:$0xff]
        %v665 = vld [vmem:[#allocation7 + $0xf0] sm:$0xff]
        %v666 = vld [vmem:[#allocation7 + $0xf8] sm:$0xf]
        %v667 = vld [vmem:[#allocation7 + $0xfc] sm:$0xff]
        %v668 = vld [vmem:[#allocation7 + $0x104] sm:$0xff]
        %v669 = vld [vmem:[#allocation7 + $0x10c] sm:$0xff]
        %v670 = vld [vmem:[#allocation7 + $0x114] sm:$0xf]
        %v671 = vld [vmem:[#allocation7 + $0x118] sm:$0xff]
        %v672 = vld [vmem:[#allocation7 + $0x120] sm:$0xff]
        %v673 = vld [vmem:[#allocation7 + $0x128] sm:$0xff]
        %v674 = vld [vmem:[#allocation7 + $0x130] sm:$0xf]
        %v675 = vld [vmem:[#allocation7 + $0x134] sm:$0xff]
        %v676 = vld [vmem:[#allocation7 + $0x13c] sm:$0xff]
        %v677 = vld [vmem:[#allocation7 + $0x144] sm:$0xff]
        %v678 = vld [vmem:[#allocation7 + $0x14c] sm:$0xf]
        %v679 = vld [vmem:[#allocation7 + $0x150] sm:$0xff]
        %v680 = vld [vmem:[#allocation7 + $0x158] sm:$0xff]
        %v681 = vld [vmem:[#allocation7 + $0x160] sm:$0xff]
        %v682 = vld [vmem:[#allocation7 + $0x168] sm:$0xf]
        %v683 = vld [vmem:[#allocation7 + $0x16c] sm:$0xff]
        %v684 = vld [vmem:[#allocation7 + $0x174] sm:$0xff]
        %v685 = vld [vmem:[#allocation7 + $0x17c] sm:$0xff]
        %v686 = vld [vmem:[#allocation7 + $0x184] sm:$0xf]
        %v687 = vld [vmem:[#allocation7 + $0x188] sm:$0xff]
        %v688 = vld [vmem:[#allocation7 + $0x190] sm:$0xff]
        %v689 = vld [vmem:[#allocation7 + $0x198] sm:$0xff]
        %v690 = vld [vmem:[#allocation7 + $0x1a0] sm:$0xf]
        %v691 = vld [vmem:[#allocation7 + $0x1a4] sm:$0xff]
        %v692 = vld [vmem:[#allocation7 + $0x1ac] sm:$0xff]
        %v693 = vld [vmem:[#allocation7 + $0x1b4] sm:$0xff]
        %v694 = vld [vmem:[#allocation7 + $0x1bc] sm:$0xf]
        %v759 = vunpack.c.l.b16 %v631
        %v760 = vunpack.c.h.b16 %v631
        %v761 = vunpack.c.l.b16 %v632
        %v762 = vunpack.c.h.b16 %v632
        %v763 = vunpack.c.l.b16 %v633
        %v764 = vunpack.c.h.b16 %v633
        %v765 = vunpack.c.l.b16 %v634
        %v766 = vunpack.c.l.b16 %v635
        %v767 = vunpack.c.h.b16 %v635
        %v768 = vunpack.c.l.b16 %v636
        %v769 = vunpack.c.h.b16 %v636
        %v770 = vunpack.c.l.b16 %v637
        %v771 = vunpack.c.h.b16 %v637
        %v772 = vunpack.c.l.b16 %v638
        %v773 = vunpack.c.l.b16 %v639
        %v774 = vunpack.c.h.b16 %v639
        %v775 = vunpack.c.l.b16 %v640
        %v776 = vunpack.c.h.b16 %v640
        %v777 = vunpack.c.l.b16 %v641
        %v778 = vunpack.c.h.b16 %v641
        %v779 = vunpack.c.l.b16 %v642
        %v780 = vunpack.c.l.b16 %v643
        %v781 = vunpack.c.h.b16 %v643
        %v782 = vunpack.c.l.b16 %v644
        %v783 = vunpack.c.h.b16 %v644
        %v784 = vunpack.c.l.b16 %v645
        %v785 = vunpack.c.h.b16 %v645
        %v786 = vunpack.c.l.b16 %v646
        %v787 = vunpack.c.l.b16 %v647
        %v788 = vunpack.c.h.b16 %v647
        %v789 = vunpack.c.l.b16 %v648
        %v790 = vunpack.c.h.b16 %v648
        %v791 = vunpack.c.l.b16 %v649
        %v792 = vunpack.c.h.b16 %v649
        %v793 = vunpack.c.l.b16 %v650
        %v794 = vunpack.c.l.b16 %v651
        %v795 = vunpack.c.h.b16 %v651
        %v796 = vunpack.c.l.b16 %v652
        %v797 = vunpack.c.h.b16 %v652
        %v798 = vunpack.c.l.b16 %v653
        %v799 = vunpack.c.h.b16 %v653
        %v800 = vunpack.c.l.b16 %v654
        %v801 = vunpack.c.l.b16 %v655
        %v802 = vunpack.c.h.b16 %v655
        %v803 = vunpack.c.l.b16 %v656
        %v804 = vunpack.c.h.b16 %v656
        %v805 = vunpack.c.l.b16 %v657
        %v806 = vunpack.c.h.b16 %v657
        %v807 = vunpack.c.l.b16 %v658
        %v808 = vunpack.c.l.b16 %v659
        %v809 = vunpack.c.h.b16 %v659
        %v810 = vunpack.c.l.b16 %v660
        %v811 = vunpack.c.h.b16 %v660
        %v812 = vunpack.c.l.b16 %v661
        %v813 = vunpack.c.h.b16 %v661
        %v814 = vunpack.c.l.b16 %v662
        %v815 = vunpack.c.l.b16 %v663
        %v816 = vunpack.c.h.b16 %v663
        %v817 = vunpack.c.l.b16 %v664
        %v818 = vunpack.c.h.b16 %v664
        %v819 = vunpack.c.l.b16 %v665
        %v820 = vunpack.c.h.b16 %v665
        %v821 = vunpack.c.l.b16 %v666
        %v822 = vunpack.c.l.b16 %v667
        %v823 = vunpack.c.h.b16 %v667
        %v824 = vunpack.c.l.b16 %v668
        %v825 = vunpack.c.h.b16 %v668
        %v826 = vunpack.c.l.b16 %v669
        %v827 = vunpack.c.h.b16 %v669
        %v828 = vunpack.c.l.b16 %v670
        %v829 = vunpack.c.l.b16 %v671
        %v830 = vunpack.c.h.b16 %v671
        %v831 = vunpack.c.l.b16 %v672
        %v832 = vunpack.c.h.b16 %v672
        %v833 = vunpack.c.l.b16 %v673
        %v834 = vunpack.c.h.b16 %v673
        %v835 = vunpack.c.l.b16 %v674
        %v836 = vunpack.c.l.b16 %v675
        %v837 = vunpack.c.h.b16 %v675
        %v838 = vunpack.c.l.b16 %v676
        %v839 = vunpack.c.h.b16 %v676
        %v840 = vunpack.c.l.b16 %v677
        %v841 = vunpack.c.h.b16 %v677
        %v842 = vunpack.c.l.b16 %v678
        %v843 = vunpack.c.l.b16 %v679
        %v844 = vunpack.c.h.b16 %v679
        %v845 = vunpack.c.l.b16 %v680
        %v846 = vunpack.c.h.b16 %v680
        %v847 = vunpack.c.l.b16 %v681
        %v848 = vunpack.c.h.b16 %v681
        %v849 = vunpack.c.l.b16 %v682
        %v850 = vunpack.c.l.b16 %v683
        %v851 = vunpack.c.h.b16 %v683
        %v852 = vunpack.c.l.b16 %v684
        %v853 = vunpack.c.h.b16 %v684
        %v854 = vunpack.c.l.b16 %v685
        %v855 = vunpack.c.h.b16 %v685
        %v856 = vunpack.c.l.b16 %v686
        %v857 = vunpack.c.l.b16 %v687
        %v858 = vunpack.c.h.b16 %v687
        %v859 = vunpack.c.l.b16 %v688
        %v860 = vunpack.c.h.b16 %v688
        %v861 = vunpack.c.l.b16 %v689
        %v862 = vunpack.c.h.b16 %v689
        %v863 = vunpack.c.l.b16 %v690
        %v864 = vunpack.c.l.b16 %v691
        %v865 = vunpack.c.h.b16 %v691
        %v866 = vunpack.c.l.b16 %v692
        %v867 = vunpack.c.h.b16 %v692
        %v868 = vunpack.c.l.b16 %v693
        %v869 = vunpack.c.h.b16 %v693
        %v870 = vunpack.c.l.b16 %v694
        %v871 = vpack.c.b16 %v766, %v759
        %v872 = vpack.c.b16 %v767, %v760
        %v873 = vpack.c.b16 %v768, %v761
        %v874 = vpack.c.b16 %v769, %v762
        %v875 = vpack.c.b16 %v770, %v763
        %v876 = vpack.c.b16 %v771, %v764
        %v877 = vpack.c.b16 %v772, %v765
        %v878 = vpack.c.b16 %v780, %v773
        %v879 = vpack.c.b16 %v781, %v774
        %v880 = vpack.c.b16 %v782, %v775
        %v881 = vpack.c.b16 %v783, %v776
        %v882 = vpack.c.b16 %v784, %v777
        %v883 = vpack.c.b16 %v785, %v778
        %v884 = vpack.c.b16 %v786, %v779
        %v885 = vpack.c.b16 %v794, %v787
        %v886 = vpack.c.b16 %v795, %v788
        %v887 = vpack.c.b16 %v796, %v789
        %v888 = vpack.c.b16 %v797, %v790
        %v889 = vpack.c.b16 %v798, %v791
        %v890 = vpack.c.b16 %v799, %v792
        %v891 = vpack.c.b16 %v800, %v793
        %v892 = vpack.c.b16 %v808, %v801
        %v893 = vpack.c.b16 %v809, %v802
        %v894 = vpack.c.b16 %v810, %v803
        %v895 = vpack.c.b16 %v811, %v804
        %v896 = vpack.c.b16 %v812, %v805
        %v897 = vpack.c.b16 %v813, %v806
        %v898 = vpack.c.b16 %v814, %v807
        %v899 = vpack.c.b16 %v822, %v815
        %v900 = vpack.c.b16 %v823, %v816
        %v901 = vpack.c.b16 %v824, %v817
        %v902 = vpack.c.b16 %v825, %v818
        %v903 = vpack.c.b16 %v826, %v819
        %v904 = vpack.c.b16 %v827, %v820
        %v905 = vpack.c.b16 %v828, %v821
        %v906 = vpack.c.b16 %v836, %v829
        %v907 = vpack.c.b16 %v837, %v830
        %v908 = vpack.c.b16 %v838, %v831
        %v909 = vpack.c.b16 %v839, %v832
        %v910 = vpack.c.b16 %v840, %v833
        %v911 = vpack.c.b16 %v841, %v834
        %v912 = vpack.c.b16 %v842, %v835
        %v913 = vpack.c.b16 %v850, %v843
        %v914 = vpack.c.b16 %v851, %v844
        %v915 = vpack.c.b16 %v852, %v845
        %v916 = vpack.c.b16 %v853, %v846
        %v917 = vpack.c.b16 %v854, %v847
        %v918 = vpack.c.b16 %v855, %v848
        %v919 = vpack.c.b16 %v856, %v849
        %v920 = vpack.c.b16 %v864, %v857
        %v921 = vpack.c.b16 %v865, %v858
        %v922 = vpack.c.b16 %v866, %v859
        %v923 = vpack.c.b16 %v867, %v860
        %v924 = vpack.c.b16 %v868, %v861
        %v925 = vpack.c.b16 %v869, %v862
        %v926 = vpack.c.b16 %v870, %v863
        %983 = vmatpush.bf16.msra.mxu0 %v920
        %984 = vmatpush.bf16.msra.mxu0 %v913
        %985 = vmatpush.bf16.msra.mxu0 %v906
        %986 = vmatpush.bf16.msra.mxu0 %v899
        %987 = vmatpush.bf16.msra.mxu0 %v892
        %988 = vmatpush.bf16.msra.mxu0 %v885
        %989 = vmatpush.bf16.msra.mxu0 %v878
        %990 = vmatpush.bf16.msra.mxu0 %v871
        %991 = vmatmul.bf16.gmra.mxu0 %v623
        %v992 = vpop.f32.mrf.mxu0
        %v993 = vadd.f32 0.0, %v992
        %v994 = vpop.f32.mrf.mxu0
        %v995 = vadd.f32 0.0, %v994
        %996 = vmatmul.bf16.gmra.mxu0 %v624
        %v997 = vpop.f32.mrf.mxu0
        %v998 = vadd.f32 0.0, %v997
        %v999 = vpop.f32.mrf.mxu0
        %v1000 = vadd.f32 0.0, %v999
        %1001 = vmatmul.bf16.gmra.mxu0 %v625
        %v1002 = vpop.f32.mrf.mxu0
        %v1003 = vadd.f32 0.0, %v1002
        %v1004 = vpop.f32.mrf.mxu0
        %v1005 = vadd.f32 0.0, %v1004
        %1006 = vmatmul.bf16.gmra.mxu0 %v626
        %v1007 = vpop.f32.mrf.mxu0
        %v1008 = vadd.f32 0.0, %v1007
        %v1009 = vpop.f32.mrf.mxu0
        %v1010 = vadd.f32 0.0, %v1009
        %1011 = vmatmul.bf16.gmra.mxu0 %v627
        %v1012 = vpop.f32.mrf.mxu0
        %v1013 = vadd.f32 0.0, %v1012
        %v1014 = vpop.f32.mrf.mxu0
        %v1015 = vadd.f32 0.0, %v1014
        %1016 = vmatmul.bf16.gmra.mxu0 %v628
        %v1017 = vpop.f32.mrf.mxu0
        %v1018 = vadd.f32 0.0, %v1017
        %v1019 = vpop.f32.mrf.mxu0
        %v1020 = vadd.f32 0.0, %v1019
        %1021 = vmatmul.bf16.gmra.mxu0 %v629
        %v1022 = vpop.f32.mrf.mxu0
        %v1023 = vadd.f32 0.0, %v1022
        %v1024 = vpop.f32.mrf.mxu0
        %v1025 = vadd.f32 0.0, %v1024
        %1026 = vmatmul.bf16.gmra.mxu0 %v630
        %v1027 = vpop.f32.mrf.mxu0
        %v1028 = vadd.f32 0.0, %v1027
        %v1029 = vpop.f32.mrf.mxu0
        %v1030 = vadd.f32 0.0, %v1029
        %1031 = vdwg.mxu0
        %1032 = vmatpush.bf16.msra.mxu0 %v921
        %1033 = vmatpush.bf16.msra.mxu0 %v914
        %1034 = vmatpush.bf16.msra.mxu0 %v907
        %1035 = vmatpush.bf16.msra.mxu0 %v900
        %1036 = vmatpush.bf16.msra.mxu0 %v893
        %1037 = vmatpush.bf16.msra.mxu0 %v886
        %1038 = vmatpush.bf16.msra.mxu0 %v879
        %1039 = vmatpush.bf16.msra.mxu0 %v872
        %1040 = vmatmul.bf16.gmra.mxu0 %v623
        %v1041 = vpop.f32.mrf.mxu0
        %v1042 = vadd.f32 0.0, %v1041
        %v1043 = vpop.f32.mrf.mxu0
        %v1044 = vadd.f32 0.0, %v1043
        %1045 = vmatmul.bf16.gmra.mxu0 %v624
        %v1046 = vpop.f32.mrf.mxu0
        %v1047 = vadd.f32 0.0, %v1046
        %v1048 = vpop.f32.mrf.mxu0
        %v1049 = vadd.f32 0.0, %v1048
        %1050 = vmatmul.bf16.gmra.mxu0 %v625
        %v1051 = vpop.f32.mrf.mxu0
        %v1052 = vadd.f32 0.0, %v1051
        %v1053 = vpop.f32.mrf.mxu0
        %v1054 = vadd.f32 0.0, %v1053
        %1055 = vmatmul.bf16.gmra.mxu0 %v626
        %v1056 = vpop.f32.mrf.mxu0
        %v1057 = vadd.f32 0.0, %v1056
        %v1058 = vpop.f32.mrf.mxu0
        %v1059 = vadd.f32 0.0, %v1058
        %1060 = vmatmul.bf16.gmra.mxu0 %v627
        %v1061 = vpop.f32.mrf.mxu0
        %v1062 = vadd.f32 0.0, %v1061
        %v1063 = vpop.f32.mrf.mxu0
        %v1064 = vadd.f32 0.0, %v1063
        %1065 = vmatmul.bf16.gmra.mxu0 %v628
        %v1066 = vpop.f32.mrf.mxu0
        %v1067 = vadd.f32 0.0, %v1066
        %v1068 = vpop.f32.mrf.mxu0
        %v1069 = vadd.f32 0.0, %v1068
        %1070 = vmatmul.bf16.gmra.mxu0 %v629
        %v1071 = vpop.f32.mrf.mxu0
        %v1072 = vadd.f32 0.0, %v1071
        %v1073 = vpop.f32.mrf.mxu0
        %v1074 = vadd.f32 0.0, %v1073
        %1075 = vmatmul.bf16.gmra.mxu0 %v630
        %v1076 = vpop.f32.mrf.mxu0
        %v1077 = vadd.f32 0.0, %v1076
        %v1078 = vpop.f32.mrf.mxu0
        %v1079 = vadd.f32 0.0, %v1078
        %1080 = vdwg.mxu0
        %1081 = vmatpush.bf16.msra.mxu0 %v922
        %1082 = vmatpush.bf16.msra.mxu0 %v915
        %1083 = vmatpush.bf16.msra.mxu0 %v908
        %1084 = vmatpush.bf16.msra.mxu0 %v901
        %1085 = vmatpush.bf16.msra.mxu0 %v894
        %1086 = vmatpush.bf16.msra.mxu0 %v887
        %1087 = vmatpush.bf16.msra.mxu0 %v880
        %1088 = vmatpush.bf16.msra.mxu0 %v873
        %1089 = vmatmul.bf16.gmra.mxu0 %v623
        %v1090 = vpop.f32.mrf.mxu0
        %v1091 = vadd.f32 0.0, %v1090
        %v1092 = vpop.f32.mrf.mxu0
        %v1093 = vadd.f32 0.0, %v1092
        %1094 = vmatmul.bf16.gmra.mxu0 %v624
        %v1095 = vpop.f32.mrf.mxu0
        %v1096 = vadd.f32 0.0, %v1095
        %v1097 = vpop.f32.mrf.mxu0
        %v1098 = vadd.f32 0.0, %v1097
        %1099 = vmatmul.bf16.gmra.mxu0 %v625
        %v1100 = vpop.f32.mrf.mxu0
        %v1101 = vadd.f32 0.0, %v1100
        %v1102 = vpop.f32.mrf.mxu0
        %v1103 = vadd.f32 0.0, %v1102
        %1104 = vmatmul.bf16.gmra.mxu0 %v626
        %v1105 = vpop.f32.mrf.mxu0
        %v1106 = vadd.f32 0.0, %v1105
        %v1107 = vpop.f32.mrf.mxu0
        %v1108 = vadd.f32 0.0, %v1107
        %1109 = vmatmul.bf16.gmra.mxu0 %v627
        %v1110 = vpop.f32.mrf.mxu0
        %v1111 = vadd.f32 0.0, %v1110
        %v1112 = vpop.f32.mrf.mxu0
        %v1113 = vadd.f32 0.0, %v1112
        %1114 = vmatmul.bf16.gmra.mxu0 %v628
        %v1115 = vpop.f32.mrf.mxu0
        %v1116 = vadd.f32 0.0, %v1115
        %v1117 = vpop.f32.mrf.mxu0
        %v1118 = vadd.f32 0.0, %v1117
        %1119 = vmatmul.bf16.gmra.mxu0 %v629
        %v1120 = vpop.f32.mrf.mxu0
        %v1121 = vadd.f32 0.0, %v1120
        %v1122 = vpop.f32.mrf.mxu0
        %v1123 = vadd.f32 0.0, %v1122
        %1124 = vmatmul.bf16.gmra.mxu0 %v630
        %v1125 = vpop.f32.mrf.mxu0
        %v1126 = vadd.f32 0.0, %v1125
        %v1127 = vpop.f32.mrf.mxu0
        %v1128 = vadd.f32 0.0, %v1127
        %1129 = vdwg.mxu0
        %1130 = vmatpush.bf16.msra.mxu0 %v923
        %1131 = vmatpush.bf16.msra.mxu0 %v916
        %1132 = vmatpush.bf16.msra.mxu0 %v909
        %1133 = vmatpush.bf16.msra.mxu0 %v902
        %1134 = vmatpush.bf16.msra.mxu0 %v895
        %1135 = vmatpush.bf16.msra.mxu0 %v888
        %1136 = vmatpush.bf16.msra.mxu0 %v881
        %1137 = vmatpush.bf16.msra.mxu0 %v874
        %1138 = vmatmul.bf16.gmra.mxu0 %v623
        %v1139 = vpop.f32.mrf.mxu0
        %v1140 = vadd.f32 0.0, %v1139
        %v1141 = vpop.f32.mrf.mxu0
        %v1142 = vadd.f32 0.0, %v1141
        %1143 = vmatmul.bf16.gmra.mxu0 %v624
        %v1144 = vpop.f32.mrf.mxu0
        %v1145 = vadd.f32 0.0, %v1144
        %v1146 = vpop.f32.mrf.mxu0
        %v1147 = vadd.f32 0.0, %v1146
        %1148 = vmatmul.bf16.gmra.mxu0 %v625
        %v1149 = vpop.f32.mrf.mxu0
        %v1150 = vadd.f32 0.0, %v1149
        %v1151 = vpop.f32.mrf.mxu0
        %v1152 = vadd.f32 0.0, %v1151
        %1153 = vmatmul.bf16.gmra.mxu0 %v626
        %v1154 = vpop.f32.mrf.mxu0
        %v1155 = vadd.f32 0.0, %v1154
        %v1156 = vpop.f32.mrf.mxu0
        %v1157 = vadd.f32 0.0, %v1156
        %1158 = vmatmul.bf16.gmra.mxu0 %v627
        %v1159 = vpop.f32.mrf.mxu0
        %v1160 = vadd.f32 0.0, %v1159
        %v1161 = vpop.f32.mrf.mxu0
        %v1162 = vadd.f32 0.0, %v1161
        %1163 = vmatmul.bf16.gmra.mxu0 %v628
        %v1164 = vpop.f32.mrf.mxu0
        %v1165 = vadd.f32 0.0, %v1164
        %v1166 = vpop.f32.mrf.mxu0
        %v1167 = vadd.f32 0.0, %v1166
        %1168 = vmatmul.bf16.gmra.mxu0 %v629
        %v1169 = vpop.f32.mrf.mxu0
        %v1170 = vadd.f32 0.0, %v1169
        %v1171 = vpop.f32.mrf.mxu0
        %v1172 = vadd.f32 0.0, %v1171
        %1173 = vmatmul.bf16.gmra.mxu0 %v630
        %v1174 = vpop.f32.mrf.mxu0
        %v1175 = vadd.f32 0.0, %v1174
        %v1176 = vpop.f32.mrf.mxu0
        %v1177 = vadd.f32 0.0, %v1176
        %1178 = vdwg.mxu0
        %1179 = vmatpush.bf16.msra.mxu0 %v924
        %1180 = vmatpush.bf16.msra.mxu0 %v917
        %1181 = vmatpush.bf16.msra.mxu0 %v910
        %1182 = vmatpush.bf16.msra.mxu0 %v903
        %1183 = vmatpush.bf16.msra.mxu0 %v896
        %1184 = vmatpush.bf16.msra.mxu0 %v889
        %1185 = vmatpush.bf16.msra.mxu0 %v882
        %1186 = vmatpush.bf16.msra.mxu0 %v875
        %1187 = vmatmul.bf16.gmra.mxu0 %v623
        %v1188 = vpop.f32.mrf.mxu0
        %v1189 = vadd.f32 0.0, %v1188
        %v1190 = vpop.f32.mrf.mxu0
        %v1191 = vadd.f32 0.0, %v1190
        %1192 = vmatmul.bf16.gmra.mxu0 %v624
        %v1193 = vpop.f32.mrf.mxu0
        %v1194 = vadd.f32 0.0, %v1193
        %v1195 = vpop.f32.mrf.mxu0
        %v1196 = vadd.f32 0.0, %v1195
        %1197 = vmatmul.bf16.gmra.mxu0 %v625
        %v1198 = vpop.f32.mrf.mxu0
        %v1199 = vadd.f32 0.0, %v1198
        %v1200 = vpop.f32.mrf.mxu0
        %v1201 = vadd.f32 0.0, %v1200
        %1202 = vmatmul.bf16.gmra.mxu0 %v626
        %v1203 = vpop.f32.mrf.mxu0
        %v1204 = vadd.f32 0.0, %v1203
        %v1205 = vpop.f32.mrf.mxu0
        %v1206 = vadd.f32 0.0, %v1205
        %1207 = vmatmul.bf16.gmra.mxu0 %v627
        %v1208 = vpop.f32.mrf.mxu0
        %v1209 = vadd.f32 0.0, %v1208
        %v1210 = vpop.f32.mrf.mxu0
        %v1211 = vadd.f32 0.0, %v1210
        %1212 = vmatmul.bf16.gmra.mxu0 %v628
        %v1213 = vpop.f32.mrf.mxu0
        %v1214 = vadd.f32 0.0, %v1213
        %v1215 = vpop.f32.mrf.mxu0
        %v1216 = vadd.f32 0.0, %v1215
        %1217 = vmatmul.bf16.gmra.mxu0 %v629
        %v1218 = vpop.f32.mrf.mxu0
        %v1219 = vadd.f32 0.0, %v1218
        %v1220 = vpop.f32.mrf.mxu0
        %v1221 = vadd.f32 0.0, %v1220
        %1222 = vmatmul.bf16.gmra.mxu0 %v630
        %v1223 = vpop.f32.mrf.mxu0
        %v1224 = vadd.f32 0.0, %v1223
        %v1225 = vpop.f32.mrf.mxu0
        %v1226 = vadd.f32 0.0, %v1225
        %1227 = vdwg.mxu0
        %1228 = vmatpush.bf16.msra.mxu0 %v925
        %1229 = vmatpush.bf16.msra.mxu0 %v918
        %1230 = vmatpush.bf16.msra.mxu0 %v911
        %1231 = vmatpush.bf16.msra.mxu0 %v904
        %1232 = vmatpush.bf16.msra.mxu0 %v897
        %1233 = vmatpush.bf16.msra.mxu0 %v890
        %1234 = vmatpush.bf16.msra.mxu0 %v883
        %1235 = vmatpush.bf16.msra.mxu0 %v876
        %1236 = vmatmul.bf16.gmra.mxu0 %v623
        %v1237 = vpop.f32.mrf.mxu0
        %v1238 = vadd.f32 0.0, %v1237
        %v1239 = vpop.f32.mrf.mxu0
        %v1240 = vadd.f32 0.0, %v1239
        %1241 = vmatmul.bf16.gmra.mxu0 %v624
        %v1242 = vpop.f32.mrf.mxu0
        %v1243 = vadd.f32 0.0, %v1242
        %v1244 = vpop.f32.mrf.mxu0
        %v1245 = vadd.f32 0.0, %v1244
        %1246 = vmatmul.bf16.gmra.mxu0 %v625
        %v1247 = vpop.f32.mrf.mxu0
        %v1248 = vadd.f32 0.0, %v1247
        %v1249 = vpop.f32.mrf.mxu0
        %v1250 = vadd.f32 0.0, %v1249
        %1251 = vmatmul.bf16.gmra.mxu0 %v626
        %v1252 = vpop.f32.mrf.mxu0
        %v1253 = vadd.f32 0.0, %v1252
        %v1254 = vpop.f32.mrf.mxu0
        %v1255 = vadd.f32 0.0, %v1254
        %1256 = vmatmul.bf16.gmra.mxu0 %v627
        %v1257 = vpop.f32.mrf.mxu0
        %v1258 = vadd.f32 0.0, %v1257
        %v1259 = vpop.f32.mrf.mxu0
        %v1260 = vadd.f32 0.0, %v1259
        %1261 = vmatmul.bf16.gmra.mxu0 %v628
        %v1262 = vpop.f32.mrf.mxu0
        %v1263 = vadd.f32 0.0, %v1262
        %v1264 = vpop.f32.mrf.mxu0
        %v1265 = vadd.f32 0.0, %v1264
        %1266 = vmatmul.bf16.gmra.mxu0 %v629
        %v1267 = vpop.f32.mrf.mxu0
        %v1268 = vadd.f32 0.0, %v1267
        %v1269 = vpop.f32.mrf.mxu0
        %v1270 = vadd.f32 0.0, %v1269
        %1271 = vmatmul.bf16.gmra.mxu0 %v630
        %v1272 = vpop.f32.mrf.mxu0
        %v1273 = vadd.f32 0.0, %v1272
        %v1274 = vpop.f32.mrf.mxu0
        %v1275 = vadd.f32 0.0, %v1274
        %1276 = vdwg.mxu0
        %1277 = vmatpush.bf16.msra.mxu0 %v926
        %1278 = vmatpush.bf16.msra.mxu0 %v919
        %1279 = vmatpush.bf16.msra.mxu0 %v912
        %1280 = vmatpush.bf16.msra.mxu0 %v905
        %1281 = vmatpush.bf16.msra.mxu0 %v898
        %1282 = vmatpush.bf16.msra.mxu0 %v891
        %1283 = vmatpush.bf16.msra.mxu0 %v884
        %1284 = vmatpush.bf16.msra.mxu0 %v877
        %1285 = vmatmul.bf16.gmra.mxu0 %v623
        %v1286 = vpop.f32.mrf.mxu0
        %v1287 = vadd.f32 0.0, %v1286
        %v1288 = vpop.f32.mrf.mxu0
        %v1289 = vadd.f32 0.0, %v1288
        %1290 = vmatmul.bf16.gmra.mxu0 %v624
        %v1291 = vpop.f32.mrf.mxu0
        %v1292 = vadd.f32 0.0, %v1291
        %v1293 = vpop.f32.mrf.mxu0
        %v1294 = vadd.f32 0.0, %v1293
        %1295 = vmatmul.bf16.gmra.mxu0 %v625
        %v1296 = vpop.f32.mrf.mxu0
        %v1297 = vadd.f32 0.0, %v1296
        %v1298 = vpop.f32.mrf.mxu0
        %v1299 = vadd.f32 0.0, %v1298
        %1300 = vmatmul.bf16.gmra.mxu0 %v626
        %v1301 = vpop.f32.mrf.mxu0
        %v1302 = vadd.f32 0.0, %v1301
        %v1303 = vpop.f32.mrf.mxu0
        %v1304 = vadd.f32 0.0, %v1303
        %1305 = vmatmul.bf16.gmra.mxu0 %v627
        %v1306 = vpop.f32.mrf.mxu0
        %v1307 = vadd.f32 0.0, %v1306
        %v1308 = vpop.f32.mrf.mxu0
        %v1309 = vadd.f32 0.0, %v1308
        %1310 = vmatmul.bf16.gmra.mxu0 %v628
        %v1311 = vpop.f32.mrf.mxu0
        %v1312 = vadd.f32 0.0, %v1311
        %v1313 = vpop.f32.mrf.mxu0
        %v1314 = vadd.f32 0.0, %v1313
        %1315 = vmatmul.bf16.gmra.mxu0 %v629
        %v1316 = vpop.f32.mrf.mxu0
        %v1317 = vadd.f32 0.0, %v1316
        %v1318 = vpop.f32.mrf.mxu0
        %v1319 = vadd.f32 0.0, %v1318
        %1320 = vmatmul.bf16.gmra.mxu0 %v630
        %v1321 = vpop.f32.mrf.mxu0
        %v1322 = vadd.f32 0.0, %v1321
        %v1323 = vpop.f32.mrf.mxu0
        %v1324 = vadd.f32 0.0, %v1323
        %1325 = vdwg.mxu0
        %v1326 = vpack.c.bf16 %v993, %v993
        %v1327 = vpack.c.bf16 %v995, %v995
        %v1328 = vpack.c.bf16 %v998, %v998
        %v1329 = vpack.c.bf16 %v1000, %v1000
        %v1330 = vpack.c.bf16 %v1003, %v1003
        %v1331 = vpack.c.bf16 %v1005, %v1005
        %v1332 = vpack.c.bf16 %v1008, %v1008
        %v1333 = vpack.c.bf16 %v1010, %v1010
        %v1334 = vpack.c.bf16 %v1013, %v1013
        %v1335 = vpack.c.bf16 %v1015, %v1015
        %v1336 = vpack.c.bf16 %v1018, %v1018
        %v1337 = vpack.c.bf16 %v1020, %v1020
        %v1338 = vpack.c.bf16 %v1023, %v1023
        %v1339 = vpack.c.bf16 %v1025, %v1025
        %v1340 = vpack.c.bf16 %v1028, %v1028
        %v1341 = vpack.c.bf16 %v1030, %v1030
        %v1342 = vpack.c.bf16 %v1042, %v1042
        %v1343 = vpack.c.bf16 %v1044, %v1044
        %v1344 = vpack.c.bf16 %v1047, %v1047
        %v1345 = vpack.c.bf16 %v1049, %v1049
        %v1346 = vpack.c.bf16 %v1052, %v1052
        %v1347 = vpack.c.bf16 %v1054, %v1054
        %v1348 = vpack.c.bf16 %v1057, %v1057
        %v1349 = vpack.c.bf16 %v1059, %v1059
        %v1350 = vpack.c.bf16 %v1062, %v1062
        %v1351 = vpack.c.bf16 %v1064, %v1064
        %v1352 = vpack.c.bf16 %v1067, %v1067
        %v1353 = vpack.c.bf16 %v1069, %v1069
        %v1354 = vpack.c.bf16 %v1072, %v1072
        %v1355 = vpack.c.bf16 %v1074, %v1074
        %v1356 = vpack.c.bf16 %v1077, %v1077
        %v1357 = vpack.c.bf16 %v1079, %v1079
        %v1358 = vld [vmem:[%s3] sm:$0x1]
        %v1360 = vperm.slane %v1358, 0
        %v1362 = vadd.f32 %v1091, %v1360
        %v1363 = vadd.f32 %v1093, %v1360
        %v1364 = vadd.f32 %v1096, %v1360
        %v1365 = vadd.f32 %v1098, %v1360
        %v1366 = vadd.f32 %v1101, %v1360
        %v1367 = vadd.f32 %v1103, %v1360
        %v1368 = vadd.f32 %v1106, %v1360
        %v1369 = vadd.f32 %v1108, %v1360
        %v1370 = vadd.f32 %v1111, %v1360
        %v1371 = vadd.f32 %v1113, %v1360
        %v1372 = vadd.f32 %v1116, %v1360
        %v1373 = vadd.f32 %v1118, %v1360
        %v1374 = vadd.f32 %v1121, %v1360
        %v1375 = vadd.f32 %v1123, %v1360
        %v1376 = vadd.f32 %v1126, %v1360
        %v1377 = vadd.f32 %v1128, %v1360
        %v1378 = vpack.c.bf16 %v1189, %v1140
        %v1379 = vpack.c.bf16 %v1287, %v1238
        %v1380 = vpack.c.bf16 %v1191, %v1142
        %v1381 = vpack.c.bf16 %v1289, %v1240
        %v1382 = vpack.c.bf16 %v1194, %v1145
        %v1383 = vpack.c.bf16 %v1292, %v1243
        %v1384 = vpack.c.bf16 %v1196, %v1147
        %v1385 = vpack.c.bf16 %v1294, %v1245
        %v1386 = vpack.c.bf16 %v1199, %v1150
        %v1387 = vpack.c.bf16 %v1297, %v1248
        %v1388 = vpack.c.bf16 %v1201, %v1152
        %v1389 = vpack.c.bf16 %v1299, %v1250
        %v1390 = vpack.c.bf16 %v1204, %v1155
        %v1391 = vpack.c.bf16 %v1302, %v1253
        %v1392 = vpack.c.bf16 %v1206, %v1157
        %v1393 = vpack.c.bf16 %v1304, %v1255
        %v1394 = vpack.c.bf16 %v1209, %v1160
        %v1395 = vpack.c.bf16 %v1307, %v1258
        %v1396 = vpack.c.bf16 %v1211, %v1162
        %v1397 = vpack.c.bf16 %v1309, %v1260
        %v1398 = vpack.c.bf16 %v1214, %v1165
        %v1399 = vpack.c.bf16 %v1312, %v1263
        %v1400 = vpack.c.bf16 %v1216, %v1167
        %v1401 = vpack.c.bf16 %v1314, %v1265
        %v1402 = vpack.c.bf16 %v1219, %v1170
        %v1403 = vpack.c.bf16 %v1317, %v1268
        %v1404 = vpack.c.bf16 %v1221, %v1172
        %v1405 = vpack.c.bf16 %v1319, %v1270
        %v1406 = vpack.c.bf16 %v1224, %v1175
        %v1407 = vpack.c.bf16 %v1322, %v1273
        %v1408 = vpack.c.bf16 %v1226, %v1177
        %v1409 = vpack.c.bf16 %v1324, %v1275
        %v1410 = vld [vmem:[#allocation8] sm:$0xf]
        %v1411 = vld [vmem:[#allocation8 + $0x4] sm:$0xf]
        %v1412 = vunpack.c.l.bf16 %v1410
        %v1413 = vunpack.c.l.bf16 %v1411
        %v1416 = vunpack.c.l.b16 %v1326
        %v1417 = vunpack.c.l.b16 %v1327
        %v1418 = vpack.c.b16 %v1417, %v1416
        %v1421 = vunpack.c.l.b16 %v1342
        %v1422 = vunpack.c.l.b16 %v1343
        %v1423 = vpack.c.b16 %v1422, %v1421
        %vm1424 = vcmask 261120
        %v1426 = vsel %vm1424, %v1418, 0
        %v1429 = vsel %vm1424, %v1423, 0
        %1431 = vmatpush.bf16.xpose.msra.mxu0 0
        %1432 = vmatpush.bf16.xpose.msra.mxu0 0
        %1433 = vmatpush.bf16.xpose.msra.mxu0 0
        %1434 = vmatpush.bf16.xpose.msra.mxu0 0
        %1435 = vmatpush.bf16.xpose.msra.mxu0 0
        %1436 = vmatpush.bf16.xpose.msra.mxu0 0
        %1437 = vmatpush.bf16.xpose.msra.mxu0 0
        %1438 = vmatpush.bf16.xpose.msra.mxu0 %v1429
        %1439 = vmatmul.bf16.gmra.mxu0 %v1426
        %v1440 = vpop.f32.mrf.mxu0
        %v1441 = vadd.f32 %v1412, %v1440
        %v1442 = vpop.f32.mrf.mxu0
        %v1443 = vadd.f32 %v1413, %v1442
        %1444 = vdwg.mxu0
        %v1447 = vunpack.c.l.b16 %v1328
        %v1448 = vunpack.c.l.b16 %v1329
        %v1449 = vpack.c.b16 %v1448, %v1447
        %v1452 = vunpack.c.l.b16 %v1344
        %v1453 = vunpack.c.l.b16 %v1345
        %v1454 = vpack.c.b16 %v1453, %v1452
        %v1456 = vsel %vm1424, %v1449, 0
        %v1459 = vsel %vm1424, %v1454, 0
        %1461 = vmatpush.bf16.xpose.msra.mxu0 0
        %1462 = vmatpush.bf16.xpose.msra.mxu0 0
        %1463 = vmatpush.bf16.xpose.msra.mxu0 0
        %1464 = vmatpush.bf16.xpose.msra.mxu0 0
        %1465 = vmatpush.bf16.xpose.msra.mxu0 0
        %1466 = vmatpush.bf16.xpose.msra.mxu0 0
        %1467 = vmatpush.bf16.xpose.msra.mxu0 0
        %1468 = vmatpush.bf16.xpose.msra.mxu0 %v1459
        %1469 = vmatmul.bf16.gmra.mxu0 %v1456
        %v1470 = vpop.f32.mrf.mxu0
        %v1471 = vadd.f32 %v1412, %v1470
        %v1472 = vpop.f32.mrf.mxu0
        %v1473 = vadd.f32 %v1413, %v1472
        %1474 = vdwg.mxu0
        %v1477 = vunpack.c.l.b16 %v1330
        %v1478 = vunpack.c.l.b16 %v1331
        %v1479 = vpack.c.b16 %v1478, %v1477
        %v1482 = vunpack.c.l.b16 %v1346
        %v1483 = vunpack.c.l.b16 %v1347
        %v1484 = vpack.c.b16 %v1483, %v1482
        %v1486 = vsel %vm1424, %v1479, 0
        %v1489 = vsel %vm1424, %v1484, 0
        %1491 = vmatpush.bf16.xpose.msra.mxu0 0
        %1492 = vmatpush.bf16.xpose.msra.mxu0 0
        %1493 = vmatpush.bf16.xpose.msra.mxu0 0
        %1494 = vmatpush.bf16.xpose.msra.mxu0 0
        %1495 = vmatpush.bf16.xpose.msra.mxu0 0
        %1496 = vmatpush.bf16.xpose.msra.mxu0 0
        %1497 = vmatpush.bf16.xpose.msra.mxu0 0
        %1498 = vmatpush.bf16.xpose.msra.mxu0 %v1489
        %1499 = vmatmul.bf16.gmra.mxu0 %v1486
        %v1500 = vpop.f32.mrf.mxu0
        %v1501 = vadd.f32 %v1412, %v1500
        %v1502 = vpop.f32.mrf.mxu0
        %v1503 = vadd.f32 %v1413, %v1502
        %1504 = vdwg.mxu0
        %v1507 = vunpack.c.l.b16 %v1332
        %v1508 = vunpack.c.l.b16 %v1333
        %v1509 = vpack.c.b16 %v1508, %v1507
        %v1512 = vunpack.c.l.b16 %v1348
        %v1513 = vunpack.c.l.b16 %v1349
        %v1514 = vpack.c.b16 %v1513, %v1512
        %v1516 = vsel %vm1424, %v1509, 0
        %v1519 = vsel %vm1424, %v1514, 0
        %1521 = vmatpush.bf16.xpose.msra.mxu0 0
        %1522 = vmatpush.bf16.xpose.msra.mxu0 0
        %1523 = vmatpush.bf16.xpose.msra.mxu0 0
        %1524 = vmatpush.bf16.xpose.msra.mxu0 0
        %1525 = vmatpush.bf16.xpose.msra.mxu0 0
        %1526 = vmatpush.bf16.xpose.msra.mxu0 0
        %1527 = vmatpush.bf16.xpose.msra.mxu0 0
        %1528 = vmatpush.bf16.xpose.msra.mxu0 %v1519
        %1529 = vmatmul.bf16.gmra.mxu0 %v1516
        %v1530 = vpop.f32.mrf.mxu0
        %v1531 = vadd.f32 %v1412, %v1530
        %v1532 = vpop.f32.mrf.mxu0
        %v1533 = vadd.f32 %v1413, %v1532
        %1534 = vdwg.mxu0
        %v1537 = vunpack.c.l.b16 %v1334
        %v1538 = vunpack.c.l.b16 %v1335
        %v1539 = vpack.c.b16 %v1538, %v1537
        %v1542 = vunpack.c.l.b16 %v1350
        %v1543 = vunpack.c.l.b16 %v1351
        %v1544 = vpack.c.b16 %v1543, %v1542
        %v1546 = vsel %vm1424, %v1539, 0
        %v1549 = vsel %vm1424, %v1544, 0
        %1551 = vmatpush.bf16.xpose.msra.mxu0 0
        %1552 = vmatpush.bf16.xpose.msra.mxu0 0
        %1553 = vmatpush.bf16.xpose.msra.mxu0 0
        %1554 = vmatpush.bf16.xpose.msra.mxu0 0
        %1555 = vmatpush.bf16.xpose.msra.mxu0 0
        %1556 = vmatpush.bf16.xpose.msra.mxu0 0
        %1557 = vmatpush.bf16.xpose.msra.mxu0 0
        %1558 = vmatpush.bf16.xpose.msra.mxu0 %v1549
        %1559 = vmatmul.bf16.gmra.mxu0 %v1546
        %v1560 = vpop.f32.mrf.mxu0
        %v1561 = vadd.f32 %v1412, %v1560
        %v1562 = vpop.f32.mrf.mxu0
        %v1563 = vadd.f32 %v1413, %v1562
        %1564 = vdwg.mxu0
        %v1567 = vunpack.c.l.b16 %v1336
        %v1568 = vunpack.c.l.b16 %v1337
        %v1569 = vpack.c.b16 %v1568, %v1567
        %v1572 = vunpack.c.l.b16 %v1352
        %v1573 = vunpack.c.l.b16 %v1353
        %v1574 = vpack.c.b16 %v1573, %v1572
        %v1576 = vsel %vm1424, %v1569, 0
        %v1579 = vsel %vm1424, %v1574, 0
        %1581 = vmatpush.bf16.xpose.msra.mxu0 0
        %1582 = vmatpush.bf16.xpose.msra.mxu0 0
        %1583 = vmatpush.bf16.xpose.msra.mxu0 0
        %1584 = vmatpush.bf16.xpose.msra.mxu0 0
        %1585 = vmatpush.bf16.xpose.msra.mxu0 0
        %1586 = vmatpush.bf16.xpose.msra.mxu0 0
        %1587 = vmatpush.bf16.xpose.msra.mxu0 0
        %1588 = vmatpush.bf16.xpose.msra.mxu0 %v1579
        %1589 = vmatmul.bf16.gmra.mxu0 %v1576
        %v1590 = vpop.f32.mrf.mxu0
        %v1591 = vadd.f32 %v1412, %v1590
        %v1592 = vpop.f32.mrf.mxu0
        %v1593 = vadd.f32 %v1413, %v1592
        %1594 = vdwg.mxu0
        %v1597 = vunpack.c.l.b16 %v1338
        %v1598 = vunpack.c.l.b16 %v1339
        %v1599 = vpack.c.b16 %v1598, %v1597
        %v1602 = vunpack.c.l.b16 %v1354
        %v1603 = vunpack.c.l.b16 %v1355
        %v1604 = vpack.c.b16 %v1603, %v1602
        %v1606 = vsel %vm1424, %v1599, 0
        %v1609 = vsel %vm1424, %v1604, 0
        %1611 = vmatpush.bf16.xpose.msra.mxu0 0
        %1612 = vmatpush.bf16.xpose.msra.mxu0 0
        %1613 = vmatpush.bf16.xpose.msra.mxu0 0
        %1614 = vmatpush.bf16.xpose.msra.mxu0 0
        %1615 = vmatpush.bf16.xpose.msra.mxu0 0
        %1616 = vmatpush.bf16.xpose.msra.mxu0 0
        %1617 = vmatpush.bf16.xpose.msra.mxu0 0
        %1618 = vmatpush.bf16.xpose.msra.mxu0 %v1609
        %1619 = vmatmul.bf16.gmra.mxu0 %v1606
        %v1620 = vpop.f32.mrf.mxu0
        %v1621 = vadd.f32 %v1412, %v1620
        %v1622 = vpop.f32.mrf.mxu0
        %v1623 = vadd.f32 %v1413, %v1622
        %1624 = vdwg.mxu0
        %v1627 = vunpack.c.l.b16 %v1340
        %v1628 = vunpack.c.l.b16 %v1341
        %v1629 = vpack.c.b16 %v1628, %v1627
        %v1632 = vunpack.c.l.b16 %v1356
        %v1633 = vunpack.c.l.b16 %v1357
        %v1634 = vpack.c.b16 %v1633, %v1632
        %v1636 = vsel %vm1424, %v1629, 0
        %v1639 = vsel %vm1424, %v1634, 0
        %1641 = vmatpush.bf16.xpose.msra.mxu0 0
        %1642 = vmatpush.bf16.xpose.msra.mxu0 0
        %1643 = vmatpush.bf16.xpose.msra.mxu0 0
        %1644 = vmatpush.bf16.xpose.msra.mxu0 0
        %1645 = vmatpush.bf16.xpose.msra.mxu0 0
        %1646 = vmatpush.bf16.xpose.msra.mxu0 0
        %1647 = vmatpush.bf16.xpose.msra.mxu0 0
        %1648 = vmatpush.bf16.xpose.msra.mxu0 %v1639
        %1649 = vmatmul.bf16.gmra.mxu0 %v1636
        %v1650 = vpop.f32.mrf.mxu0
        %v1651 = vadd.f32 %v1412, %v1650
        %v1652 = vpop.f32.mrf.mxu0
        %v1653 = vadd.f32 %v1413, %v1652
        %1654 = vdwg.mxu0
        %vm1655 = vcmask 130048
        %v1656 = vsel %vm1655, %v1441, -inf
        %1657 = vmax.xlane.f32.xlu0 %v1656
        %v1658 = vpop.xlane.xlu0 %1657
        %v1659 = vsel %vm1655, %v1443, -inf
        %1660 = vmax.xlane.f32.xlu0 %v1659
        %v1661 = vpop.xlane.xlu0 %1660
        %v1662 = vsel %vm1655, %v1471, -inf
        %1663 = vmax.xlane.f32.xlu0 %v1662
        %v1664 = vpop.xlane.xlu0 %1663
        %v1665 = vsel %vm1655, %v1473, -inf
        %1666 = vmax.xlane.f32.xlu0 %v1665
        %v1667 = vpop.xlane.xlu0 %1666
        %v1668 = vsel %vm1655, %v1501, -inf
        %1669 = vmax.xlane.f32.xlu0 %v1668
        %v1670 = vpop.xlane.xlu0 %1669
        %v1671 = vsel %vm1655, %v1503, -inf
        %1672 = vmax.xlane.f32.xlu0 %v1671
        %v1673 = vpop.xlane.xlu0 %1672
        %v1674 = vsel %vm1655, %v1531, -inf
        %1675 = vmax.xlane.f32.xlu0 %v1674
        %v1676 = vpop.xlane.xlu0 %1675
        %v1677 = vsel %vm1655, %v1533, -inf
        %1678 = vmax.xlane.f32.xlu0 %v1677
        %v1679 = vpop.xlane.xlu0 %1678
        %v1680 = vsel %vm1655, %v1561, -inf
        %1681 = vmax.xlane.f32.xlu0 %v1680
        %v1682 = vpop.xlane.xlu0 %1681
        %v1683 = vsel %vm1655, %v1563, -inf
        %1684 = vmax.xlane.f32.xlu0 %v1683
        %v1685 = vpop.xlane.xlu0 %1684
        %v1686 = vsel %vm1655, %v1591, -inf
        %1687 = vmax.xlane.f32.xlu0 %v1686
        %v1688 = vpop.xlane.xlu0 %1687
        %v1689 = vsel %vm1655, %v1593, -inf
        %1690 = vmax.xlane.f32.xlu0 %v1689
        %v1691 = vpop.xlane.xlu0 %1690
        %v1692 = vsel %vm1655, %v1621, -inf
        %1693 = vmax.xlane.f32.xlu0 %v1692
        %v1694 = vpop.xlane.xlu0 %1693
        %v1695 = vsel %vm1655, %v1623, -inf
        %1696 = vmax.xlane.f32.xlu0 %v1695
        %v1697 = vpop.xlane.xlu0 %1696
        %v1698 = vsel %vm1655, %v1651, -inf
        %1699 = vmax.xlane.f32.xlu0 %v1698
        %v1700 = vpop.xlane.xlu0 %1699
        %v1701 = vsel %vm1655, %v1653, -inf
        %1702 = vmax.xlane.f32.xlu0 %v1701
        %v1703 = vpop.xlane.xlu0 %1702
        %v1704 = vsub.f32 %v1441, %v1658
        %v1705 = vsub.f32 %v1443, %v1661
        %v1706 = vsub.f32 %v1471, %v1664
        %v1707 = vsub.f32 %v1473, %v1667
        %v1708 = vsub.f32 %v1501, %v1670
        %v1709 = vsub.f32 %v1503, %v1673
        %v1710 = vsub.f32 %v1531, %v1676
        %v1711 = vsub.f32 %v1533, %v1679
        %v1712 = vsub.f32 %v1561, %v1682
        %v1713 = vsub.f32 %v1563, %v1685
        %v1714 = vsub.f32 %v1591, %v1688
        %v1715 = vsub.f32 %v1593, %v1691
        %v1716 = vsub.f32 %v1621, %v1694
        %v1717 = vsub.f32 %v1623, %v1697
        %v1718 = vsub.f32 %v1651, %v1700
        %v1719 = vsub.f32 %v1653, %v1703
        %v1720 = vmul.f32 %v1704, 1.442695
        %v1721 = vpow.pop %v1720
        %v1722 = vmul.f32 %v1705, 1.442695
        %v1723 = vpow.pop %v1722
        %v1724 = vmul.f32 %v1706, 1.442695
        %v1725 = vpow.pop %v1724
        %v1726 = vmul.f32 %v1707, 1.442695
        %v1727 = vpow.pop %v1726
        %v1728 = vmul.f32 %v1708, 1.442695
        %v1729 = vpow.pop %v1728
        %v1730 = vmul.f32 %v1709, 1.442695
        %v1731 = vpow.pop %v1730
        %v1732 = vmul.f32 %v1710, 1.442695
        %v1733 = vpow.pop %v1732
        %v1734 = vmul.f32 %v1711, 1.442695
        %v1735 = vpow.pop %v1734
        %v1736 = vmul.f32 %v1712, 1.442695
        %v1737 = vpow.pop %v1736
        %v1738 = vmul.f32 %v1713, 1.442695
        %v1739 = vpow.pop %v1738
        %v1740 = vmul.f32 %v1714, 1.442695
        %v1741 = vpow.pop %v1740
        %v1742 = vmul.f32 %v1715, 1.442695
        %v1743 = vpow.pop %v1742
        %v1744 = vmul.f32 %v1716, 1.442695
        %v1745 = vpow.pop %v1744
        %v1746 = vmul.f32 %v1717, 1.442695
        %v1747 = vpow.pop %v1746
        %v1748 = vmul.f32 %v1718, 1.442695
        %v1749 = vpow.pop %v1748
        %v1750 = vmul.f32 %v1719, 1.442695
        %v1751 = vpow.pop %v1750
        %v1752 = vsel %vm1655, %v1721, 0.0
        %1753 = vadd.xlane.f32.xlu0 %v1752
        %v1754 = vpop.xlane.xlu0 %1753
        %v1755 = vsel %vm1655, %v1723, 0.0
        %1756 = vadd.xlane.f32.xlu0 %v1755
        %v1757 = vpop.xlane.xlu0 %1756
        %v1758 = vsel %vm1655, %v1725, 0.0
        %1759 = vadd.xlane.f32.xlu0 %v1758
        %v1760 = vpop.xlane.xlu0 %1759
        %v1761 = vsel %vm1655, %v1727, 0.0
        %1762 = vadd.xlane.f32.xlu0 %v1761
        %v1763 = vpop.xlane.xlu0 %1762
        %v1764 = vsel %vm1655, %v1729, 0.0
        %1765 = vadd.xlane.f32.xlu0 %v1764
        %v1766 = vpop.xlane.xlu0 %1765
        %v1767 = vsel %vm1655, %v1731, 0.0
        %1768 = vadd.xlane.f32.xlu0 %v1767
        %v1769 = vpop.xlane.xlu0 %1768
        %v1770 = vsel %vm1655, %v1733, 0.0
        %1771 = vadd.xlane.f32.xlu0 %v1770
        %v1772 = vpop.xlane.xlu0 %1771
        %v1773 = vsel %vm1655, %v1735, 0.0
        %1774 = vadd.xlane.f32.xlu0 %v1773
        %v1775 = vpop.xlane.xlu0 %1774
        %v1776 = vsel %vm1655, %v1737, 0.0
        %1777 = vadd.xlane.f32.xlu0 %v1776
        %v1778 = vpop.xlane.xlu0 %1777
        %v1779 = vsel %vm1655, %v1739, 0.0
        %1780 = vadd.xlane.f32.xlu0 %v1779
        %v1781 = vpop.xlane.xlu0 %1780
        %v1782 = vsel %vm1655, %v1741, 0.0
        %1783 = vadd.xlane.f32.xlu0 %v1782
        %v1784 = vpop.xlane.xlu0 %1783
        %v1785 = vsel %vm1655, %v1743, 0.0
        %1786 = vadd.xlane.f32.xlu0 %v1785
        %v1787 = vpop.xlane.xlu0 %1786
        %v1788 = vsel %vm1655, %v1745, 0.0
        %1789 = vadd.xlane.f32.xlu0 %v1788
        %v1790 = vpop.xlane.xlu0 %1789
        %v1791 = vsel %vm1655, %v1747, 0.0
        %1792 = vadd.xlane.f32.xlu0 %v1791
        %v1793 = vpop.xlane.xlu0 %1792
        %v1794 = vsel %vm1655, %v1749, 0.0
        %1795 = vadd.xlane.f32.xlu0 %v1794
        %v1796 = vpop.xlane.xlu0 %1795
        %v1797 = vsel %vm1655, %v1751, 0.0
        %1798 = vadd.xlane.f32.xlu0 %v1797
        %v1799 = vpop.xlane.xlu0 %1798
        %v1800 = vpack.c.bf16 %v1721, %v1721
        %v1801 = vpack.c.bf16 %v1723, %v1723
        %v1802 = vpack.c.bf16 %v1725, %v1725
        %v1803 = vpack.c.bf16 %v1727, %v1727
        %v1804 = vpack.c.bf16 %v1729, %v1729
        %v1805 = vpack.c.bf16 %v1731, %v1731
        %v1806 = vpack.c.bf16 %v1733, %v1733
        %v1807 = vpack.c.bf16 %v1735, %v1735
        %v1808 = vpack.c.bf16 %v1737, %v1737
        %v1809 = vpack.c.bf16 %v1739, %v1739
        %v1810 = vpack.c.bf16 %v1741, %v1741
        %v1811 = vpack.c.bf16 %v1743, %v1743
        %v1812 = vpack.c.bf16 %v1745, %v1745
        %v1813 = vpack.c.bf16 %v1747, %v1747
        %v1814 = vpack.c.bf16 %v1749, %v1749
        %v1815 = vpack.c.bf16 %v1751, %v1751
        %v1818 = vunpack.c.l.b16 %v1800
        %v1819 = vunpack.c.l.b16 %v1801
        %v1820 = vpack.c.b16 %v1819, %v1818
        %v1823 = vunpack.c.l.b16 %v1378
        %v1824 = vunpack.c.l.b16 %v1380
        %v1825 = vpack.c.b16 %v1824, %v1823
        %v1828 = vsel %vm1655, %v1820, 0
        %1830 = vmatpush.bf16.msra.mxu0 0
        %1831 = vmatpush.bf16.msra.mxu0 0
        %1832 = vmatpush.bf16.msra.mxu0 0
        %1833 = vmatpush.bf16.msra.mxu0 0
        %1834 = vmatpush.bf16.msra.mxu0 0
        %1835 = vmatpush.bf16.msra.mxu0 0
        %1836 = vmatpush.bf16.msra.mxu0 0
        %1837 = vmatpush.bf16.msra.mxu0 %v1825
        %1838 = vmatmul.bf16.gmra.mxu0 %v1828
        %v1839 = vpop.f32.mrf.mxu0
        %v1840 = vadd.f32 0.0, %v1839
        %v1841 = vpop.f32.mrf.mxu0
        %v1842 = vadd.f32 0.0, %v1841
        %1843 = vdwg.mxu0
        %v1846 = vunpack.c.l.b16 %v1802
        %v1847 = vunpack.c.l.b16 %v1803
        %v1848 = vpack.c.b16 %v1847, %v1846
        %v1851 = vunpack.c.l.b16 %v1382
        %v1852 = vunpack.c.l.b16 %v1384
        %v1853 = vpack.c.b16 %v1852, %v1851
        %v1856 = vsel %vm1655, %v1848, 0
        %1858 = vmatpush.bf16.msra.mxu0 0
        %1859 = vmatpush.bf16.msra.mxu0 0
        %1860 = vmatpush.bf16.msra.mxu0 0
        %1861 = vmatpush.bf16.msra.mxu0 0
        %1862 = vmatpush.bf16.msra.mxu0 0
        %1863 = vmatpush.bf16.msra.mxu0 0
        %1864 = vmatpush.bf16.msra.mxu0 0
        %1865 = vmatpush.bf16.msra.mxu0 %v1853
        %1866 = vmatmul.bf16.gmra.mxu0 %v1856
        %v1867 = vpop.f32.mrf.mxu0
        %v1868 = vadd.f32 0.0, %v1867
        %v1869 = vpop.f32.mrf.mxu0
        %v1870 = vadd.f32 0.0, %v1869
        %1871 = vdwg.mxu0
        %v1874 = vunpack.c.l.b16 %v1804
        %v1875 = vunpack.c.l.b16 %v1805
        %v1876 = vpack.c.b16 %v1875, %v1874
        %v1879 = vunpack.c.l.b16 %v1386
        %v1880 = vunpack.c.l.b16 %v1388
        %v1881 = vpack.c.b16 %v1880, %v1879
        %v1884 = vsel %vm1655, %v1876, 0
        %1886 = vmatpush.bf16.msra.mxu0 0
        %1887 = vmatpush.bf16.msra.mxu0 0
        %1888 = vmatpush.bf16.msra.mxu0 0
        %1889 = vmatpush.bf16.msra.mxu0 0
        %1890 = vmatpush.bf16.msra.mxu0 0
        %1891 = vmatpush.bf16.msra.mxu0 0
        %1892 = vmatpush.bf16.msra.mxu0 0
        %1893 = vmatpush.bf16.msra.mxu0 %v1881
        %1894 = vmatmul.bf16.gmra.mxu0 %v1884
        %v1895 = vpop.f32.mrf.mxu0
        %v1896 = vadd.f32 0.0, %v1895
        %v1897 = vpop.f32.mrf.mxu0
        %v1898 = vadd.f32 0.0, %v1897
        %1899 = vdwg.mxu0
        %v1902 = vunpack.c.l.b16 %v1806
        %v1903 = vunpack.c.l.b16 %v1807
        %v1904 = vpack.c.b16 %v1903, %v1902
        %v1907 = vunpack.c.l.b16 %v1390
        %v1908 = vunpack.c.l.b16 %v1392
        %v1909 = vpack.c.b16 %v1908, %v1907
        %v1912 = vsel %vm1655, %v1904, 0
        %1914 = vmatpush.bf16.msra.mxu0 0
        %1915 = vmatpush.bf16.msra.mxu0 0
        %1916 = vmatpush.bf16.msra.mxu0 0
        %1917 = vmatpush.bf16.msra.mxu0 0
        %1918 = vmatpush.bf16.msra.mxu0 0
        %1919 = vmatpush.bf16.msra.mxu0 0
        %1920 = vmatpush.bf16.msra.mxu0 0
        %1921 = vmatpush.bf16.msra.mxu0 %v1909
        %1922 = vmatmul.bf16.gmra.mxu0 %v1912
        %v1923 = vpop.f32.mrf.mxu0
        %v1924 = vadd.f32 0.0, %v1923
        %v1925 = vpop.f32.mrf.mxu0
        %v1926 = vadd.f32 0.0, %v1925
        %1927 = vdwg.mxu0
        %v1930 = vunpack.c.l.b16 %v1808
        %v1931 = vunpack.c.l.b16 %v1809
        %v1932 = vpack.c.b16 %v1931, %v1930
        %v1935 = vunpack.c.l.b16 %v1394
        %v1936 = vunpack.c.l.b16 %v1396
        %v1937 = vpack.c.b16 %v1936, %v1935
        %v1940 = vsel %vm1655, %v1932, 0
        %1942 = vmatpush.bf16.msra.mxu0 0
        %1943 = vmatpush.bf16.msra.mxu0 0
        %1944 = vmatpush.bf16.msra.mxu0 0
        %1945 = vmatpush.bf16.msra.mxu0 0
        %1946 = vmatpush.bf16.msra.mxu0 0
        %1947 = vmatpush.bf16.msra.mxu0 0
        %1948 = vmatpush.bf16.msra.mxu0 0
        %1949 = vmatpush.bf16.msra.mxu0 %v1937
        %1950 = vmatmul.bf16.gmra.mxu0 %v1940
        %v1951 = vpop.f32.mrf.mxu0
        %v1952 = vadd.f32 0.0, %v1951
        %v1953 = vpop.f32.mrf.mxu0
        %v1954 = vadd.f32 0.0, %v1953
        %1955 = vdwg.mxu0
        %v1958 = vunpack.c.l.b16 %v1810
        %v1959 = vunpack.c.l.b16 %v1811
        %v1960 = vpack.c.b16 %v1959, %v1958
        %v1963 = vunpack.c.l.b16 %v1398
        %v1964 = vunpack.c.l.b16 %v1400
        %v1965 = vpack.c.b16 %v1964, %v1963
        %v1968 = vsel %vm1655, %v1960, 0
        %1970 = vmatpush.bf16.msra.mxu0 0
        %1971 = vmatpush.bf16.msra.mxu0 0
        %1972 = vmatpush.bf16.msra.mxu0 0
        %1973 = vmatpush.bf16.msra.mxu0 0
        %1974 = vmatpush.bf16.msra.mxu0 0
        %1975 = vmatpush.bf16.msra.mxu0 0
        %1976 = vmatpush.bf16.msra.mxu0 0
        %1977 = vmatpush.bf16.msra.mxu0 %v1965
        %1978 = vmatmul.bf16.gmra.mxu0 %v1968
        %v1979 = vpop.f32.mrf.mxu0
        %v1980 = vadd.f32 0.0, %v1979
        %v1981 = vpop.f32.mrf.mxu0
        %v1982 = vadd.f32 0.0, %v1981
        %1983 = vdwg.mxu0
        %v1986 = vunpack.c.l.b16 %v1812
        %v1987 = vunpack.c.l.b16 %v1813
        %v1988 = vpack.c.b16 %v1987, %v1986
        %v1991 = vunpack.c.l.b16 %v1402
        %v1992 = vunpack.c.l.b16 %v1404
        %v1993 = vpack.c.b16 %v1992, %v1991
        %v1996 = vsel %vm1655, %v1988, 0
        %1998 = vmatpush.bf16.msra.mxu0 0
        %1999 = vmatpush.bf16.msra.mxu0 0
        %2000 = vmatpush.bf16.msra.mxu0 0
        %2001 = vmatpush.bf16.msra.mxu0 0
        %2002 = vmatpush.bf16.msra.mxu0 0
        %2003 = vmatpush.bf16.msra.mxu0 0
        %2004 = vmatpush.bf16.msra.mxu0 0
        %2005 = vmatpush.bf16.msra.mxu0 %v1993
        %2006 = vmatmul.bf16.gmra.mxu0 %v1996
        %v2007 = vpop.f32.mrf.mxu0
        %v2008 = vadd.f32 0.0, %v2007
        %v2009 = vpop.f32.mrf.mxu0
        %v2010 = vadd.f32 0.0, %v2009
        %2011 = vdwg.mxu0
        %v2014 = vunpack.c.l.b16 %v1814
        %v2015 = vunpack.c.l.b16 %v1815
        %v2016 = vpack.c.b16 %v2015, %v2014
        %v2019 = vunpack.c.l.b16 %v1406
        %v2020 = vunpack.c.l.b16 %v1408
        %v2021 = vpack.c.b16 %v2020, %v2019
        %v2024 = vsel %vm1655, %v2016, 0
        %2026 = vmatpush.bf16.msra.mxu0 0
        %2027 = vmatpush.bf16.msra.mxu0 0
        %2028 = vmatpush.bf16.msra.mxu0 0
        %2029 = vmatpush.bf16.msra.mxu0 0
        %2030 = vmatpush.bf16.msra.mxu0 0
        %2031 = vmatpush.bf16.msra.mxu0 0
        %2032 = vmatpush.bf16.msra.mxu0 0
        %2033 = vmatpush.bf16.msra.mxu0 %v2021
        %2034 = vmatmul.bf16.gmra.mxu0 %v2024
        %v2035 = vpop.f32.mrf.mxu0
        %v2036 = vadd.f32 0.0, %v2035
        %v2037 = vpop.f32.mrf.mxu0
        %v2038 = vadd.f32 0.0, %v2037
        %2039 = vdwg.mxu0
        %v2040 = vrcp.pop %v1754
        %v2041 = vmul.f32 %v1754, %v2040
        %v2042 = vsub.f32 1.0, %v2041
        %v2043 = vmul.f32 %v2040, %v2042
        %v2044 = vadd.f32 %v2040, %v2043
        %vm2045 = vweird.f32 %v1754
        %vm2046 = vweird.f32 %v2040
        %vm2047 = vmor %vm2045, %vm2046
        %v2048 = vsel %vm2047, %v2040, %v2044
        %v2049 = vand.u32 2147483647, %v1754
        %vm2050 = vcmp.eq.f32.partialorder %v2049, 8.507059e+37
        %v2051 = vand.u32 %v1754, 2147483648
        %v2052 = vor.u32 1.1754944e-38, %v2051
        %v2053 = vsel %vm2050, %v2052, %v2048
        %v2054 = vrcp.pop %v1757
        %v2055 = vmul.f32 %v1757, %v2054
        %v2056 = vsub.f32 1.0, %v2055
        %v2057 = vmul.f32 %v2054, %v2056
        %v2058 = vadd.f32 %v2054, %v2057
        %vm2059 = vweird.f32 %v1757
        %vm2060 = vweird.f32 %v2054
        %vm2061 = vmor %vm2059, %vm2060
        %v2062 = vsel %vm2061, %v2054, %v2058
        %v2063 = vand.u32 2147483647, %v1757
        %vm2064 = vcmp.eq.f32.partialorder %v2063, 8.507059e+37
        %v2065 = vand.u32 %v1757, 2147483648
        %v2066 = vor.u32 1.1754944e-38, %v2065
        %v2067 = vsel %vm2064, %v2066, %v2062
        %v2068 = vrcp.pop %v1760
        %v2069 = vmul.f32 %v1760, %v2068
        %v2070 = vsub.f32 1.0, %v2069
        %v2071 = vmul.f32 %v2068, %v2070
        %v2072 = vadd.f32 %v2068, %v2071
        %vm2073 = vweird.f32 %v1760
        %vm2074 = vweird.f32 %v2068
        %vm2075 = vmor %vm2073, %vm2074
        %v2076 = vsel %vm2075, %v2068, %v2072
        %v2077 = vand.u32 2147483647, %v1760
        %vm2078 = vcmp.eq.f32.partialorder %v2077, 8.507059e+37
        %v2079 = vand.u32 %v1760, 2147483648
        %v2080 = vor.u32 1.1754944e-38, %v2079
        %v2081 = vsel %vm2078, %v2080, %v2076
        %v2082 = vrcp.pop %v1763
        %v2083 = vmul.f32 %v1763, %v2082
        %v2084 = vsub.f32 1.0, %v2083
        %v2085 = vmul.f32 %v2082, %v2084
        %v2086 = vadd.f32 %v2082, %v2085
        %vm2087 = vweird.f32 %v1763
        %vm2088 = vweird.f32 %v2082
        %vm2089 = vmor %vm2087, %vm2088
        %v2090 = vsel %vm2089, %v2082, %v2086
        %v2091 = vand.u32 2147483647, %v1763
        %vm2092 = vcmp.eq.f32.partialorder %v2091, 8.507059e+37
        %v2093 = vand.u32 %v1763, 2147483648
        %v2094 = vor.u32 1.1754944e-38, %v2093
        %v2095 = vsel %vm2092, %v2094, %v2090
        %v2096 = vrcp.pop %v1766
        %v2097 = vmul.f32 %v1766, %v2096
        %v2098 = vsub.f32 1.0, %v2097
        %v2099 = vmul.f32 %v2096, %v2098
        %v2100 = vadd.f32 %v2096, %v2099
        %vm2101 = vweird.f32 %v1766
        %vm2102 = vweird.f32 %v2096
        %vm2103 = vmor %vm2101, %vm2102
        %v2104 = vsel %vm2103, %v2096, %v2100
        %v2105 = vand.u32 2147483647, %v1766
        %vm2106 = vcmp.eq.f32.partialorder %v2105, 8.507059e+37
        %v2107 = vand.u32 %v1766, 2147483648
        %v2108 = vor.u32 1.1754944e-38, %v2107
        %v2109 = vsel %vm2106, %v2108, %v2104
        %v2110 = vrcp.pop %v1769
        %v2111 = vmul.f32 %v1769, %v2110
        %v2112 = vsub.f32 1.0, %v2111
        %v2113 = vmul.f32 %v2110, %v2112
        %v2114 = vadd.f32 %v2110, %v2113
        %vm2115 = vweird.f32 %v1769
        %vm2116 = vweird.f32 %v2110
        %vm2117 = vmor %vm2115, %vm2116
        %v2118 = vsel %vm2117, %v2110, %v2114
        %v2119 = vand.u32 2147483647, %v1769
        %vm2120 = vcmp.eq.f32.partialorder %v2119, 8.507059e+37
        %v2121 = vand.u32 %v1769, 2147483648
        %v2122 = vor.u32 1.1754944e-38, %v2121
        %v2123 = vsel %vm2120, %v2122, %v2118
        %v2124 = vrcp.pop %v1772
        %v2125 = vmul.f32 %v1772, %v2124
        %v2126 = vsub.f32 1.0, %v2125
        %v2127 = vmul.f32 %v2124, %v2126
        %v2128 = vadd.f32 %v2124, %v2127
        %vm2129 = vweird.f32 %v1772
        %vm2130 = vweird.f32 %v2124
        %vm2131 = vmor %vm2129, %vm2130
        %v2132 = vsel %vm2131, %v2124, %v2128
        %v2133 = vand.u32 2147483647, %v1772
        %vm2134 = vcmp.eq.f32.partialorder %v2133, 8.507059e+37
        %v2135 = vand.u32 %v1772, 2147483648
        %v2136 = vor.u32 1.1754944e-38, %v2135
        %v2137 = vsel %vm2134, %v2136, %v2132
        %v2138 = vrcp.pop %v1775
        %v2139 = vmul.f32 %v1775, %v2138
        %v2140 = vsub.f32 1.0, %v2139
        %v2141 = vmul.f32 %v2138, %v2140
        %v2142 = vadd.f32 %v2138, %v2141
        %vm2143 = vweird.f32 %v1775
        %vm2144 = vweird.f32 %v2138
        %vm2145 = vmor %vm2143, %vm2144
        %v2146 = vsel %vm2145, %v2138, %v2142
        %v2147 = vand.u32 2147483647, %v1775
        %vm2148 = vcmp.eq.f32.partialorder %v2147, 8.507059e+37
        %v2149 = vand.u32 %v1775, 2147483648
        %v2150 = vor.u32 1.1754944e-38, %v2149
        %v2151 = vsel %vm2148, %v2150, %v2146
        %v2152 = vrcp.pop %v1778
        %v2153 = vmul.f32 %v1778, %v2152
        %v2154 = vsub.f32 1.0, %v2153
        %v2155 = vmul.f32 %v2152, %v2154
        %v2156 = vadd.f32 %v2152, %v2155
        %vm2157 = vweird.f32 %v1778
        %vm2158 = vweird.f32 %v2152
        %vm2159 = vmor %vm2157, %vm2158
        %v2160 = vsel %vm2159, %v2152, %v2156
        %v2161 = vand.u32 2147483647, %v1778
        %vm2162 = vcmp.eq.f32.partialorder %v2161, 8.507059e+37
        %v2163 = vand.u32 %v1778, 2147483648
        %v2164 = vor.u32 1.1754944e-38, %v2163
        %v2165 = vsel %vm2162, %v2164, %v2160
        %v2166 = vrcp.pop %v1781
        %v2167 = vmul.f32 %v1781, %v2166
        %v2168 = vsub.f32 1.0, %v2167
        %v2169 = vmul.f32 %v2166, %v2168
        %v2170 = vadd.f32 %v2166, %v2169
        %vm2171 = vweird.f32 %v1781
        %vm2172 = vweird.f32 %v2166
        %vm2173 = vmor %vm2171, %vm2172
        %v2174 = vsel %vm2173, %v2166, %v2170
        %v2175 = vand.u32 2147483647, %v1781
        %vm2176 = vcmp.eq.f32.partialorder %v2175, 8.507059e+37
        %v2177 = vand.u32 %v1781, 2147483648
        %v2178 = vor.u32 1.1754944e-38, %v2177
        %v2179 = vsel %vm2176, %v2178, %v2174
        %v2180 = vrcp.pop %v1784
        %v2181 = vmul.f32 %v1784, %v2180
        %v2182 = vsub.f32 1.0, %v2181
        %v2183 = vmul.f32 %v2180, %v2182
        %v2184 = vadd.f32 %v2180, %v2183
        %vm2185 = vweird.f32 %v1784
        %vm2186 = vweird.f32 %v2180
        %vm2187 = vmor %vm2185, %vm2186
        %v2188 = vsel %vm2187, %v2180, %v2184
        %v2189 = vand.u32 2147483647, %v1784
        %vm2190 = vcmp.eq.f32.partialorder %v2189, 8.507059e+37
        %v2191 = vand.u32 %v1784, 2147483648
        %v2192 = vor.u32 1.1754944e-38, %v2191
        %v2193 = vsel %vm2190, %v2192, %v2188
        %v2194 = vrcp.pop %v1787
        %v2195 = vmul.f32 %v1787, %v2194
        %v2196 = vsub.f32 1.0, %v2195
        %v2197 = vmul.f32 %v2194, %v2196
        %v2198 = vadd.f32 %v2194, %v2197
        %vm2199 = vweird.f32 %v1787
        %vm2200 = vweird.f32 %v2194
        %vm2201 = vmor %vm2199, %vm2200
        %v2202 = vsel %vm2201, %v2194, %v2198
        %v2203 = vand.u32 2147483647, %v1787
        %vm2204 = vcmp.eq.f32.partialorder %v2203, 8.507059e+37
        %v2205 = vand.u32 %v1787, 2147483648
        %v2206 = vor.u32 1.1754944e-38, %v2205
        %v2207 = vsel %vm2204, %v2206, %v2202
        %v2208 = vrcp.pop %v1790
        %v2209 = vmul.f32 %v1790, %v2208
        %v2210 = vsub.f32 1.0, %v2209
        %v2211 = vmul.f32 %v2208, %v2210
        %v2212 = vadd.f32 %v2208, %v2211
        %vm2213 = vweird.f32 %v1790
        %vm2214 = vweird.f32 %v2208
        %vm2215 = vmor %vm2213, %vm2214
        %v2216 = vsel %vm2215, %v2208, %v2212
        %v2217 = vand.u32 2147483647, %v1790
        %vm2218 = vcmp.eq.f32.partialorder %v2217, 8.507059e+37
        %v2219 = vand.u32 %v1790, 2147483648
        %v2220 = vor.u32 1.1754944e-38, %v2219
        %v2221 = vsel %vm2218, %v2220, %v2216
        %v2222 = vrcp.pop %v1793
        %v2223 = vmul.f32 %v1793, %v2222
        %v2224 = vsub.f32 1.0, %v2223
        %v2225 = vmul.f32 %v2222, %v2224
        %v2226 = vadd.f32 %v2222, %v2225
        %vm2227 = vweird.f32 %v1793
        %vm2228 = vweird.f32 %v2222
        %vm2229 = vmor %vm2227, %vm2228
        %v2230 = vsel %vm2229, %v2222, %v2226
        %v2231 = vand.u32 2147483647, %v1793
        %vm2232 = vcmp.eq.f32.partialorder %v2231, 8.507059e+37
        %v2233 = vand.u32 %v1793, 2147483648
        %v2234 = vor.u32 1.1754944e-38, %v2233
        %v2235 = vsel %vm2232, %v2234, %v2230
        %v2236 = vrcp.pop %v1796
        %v2237 = vmul.f32 %v1796, %v2236
        %v2238 = vsub.f32 1.0, %v2237
        %v2239 = vmul.f32 %v2236, %v2238
        %v2240 = vadd.f32 %v2236, %v2239
        %vm2241 = vweird.f32 %v1796
        %vm2242 = vweird.f32 %v2236
        %vm2243 = vmor %vm2241, %vm2242
        %v2244 = vsel %vm2243, %v2236, %v2240
        %v2245 = vand.u32 2147483647, %v1796
        %vm2246 = vcmp.eq.f32.partialorder %v2245, 8.507059e+37
        %v2247 = vand.u32 %v1796, 2147483648
        %v2248 = vor.u32 1.1754944e-38, %v2247
        %v2249 = vsel %vm2246, %v2248, %v2244
        %v2250 = vrcp.pop %v1799
        %v2251 = vmul.f32 %v1799, %v2250
        %v2252 = vsub.f32 1.0, %v2251
        %v2253 = vmul.f32 %v2250, %v2252
        %v2254 = vadd.f32 %v2250, %v2253
        %vm2255 = vweird.f32 %v1799
        %vm2256 = vweird.f32 %v2250
        %vm2257 = vmor %vm2255, %vm2256
        %v2258 = vsel %vm2257, %v2250, %v2254
        %v2259 = vand.u32 2147483647, %v1799
        %vm2260 = vcmp.eq.f32.partialorder %v2259, 8.507059e+37
        %v2261 = vand.u32 %v1799, 2147483648
        %v2262 = vor.u32 1.1754944e-38, %v2261
        %v2263 = vsel %vm2260, %v2262, %v2258
        %v2264 = vmul.f32 %v1840, %v2053
        %v2265 = vmul.f32 %v1842, %v2067
        %v2266 = vmul.f32 %v1868, %v2081
        %v2267 = vmul.f32 %v1870, %v2095
        %v2268 = vmul.f32 %v1896, %v2109
        %v2269 = vmul.f32 %v1898, %v2123
        %v2270 = vmul.f32 %v1924, %v2137
        %v2271 = vmul.f32 %v1926, %v2151
        %v2272 = vmul.f32 %v1952, %v2165
        %v2273 = vmul.f32 %v1954, %v2179
        %v2274 = vmul.f32 %v1980, %v2193
        %v2275 = vmul.f32 %v1982, %v2207
        %v2276 = vmul.f32 %v2008, %v2221
        %v2277 = vmul.f32 %v2010, %v2235
        %v2278 = vmul.f32 %v2036, %v2249
        %v2279 = vmul.f32 %v2038, %v2263
        %v2280 = vadd.f32 %v2264, 0.0
        %v2281 = vadd.f32 %v2265, 0.0
        %v2282 = vadd.f32 %v2266, 0.0
        %v2283 = vadd.f32 %v2267, 0.0
        %v2284 = vadd.f32 %v2268, 0.0
        %v2285 = vadd.f32 %v2269, 0.0
        %v2286 = vadd.f32 %v2270, 0.0
        %v2287 = vadd.f32 %v2271, 0.0
        %v2288 = vadd.f32 %v2272, 0.0
        %v2289 = vadd.f32 %v2273, 0.0
        %v2290 = vadd.f32 %v2274, 0.0
        %v2291 = vadd.f32 %v2275, 0.0
        %v2292 = vadd.f32 %v2276, 0.0
        %v2293 = vadd.f32 %v2277, 0.0
        %v2294 = vadd.f32 %v2278, 0.0
        %v2295 = vadd.f32 %v2279, 0.0
        %s2296 = scalar_lea.vmem [#allocation8], 8
        %v2297 = vld [vmem:[%s2296] sm:$0xf]
        %v2298 = vld [vmem:[%s2296 + $0x4] sm:$0xf]
        %v2299 = vunpack.c.l.bf16 %v2297
        %v2300 = vunpack.c.l.bf16 %v2298
        %2301 = vrot.lane.b32.xlu0 %v1418, 96
        %v2302 = vpop.permute.xlu0 %2301
        %2303 = vrot.lane.b32.xlu0 %v1423, 96
        %v2304 = vpop.permute.xlu0 %2303
        %v2306 = vsel %vm1424, %v2302, 0
        %v2309 = vsel %vm1424, %v2304, 0
        %2311 = vmatpush.bf16.xpose.msra.mxu0 0
        %2312 = vmatpush.bf16.xpose.msra.mxu0 0
        %2313 = vmatpush.bf16.xpose.msra.mxu0 0
        %2314 = vmatpush.bf16.xpose.msra.mxu0 0
        %2315 = vmatpush.bf16.xpose.msra.mxu0 0
        %2316 = vmatpush.bf16.xpose.msra.mxu0 0
        %2317 = vmatpush.bf16.xpose.msra.mxu0 0
        %2318 = vmatpush.bf16.xpose.msra.mxu0 %v2309
        %2319 = vmatmul.bf16.gmra.mxu0 %v2306
        %v2320 = vpop.f32.mrf.mxu0
        %v2321 = vadd.f32 %v2299, %v2320
        %v2322 = vpop.f32.mrf.mxu0
        %v2323 = vadd.f32 %v2300, %v2322
        %2324 = vdwg.mxu0
        %2325 = vrot.lane.b32.xlu0 %v1449, 96
        %v2326 = vpop.permute.xlu0 %2325
        %2327 = vrot.lane.b32.xlu0 %v1454, 96
        %v2328 = vpop.permute.xlu0 %2327
        %v2330 = vsel %vm1424, %v2326, 0
        %v2333 = vsel %vm1424, %v2328, 0
        %2335 = vmatpush.bf16.xpose.msra.mxu0 0
        %2336 = vmatpush.bf16.xpose.msra.mxu0 0
        %2337 = vmatpush.bf16.xpose.msra.mxu0 0
        %2338 = vmatpush.bf16.xpose.msra.mxu0 0
        %2339 = vmatpush.bf16.xpose.msra.mxu0 0
        %2340 = vmatpush.bf16.xpose.msra.mxu0 0
        %2341 = vmatpush.bf16.xpose.msra.mxu0 0
        %2342 = vmatpush.bf16.xpose.msra.mxu0 %v2333
        %2343 = vmatmul.bf16.gmra.mxu0 %v2330
        %v2344 = vpop.f32.mrf.mxu0
        %v2345 = vadd.f32 %v2299, %v2344
        %v2346 = vpop.f32.mrf.mxu0
        %v2347 = vadd.f32 %v2300, %v2346
        %2348 = vdwg.mxu0
        %2349 = vrot.lane.b32.xlu0 %v1479, 96
        %v2350 = vpop.permute.xlu0 %2349
        %2351 = vrot.lane.b32.xlu0 %v1484, 96
        %v2352 = vpop.permute.xlu0 %2351
        %v2354 = vsel %vm1424, %v2350, 0
        %v2357 = vsel %vm1424, %v2352, 0
        %2359 = vmatpush.bf16.xpose.msra.mxu0 0
        %2360 = vmatpush.bf16.xpose.msra.mxu0 0
        %2361 = vmatpush.bf16.xpose.msra.mxu0 0
        %2362 = vmatpush.bf16.xpose.msra.mxu0 0
        %2363 = vmatpush.bf16.xpose.msra.mxu0 0
        %2364 = vmatpush.bf16.xpose.msra.mxu0 0
        %2365 = vmatpush.bf16.xpose.msra.mxu0 0
        %2366 = vmatpush.bf16.xpose.msra.mxu0 %v2357
        %2367 = vmatmul.bf16.gmra.mxu0 %v2354
        %v2368 = vpop.f32.mrf.mxu0
        %v2369 = vadd.f32 %v2299, %v2368
        %v2370 = vpop.f32.mrf.mxu0
        %v2371 = vadd.f32 %v2300, %v2370
        %2372 = vdwg.mxu0
        %2373 = vrot.lane.b32.xlu0 %v1509, 96
        %v2374 = vpop.permute.xlu0 %2373
        %2375 = vrot.lane.b32.xlu0 %v1514, 96
        %v2376 = vpop.permute.xlu0 %2375
        %v2378 = vsel %vm1424, %v2374, 0
        %v2381 = vsel %vm1424, %v2376, 0
        %2383 = vmatpush.bf16.xpose.msra.mxu0 0
        %2384 = vmatpush.bf16.xpose.msra.mxu0 0
        %2385 = vmatpush.bf16.xpose.msra.mxu0 0
        %2386 = vmatpush.bf16.xpose.msra.mxu0 0
        %2387 = vmatpush.bf16.xpose.msra.mxu0 0
        %2388 = vmatpush.bf16.xpose.msra.mxu0 0
        %2389 = vmatpush.bf16.xpose.msra.mxu0 0
        %2390 = vmatpush.bf16.xpose.msra.mxu0 %v2381
        %2391 = vmatmul.bf16.gmra.mxu0 %v2378
        %v2392 = vpop.f32.mrf.mxu0
        %v2393 = vadd.f32 %v2299, %v2392
        %v2394 = vpop.f32.mrf.mxu0
        %v2395 = vadd.f32 %v2300, %v2394
        %2396 = vdwg.mxu0
        %2397 = vrot.lane.b32.xlu0 %v1539, 96
        %v2398 = vpop.permute.xlu0 %2397
        %2399 = vrot.lane.b32.xlu0 %v1544, 96
        %v2400 = vpop.permute.xlu0 %2399
        %v2402 = vsel %vm1424, %v2398, 0
        %v2405 = vsel %vm1424, %v2400, 0
        %2407 = vmatpush.bf16.xpose.msra.mxu0 0
        %2408 = vmatpush.bf16.xpose.msra.mxu0 0
        %2409 = vmatpush.bf16.xpose.msra.mxu0 0
        %2410 = vmatpush.bf16.xpose.msra.mxu0 0
        %2411 = vmatpush.bf16.xpose.msra.mxu0 0
        %2412 = vmatpush.bf16.xpose.msra.mxu0 0
        %2413 = vmatpush.bf16.xpose.msra.mxu0 0
        %2414 = vmatpush.bf16.xpose.msra.mxu0 %v2405
        %2415 = vmatmul.bf16.gmra.mxu0 %v2402
        %v2416 = vpop.f32.mrf.mxu0
        %v2417 = vadd.f32 %v2299, %v2416
        %v2418 = vpop.f32.mrf.mxu0
        %v2419 = vadd.f32 %v2300, %v2418
        %2420 = vdwg.mxu0
        %2421 = vrot.lane.b32.xlu0 %v1569, 96
        %v2422 = vpop.permute.xlu0 %2421
        %2423 = vrot.lane.b32.xlu0 %v1574, 96
        %v2424 = vpop.permute.xlu0 %2423
        %v2426 = vsel %vm1424, %v2422, 0
        %v2429 = vsel %vm1424, %v2424, 0
        %2431 = vmatpush.bf16.xpose.msra.mxu0 0
        %2432 = vmatpush.bf16.xpose.msra.mxu0 0
        %2433 = vmatpush.bf16.xpose.msra.mxu0 0
        %2434 = vmatpush.bf16.xpose.msra.mxu0 0
        %2435 = vmatpush.bf16.xpose.msra.mxu0 0
        %2436 = vmatpush.bf16.xpose.msra.mxu0 0
        %2437 = vmatpush.bf16.xpose.msra.mxu0 0
        %2438 = vmatpush.bf16.xpose.msra.mxu0 %v2429
        %2439 = vmatmul.bf16.gmra.mxu0 %v2426
        %v2440 = vpop.f32.mrf.mxu0
        %v2441 = vadd.f32 %v2299, %v2440
        %v2442 = vpop.f32.mrf.mxu0
        %v2443 = vadd.f32 %v2300, %v2442
        %2444 = vdwg.mxu0
        %2445 = vrot.lane.b32.xlu0 %v1599, 96
        %v2446 = vpop.permute.xlu0 %2445
        %2447 = vrot.lane.b32.xlu0 %v1604, 96
        %v2448 = vpop.permute.xlu0 %2447
        %v2450 = vsel %vm1424, %v2446, 0
        %v2453 = vsel %vm1424, %v2448, 0
        %2455 = vmatpush.bf16.xpose.msra.mxu0 0
        %2456 = vmatpush.bf16.xpose.msra.mxu0 0
        %2457 = vmatpush.bf16.xpose.msra.mxu0 0
        %2458 = vmatpush.bf16.xpose.msra.mxu0 0
        %2459 = vmatpush.bf16.xpose.msra.mxu0 0
        %2460 = vmatpush.bf16.xpose.msra.mxu0 0
        %2461 = vmatpush.bf16.xpose.msra.mxu0 0
        %2462 = vmatpush.bf16.xpose.msra.mxu0 %v2453
        %2463 = vmatmul.bf16.gmra.mxu0 %v2450
        %v2464 = vpop.f32.mrf.mxu0
        %v2465 = vadd.f32 %v2299, %v2464
        %v2466 = vpop.f32.mrf.mxu0
        %v2467 = vadd.f32 %v2300, %v2466
        %2468 = vdwg.mxu0
        %2469 = vrot.lane.b32.xlu0 %v1629, 96
        %v2470 = vpop.permute.xlu0 %2469
        %2471 = vrot.lane.b32.xlu0 %v1634, 96
        %v2472 = vpop.permute.xlu0 %2471
        %v2474 = vsel %vm1424, %v2470, 0
        %v2477 = vsel %vm1424, %v2472, 0
        %2479 = vmatpush.bf16.xpose.msra.mxu0 0
        %2480 = vmatpush.bf16.xpose.msra.mxu0 0
        %2481 = vmatpush.bf16.xpose.msra.mxu0 0
        %2482 = vmatpush.bf16.xpose.msra.mxu0 0
        %2483 = vmatpush.bf16.xpose.msra.mxu0 0
        %2484 = vmatpush.bf16.xpose.msra.mxu0 0
        %2485 = vmatpush.bf16.xpose.msra.mxu0 0
        %2486 = vmatpush.bf16.xpose.msra.mxu0 %v2477
        %2487 = vmatmul.bf16.gmra.mxu0 %v2474
        %v2488 = vpop.f32.mrf.mxu0
        %v2489 = vadd.f32 %v2299, %v2488
        %v2490 = vpop.f32.mrf.mxu0
        %v2491 = vadd.f32 %v2300, %v2490
        %2492 = vdwg.mxu0
        %v2493 = vsel %vm1655, %v2321, -inf
        %2494 = vmax.xlane.f32.xlu0 %v2493
        %v2495 = vpop.xlane.xlu0 %2494
        %v2496 = vsel %vm1655, %v2323, -inf
        %2497 = vmax.xlane.f32.xlu0 %v2496
        %v2498 = vpop.xlane.xlu0 %2497
        %v2499 = vsel %vm1655, %v2345, -inf
        %2500 = vmax.xlane.f32.xlu0 %v2499
        %v2501 = vpop.xlane.xlu0 %2500
        %v2502 = vsel %vm1655, %v2347, -inf
        %2503 = vmax.xlane.f32.xlu0 %v2502
        %v2504 = vpop.xlane.xlu0 %2503
        %v2505 = vsel %vm1655, %v2369, -inf
        %2506 = vmax.xlane.f32.xlu0 %v2505
        %v2507 = vpop.xlane.xlu0 %2506
        %v2508 = vsel %vm1655, %v2371, -inf
        %2509 = vmax.xlane.f32.xlu0 %v2508
        %v2510 = vpop.xlane.xlu0 %2509
        %v2511 = vsel %vm1655, %v2393, -inf
        %2512 = vmax.xlane.f32.xlu0 %v2511
        %v2513 = vpop.xlane.xlu0 %2512
        %v2514 = vsel %vm1655, %v2395, -inf
        %2515 = vmax.xlane.f32.xlu0 %v2514
        %v2516 = vpop.xlane.xlu0 %2515
        %v2517 = vsel %vm1655, %v2417, -inf
        %2518 = vmax.xlane.f32.xlu0 %v2517
        %v2519 = vpop.xlane.xlu0 %2518
        %v2520 = vsel %vm1655, %v2419, -inf
        %2521 = vmax.xlane.f32.xlu0 %v2520
        %v2522 = vpop.xlane.xlu0 %2521
        %v2523 = vsel %vm1655, %v2441, -inf
        %2524 = vmax.xlane.f32.xlu0 %v2523
        %v2525 = vpop.xlane.xlu0 %2524
        %v2526 = vsel %vm1655, %v2443, -inf
        %2527 = vmax.xlane.f32.xlu0 %v2526
        %v2528 = vpop.xlane.xlu0 %2527
        %v2529 = vsel %vm1655, %v2465, -inf
        %2530 = vmax.xlane.f32.xlu0 %v2529
        %v2531 = vpop.xlane.xlu0 %2530
        %v2532 = vsel %vm1655, %v2467, -inf
        %2533 = vmax.xlane.f32.xlu0 %v2532
        %v2534 = vpop.xlane.xlu0 %2533
        %v2535 = vsel %vm1655, %v2489, -inf
        %2536 = vmax.xlane.f32.xlu0 %v2535
        %v2537 = vpop.xlane.xlu0 %2536
        %v2538 = vsel %vm1655, %v2491, -inf
        %2539 = vmax.xlane.f32.xlu0 %v2538
        %v2540 = vpop.xlane.xlu0 %2539
        %v2541 = vsub.f32 %v2321, %v2495
        %v2542 = vsub.f32 %v2323, %v2498
        %v2543 = vsub.f32 %v2345, %v2501
        %v2544 = vsub.f32 %v2347, %v2504
        %v2545 = vsub.f32 %v2369, %v2507
        %v2546 = vsub.f32 %v2371, %v2510
        %v2547 = vsub.f32 %v2393, %v2513
        %v2548 = vsub.f32 %v2395, %v2516
        %v2549 = vsub.f32 %v2417, %v2519
        %v2550 = vsub.f32 %v2419, %v2522
        %v2551 = vsub.f32 %v2441, %v2525
        %v2552 = vsub.f32 %v2443, %v2528
        %v2553 = vsub.f32 %v2465, %v2531
        %v2554 = vsub.f32 %v2467, %v2534
        %v2555 = vsub.f32 %v2489, %v2537
        %v2556 = vsub.f32 %v2491, %v2540
        %v2557 = vmul.f32 %v2541, 1.442695
        %v2558 = vpow.pop %v2557
        %v2559 = vmul.f32 %v2542, 1.442695
        %v2560 = vpow.pop %v2559
        %v2561 = vmul.f32 %v2543, 1.442695
        %v2562 = vpow.pop %v2561
        %v2563 = vmul.f32 %v2544, 1.442695
        %v2564 = vpow.pop %v2563
        %v2565 = vmul.f32 %v2545, 1.442695
        %v2566 = vpow.pop %v2565
        %v2567 = vmul.f32 %v2546, 1.442695
        %v2568 = vpow.pop %v2567
        %v2569 = vmul.f32 %v2547, 1.442695
        %v2570 = vpow.pop %v2569
        %v2571 = vmul.f32 %v2548, 1.442695
        %v2572 = vpow.pop %v2571
        %v2573 = vmul.f32 %v2549, 1.442695
        %v2574 = vpow.pop %v2573
        %v2575 = vmul.f32 %v2550, 1.442695
        %v2576 = vpow.pop %v2575
        %v2577 = vmul.f32 %v2551, 1.442695
        %v2578 = vpow.pop %v2577
        %v2579 = vmul.f32 %v2552, 1.442695
        %v2580 = vpow.pop %v2579
        %v2581 = vmul.f32 %v2553, 1.442695
        %v2582 = vpow.pop %v2581
        %v2583 = vmul.f32 %v2554, 1.442695
        %v2584 = vpow.pop %v2583
        %v2585 = vmul.f32 %v2555, 1.442695
        %v2586 = vpow.pop %v2585
        %v2587 = vmul.f32 %v2556, 1.442695
        %v2588 = vpow.pop %v2587
        %v2589 = vsel %vm1655, %v2558, 0.0
        %2590 = vadd.xlane.f32.xlu0 %v2589
        %v2591 = vpop.xlane.xlu0 %2590
        %v2592 = vsel %vm1655, %v2560, 0.0
        %2593 = vadd.xlane.f32.xlu0 %v2592
        %v2594 = vpop.xlane.xlu0 %2593
        %v2595 = vsel %vm1655, %v2562, 0.0
        %2596 = vadd.xlane.f32.xlu0 %v2595
        %v2597 = vpop.xlane.xlu0 %2596
        %v2598 = vsel %vm1655, %v2564, 0.0
        %2599 = vadd.xlane.f32.xlu0 %v2598
        %v2600 = vpop.xlane.xlu0 %2599
        %v2601 = vsel %vm1655, %v2566, 0.0
        %2602 = vadd.xlane.f32.xlu0 %v2601
        %v2603 = vpop.xlane.xlu0 %2602
        %v2604 = vsel %vm1655, %v2568, 0.0
        %2605 = vadd.xlane.f32.xlu0 %v2604
        %v2606 = vpop.xlane.xlu0 %2605
        %v2607 = vsel %vm1655, %v2570, 0.0
        %2608 = vadd.xlane.f32.xlu0 %v2607
        %v2609 = vpop.xlane.xlu0 %2608
        %v2610 = vsel %vm1655, %v2572, 0.0
        %2611 = vadd.xlane.f32.xlu0 %v2610
        %v2612 = vpop.xlane.xlu0 %2611
        %v2613 = vsel %vm1655, %v2574, 0.0
        %2614 = vadd.xlane.f32.xlu0 %v2613
        %v2615 = vpop.xlane.xlu0 %2614
        %v2616 = vsel %vm1655, %v2576, 0.0
        %2617 = vadd.xlane.f32.xlu0 %v2616
        %v2618 = vpop.xlane.xlu0 %2617
        %v2619 = vsel %vm1655, %v2578, 0.0
        %2620 = vadd.xlane.f32.xlu0 %v2619
        %v2621 = vpop.xlane.xlu0 %2620
        %v2622 = vsel %vm1655, %v2580, 0.0
        %2623 = vadd.xlane.f32.xlu0 %v2622
        %v2624 = vpop.xlane.xlu0 %2623
        %v2625 = vsel %vm1655, %v2582, 0.0
        %2626 = vadd.xlane.f32.xlu0 %v2625
        %v2627 = vpop.xlane.xlu0 %2626
        %v2628 = vsel %vm1655, %v2584, 0.0
        %2629 = vadd.xlane.f32.xlu0 %v2628
        %v2630 = vpop.xlane.xlu0 %2629
        %v2631 = vsel %vm1655, %v2586, 0.0
        %2632 = vadd.xlane.f32.xlu0 %v2631
        %v2633 = vpop.xlane.xlu0 %2632
        %v2634 = vsel %vm1655, %v2588, 0.0
        %2635 = vadd.xlane.f32.xlu0 %v2634
        %v2636 = vpop.xlane.xlu0 %2635
        %v2637 = vpack.c.bf16 %v2558, %v2558
        %v2638 = vpack.c.bf16 %v2560, %v2560
        %v2639 = vpack.c.bf16 %v2562, %v2562
        %v2640 = vpack.c.bf16 %v2564, %v2564
        %v2641 = vpack.c.bf16 %v2566, %v2566
        %v2642 = vpack.c.bf16 %v2568, %v2568
        %v2643 = vpack.c.bf16 %v2570, %v2570
        %v2644 = vpack.c.bf16 %v2572, %v2572
        %v2645 = vpack.c.bf16 %v2574, %v2574
        %v2646 = vpack.c.bf16 %v2576, %v2576
        %v2647 = vpack.c.bf16 %v2578, %v2578
        %v2648 = vpack.c.bf16 %v2580, %v2580
        %v2649 = vpack.c.bf16 %v2582, %v2582
        %v2650 = vpack.c.bf16 %v2584, %v2584
        %v2651 = vpack.c.bf16 %v2586, %v2586
        %v2652 = vpack.c.bf16 %v2588, %v2588
        %v2653 = vrot.slane %v1378, 4
        %v2654 = vrot.slane %v1380, 4
        %v2657 = vunpack.c.l.b16 %v2637
        %v2658 = vunpack.c.l.b16 %v2638
        %v2659 = vpack.c.b16 %v2658, %v2657
        %v2660 = vunpack.c.l.b16 %v2653
        %v2661 = vunpack.c.l.b16 %v2654
        %v2662 = vpack.c.b16 %v2661, %v2660
        %v2665 = vsel %vm1655, %v2659, 0
        %2667 = vmatpush.bf16.msra.mxu0 0
        %2668 = vmatpush.bf16.msra.mxu0 0
        %2669 = vmatpush.bf16.msra.mxu0 0
        %2670 = vmatpush.bf16.msra.mxu0 0
        %2671 = vmatpush.bf16.msra.mxu0 0
        %2672 = vmatpush.bf16.msra.mxu0 0
        %2673 = vmatpush.bf16.msra.mxu0 0
        %2674 = vmatpush.bf16.msra.mxu0 %v2662
        %2675 = vmatmul.bf16.gmra.mxu0 %v2665
        %v2676 = vpop.f32.mrf.mxu0
        %v2677 = vadd.f32 0.0, %v2676
        %v2678 = vpop.f32.mrf.mxu0
        %v2679 = vadd.f32 0.0, %v2678
        %2680 = vdwg.mxu0
        %v2681 = vrot.slane %v1382, 4
        %v2682 = vrot.slane %v1384, 4
        %v2685 = vunpack.c.l.b16 %v2639
        %v2686 = vunpack.c.l.b16 %v2640
        %v2687 = vpack.c.b16 %v2686, %v2685
        %v2688 = vunpack.c.l.b16 %v2681
        %v2689 = vunpack.c.l.b16 %v2682
        %v2690 = vpack.c.b16 %v2689, %v2688
        %v2693 = vsel %vm1655, %v2687, 0
        %2695 = vmatpush.bf16.msra.mxu0 0
        %2696 = vmatpush.bf16.msra.mxu0 0
        %2697 = vmatpush.bf16.msra.mxu0 0
        %2698 = vmatpush.bf16.msra.mxu0 0
        %2699 = vmatpush.bf16.msra.mxu0 0
        %2700 = vmatpush.bf16.msra.mxu0 0
        %2701 = vmatpush.bf16.msra.mxu0 0
        %2702 = vmatpush.bf16.msra.mxu0 %v2690
        %2703 = vmatmul.bf16.gmra.mxu0 %v2693
        %v2704 = vpop.f32.mrf.mxu0
        %v2705 = vadd.f32 0.0, %v2704
        %v2706 = vpop.f32.mrf.mxu0
        %v2707 = vadd.f32 0.0, %v2706
        %2708 = vdwg.mxu0
        %v2709 = vrot.slane %v1386, 4
        %v2710 = vrot.slane %v1388, 4
        %v2713 = vunpack.c.l.b16 %v2641
        %v2714 = vunpack.c.l.b16 %v2642
        %v2715 = vpack.c.b16 %v2714, %v2713
        %v2716 = vunpack.c.l.b16 %v2709
        %v2717 = vunpack.c.l.b16 %v2710
        %v2718 = vpack.c.b16 %v2717, %v2716
        %v2721 = vsel %vm1655, %v2715, 0
        %2723 = vmatpush.bf16.msra.mxu0 0
        %2724 = vmatpush.bf16.msra.mxu0 0
        %2725 = vmatpush.bf16.msra.mxu0 0
        %2726 = vmatpush.bf16.msra.mxu0 0
        %2727 = vmatpush.bf16.msra.mxu0 0
        %2728 = vmatpush.bf16.msra.mxu0 0
        %2729 = vmatpush.bf16.msra.mxu0 0
        %2730 = vmatpush.bf16.msra.mxu0 %v2718
        %2731 = vmatmul.bf16.gmra.mxu0 %v2721
        %v2732 = vpop.f32.mrf.mxu0
        %v2733 = vadd.f32 0.0, %v2732
        %v2734 = vpop.f32.mrf.mxu0
        %v2735 = vadd.f32 0.0, %v2734
        %2736 = vdwg.mxu0
        %v2737 = vrot.slane %v1390, 4
        %v2738 = vrot.slane %v1392, 4
        %v2741 = vunpack.c.l.b16 %v2643
        %v2742 = vunpack.c.l.b16 %v2644
        %v2743 = vpack.c.b16 %v2742, %v2741
        %v2744 = vunpack.c.l.b16 %v2737
        %v2745 = vunpack.c.l.b16 %v2738
        %v2746 = vpack.c.b16 %v2745, %v2744
        %v2749 = vsel %vm1655, %v2743, 0
        %2751 = vmatpush.bf16.msra.mxu0 0
        %2752 = vmatpush.bf16.msra.mxu0 0
        %2753 = vmatpush.bf16.msra.mxu0 0
        %2754 = vmatpush.bf16.msra.mxu0 0
        %2755 = vmatpush.bf16.msra.mxu0 0
        %2756 = vmatpush.bf16.msra.mxu0 0
        %2757 = vmatpush.bf16.msra.mxu0 0
        %2758 = vmatpush.bf16.msra.mxu0 %v2746
        %2759 = vmatmul.bf16.gmra.mxu0 %v2749
        %v2760 = vpop.f32.mrf.mxu0
        %v2761 = vadd.f32 0.0, %v2760
        %v2762 = vpop.f32.mrf.mxu0
        %v2763 = vadd.f32 0.0, %v2762
        %2764 = vdwg.mxu0
        %v2765 = vrot.slane %v1394, 4
        %v2766 = vrot.slane %v1396, 4
        %v2769 = vunpack.c.l.b16 %v2645
        %v2770 = vunpack.c.l.b16 %v2646
        %v2771 = vpack.c.b16 %v2770, %v2769
        %v2772 = vunpack.c.l.b16 %v2765
        %v2773 = vunpack.c.l.b16 %v2766
        %v2774 = vpack.c.b16 %v2773, %v2772
        %v2777 = vsel %vm1655, %v2771, 0
        %2779 = vmatpush.bf16.msra.mxu0 0
        %2780 = vmatpush.bf16.msra.mxu0 0
        %2781 = vmatpush.bf16.msra.mxu0 0
        %2782 = vmatpush.bf16.msra.mxu0 0
        %2783 = vmatpush.bf16.msra.mxu0 0
        %2784 = vmatpush.bf16.msra.mxu0 0
        %2785 = vmatpush.bf16.msra.mxu0 0
        %2786 = vmatpush.bf16.msra.mxu0 %v2774
        %2787 = vmatmul.bf16.gmra.mxu0 %v2777
        %v2788 = vpop.f32.mrf.mxu0
        %v2789 = vadd.f32 0.0, %v2788
        %v2790 = vpop.f32.mrf.mxu0
        %v2791 = vadd.f32 0.0, %v2790
        %2792 = vdwg.mxu0
        %v2793 = vrot.slane %v1398, 4
        %v2794 = vrot.slane %v1400, 4
        %v2797 = vunpack.c.l.b16 %v2647
        %v2798 = vunpack.c.l.b16 %v2648
        %v2799 = vpack.c.b16 %v2798, %v2797
        %v2800 = vunpack.c.l.b16 %v2793
        %v2801 = vunpack.c.l.b16 %v2794
        %v2802 = vpack.c.b16 %v2801, %v2800
        %v2805 = vsel %vm1655, %v2799, 0
        %2807 = vmatpush.bf16.msra.mxu0 0
        %2808 = vmatpush.bf16.msra.mxu0 0
        %2809 = vmatpush.bf16.msra.mxu0 0
        %2810 = vmatpush.bf16.msra.mxu0 0
        %2811 = vmatpush.bf16.msra.mxu0 0
        %2812 = vmatpush.bf16.msra.mxu0 0
        %2813 = vmatpush.bf16.msra.mxu0 0
        %2814 = vmatpush.bf16.msra.mxu0 %v2802
        %2815 = vmatmul.bf16.gmra.mxu0 %v2805
        %v2816 = vpop.f32.mrf.mxu0
        %v2817 = vadd.f32 0.0, %v2816
        %v2818 = vpop.f32.mrf.mxu0
        %v2819 = vadd.f32 0.0, %v2818
        %2820 = vdwg.mxu0
        %v2821 = vrot.slane %v1402, 4
        %v2822 = vrot.slane %v1404, 4
        %v2825 = vunpack.c.l.b16 %v2649
        %v2826 = vunpack.c.l.b16 %v2650
        %v2827 = vpack.c.b16 %v2826, %v2825
        %v2828 = vunpack.c.l.b16 %v2821
        %v2829 = vunpack.c.l.b16 %v2822
        %v2830 = vpack.c.b16 %v2829, %v2828
        %v2833 = vsel %vm1655, %v2827, 0
        %2835 = vmatpush.bf16.msra.mxu0 0
        %2836 = vmatpush.bf16.msra.mxu0 0
        %2837 = vmatpush.bf16.msra.mxu0 0
        %2838 = vmatpush.bf16.msra.mxu0 0
        %2839 = vmatpush.bf16.msra.mxu0 0
        %2840 = vmatpush.bf16.msra.mxu0 0
        %2841 = vmatpush.bf16.msra.mxu0 0
        %2842 = vmatpush.bf16.msra.mxu0 %v2830
        %2843 = vmatmul.bf16.gmra.mxu0 %v2833
        %v2844 = vpop.f32.mrf.mxu0
        %v2845 = vadd.f32 0.0, %v2844
        %v2846 = vpop.f32.mrf.mxu0
        %v2847 = vadd.f32 0.0, %v2846
        %2848 = vdwg.mxu0
        %v2849 = vrot.slane %v1406, 4
        %v2850 = vrot.slane %v1408, 4
        %v2853 = vunpack.c.l.b16 %v2651
        %v2854 = vunpack.c.l.b16 %v2652
        %v2855 = vpack.c.b16 %v2854, %v2853
        %v2856 = vunpack.c.l.b16 %v2849
        %v2857 = vunpack.c.l.b16 %v2850
        %v2858 = vpack.c.b16 %v2857, %v2856
        %v2861 = vsel %vm1655, %v2855, 0
        %2863 = vmatpush.bf16.msra.mxu0 0
        %2864 = vmatpush.bf16.msra.mxu0 0
        %2865 = vmatpush.bf16.msra.mxu0 0
        %2866 = vmatpush.bf16.msra.mxu0 0
        %2867 = vmatpush.bf16.msra.mxu0 0
        %2868 = vmatpush.bf16.msra.mxu0 0
        %2869 = vmatpush.bf16.msra.mxu0 0
        %2870 = vmatpush.bf16.msra.mxu0 %v2858
        %2871 = vmatmul.bf16.gmra.mxu0 %v2861
        %v2872 = vpop.f32.mrf.mxu0
        %v2873 = vadd.f32 0.0, %v2872
        %v2874 = vpop.f32.mrf.mxu0
        %v2875 = vadd.f32 0.0, %v2874
        %2876 = vdwg.mxu0
        %v2877 = vrcp.pop %v2591
        %v2878 = vmul.f32 %v2591, %v2877
        %v2879 = vsub.f32 1.0, %v2878
        %v2880 = vmul.f32 %v2877, %v2879
        %v2881 = vadd.f32 %v2877, %v2880
        %vm2882 = vweird.f32 %v2591
        %vm2883 = vweird.f32 %v2877
        %vm2884 = vmor %vm2882, %vm2883
        %v2885 = vsel %vm2884, %v2877, %v2881
        %v2886 = vand.u32 2147483647, %v2591
        %vm2887 = vcmp.eq.f32.partialorder %v2886, 8.507059e+37
        %v2888 = vand.u32 %v2591, 2147483648
        %v2889 = vor.u32 1.1754944e-38, %v2888
        %v2890 = vsel %vm2887, %v2889, %v2885
        %v2891 = vrcp.pop %v2594
        %v2892 = vmul.f32 %v2594, %v2891
        %v2893 = vsub.f32 1.0, %v2892
        %v2894 = vmul.f32 %v2891, %v2893
        %v2895 = vadd.f32 %v2891, %v2894
        %vm2896 = vweird.f32 %v2594
        %vm2897 = vweird.f32 %v2891
        %vm2898 = vmor %vm2896, %vm2897
        %v2899 = vsel %vm2898, %v2891, %v2895
        %v2900 = vand.u32 2147483647, %v2594
        %vm2901 = vcmp.eq.f32.partialorder %v2900, 8.507059e+37
        %v2902 = vand.u32 %v2594, 2147483648
        %v2903 = vor.u32 1.1754944e-38, %v2902
        %v2904 = vsel %vm2901, %v2903, %v2899
        %v2905 = vrcp.pop %v2597
        %v2906 = vmul.f32 %v2597, %v2905
        %v2907 = vsub.f32 1.0, %v2906
        %v2908 = vmul.f32 %v2905, %v2907
        %v2909 = vadd.f32 %v2905, %v2908
        %vm2910 = vweird.f32 %v2597
        %vm2911 = vweird.f32 %v2905
        %vm2912 = vmor %vm2910, %vm2911
        %v2913 = vsel %vm2912, %v2905, %v2909
        %v2914 = vand.u32 2147483647, %v2597
        %vm2915 = vcmp.eq.f32.partialorder %v2914, 8.507059e+37
        %v2916 = vand.u32 %v2597, 2147483648
        %v2917 = vor.u32 1.1754944e-38, %v2916
        %v2918 = vsel %vm2915, %v2917, %v2913
        %v2919 = vrcp.pop %v2600
        %v2920 = vmul.f32 %v2600, %v2919
        %v2921 = vsub.f32 1.0, %v2920
        %v2922 = vmul.f32 %v2919, %v2921
        %v2923 = vadd.f32 %v2919, %v2922
        %vm2924 = vweird.f32 %v2600
        %vm2925 = vweird.f32 %v2919
        %vm2926 = vmor %vm2924, %vm2925
        %v2927 = vsel %vm2926, %v2919, %v2923
        %v2928 = vand.u32 2147483647, %v2600
        %vm2929 = vcmp.eq.f32.partialorder %v2928, 8.507059e+37
        %v2930 = vand.u32 %v2600, 2147483648
        %v2931 = vor.u32 1.1754944e-38, %v2930
        %v2932 = vsel %vm2929, %v2931, %v2927
        %v2933 = vrcp.pop %v2603
        %v2934 = vmul.f32 %v2603, %v2933
        %v2935 = vsub.f32 1.0, %v2934
        %v2936 = vmul.f32 %v2933, %v2935
        %v2937 = vadd.f32 %v2933, %v2936
        %vm2938 = vweird.f32 %v2603
        %vm2939 = vweird.f32 %v2933
        %vm2940 = vmor %vm2938, %vm2939
        %v2941 = vsel %vm2940, %v2933, %v2937
        %v2942 = vand.u32 2147483647, %v2603
        %vm2943 = vcmp.eq.f32.partialorder %v2942, 8.507059e+37
        %v2944 = vand.u32 %v2603, 2147483648
        %v2945 = vor.u32 1.1754944e-38, %v2944
        %v2946 = vsel %vm2943, %v2945, %v2941
        %v2947 = vrcp.pop %v2606
        %v2948 = vmul.f32 %v2606, %v2947
        %v2949 = vsub.f32 1.0, %v2948
        %v2950 = vmul.f32 %v2947, %v2949
        %v2951 = vadd.f32 %v2947, %v2950
        %vm2952 = vweird.f32 %v2606
        %vm2953 = vweird.f32 %v2947
        %vm2954 = vmor %vm2952, %vm2953
        %v2955 = vsel %vm2954, %v2947, %v2951
        %v2956 = vand.u32 2147483647, %v2606
        %vm2957 = vcmp.eq.f32.partialorder %v2956, 8.507059e+37
        %v2958 = vand.u32 %v2606, 2147483648
        %v2959 = vor.u32 1.1754944e-38, %v2958
        %v2960 = vsel %vm2957, %v2959, %v2955
        %v2961 = vrcp.pop %v2609
        %v2962 = vmul.f32 %v2609, %v2961
        %v2963 = vsub.f32 1.0, %v2962
        %v2964 = vmul.f32 %v2961, %v2963
        %v2965 = vadd.f32 %v2961, %v2964
        %vm2966 = vweird.f32 %v2609
        %vm2967 = vweird.f32 %v2961
        %vm2968 = vmor %vm2966, %vm2967
        %v2969 = vsel %vm2968, %v2961, %v2965
        %v2970 = vand.u32 2147483647, %v2609
        %vm2971 = vcmp.eq.f32.partialorder %v2970, 8.507059e+37
        %v2972 = vand.u32 %v2609, 2147483648
        %v2973 = vor.u32 1.1754944e-38, %v2972
        %v2974 = vsel %vm2971, %v2973, %v2969
        %v2975 = vrcp.pop %v2612
        %v2976 = vmul.f32 %v2612, %v2975
        %v2977 = vsub.f32 1.0, %v2976
        %v2978 = vmul.f32 %v2975, %v2977
        %v2979 = vadd.f32 %v2975, %v2978
        %vm2980 = vweird.f32 %v2612
        %vm2981 = vweird.f32 %v2975
        %vm2982 = vmor %vm2980, %vm2981
        %v2983 = vsel %vm2982, %v2975, %v2979
        %v2984 = vand.u32 2147483647, %v2612
        %vm2985 = vcmp.eq.f32.partialorder %v2984, 8.507059e+37
        %v2986 = vand.u32 %v2612, 2147483648
        %v2987 = vor.u32 1.1754944e-38, %v2986
        %v2988 = vsel %vm2985, %v2987, %v2983
        %v2989 = vrcp.pop %v2615
        %v2990 = vmul.f32 %v2615, %v2989
        %v2991 = vsub.f32 1.0, %v2990
        %v2992 = vmul.f32 %v2989, %v2991
        %v2993 = vadd.f32 %v2989, %v2992
        %vm2994 = vweird.f32 %v2615
        %vm2995 = vweird.f32 %v2989
        %vm2996 = vmor %vm2994, %vm2995
        %v2997 = vsel %vm2996, %v2989, %v2993
        %v2998 = vand.u32 2147483647, %v2615
        %vm2999 = vcmp.eq.f32.partialorder %v2998, 8.507059e+37
        %v3000 = vand.u32 %v2615, 2147483648
        %v3001 = vor.u32 1.1754944e-38, %v3000
        %v3002 = vsel %vm2999, %v3001, %v2997
        %v3003 = vrcp.pop %v2618
        %v3004 = vmul.f32 %v2618, %v3003
        %v3005 = vsub.f32 1.0, %v3004
        %v3006 = vmul.f32 %v3003, %v3005
        %v3007 = vadd.f32 %v3003, %v3006
        %vm3008 = vweird.f32 %v2618
        %vm3009 = vweird.f32 %v3003
        %vm3010 = vmor %vm3008, %vm3009
        %v3011 = vsel %vm3010, %v3003, %v3007
        %v3012 = vand.u32 2147483647, %v2618
        %vm3013 = vcmp.eq.f32.partialorder %v3012, 8.507059e+37
        %v3014 = vand.u32 %v2618, 2147483648
        %v3015 = vor.u32 1.1754944e-38, %v3014
        %v3016 = vsel %vm3013, %v3015, %v3011
        %v3017 = vrcp.pop %v2621
        %v3018 = vmul.f32 %v2621, %v3017
        %v3019 = vsub.f32 1.0, %v3018
        %v3020 = vmul.f32 %v3017, %v3019
        %v3021 = vadd.f32 %v3017, %v3020
        %vm3022 = vweird.f32 %v2621
        %vm3023 = vweird.f32 %v3017
        %vm3024 = vmor %vm3022, %vm3023
        %v3025 = vsel %vm3024, %v3017, %v3021
        %v3026 = vand.u32 2147483647, %v2621
        %vm3027 = vcmp.eq.f32.partialorder %v3026, 8.507059e+37
        %v3028 = vand.u32 %v2621, 2147483648
        %v3029 = vor.u32 1.1754944e-38, %v3028
        %v3030 = vsel %vm3027, %v3029, %v3025
        %v3031 = vrcp.pop %v2624
        %v3032 = vmul.f32 %v2624, %v3031
        %v3033 = vsub.f32 1.0, %v3032
        %v3034 = vmul.f32 %v3031, %v3033
        %v3035 = vadd.f32 %v3031, %v3034
        %vm3036 = vweird.f32 %v2624
        %vm3037 = vweird.f32 %v3031
        %vm3038 = vmor %vm3036, %vm3037
        %v3039 = vsel %vm3038, %v3031, %v3035
        %v3040 = vand.u32 2147483647, %v2624
        %vm3041 = vcmp.eq.f32.partialorder %v3040, 8.507059e+37
        %v3042 = vand.u32 %v2624, 2147483648
        %v3043 = vor.u32 1.1754944e-38, %v3042
        %v3044 = vsel %vm3041, %v3043, %v3039
        %v3045 = vrcp.pop %v2627
        %v3046 = vmul.f32 %v2627, %v3045
        %v3047 = vsub.f32 1.0, %v3046
        %v3048 = vmul.f32 %v3045, %v3047
        %v3049 = vadd.f32 %v3045, %v3048
        %vm3050 = vweird.f32 %v2627
        %vm3051 = vweird.f32 %v3045
        %vm3052 = vmor %vm3050, %vm3051
        %v3053 = vsel %vm3052, %v3045, %v3049
        %v3054 = vand.u32 2147483647, %v2627
        %vm3055 = vcmp.eq.f32.partialorder %v3054, 8.507059e+37
        %v3056 = vand.u32 %v2627, 2147483648
        %v3057 = vor.u32 1.1754944e-38, %v3056
        %v3058 = vsel %vm3055, %v3057, %v3053
        %v3059 = vrcp.pop %v2630
        %v3060 = vmul.f32 %v2630, %v3059
        %v3061 = vsub.f32 1.0, %v3060
        %v3062 = vmul.f32 %v3059, %v3061
        %v3063 = vadd.f32 %v3059, %v3062
        %vm3064 = vweird.f32 %v2630
        %vm3065 = vweird.f32 %v3059
        %vm3066 = vmor %vm3064, %vm3065
        %v3067 = vsel %vm3066, %v3059, %v3063
        %v3068 = vand.u32 2147483647, %v2630
        %vm3069 = vcmp.eq.f32.partialorder %v3068, 8.507059e+37
        %v3070 = vand.u32 %v2630, 2147483648
        %v3071 = vor.u32 1.1754944e-38, %v3070
        %v3072 = vsel %vm3069, %v3071, %v3067
        %v3073 = vrcp.pop %v2633
        %v3074 = vmul.f32 %v2633, %v3073
        %v3075 = vsub.f32 1.0, %v3074
        %v3076 = vmul.f32 %v3073, %v3075
        %v3077 = vadd.f32 %v3073, %v3076
        %vm3078 = vweird.f32 %v2633
        %vm3079 = vweird.f32 %v3073
        %vm3080 = vmor %vm3078, %vm3079
        %v3081 = vsel %vm3080, %v3073, %v3077
        %v3082 = vand.u32 2147483647, %v2633
        %vm3083 = vcmp.eq.f32.partialorder %v3082, 8.507059e+37
        %v3084 = vand.u32 %v2633, 2147483648
        %v3085 = vor.u32 1.1754944e-38, %v3084
        %v3086 = vsel %vm3083, %v3085, %v3081
        %v3087 = vrcp.pop %v2636
        %v3088 = vmul.f32 %v2636, %v3087
        %v3089 = vsub.f32 1.0, %v3088
        %v3090 = vmul.f32 %v3087, %v3089
        %v3091 = vadd.f32 %v3087, %v3090
        %vm3092 = vweird.f32 %v2636
        %vm3093 = vweird.f32 %v3087
        %vm3094 = vmor %vm3092, %vm3093
        %v3095 = vsel %vm3094, %v3087, %v3091
        %v3096 = vand.u32 2147483647, %v2636
        %vm3097 = vcmp.eq.f32.partialorder %v3096, 8.507059e+37
        %v3098 = vand.u32 %v2636, 2147483648
        %v3099 = vor.u32 1.1754944e-38, %v3098
        %v3100 = vsel %vm3097, %v3099, %v3095
        %v3101 = vmul.f32 %v2677, %v2890
        %v3102 = vmul.f32 %v2679, %v2904
        %v3103 = vmul.f32 %v2705, %v2918
        %v3104 = vmul.f32 %v2707, %v2932
        %v3105 = vmul.f32 %v2733, %v2946
        %v3106 = vmul.f32 %v2735, %v2960
        %v3107 = vmul.f32 %v2761, %v2974
        %v3108 = vmul.f32 %v2763, %v2988
        %v3109 = vmul.f32 %v2789, %v3002
        %v3110 = vmul.f32 %v2791, %v3016
        %v3111 = vmul.f32 %v2817, %v3030
        %v3112 = vmul.f32 %v2819, %v3044
        %v3113 = vmul.f32 %v2845, %v3058
        %v3114 = vmul.f32 %v2847, %v3072
        %v3115 = vmul.f32 %v2873, %v3086
        %v3116 = vmul.f32 %v2875, %v3100
        %v3117 = vadd.f32 %v2280, %v3101
        %v3118 = vadd.f32 %v2281, %v3102
        %v3119 = vadd.f32 %v2282, %v3103
        %v3120 = vadd.f32 %v2283, %v3104
        %v3121 = vadd.f32 %v2284, %v3105
        %v3122 = vadd.f32 %v2285, %v3106
        %v3123 = vadd.f32 %v2286, %v3107
        %v3124 = vadd.f32 %v2287, %v3108
        %v3125 = vadd.f32 %v2288, %v3109
        %v3126 = vadd.f32 %v2289, %v3110
        %v3127 = vadd.f32 %v2290, %v3111
        %v3128 = vadd.f32 %v2291, %v3112
        %v3129 = vadd.f32 %v2292, %v3113
        %v3130 = vadd.f32 %v2293, %v3114
        %v3131 = vadd.f32 %v2294, %v3115
        %v3132 = vadd.f32 %v2295, %v3116
        %s3133 = scalar_lea.vmem [#allocation8], 16
        %v3134 = vld [vmem:[%s3133] sm:$0xf]
        %v3135 = vld [vmem:[%s3133 + $0x4] sm:$0xf]
        %v3136 = vunpack.c.l.bf16 %v3134
        %v3137 = vunpack.c.l.bf16 %v3135
        %3138 = vrot.lane.b32.xlu0 %v1418, 64
        %v3139 = vpop.permute.xlu0 %3138
        %3140 = vrot.lane.b32.xlu0 %v1423, 64
        %v3141 = vpop.permute.xlu0 %3140
        %v3143 = vsel %vm1424, %v3139, 0
        %v3146 = vsel %vm1424, %v3141, 0
        %3148 = vmatpush.bf16.xpose.msra.mxu0 0
        %3149 = vmatpush.bf16.xpose.msra.mxu0 0
        %3150 = vmatpush.bf16.xpose.msra.mxu0 0
        %3151 = vmatpush.bf16.xpose.msra.mxu0 0
        %3152 = vmatpush.bf16.xpose.msra.mxu0 0
        %3153 = vmatpush.bf16.xpose.msra.mxu0 0
        %3154 = vmatpush.bf16.xpose.msra.mxu0 0
        %3155 = vmatpush.bf16.xpose.msra.mxu0 %v3146
        %3156 = vmatmul.bf16.gmra.mxu0 %v3143
        %v3157 = vpop.f32.mrf.mxu0
        %v3158 = vadd.f32 %v3136, %v3157
        %v3159 = vpop.f32.mrf.mxu0
        %v3160 = vadd.f32 %v3137, %v3159
        %3161 = vdwg.mxu0
        %3162 = vrot.lane.b32.xlu0 %v1449, 64
        %v3163 = vpop.permute.xlu0 %3162
        %3164 = vrot.lane.b32.xlu0 %v1454, 64
        %v3165 = vpop.permute.xlu0 %3164
        %v3167 = vsel %vm1424, %v3163, 0
        %v3170 = vsel %vm1424, %v3165, 0
        %3172 = vmatpush.bf16.xpose.msra.mxu0 0
        %3173 = vmatpush.bf16.xpose.msra.mxu0 0
        %3174 = vmatpush.bf16.xpose.msra.mxu0 0
        %3175 = vmatpush.bf16.xpose.msra.mxu0 0
        %3176 = vmatpush.bf16.xpose.msra.mxu0 0
        %3177 = vmatpush.bf16.xpose.msra.mxu0 0
        %3178 = vmatpush.bf16.xpose.msra.mxu0 0
        %3179 = vmatpush.bf16.xpose.msra.mxu0 %v3170
        %3180 = vmatmul.bf16.gmra.mxu0 %v3167
        %v3181 = vpop.f32.mrf.mxu0
        %v3182 = vadd.f32 %v3136, %v3181
        %v3183 = vpop.f32.mrf.mxu0
        %v3184 = vadd.f32 %v3137, %v3183
        %3185 = vdwg.mxu0
        %3186 = vrot.lane.b32.xlu0 %v1479, 64
        %v3187 = vpop.permute.xlu0 %3186
        %3188 = vrot.lane.b32.xlu0 %v1484, 64
        %v3189 = vpop.permute.xlu0 %3188
        %v3191 = vsel %vm1424, %v3187, 0
        %v3194 = vsel %vm1424, %v3189, 0
        %3196 = vmatpush.bf16.xpose.msra.mxu0 0
        %3197 = vmatpush.bf16.xpose.msra.mxu0 0
        %3198 = vmatpush.bf16.xpose.msra.mxu0 0
        %3199 = vmatpush.bf16.xpose.msra.mxu0 0
        %3200 = vmatpush.bf16.xpose.msra.mxu0 0
        %3201 = vmatpush.bf16.xpose.msra.mxu0 0
        %3202 = vmatpush.bf16.xpose.msra.mxu0 0
        %3203 = vmatpush.bf16.xpose.msra.mxu0 %v3194
        %3204 = vmatmul.bf16.gmra.mxu0 %v3191
        %v3205 = vpop.f32.mrf.mxu0
        %v3206 = vadd.f32 %v3136, %v3205
        %v3207 = vpop.f32.mrf.mxu0
        %v3208 = vadd.f32 %v3137, %v3207
        %3209 = vdwg.mxu0
        %3210 = vrot.lane.b32.xlu0 %v1509, 64
        %v3211 = vpop.permute.xlu0 %3210
        %3212 = vrot.lane.b32.xlu0 %v1514, 64
        %v3213 = vpop.permute.xlu0 %3212
        %v3215 = vsel %vm1424, %v3211, 0
        %v3218 = vsel %vm1424, %v3213, 0
        %3220 = vmatpush.bf16.xpose.msra.mxu0 0
        %3221 = vmatpush.bf16.xpose.msra.mxu0 0
        %3222 = vmatpush.bf16.xpose.msra.mxu0 0
        %3223 = vmatpush.bf16.xpose.msra.mxu0 0
        %3224 = vmatpush.bf16.xpose.msra.mxu0 0
        %3225 = vmatpush.bf16.xpose.msra.mxu0 0
        %3226 = vmatpush.bf16.xpose.msra.mxu0 0
        %3227 = vmatpush.bf16.xpose.msra.mxu0 %v3218
        %3228 = vmatmul.bf16.gmra.mxu0 %v3215
        %v3229 = vpop.f32.mrf.mxu0
        %v3230 = vadd.f32 %v3136, %v3229
        %v3231 = vpop.f32.mrf.mxu0
        %v3232 = vadd.f32 %v3137, %v3231
        %3233 = vdwg.mxu0
        %3234 = vrot.lane.b32.xlu0 %v1539, 64
        %v3235 = vpop.permute.xlu0 %3234
        %3236 = vrot.lane.b32.xlu0 %v1544, 64
        %v3237 = vpop.permute.xlu0 %3236
        %v3239 = vsel %vm1424, %v3235, 0
        %v3242 = vsel %vm1424, %v3237, 0
        %3244 = vmatpush.bf16.xpose.msra.mxu0 0
        %3245 = vmatpush.bf16.xpose.msra.mxu0 0
        %3246 = vmatpush.bf16.xpose.msra.mxu0 0
        %3247 = vmatpush.bf16.xpose.msra.mxu0 0
        %3248 = vmatpush.bf16.xpose.msra.mxu0 0
        %3249 = vmatpush.bf16.xpose.msra.mxu0 0
        %3250 = vmatpush.bf16.xpose.msra.mxu0 0
        %3251 = vmatpush.bf16.xpose.msra.mxu0 %v3242
        %3252 = vmatmul.bf16.gmra.mxu0 %v3239
        %v3253 = vpop.f32.mrf.mxu0
        %v3254 = vadd.f32 %v3136, %v3253
        %v3255 = vpop.f32.mrf.mxu0
        %v3256 = vadd.f32 %v3137, %v3255
        %3257 = vdwg.mxu0
        %3258 = vrot.lane.b32.xlu0 %v1569, 64
        %v3259 = vpop.permute.xlu0 %3258
        %3260 = vrot.lane.b32.xlu0 %v1574, 64
        %v3261 = vpop.permute.xlu0 %3260
        %v3263 = vsel %vm1424, %v3259, 0
        %v3266 = vsel %vm1424, %v3261, 0
        %3268 = vmatpush.bf16.xpose.msra.mxu0 0
        %3269 = vmatpush.bf16.xpose.msra.mxu0 0
        %3270 = vmatpush.bf16.xpose.msra.mxu0 0
        %3271 = vmatpush.bf16.xpose.msra.mxu0 0
        %3272 = vmatpush.bf16.xpose.msra.mxu0 0
        %3273 = vmatpush.bf16.xpose.msra.mxu0 0
        %3274 = vmatpush.bf16.xpose.msra.mxu0 0
        %3275 = vmatpush.bf16.xpose.msra.mxu0 %v3266
        %3276 = vmatmul.bf16.gmra.mxu0 %v3263
        %v3277 = vpop.f32.mrf.mxu0
        %v3278 = vadd.f32 %v3136, %v3277
        %v3279 = vpop.f32.mrf.mxu0
        %v3280 = vadd.f32 %v3137, %v3279
        %3281 = vdwg.mxu0
        %3282 = vrot.lane.b32.xlu0 %v1599, 64
        %v3283 = vpop.permute.xlu0 %3282
        %3284 = vrot.lane.b32.xlu0 %v1604, 64
        %v3285 = vpop.permute.xlu0 %3284
        %v3287 = vsel %vm1424, %v3283, 0
        %v3290 = vsel %vm1424, %v3285, 0
        %3292 = vmatpush.bf16.xpose.msra.mxu0 0
        %3293 = vmatpush.bf16.xpose.msra.mxu0 0
        %3294 = vmatpush.bf16.xpose.msra.mxu0 0
        %3295 = vmatpush.bf16.xpose.msra.mxu0 0
        %3296 = vmatpush.bf16.xpose.msra.mxu0 0
        %3297 = vmatpush.bf16.xpose.msra.mxu0 0
        %3298 = vmatpush.bf16.xpose.msra.mxu0 0
        %3299 = vmatpush.bf16.xpose.msra.mxu0 %v3290
        %3300 = vmatmul.bf16.gmra.mxu0 %v3287
        %v3301 = vpop.f32.mrf.mxu0
        %v3302 = vadd.f32 %v3136, %v3301
        %v3303 = vpop.f32.mrf.mxu0
        %v3304 = vadd.f32 %v3137, %v3303
        %3305 = vdwg.mxu0
        %3306 = vrot.lane.b32.xlu0 %v1629, 64
        %v3307 = vpop.permute.xlu0 %3306
        %3308 = vrot.lane.b32.xlu0 %v1634, 64
        %v3309 = vpop.permute.xlu0 %3308
        %v3311 = vsel %vm1424, %v3307, 0
        %v3314 = vsel %vm1424, %v3309, 0
        %3316 = vmatpush.bf16.xpose.msra.mxu0 0
        %3317 = vmatpush.bf16.xpose.msra.mxu0 0
        %3318 = vmatpush.bf16.xpose.msra.mxu0 0
        %3319 = vmatpush.bf16.xpose.msra.mxu0 0
        %3320 = vmatpush.bf16.xpose.msra.mxu0 0
        %3321 = vmatpush.bf16.xpose.msra.mxu0 0
        %3322 = vmatpush.bf16.xpose.msra.mxu0 0
        %3323 = vmatpush.bf16.xpose.msra.mxu0 %v3314
        %3324 = vmatmul.bf16.gmra.mxu0 %v3311
        %v3325 = vpop.f32.mrf.mxu0
        %v3326 = vadd.f32 %v3136, %v3325
        %v3327 = vpop.f32.mrf.mxu0
        %v3328 = vadd.f32 %v3137, %v3327
        %3329 = vdwg.mxu0
        %v3330 = vsel %vm1655, %v3158, -inf
        %3331 = vmax.xlane.f32.xlu0 %v3330
        %v3332 = vpop.xlane.xlu0 %3331
        %v3333 = vsel %vm1655, %v3160, -inf
        %3334 = vmax.xlane.f32.xlu0 %v3333
        %v3335 = vpop.xlane.xlu0 %3334
        %v3336 = vsel %vm1655, %v3182, -inf
        %3337 = vmax.xlane.f32.xlu0 %v3336
        %v3338 = vpop.xlane.xlu0 %3337
        %v3339 = vsel %vm1655, %v3184, -inf
        %3340 = vmax.xlane.f32.xlu0 %v3339
        %v3341 = vpop.xlane.xlu0 %3340
        %v3342 = vsel %vm1655, %v3206, -inf
        %3343 = vmax.xlane.f32.xlu0 %v3342
        %v3344 = vpop.xlane.xlu0 %3343
        %v3345 = vsel %vm1655, %v3208, -inf
        %3346 = vmax.xlane.f32.xlu0 %v3345
        %v3347 = vpop.xlane.xlu0 %3346
        %v3348 = vsel %vm1655, %v3230, -inf
        %3349 = vmax.xlane.f32.xlu0 %v3348
        %v3350 = vpop.xlane.xlu0 %3349
        %v3351 = vsel %vm1655, %v3232, -inf
        %3352 = vmax.xlane.f32.xlu0 %v3351
        %v3353 = vpop.xlane.xlu0 %3352
        %v3354 = vsel %vm1655, %v3254, -inf
        %3355 = vmax.xlane.f32.xlu0 %v3354
        %v3356 = vpop.xlane.xlu0 %3355
        %v3357 = vsel %vm1655, %v3256, -inf
        %3358 = vmax.xlane.f32.xlu0 %v3357
        %v3359 = vpop.xlane.xlu0 %3358
        %v3360 = vsel %vm1655, %v3278, -inf
        %3361 = vmax.xlane.f32.xlu0 %v3360
        %v3362 = vpop.xlane.xlu0 %3361
        %v3363 = vsel %vm1655, %v3280, -inf
        %3364 = vmax.xlane.f32.xlu0 %v3363
        %v3365 = vpop.xlane.xlu0 %3364
        %v3366 = vsel %vm1655, %v3302, -inf
        %3367 = vmax.xlane.f32.xlu0 %v3366
        %v3368 = vpop.xlane.xlu0 %3367
        %v3369 = vsel %vm1655, %v3304, -inf
        %3370 = vmax.xlane.f32.xlu0 %v3369
        %v3371 = vpop.xlane.xlu0 %3370
        %v3372 = vsel %vm1655, %v3326, -inf
        %3373 = vmax.xlane.f32.xlu0 %v3372
        %v3374 = vpop.xlane.xlu0 %3373
        %v3375 = vsel %vm1655, %v3328, -inf
        %3376 = vmax.xlane.f32.xlu0 %v3375
        %v3377 = vpop.xlane.xlu0 %3376
        %v3378 = vsub.f32 %v3158, %v3332
        %v3379 = vsub.f32 %v3160, %v3335
        %v3380 = vsub.f32 %v3182, %v3338
        %v3381 = vsub.f32 %v3184, %v3341
        %v3382 = vsub.f32 %v3206, %v3344
        %v3383 = vsub.f32 %v3208, %v3347
        %v3384 = vsub.f32 %v3230, %v3350
        %v3385 = vsub.f32 %v3232, %v3353
        %v3386 = vsub.f32 %v3254, %v3356
        %v3387 = vsub.f32 %v3256, %v3359
        %v3388 = vsub.f32 %v3278, %v3362
        %v3389 = vsub.f32 %v3280, %v3365
        %v3390 = vsub.f32 %v3302, %v3368
        %v3391 = vsub.f32 %v3304, %v3371
        %v3392 = vsub.f32 %v3326, %v3374
        %v3393 = vsub.f32 %v3328, %v3377
        %v3394 = vmul.f32 %v3378, 1.442695
        %v3395 = vpow.pop %v3394
        %v3396 = vmul.f32 %v3379, 1.442695
        %v3397 = vpow.pop %v3396
        %v3398 = vmul.f32 %v3380, 1.442695
        %v3399 = vpow.pop %v3398
        %v3400 = vmul.f32 %v3381, 1.442695
        %v3401 = vpow.pop %v3400
        %v3402 = vmul.f32 %v3382, 1.442695
        %v3403 = vpow.pop %v3402
        %v3404 = vmul.f32 %v3383, 1.442695
        %v3405 = vpow.pop %v3404
        %v3406 = vmul.f32 %v3384, 1.442695
        %v3407 = vpow.pop %v3406
        %v3408 = vmul.f32 %v3385, 1.442695
        %v3409 = vpow.pop %v3408
        %v3410 = vmul.f32 %v3386, 1.442695
        %v3411 = vpow.pop %v3410
        %v3412 = vmul.f32 %v3387, 1.442695
        %v3413 = vpow.pop %v3412
        %v3414 = vmul.f32 %v3388, 1.442695
        %v3415 = vpow.pop %v3414
        %v3416 = vmul.f32 %v3389, 1.442695
        %v3417 = vpow.pop %v3416
        %v3418 = vmul.f32 %v3390, 1.442695
        %v3419 = vpow.pop %v3418
        %v3420 = vmul.f32 %v3391, 1.442695
        %v3421 = vpow.pop %v3420
        %v3422 = vmul.f32 %v3392, 1.442695
        %v3423 = vpow.pop %v3422
        %v3424 = vmul.f32 %v3393, 1.442695
        %v3425 = vpow.pop %v3424
        %v3426 = vsel %vm1655, %v3395, 0.0
        %3427 = vadd.xlane.f32.xlu0 %v3426
        %v3428 = vpop.xlane.xlu0 %3427
        %v3429 = vsel %vm1655, %v3397, 0.0
        %3430 = vadd.xlane.f32.xlu0 %v3429
        %v3431 = vpop.xlane.xlu0 %3430
        %v3432 = vsel %vm1655, %v3399, 0.0
        %3433 = vadd.xlane.f32.xlu0 %v3432
        %v3434 = vpop.xlane.xlu0 %3433
        %v3435 = vsel %vm1655, %v3401, 0.0
        %3436 = vadd.xlane.f32.xlu0 %v3435
        %v3437 = vpop.xlane.xlu0 %3436
        %v3438 = vsel %vm1655, %v3403, 0.0
        %3439 = vadd.xlane.f32.xlu0 %v3438
        %v3440 = vpop.xlane.xlu0 %3439
        %v3441 = vsel %vm1655, %v3405, 0.0
        %3442 = vadd.xlane.f32.xlu0 %v3441
        %v3443 = vpop.xlane.xlu0 %3442
        %v3444 = vsel %vm1655, %v3407, 0.0
        %3445 = vadd.xlane.f32.xlu0 %v3444
        %v3446 = vpop.xlane.xlu0 %3445
        %v3447 = vsel %vm1655, %v3409, 0.0
        %3448 = vadd.xlane.f32.xlu0 %v3447
        %v3449 = vpop.xlane.xlu0 %3448
        %v3450 = vsel %vm1655, %v3411, 0.0
        %3451 = vadd.xlane.f32.xlu0 %v3450
        %v3452 = vpop.xlane.xlu0 %3451
        %v3453 = vsel %vm1655, %v3413, 0.0
        %3454 = vadd.xlane.f32.xlu0 %v3453
        %v3455 = vpop.xlane.xlu0 %3454
        %v3456 = vsel %vm1655, %v3415, 0.0
        %3457 = vadd.xlane.f32.xlu0 %v3456
        %v3458 = vpop.xlane.xlu0 %3457
        %v3459 = vsel %vm1655, %v3417, 0.0
        %3460 = vadd.xlane.f32.xlu0 %v3459
        %v3461 = vpop.xlane.xlu0 %3460
        %v3462 = vsel %vm1655, %v3419, 0.0
        %3463 = vadd.xlane.f32.xlu0 %v3462
        %v3464 = vpop.xlane.xlu0 %3463
        %v3465 = vsel %vm1655, %v3421, 0.0
        %3466 = vadd.xlane.f32.xlu0 %v3465
        %v3467 = vpop.xlane.xlu0 %3466
        %v3468 = vsel %vm1655, %v3423, 0.0
        %3469 = vadd.xlane.f32.xlu0 %v3468
        %v3470 = vpop.xlane.xlu0 %3469
        %v3471 = vsel %vm1655, %v3425, 0.0
        %3472 = vadd.xlane.f32.xlu0 %v3471
        %v3473 = vpop.xlane.xlu0 %3472
        %v3474 = vpack.c.bf16 %v3395, %v3395
        %v3475 = vpack.c.bf16 %v3397, %v3397
        %v3476 = vpack.c.bf16 %v3399, %v3399
        %v3477 = vpack.c.bf16 %v3401, %v3401
        %v3478 = vpack.c.bf16 %v3403, %v3403
        %v3479 = vpack.c.bf16 %v3405, %v3405
        %v3480 = vpack.c.bf16 %v3407, %v3407
        %v3481 = vpack.c.bf16 %v3409, %v3409
        %v3482 = vpack.c.bf16 %v3411, %v3411
        %v3483 = vpack.c.bf16 %v3413, %v3413
        %v3484 = vpack.c.bf16 %v3415, %v3415
        %v3485 = vpack.c.bf16 %v3417, %v3417
        %v3486 = vpack.c.bf16 %v3419, %v3419
        %v3487 = vpack.c.bf16 %v3421, %v3421
        %v3488 = vpack.c.bf16 %v3423, %v3423
        %v3489 = vpack.c.bf16 %v3425, %v3425
        %v3492 = vunpack.c.l.b16 %v3474
        %v3493 = vunpack.c.l.b16 %v3475
        %v3494 = vpack.c.b16 %v3493, %v3492
        %v3497 = vunpack.c.l.b16 %v1379
        %v3498 = vunpack.c.l.b16 %v1381
        %v3499 = vpack.c.b16 %v3498, %v3497
        %v3502 = vsel %vm1655, %v3494, 0
        %3504 = vmatpush.bf16.msra.mxu0 0
        %3505 = vmatpush.bf16.msra.mxu0 0
        %3506 = vmatpush.bf16.msra.mxu0 0
        %3507 = vmatpush.bf16.msra.mxu0 0
        %3508 = vmatpush.bf16.msra.mxu0 0
        %3509 = vmatpush.bf16.msra.mxu0 0
        %3510 = vmatpush.bf16.msra.mxu0 0
        %3511 = vmatpush.bf16.msra.mxu0 %v3499
        %3512 = vmatmul.bf16.gmra.mxu0 %v3502
        %v3513 = vpop.f32.mrf.mxu0
        %v3514 = vadd.f32 0.0, %v3513
        %v3515 = vpop.f32.mrf.mxu0
        %v3516 = vadd.f32 0.0, %v3515
        %3517 = vdwg.mxu0
        %v3520 = vunpack.c.l.b16 %v3476
        %v3521 = vunpack.c.l.b16 %v3477
        %v3522 = vpack.c.b16 %v3521, %v3520
        %v3525 = vunpack.c.l.b16 %v1383
        %v3526 = vunpack.c.l.b16 %v1385
        %v3527 = vpack.c.b16 %v3526, %v3525
        %v3530 = vsel %vm1655, %v3522, 0
        %3532 = vmatpush.bf16.msra.mxu0 0
        %3533 = vmatpush.bf16.msra.mxu0 0
        %3534 = vmatpush.bf16.msra.mxu0 0
        %3535 = vmatpush.bf16.msra.mxu0 0
        %3536 = vmatpush.bf16.msra.mxu0 0
        %3537 = vmatpush.bf16.msra.mxu0 0
        %3538 = vmatpush.bf16.msra.mxu0 0
        %3539 = vmatpush.bf16.msra.mxu0 %v3527
        %3540 = vmatmul.bf16.gmra.mxu0 %v3530
        %v3541 = vpop.f32.mrf.mxu0
        %v3542 = vadd.f32 0.0, %v3541
        %v3543 = vpop.f32.mrf.mxu0
        %v3544 = vadd.f32 0.0, %v3543
        %3545 = vdwg.mxu0
        %v3548 = vunpack.c.l.b16 %v3478
        %v3549 = vunpack.c.l.b16 %v3479
        %v3550 = vpack.c.b16 %v3549, %v3548
        %v3553 = vunpack.c.l.b16 %v1387
        %v3554 = vunpack.c.l.b16 %v1389
        %v3555 = vpack.c.b16 %v3554, %v3553
        %v3558 = vsel %vm1655, %v3550, 0
        %3560 = vmatpush.bf16.msra.mxu0 0
        %3561 = vmatpush.bf16.msra.mxu0 0
        %3562 = vmatpush.bf16.msra.mxu0 0
        %3563 = vmatpush.bf16.msra.mxu0 0
        %3564 = vmatpush.bf16.msra.mxu0 0
        %3565 = vmatpush.bf16.msra.mxu0 0
        %3566 = vmatpush.bf16.msra.mxu0 0
        %3567 = vmatpush.bf16.msra.mxu0 %v3555
        %3568 = vmatmul.bf16.gmra.mxu0 %v3558
        %v3569 = vpop.f32.mrf.mxu0
        %v3570 = vadd.f32 0.0, %v3569
        %v3571 = vpop.f32.mrf.mxu0
        %v3572 = vadd.f32 0.0, %v3571
        %3573 = vdwg.mxu0
        %v3576 = vunpack.c.l.b16 %v3480
        %v3577 = vunpack.c.l.b16 %v3481
        %v3578 = vpack.c.b16 %v3577, %v3576
        %v3581 = vunpack.c.l.b16 %v1391
        %v3582 = vunpack.c.l.b16 %v1393
        %v3583 = vpack.c.b16 %v3582, %v3581
        %v3586 = vsel %vm1655, %v3578, 0
        %3588 = vmatpush.bf16.msra.mxu0 0
        %3589 = vmatpush.bf16.msra.mxu0 0
        %3590 = vmatpush.bf16.msra.mxu0 0
        %3591 = vmatpush.bf16.msra.mxu0 0
        %3592 = vmatpush.bf16.msra.mxu0 0
        %3593 = vmatpush.bf16.msra.mxu0 0
        %3594 = vmatpush.bf16.msra.mxu0 0
        %3595 = vmatpush.bf16.msra.mxu0 %v3583
        %3596 = vmatmul.bf16.gmra.mxu0 %v3586
        %v3597 = vpop.f32.mrf.mxu0
        %v3598 = vadd.f32 0.0, %v3597
        %v3599 = vpop.f32.mrf.mxu0
        %v3600 = vadd.f32 0.0, %v3599
        %3601 = vdwg.mxu0
        %v3604 = vunpack.c.l.b16 %v3482
        %v3605 = vunpack.c.l.b16 %v3483
        %v3606 = vpack.c.b16 %v3605, %v3604
        %v3609 = vunpack.c.l.b16 %v1395
        %v3610 = vunpack.c.l.b16 %v1397
        %v3611 = vpack.c.b16 %v3610, %v3609
        %v3614 = vsel %vm1655, %v3606, 0
        %3616 = vmatpush.bf16.msra.mxu0 0
        %3617 = vmatpush.bf16.msra.mxu0 0
        %3618 = vmatpush.bf16.msra.mxu0 0
        %3619 = vmatpush.bf16.msra.mxu0 0
        %3620 = vmatpush.bf16.msra.mxu0 0
        %3621 = vmatpush.bf16.msra.mxu0 0
        %3622 = vmatpush.bf16.msra.mxu0 0
        %3623 = vmatpush.bf16.msra.mxu0 %v3611
        %3624 = vmatmul.bf16.gmra.mxu0 %v3614
        %v3625 = vpop.f32.mrf.mxu0
        %v3626 = vadd.f32 0.0, %v3625
        %v3627 = vpop.f32.mrf.mxu0
        %v3628 = vadd.f32 0.0, %v3627
        %3629 = vdwg.mxu0
        %v3632 = vunpack.c.l.b16 %v3484
        %v3633 = vunpack.c.l.b16 %v3485
        %v3634 = vpack.c.b16 %v3633, %v3632
        %v3637 = vunpack.c.l.b16 %v1399
        %v3638 = vunpack.c.l.b16 %v1401
        %v3639 = vpack.c.b16 %v3638, %v3637
        %v3642 = vsel %vm1655, %v3634, 0
        %3644 = vmatpush.bf16.msra.mxu0 0
        %3645 = vmatpush.bf16.msra.mxu0 0
        %3646 = vmatpush.bf16.msra.mxu0 0
        %3647 = vmatpush.bf16.msra.mxu0 0
        %3648 = vmatpush.bf16.msra.mxu0 0
        %3649 = vmatpush.bf16.msra.mxu0 0
        %3650 = vmatpush.bf16.msra.mxu0 0
        %3651 = vmatpush.bf16.msra.mxu0 %v3639
        %3652 = vmatmul.bf16.gmra.mxu0 %v3642
        %v3653 = vpop.f32.mrf.mxu0
        %v3654 = vadd.f32 0.0, %v3653
        %v3655 = vpop.f32.mrf.mxu0
        %v3656 = vadd.f32 0.0, %v3655
        %3657 = vdwg.mxu0
        %v3660 = vunpack.c.l.b16 %v3486
        %v3661 = vunpack.c.l.b16 %v3487
        %v3662 = vpack.c.b16 %v3661, %v3660
        %v3665 = vunpack.c.l.b16 %v1403
        %v3666 = vunpack.c.l.b16 %v1405
        %v3667 = vpack.c.b16 %v3666, %v3665
        %v3670 = vsel %vm1655, %v3662, 0
        %3672 = vmatpush.bf16.msra.mxu0 0
        %3673 = vmatpush.bf16.msra.mxu0 0
        %3674 = vmatpush.bf16.msra.mxu0 0
        %3675 = vmatpush.bf16.msra.mxu0 0
        %3676 = vmatpush.bf16.msra.mxu0 0
        %3677 = vmatpush.bf16.msra.mxu0 0
        %3678 = vmatpush.bf16.msra.mxu0 0
        %3679 = vmatpush.bf16.msra.mxu0 %v3667
        %3680 = vmatmul.bf16.gmra.mxu0 %v3670
        %v3681 = vpop.f32.mrf.mxu0
        %v3682 = vadd.f32 0.0, %v3681
        %v3683 = vpop.f32.mrf.mxu0
        %v3684 = vadd.f32 0.0, %v3683
        %3685 = vdwg.mxu0
        %v3688 = vunpack.c.l.b16 %v3488
        %v3689 = vunpack.c.l.b16 %v3489
        %v3690 = vpack.c.b16 %v3689, %v3688
        %v3693 = vunpack.c.l.b16 %v1407
        %v3694 = vunpack.c.l.b16 %v1409
        %v3695 = vpack.c.b16 %v3694, %v3693
        %v3698 = vsel %vm1655, %v3690, 0
        %3700 = vmatpush.bf16.msra.mxu0 0
        %3701 = vmatpush.bf16.msra.mxu0 0
        %3702 = vmatpush.bf16.msra.mxu0 0
        %3703 = vmatpush.bf16.msra.mxu0 0
        %3704 = vmatpush.bf16.msra.mxu0 0
        %3705 = vmatpush.bf16.msra.mxu0 0
        %3706 = vmatpush.bf16.msra.mxu0 0
        %3707 = vmatpush.bf16.msra.mxu0 %v3695
        %3708 = vmatmul.bf16.gmra.mxu0 %v3698
        %v3709 = vpop.f32.mrf.mxu0
        %v3710 = vadd.f32 0.0, %v3709
        %v3711 = vpop.f32.mrf.mxu0
        %v3712 = vadd.f32 0.0, %v3711
        %3713 = vdwg.mxu0
        %v3714 = vrcp.pop %v3428
        %v3715 = vmul.f32 %v3428, %v3714
        %v3716 = vsub.f32 1.0, %v3715
        %v3717 = vmul.f32 %v3714, %v3716
        %v3718 = vadd.f32 %v3714, %v3717
        %vm3719 = vweird.f32 %v3428
        %vm3720 = vweird.f32 %v3714
        %vm3721 = vmor %vm3719, %vm3720
        %v3722 = vsel %vm3721, %v3714, %v3718
        %v3723 = vand.u32 2147483647, %v3428
        %vm3724 = vcmp.eq.f32.partialorder %v3723, 8.507059e+37
        %v3725 = vand.u32 %v3428, 2147483648
        %v3726 = vor.u32 1.1754944e-38, %v3725
        %v3727 = vsel %vm3724, %v3726, %v3722
        %v3728 = vrcp.pop %v3431
        %v3729 = vmul.f32 %v3431, %v3728
        %v3730 = vsub.f32 1.0, %v3729
        %v3731 = vmul.f32 %v3728, %v3730
        %v3732 = vadd.f32 %v3728, %v3731
        %vm3733 = vweird.f32 %v3431
        %vm3734 = vweird.f32 %v3728
        %vm3735 = vmor %vm3733, %vm3734
        %v3736 = vsel %vm3735, %v3728, %v3732
        %v3737 = vand.u32 2147483647, %v3431
        %vm3738 = vcmp.eq.f32.partialorder %v3737, 8.507059e+37
        %v3739 = vand.u32 %v3431, 2147483648
        %v3740 = vor.u32 1.1754944e-38, %v3739
        %v3741 = vsel %vm3738, %v3740, %v3736
        %v3742 = vrcp.pop %v3434
        %v3743 = vmul.f32 %v3434, %v3742
        %v3744 = vsub.f32 1.0, %v3743
        %v3745 = vmul.f32 %v3742, %v3744
        %v3746 = vadd.f32 %v3742, %v3745
        %vm3747 = vweird.f32 %v3434
        %vm3748 = vweird.f32 %v3742
        %vm3749 = vmor %vm3747, %vm3748
        %v3750 = vsel %vm3749, %v3742, %v3746
        %v3751 = vand.u32 2147483647, %v3434
        %vm3752 = vcmp.eq.f32.partialorder %v3751, 8.507059e+37
        %v3753 = vand.u32 %v3434, 2147483648
        %v3754 = vor.u32 1.1754944e-38, %v3753
        %v3755 = vsel %vm3752, %v3754, %v3750
        %v3756 = vrcp.pop %v3437
        %v3757 = vmul.f32 %v3437, %v3756
        %v3758 = vsub.f32 1.0, %v3757
        %v3759 = vmul.f32 %v3756, %v3758
        %v3760 = vadd.f32 %v3756, %v3759
        %vm3761 = vweird.f32 %v3437
        %vm3762 = vweird.f32 %v3756
        %vm3763 = vmor %vm3761, %vm3762
        %v3764 = vsel %vm3763, %v3756, %v3760
        %v3765 = vand.u32 2147483647, %v3437
        %vm3766 = vcmp.eq.f32.partialorder %v3765, 8.507059e+37
        %v3767 = vand.u32 %v3437, 2147483648
        %v3768 = vor.u32 1.1754944e-38, %v3767
        %v3769 = vsel %vm3766, %v3768, %v3764
        %v3770 = vrcp.pop %v3440
        %v3771 = vmul.f32 %v3440, %v3770
        %v3772 = vsub.f32 1.0, %v3771
        %v3773 = vmul.f32 %v3770, %v3772
        %v3774 = vadd.f32 %v3770, %v3773
        %vm3775 = vweird.f32 %v3440
        %vm3776 = vweird.f32 %v3770
        %vm3777 = vmor %vm3775, %vm3776
        %v3778 = vsel %vm3777, %v3770, %v3774
        %v3779 = vand.u32 2147483647, %v3440
        %vm3780 = vcmp.eq.f32.partialorder %v3779, 8.507059e+37
        %v3781 = vand.u32 %v3440, 2147483648
        %v3782 = vor.u32 1.1754944e-38, %v3781
        %v3783 = vsel %vm3780, %v3782, %v3778
        %v3784 = vrcp.pop %v3443
        %v3785 = vmul.f32 %v3443, %v3784
        %v3786 = vsub.f32 1.0, %v3785
        %v3787 = vmul.f32 %v3784, %v3786
        %v3788 = vadd.f32 %v3784, %v3787
        %vm3789 = vweird.f32 %v3443
        %vm3790 = vweird.f32 %v3784
        %vm3791 = vmor %vm3789, %vm3790
        %v3792 = vsel %vm3791, %v3784, %v3788
        %v3793 = vand.u32 2147483647, %v3443
        %vm3794 = vcmp.eq.f32.partialorder %v3793, 8.507059e+37
        %v3795 = vand.u32 %v3443, 2147483648
        %v3796 = vor.u32 1.1754944e-38, %v3795
        %v3797 = vsel %vm3794, %v3796, %v3792
        %v3798 = vrcp.pop %v3446
        %v3799 = vmul.f32 %v3446, %v3798
        %v3800 = vsub.f32 1.0, %v3799
        %v3801 = vmul.f32 %v3798, %v3800
        %v3802 = vadd.f32 %v3798, %v3801
        %vm3803 = vweird.f32 %v3446
        %vm3804 = vweird.f32 %v3798
        %vm3805 = vmor %vm3803, %vm3804
        %v3806 = vsel %vm3805, %v3798, %v3802
        %v3807 = vand.u32 2147483647, %v3446
        %vm3808 = vcmp.eq.f32.partialorder %v3807, 8.507059e+37
        %v3809 = vand.u32 %v3446, 2147483648
        %v3810 = vor.u32 1.1754944e-38, %v3809
        %v3811 = vsel %vm3808, %v3810, %v3806
        %v3812 = vrcp.pop %v3449
        %v3813 = vmul.f32 %v3449, %v3812
        %v3814 = vsub.f32 1.0, %v3813
        %v3815 = vmul.f32 %v3812, %v3814
        %v3816 = vadd.f32 %v3812, %v3815
        %vm3817 = vweird.f32 %v3449
        %vm3818 = vweird.f32 %v3812
        %vm3819 = vmor %vm3817, %vm3818
        %v3820 = vsel %vm3819, %v3812, %v3816
        %v3821 = vand.u32 2147483647, %v3449
        %vm3822 = vcmp.eq.f32.partialorder %v3821, 8.507059e+37
        %v3823 = vand.u32 %v3449, 2147483648
        %v3824 = vor.u32 1.1754944e-38, %v3823
        %v3825 = vsel %vm3822, %v3824, %v3820
        %v3826 = vrcp.pop %v3452
        %v3827 = vmul.f32 %v3452, %v3826
        %v3828 = vsub.f32 1.0, %v3827
        %v3829 = vmul.f32 %v3826, %v3828
        %v3830 = vadd.f32 %v3826, %v3829
        %vm3831 = vweird.f32 %v3452
        %vm3832 = vweird.f32 %v3826
        %vm3833 = vmor %vm3831, %vm3832
        %v3834 = vsel %vm3833, %v3826, %v3830
        %v3835 = vand.u32 2147483647, %v3452
        %vm3836 = vcmp.eq.f32.partialorder %v3835, 8.507059e+37
        %v3837 = vand.u32 %v3452, 2147483648
        %v3838 = vor.u32 1.1754944e-38, %v3837
        %v3839 = vsel %vm3836, %v3838, %v3834
        %v3840 = vrcp.pop %v3455
        %v3841 = vmul.f32 %v3455, %v3840
        %v3842 = vsub.f32 1.0, %v3841
        %v3843 = vmul.f32 %v3840, %v3842
        %v3844 = vadd.f32 %v3840, %v3843
        %vm3845 = vweird.f32 %v3455
        %vm3846 = vweird.f32 %v3840
        %vm3847 = vmor %vm3845, %vm3846
        %v3848 = vsel %vm3847, %v3840, %v3844
        %v3849 = vand.u32 2147483647, %v3455
        %vm3850 = vcmp.eq.f32.partialorder %v3849, 8.507059e+37
        %v3851 = vand.u32 %v3455, 2147483648
        %v3852 = vor.u32 1.1754944e-38, %v3851
        %v3853 = vsel %vm3850, %v3852, %v3848
        %v3854 = vrcp.pop %v3458
        %v3855 = vmul.f32 %v3458, %v3854
        %v3856 = vsub.f32 1.0, %v3855
        %v3857 = vmul.f32 %v3854, %v3856
        %v3858 = vadd.f32 %v3854, %v3857
        %vm3859 = vweird.f32 %v3458
        %vm3860 = vweird.f32 %v3854
        %vm3861 = vmor %vm3859, %vm3860
        %v3862 = vsel %vm3861, %v3854, %v3858
        %v3863 = vand.u32 2147483647, %v3458
        %vm3864 = vcmp.eq.f32.partialorder %v3863, 8.507059e+37
        %v3865 = vand.u32 %v3458, 2147483648
        %v3866 = vor.u32 1.1754944e-38, %v3865
        %v3867 = vsel %vm3864, %v3866, %v3862
        %v3868 = vrcp.pop %v3461
        %v3869 = vmul.f32 %v3461, %v3868
        %v3870 = vsub.f32 1.0, %v3869
        %v3871 = vmul.f32 %v3868, %v3870
        %v3872 = vadd.f32 %v3868, %v3871
        %vm3873 = vweird.f32 %v3461
        %vm3874 = vweird.f32 %v3868
        %vm3875 = vmor %vm3873, %vm3874
        %v3876 = vsel %vm3875, %v3868, %v3872
        %v3877 = vand.u32 2147483647, %v3461
        %vm3878 = vcmp.eq.f32.partialorder %v3877, 8.507059e+37
        %v3879 = vand.u32 %v3461, 2147483648
        %v3880 = vor.u32 1.1754944e-38, %v3879
        %v3881 = vsel %vm3878, %v3880, %v3876
        %v3882 = vrcp.pop %v3464
        %v3883 = vmul.f32 %v3464, %v3882
        %v3884 = vsub.f32 1.0, %v3883
        %v3885 = vmul.f32 %v3882, %v3884
        %v3886 = vadd.f32 %v3882, %v3885
        %vm3887 = vweird.f32 %v3464
        %vm3888 = vweird.f32 %v3882
        %vm3889 = vmor %vm3887, %vm3888
        %v3890 = vsel %vm3889, %v3882, %v3886
        %v3891 = vand.u32 2147483647, %v3464
        %vm3892 = vcmp.eq.f32.partialorder %v3891, 8.507059e+37
        %v3893 = vand.u32 %v3464, 2147483648
        %v3894 = vor.u32 1.1754944e-38, %v3893
        %v3895 = vsel %vm3892, %v3894, %v3890
        %v3896 = vrcp.pop %v3467
        %v3897 = vmul.f32 %v3467, %v3896
        %v3898 = vsub.f32 1.0, %v3897
        %v3899 = vmul.f32 %v3896, %v3898
        %v3900 = vadd.f32 %v3896, %v3899
        %vm3901 = vweird.f32 %v3467
        %vm3902 = vweird.f32 %v3896
        %vm3903 = vmor %vm3901, %vm3902
        %v3904 = vsel %vm3903, %v3896, %v3900
        %v3905 = vand.u32 2147483647, %v3467
        %vm3906 = vcmp.eq.f32.partialorder %v3905, 8.507059e+37
        %v3907 = vand.u32 %v3467, 2147483648
        %v3908 = vor.u32 1.1754944e-38, %v3907
        %v3909 = vsel %vm3906, %v3908, %v3904
        %v3910 = vrcp.pop %v3470
        %v3911 = vmul.f32 %v3470, %v3910
        %v3912 = vsub.f32 1.0, %v3911
        %v3913 = vmul.f32 %v3910, %v3912
        %v3914 = vadd.f32 %v3910, %v3913
        %vm3915 = vweird.f32 %v3470
        %vm3916 = vweird.f32 %v3910
        %vm3917 = vmor %vm3915, %vm3916
        %v3918 = vsel %vm3917, %v3910, %v3914
        %v3919 = vand.u32 2147483647, %v3470
        %vm3920 = vcmp.eq.f32.partialorder %v3919, 8.507059e+37
        %v3921 = vand.u32 %v3470, 2147483648
        %v3922 = vor.u32 1.1754944e-38, %v3921
        %v3923 = vsel %vm3920, %v3922, %v3918
        %v3924 = vrcp.pop %v3473
        %v3925 = vmul.f32 %v3473, %v3924
        %v3926 = vsub.f32 1.0, %v3925
        %v3927 = vmul.f32 %v3924, %v3926
        %v3928 = vadd.f32 %v3924, %v3927
        %vm3929 = vweird.f32 %v3473
        %vm3930 = vweird.f32 %v3924
        %vm3931 = vmor %vm3929, %vm3930
        %v3932 = vsel %vm3931, %v3924, %v3928
        %v3933 = vand.u32 2147483647, %v3473
        %vm3934 = vcmp.eq.f32.partialorder %v3933, 8.507059e+37
        %v3935 = vand.u32 %v3473, 2147483648
        %v3936 = vor.u32 1.1754944e-38, %v3935
        %v3937 = vsel %vm3934, %v3936, %v3932
        %v3938 = vmul.f32 %v3514, %v3727
        %v3939 = vmul.f32 %v3516, %v3741
        %v3940 = vmul.f32 %v3542, %v3755
        %v3941 = vmul.f32 %v3544, %v3769
        %v3942 = vmul.f32 %v3570, %v3783
        %v3943 = vmul.f32 %v3572, %v3797
        %v3944 = vmul.f32 %v3598, %v3811
        %v3945 = vmul.f32 %v3600, %v3825
        %v3946 = vmul.f32 %v3626, %v3839
        %v3947 = vmul.f32 %v3628, %v3853
        %v3948 = vmul.f32 %v3654, %v3867
        %v3949 = vmul.f32 %v3656, %v3881
        %v3950 = vmul.f32 %v3682, %v3895
        %v3951 = vmul.f32 %v3684, %v3909
        %v3952 = vmul.f32 %v3710, %v3923
        %v3953 = vmul.f32 %v3712, %v3937
        %v3954 = vadd.f32 %v3117, %v3938
        %v3955 = vadd.f32 %v3118, %v3939
        %v3956 = vadd.f32 %v3119, %v3940
        %v3957 = vadd.f32 %v3120, %v3941
        %v3958 = vadd.f32 %v3121, %v3942
        %v3959 = vadd.f32 %v3122, %v3943
        %v3960 = vadd.f32 %v3123, %v3944
        %v3961 = vadd.f32 %v3124, %v3945
        %v3962 = vadd.f32 %v3125, %v3946
        %v3963 = vadd.f32 %v3126, %v3947
        %v3964 = vadd.f32 %v3127, %v3948
        %v3965 = vadd.f32 %v3128, %v3949
        %v3966 = vadd.f32 %v3129, %v3950
        %v3967 = vadd.f32 %v3130, %v3951
        %v3968 = vadd.f32 %v3131, %v3952
        %v3969 = vadd.f32 %v3132, %v3953
        %s3970 = scalar_lea.vmem [#allocation8], 24
        %v3971 = vld [vmem:[%s3970] sm:$0xf]
        %v3972 = vld [vmem:[%s3970 + $0x4] sm:$0xf]
        %v3973 = vunpack.c.l.bf16 %v3971
        %v3974 = vunpack.c.l.bf16 %v3972
        %3975 = vrot.lane.b32.xlu0 %v1418, 32
        %v3976 = vpop.permute.xlu0 %3975
        %3977 = vrot.lane.b32.xlu0 %v1423, 32
        %v3978 = vpop.permute.xlu0 %3977
        %v3980 = vsel %vm1424, %v3976, 0
        %v3983 = vsel %vm1424, %v3978, 0
        %3985 = vmatpush.bf16.xpose.msra.mxu0 0
        %3986 = vmatpush.bf16.xpose.msra.mxu0 0
        %3987 = vmatpush.bf16.xpose.msra.mxu0 0
        %3988 = vmatpush.bf16.xpose.msra.mxu0 0
        %3989 = vmatpush.bf16.xpose.msra.mxu0 0
        %3990 = vmatpush.bf16.xpose.msra.mxu0 0
        %3991 = vmatpush.bf16.xpose.msra.mxu0 0
        %3992 = vmatpush.bf16.xpose.msra.mxu0 %v3983
        %3993 = vmatmul.bf16.gmra.mxu0 %v3980
        %v3994 = vpop.f32.mrf.mxu0
        %v3995 = vadd.f32 %v3973, %v3994
        %v3996 = vpop.f32.mrf.mxu0
        %v3997 = vadd.f32 %v3974, %v3996
        %3998 = vdwg.mxu0
        %3999 = vrot.lane.b32.xlu0 %v1449, 32
        %v4000 = vpop.permute.xlu0 %3999
        %4001 = vrot.lane.b32.xlu0 %v1454, 32
        %v4002 = vpop.permute.xlu0 %4001
        %v4004 = vsel %vm1424, %v4000, 0
        %v4007 = vsel %vm1424, %v4002, 0
        %4009 = vmatpush.bf16.xpose.msra.mxu0 0
        %4010 = vmatpush.bf16.xpose.msra.mxu0 0
        %4011 = vmatpush.bf16.xpose.msra.mxu0 0
        %4012 = vmatpush.bf16.xpose.msra.mxu0 0
        %4013 = vmatpush.bf16.xpose.msra.mxu0 0
        %4014 = vmatpush.bf16.xpose.msra.mxu0 0
        %4015 = vmatpush.bf16.xpose.msra.mxu0 0
        %4016 = vmatpush.bf16.xpose.msra.mxu0 %v4007
        %4017 = vmatmul.bf16.gmra.mxu0 %v4004
        %v4018 = vpop.f32.mrf.mxu0
        %v4019 = vadd.f32 %v3973, %v4018
        %v4020 = vpop.f32.mrf.mxu0
        %v4021 = vadd.f32 %v3974, %v4020
        %4022 = vdwg.mxu0
        %4023 = vrot.lane.b32.xlu0 %v1479, 32
        %v4024 = vpop.permute.xlu0 %4023
        %4025 = vrot.lane.b32.xlu0 %v1484, 32
        %v4026 = vpop.permute.xlu0 %4025
        %v4028 = vsel %vm1424, %v4024, 0
        %v4031 = vsel %vm1424, %v4026, 0
        %4033 = vmatpush.bf16.xpose.msra.mxu0 0
        %4034 = vmatpush.bf16.xpose.msra.mxu0 0
        %4035 = vmatpush.bf16.xpose.msra.mxu0 0
        %4036 = vmatpush.bf16.xpose.msra.mxu0 0
        %4037 = vmatpush.bf16.xpose.msra.mxu0 0
        %4038 = vmatpush.bf16.xpose.msra.mxu0 0
        %4039 = vmatpush.bf16.xpose.msra.mxu0 0
        %4040 = vmatpush.bf16.xpose.msra.mxu0 %v4031
        %4041 = vmatmul.bf16.gmra.mxu0 %v4028
        %v4042 = vpop.f32.mrf.mxu0
        %v4043 = vadd.f32 %v3973, %v4042
        %v4044 = vpop.f32.mrf.mxu0
        %v4045 = vadd.f32 %v3974, %v4044
        %4046 = vdwg.mxu0
        %4047 = vrot.lane.b32.xlu0 %v1509, 32
        %v4048 = vpop.permute.xlu0 %4047
        %4049 = vrot.lane.b32.xlu0 %v1514, 32
        %v4050 = vpop.permute.xlu0 %4049
        %v4052 = vsel %vm1424, %v4048, 0
        %v4055 = vsel %vm1424, %v4050, 0
        %4057 = vmatpush.bf16.xpose.msra.mxu0 0
        %4058 = vmatpush.bf16.xpose.msra.mxu0 0
        %4059 = vmatpush.bf16.xpose.msra.mxu0 0
        %4060 = vmatpush.bf16.xpose.msra.mxu0 0
        %4061 = vmatpush.bf16.xpose.msra.mxu0 0
        %4062 = vmatpush.bf16.xpose.msra.mxu0 0
        %4063 = vmatpush.bf16.xpose.msra.mxu0 0
        %4064 = vmatpush.bf16.xpose.msra.mxu0 %v4055
        %4065 = vmatmul.bf16.gmra.mxu0 %v4052
        %v4066 = vpop.f32.mrf.mxu0
        %v4067 = vadd.f32 %v3973, %v4066
        %v4068 = vpop.f32.mrf.mxu0
        %v4069 = vadd.f32 %v3974, %v4068
        %4070 = vdwg.mxu0
        %4071 = vrot.lane.b32.xlu0 %v1539, 32
        %v4072 = vpop.permute.xlu0 %4071
        %4073 = vrot.lane.b32.xlu0 %v1544, 32
        %v4074 = vpop.permute.xlu0 %4073
        %v4076 = vsel %vm1424, %v4072, 0
        %v4079 = vsel %vm1424, %v4074, 0
        %4081 = vmatpush.bf16.xpose.msra.mxu0 0
        %4082 = vmatpush.bf16.xpose.msra.mxu0 0
        %4083 = vmatpush.bf16.xpose.msra.mxu0 0
        %4084 = vmatpush.bf16.xpose.msra.mxu0 0
        %4085 = vmatpush.bf16.xpose.msra.mxu0 0
        %4086 = vmatpush.bf16.xpose.msra.mxu0 0
        %4087 = vmatpush.bf16.xpose.msra.mxu0 0
        %4088 = vmatpush.bf16.xpose.msra.mxu0 %v4079
        %4089 = vmatmul.bf16.gmra.mxu0 %v4076
        %v4090 = vpop.f32.mrf.mxu0
        %v4091 = vadd.f32 %v3973, %v4090
        %v4092 = vpop.f32.mrf.mxu0
        %v4093 = vadd.f32 %v3974, %v4092
        %4094 = vdwg.mxu0
        %4095 = vrot.lane.b32.xlu0 %v1569, 32
        %v4096 = vpop.permute.xlu0 %4095
        %4097 = vrot.lane.b32.xlu0 %v1574, 32
        %v4098 = vpop.permute.xlu0 %4097
        %v4100 = vsel %vm1424, %v4096, 0
        %v4103 = vsel %vm1424, %v4098, 0
        %4105 = vmatpush.bf16.xpose.msra.mxu0 0
        %4106 = vmatpush.bf16.xpose.msra.mxu0 0
        %4107 = vmatpush.bf16.xpose.msra.mxu0 0
        %4108 = vmatpush.bf16.xpose.msra.mxu0 0
        %4109 = vmatpush.bf16.xpose.msra.mxu0 0
        %4110 = vmatpush.bf16.xpose.msra.mxu0 0
        %4111 = vmatpush.bf16.xpose.msra.mxu0 0
        %4112 = vmatpush.bf16.xpose.msra.mxu0 %v4103
        %4113 = vmatmul.bf16.gmra.mxu0 %v4100
        %v4114 = vpop.f32.mrf.mxu0
        %v4115 = vadd.f32 %v3973, %v4114
        %v4116 = vpop.f32.mrf.mxu0
        %v4117 = vadd.f32 %v3974, %v4116
        %4118 = vdwg.mxu0
        %4119 = vrot.lane.b32.xlu0 %v1599, 32
        %v4120 = vpop.permute.xlu0 %4119
        %4121 = vrot.lane.b32.xlu0 %v1604, 32
        %v4122 = vpop.permute.xlu0 %4121
        %v4124 = vsel %vm1424, %v4120, 0
        %v4127 = vsel %vm1424, %v4122, 0
        %4129 = vmatpush.bf16.xpose.msra.mxu0 0
        %4130 = vmatpush.bf16.xpose.msra.mxu0 0
        %4131 = vmatpush.bf16.xpose.msra.mxu0 0
        %4132 = vmatpush.bf16.xpose.msra.mxu0 0
        %4133 = vmatpush.bf16.xpose.msra.mxu0 0
        %4134 = vmatpush.bf16.xpose.msra.mxu0 0
        %4135 = vmatpush.bf16.xpose.msra.mxu0 0
        %4136 = vmatpush.bf16.xpose.msra.mxu0 %v4127
        %4137 = vmatmul.bf16.gmra.mxu0 %v4124
        %v4138 = vpop.f32.mrf.mxu0
        %v4139 = vadd.f32 %v3973, %v4138
        %v4140 = vpop.f32.mrf.mxu0
        %v4141 = vadd.f32 %v3974, %v4140
        %4142 = vdwg.mxu0
        %4143 = vrot.lane.b32.xlu0 %v1629, 32
        %v4144 = vpop.permute.xlu0 %4143
        %4145 = vrot.lane.b32.xlu0 %v1634, 32
        %v4146 = vpop.permute.xlu0 %4145
        %v4148 = vsel %vm1424, %v4144, 0
        %v4151 = vsel %vm1424, %v4146, 0
        %4153 = vmatpush.bf16.xpose.msra.mxu0 0
        %4154 = vmatpush.bf16.xpose.msra.mxu0 0
        %4155 = vmatpush.bf16.xpose.msra.mxu0 0
        %4156 = vmatpush.bf16.xpose.msra.mxu0 0
        %4157 = vmatpush.bf16.xpose.msra.mxu0 0
        %4158 = vmatpush.bf16.xpose.msra.mxu0 0
        %4159 = vmatpush.bf16.xpose.msra.mxu0 0
        %4160 = vmatpush.bf16.xpose.msra.mxu0 %v4151
        %4161 = vmatmul.bf16.gmra.mxu0 %v4148
        %v4162 = vpop.f32.mrf.mxu0
        %v4163 = vadd.f32 %v3973, %v4162
        %v4164 = vpop.f32.mrf.mxu0
        %v4165 = vadd.f32 %v3974, %v4164
        %4166 = vdwg.mxu0
        %v4167 = vsel %vm1655, %v3995, -inf
        %4168 = vmax.xlane.f32.xlu0 %v4167
        %v4169 = vpop.xlane.xlu0 %4168
        %v4170 = vsel %vm1655, %v3997, -inf
        %4171 = vmax.xlane.f32.xlu0 %v4170
        %v4172 = vpop.xlane.xlu0 %4171
        %v4173 = vsel %vm1655, %v4019, -inf
        %4174 = vmax.xlane.f32.xlu0 %v4173
        %v4175 = vpop.xlane.xlu0 %4174
        %v4176 = vsel %vm1655, %v4021, -inf
        %4177 = vmax.xlane.f32.xlu0 %v4176
        %v4178 = vpop.xlane.xlu0 %4177
        %v4179 = vsel %vm1655, %v4043, -inf
        %4180 = vmax.xlane.f32.xlu0 %v4179
        %v4181 = vpop.xlane.xlu0 %4180
        %v4182 = vsel %vm1655, %v4045, -inf
        %4183 = vmax.xlane.f32.xlu0 %v4182
        %v4184 = vpop.xlane.xlu0 %4183
        %v4185 = vsel %vm1655, %v4067, -inf
        %4186 = vmax.xlane.f32.xlu0 %v4185
        %v4187 = vpop.xlane.xlu0 %4186
        %v4188 = vsel %vm1655, %v4069, -inf
        %4189 = vmax.xlane.f32.xlu0 %v4188
        %v4190 = vpop.xlane.xlu0 %4189
        %v4191 = vsel %vm1655, %v4091, -inf
        %4192 = vmax.xlane.f32.xlu0 %v4191
        %v4193 = vpop.xlane.xlu0 %4192
        %v4194 = vsel %vm1655, %v4093, -inf
        %4195 = vmax.xlane.f32.xlu0 %v4194
        %v4196 = vpop.xlane.xlu0 %4195
        %v4197 = vsel %vm1655, %v4115, -inf
        %4198 = vmax.xlane.f32.xlu0 %v4197
        %v4199 = vpop.xlane.xlu0 %4198
        %v4200 = vsel %vm1655, %v4117, -inf
        %4201 = vmax.xlane.f32.xlu0 %v4200
        %v4202 = vpop.xlane.xlu0 %4201
        %v4203 = vsel %vm1655, %v4139, -inf
        %4204 = vmax.xlane.f32.xlu0 %v4203
        %v4205 = vpop.xlane.xlu0 %4204
        %v4206 = vsel %vm1655, %v4141, -inf
        %4207 = vmax.xlane.f32.xlu0 %v4206
        %v4208 = vpop.xlane.xlu0 %4207
        %v4209 = vsel %vm1655, %v4163, -inf
        %4210 = vmax.xlane.f32.xlu0 %v4209
        %v4211 = vpop.xlane.xlu0 %4210
        %v4212 = vsel %vm1655, %v4165, -inf
        %4213 = vmax.xlane.f32.xlu0 %v4212
        %v4214 = vpop.xlane.xlu0 %4213
        %v4215 = vsub.f32 %v3995, %v4169
        %v4216 = vsub.f32 %v3997, %v4172
        %v4217 = vsub.f32 %v4019, %v4175
        %v4218 = vsub.f32 %v4021, %v4178
        %v4219 = vsub.f32 %v4043, %v4181
        %v4220 = vsub.f32 %v4045, %v4184
        %v4221 = vsub.f32 %v4067, %v4187
        %v4222 = vsub.f32 %v4069, %v4190
        %v4223 = vsub.f32 %v4091, %v4193
        %v4224 = vsub.f32 %v4093, %v4196
        %v4225 = vsub.f32 %v4115, %v4199
        %v4226 = vsub.f32 %v4117, %v4202
        %v4227 = vsub.f32 %v4139, %v4205
        %v4228 = vsub.f32 %v4141, %v4208
        %v4229 = vsub.f32 %v4163, %v4211
        %v4230 = vsub.f32 %v4165, %v4214
        %v4231 = vmul.f32 %v4215, 1.442695
        %v4232 = vpow.pop %v4231
        %v4233 = vmul.f32 %v4216, 1.442695
        %v4234 = vpow.pop %v4233
        %v4235 = vmul.f32 %v4217, 1.442695
        %v4236 = vpow.pop %v4235
        %v4237 = vmul.f32 %v4218, 1.442695
        %v4238 = vpow.pop %v4237
        %v4239 = vmul.f32 %v4219, 1.442695
        %v4240 = vpow.pop %v4239
        %v4241 = vmul.f32 %v4220, 1.442695
        %v4242 = vpow.pop %v4241
        %v4243 = vmul.f32 %v4221, 1.442695
        %v4244 = vpow.pop %v4243
        %v4245 = vmul.f32 %v4222, 1.442695
        %v4246 = vpow.pop %v4245
        %v4247 = vmul.f32 %v4223, 1.442695
        %v4248 = vpow.pop %v4247
        %v4249 = vmul.f32 %v4224, 1.442695
        %v4250 = vpow.pop %v4249
        %v4251 = vmul.f32 %v4225, 1.442695
        %v4252 = vpow.pop %v4251
        %v4253 = vmul.f32 %v4226, 1.442695
        %v4254 = vpow.pop %v4253
        %v4255 = vmul.f32 %v4227, 1.442695
        %v4256 = vpow.pop %v4255
        %v4257 = vmul.f32 %v4228, 1.442695
        %v4258 = vpow.pop %v4257
        %v4259 = vmul.f32 %v4229, 1.442695
        %v4260 = vpow.pop %v4259
        %v4261 = vmul.f32 %v4230, 1.442695
        %v4262 = vpow.pop %v4261
        %v4263 = vsel %vm1655, %v4232, 0.0
        %4264 = vadd.xlane.f32.xlu0 %v4263
        %v4265 = vpop.xlane.xlu0 %4264
        %v4266 = vsel %vm1655, %v4234, 0.0
        %4267 = vadd.xlane.f32.xlu0 %v4266
        %v4268 = vpop.xlane.xlu0 %4267
        %v4269 = vsel %vm1655, %v4236, 0.0
        %4270 = vadd.xlane.f32.xlu0 %v4269
        %v4271 = vpop.xlane.xlu0 %4270
        %v4272 = vsel %vm1655, %v4238, 0.0
        %4273 = vadd.xlane.f32.xlu0 %v4272
        %v4274 = vpop.xlane.xlu0 %4273
        %v4275 = vsel %vm1655, %v4240, 0.0
        %4276 = vadd.xlane.f32.xlu0 %v4275
        %v4277 = vpop.xlane.xlu0 %4276
        %v4278 = vsel %vm1655, %v4242, 0.0
        %4279 = vadd.xlane.f32.xlu0 %v4278
        %v4280 = vpop.xlane.xlu0 %4279
        %v4281 = vsel %vm1655, %v4244, 0.0
        %4282 = vadd.xlane.f32.xlu0 %v4281
        %v4283 = vpop.xlane.xlu0 %4282
        %v4284 = vsel %vm1655, %v4246, 0.0
        %4285 = vadd.xlane.f32.xlu0 %v4284
        %v4286 = vpop.xlane.xlu0 %4285
        %v4287 = vsel %vm1655, %v4248, 0.0
        %4288 = vadd.xlane.f32.xlu0 %v4287
        %v4289 = vpop.xlane.xlu0 %4288
        %v4290 = vsel %vm1655, %v4250, 0.0
        %4291 = vadd.xlane.f32.xlu0 %v4290
        %v4292 = vpop.xlane.xlu0 %4291
        %v4293 = vsel %vm1655, %v4252, 0.0
        %4294 = vadd.xlane.f32.xlu0 %v4293
        %v4295 = vpop.xlane.xlu0 %4294
        %v4296 = vsel %vm1655, %v4254, 0.0
        %4297 = vadd.xlane.f32.xlu0 %v4296
        %v4298 = vpop.xlane.xlu0 %4297
        %v4299 = vsel %vm1655, %v4256, 0.0
        %4300 = vadd.xlane.f32.xlu0 %v4299
        %v4301 = vpop.xlane.xlu0 %4300
        %v4302 = vsel %vm1655, %v4258, 0.0
        %4303 = vadd.xlane.f32.xlu0 %v4302
        %v4304 = vpop.xlane.xlu0 %4303
        %v4305 = vsel %vm1655, %v4260, 0.0
        %4306 = vadd.xlane.f32.xlu0 %v4305
        %v4307 = vpop.xlane.xlu0 %4306
        %v4308 = vsel %vm1655, %v4262, 0.0
        %4309 = vadd.xlane.f32.xlu0 %v4308
        %v4310 = vpop.xlane.xlu0 %4309
        %v4311 = vpack.c.bf16 %v4232, %v4232
        %v4312 = vpack.c.bf16 %v4234, %v4234
        %v4313 = vpack.c.bf16 %v4236, %v4236
        %v4314 = vpack.c.bf16 %v4238, %v4238
        %v4315 = vpack.c.bf16 %v4240, %v4240
        %v4316 = vpack.c.bf16 %v4242, %v4242
        %v4317 = vpack.c.bf16 %v4244, %v4244
        %v4318 = vpack.c.bf16 %v4246, %v4246
        %v4319 = vpack.c.bf16 %v4248, %v4248
        %v4320 = vpack.c.bf16 %v4250, %v4250
        %v4321 = vpack.c.bf16 %v4252, %v4252
        %v4322 = vpack.c.bf16 %v4254, %v4254
        %v4323 = vpack.c.bf16 %v4256, %v4256
        %v4324 = vpack.c.bf16 %v4258, %v4258
        %v4325 = vpack.c.bf16 %v4260, %v4260
        %v4326 = vpack.c.bf16 %v4262, %v4262
        %v4327 = vrot.slane %v1379, 4
        %v4328 = vrot.slane %v1381, 4
        %v4331 = vunpack.c.l.b16 %v4311
        %v4332 = vunpack.c.l.b16 %v4312
        %v4333 = vpack.c.b16 %v4332, %v4331
        %v4334 = vunpack.c.l.b16 %v4327
        %v4335 = vunpack.c.l.b16 %v4328
        %v4336 = vpack.c.b16 %v4335, %v4334
        %v4339 = vsel %vm1655, %v4333, 0
        %4341 = vmatpush.bf16.msra.mxu0 0
        %4342 = vmatpush.bf16.msra.mxu0 0
        %4343 = vmatpush.bf16.msra.mxu0 0
        %4344 = vmatpush.bf16.msra.mxu0 0
        %4345 = vmatpush.bf16.msra.mxu0 0
        %4346 = vmatpush.bf16.msra.mxu0 0
        %4347 = vmatpush.bf16.msra.mxu0 0
        %4348 = vmatpush.bf16.msra.mxu0 %v4336
        %4349 = vmatmul.bf16.gmra.mxu0 %v4339
        %v4350 = vpop.f32.mrf.mxu0
        %v4351 = vadd.f32 0.0, %v4350
        %v4352 = vpop.f32.mrf.mxu0
        %v4353 = vadd.f32 0.0, %v4352
        %4354 = vdwg.mxu0
        %v4355 = vrot.slane %v1383, 4
        %v4356 = vrot.slane %v1385, 4
        %v4359 = vunpack.c.l.b16 %v4313
        %v4360 = vunpack.c.l.b16 %v4314
        %v4361 = vpack.c.b16 %v4360, %v4359
        %v4362 = vunpack.c.l.b16 %v4355
        %v4363 = vunpack.c.l.b16 %v4356
        %v4364 = vpack.c.b16 %v4363, %v4362
        %v4367 = vsel %vm1655, %v4361, 0
        %4369 = vmatpush.bf16.msra.mxu0 0
        %4370 = vmatpush.bf16.msra.mxu0 0
        %4371 = vmatpush.bf16.msra.mxu0 0
        %4372 = vmatpush.bf16.msra.mxu0 0
        %4373 = vmatpush.bf16.msra.mxu0 0
        %4374 = vmatpush.bf16.msra.mxu0 0
        %4375 = vmatpush.bf16.msra.mxu0 0
        %4376 = vmatpush.bf16.msra.mxu0 %v4364
        %4377 = vmatmul.bf16.gmra.mxu0 %v4367
        %v4378 = vpop.f32.mrf.mxu0
        %v4379 = vadd.f32 0.0, %v4378
        %v4380 = vpop.f32.mrf.mxu0
        %v4381 = vadd.f32 0.0, %v4380
        %4382 = vdwg.mxu0
        %v4383 = vrot.slane %v1387, 4
        %v4384 = vrot.slane %v1389, 4
        %v4387 = vunpack.c.l.b16 %v4315
        %v4388 = vunpack.c.l.b16 %v4316
        %v4389 = vpack.c.b16 %v4388, %v4387
        %v4390 = vunpack.c.l.b16 %v4383
        %v4391 = vunpack.c.l.b16 %v4384
        %v4392 = vpack.c.b16 %v4391, %v4390
        %v4395 = vsel %vm1655, %v4389, 0
        %4397 = vmatpush.bf16.msra.mxu0 0
        %4398 = vmatpush.bf16.msra.mxu0 0
        %4399 = vmatpush.bf16.msra.mxu0 0
        %4400 = vmatpush.bf16.msra.mxu0 0
        %4401 = vmatpush.bf16.msra.mxu0 0
        %4402 = vmatpush.bf16.msra.mxu0 0
        %4403 = vmatpush.bf16.msra.mxu0 0
        %4404 = vmatpush.bf16.msra.mxu0 %v4392
        %4405 = vmatmul.bf16.gmra.mxu0 %v4395
        %v4406 = vpop.f32.mrf.mxu0
        %v4407 = vadd.f32 0.0, %v4406
        %v4408 = vpop.f32.mrf.mxu0
        %v4409 = vadd.f32 0.0, %v4408
        %4410 = vdwg.mxu0
        %v4411 = vrot.slane %v1391, 4
        %v4412 = vrot.slane %v1393, 4
        %v4415 = vunpack.c.l.b16 %v4317
        %v4416 = vunpack.c.l.b16 %v4318
        %v4417 = vpack.c.b16 %v4416, %v4415
        %v4418 = vunpack.c.l.b16 %v4411
        %v4419 = vunpack.c.l.b16 %v4412
        %v4420 = vpack.c.b16 %v4419, %v4418
        %v4423 = vsel %vm1655, %v4417, 0
        %4425 = vmatpush.bf16.msra.mxu0 0
        %4426 = vmatpush.bf16.msra.mxu0 0
        %4427 = vmatpush.bf16.msra.mxu0 0
        %4428 = vmatpush.bf16.msra.mxu0 0
        %4429 = vmatpush.bf16.msra.mxu0 0
        %4430 = vmatpush.bf16.msra.mxu0 0
        %4431 = vmatpush.bf16.msra.mxu0 0
        %4432 = vmatpush.bf16.msra.mxu0 %v4420
        %4433 = vmatmul.bf16.gmra.mxu0 %v4423
        %v4434 = vpop.f32.mrf.mxu0
        %v4435 = vadd.f32 0.0, %v4434
        %v4436 = vpop.f32.mrf.mxu0
        %v4437 = vadd.f32 0.0, %v4436
        %4438 = vdwg.mxu0
        %v4439 = vrot.slane %v1395, 4
        %v4440 = vrot.slane %v1397, 4
        %v4443 = vunpack.c.l.b16 %v4319
        %v4444 = vunpack.c.l.b16 %v4320
        %v4445 = vpack.c.b16 %v4444, %v4443
        %v4446 = vunpack.c.l.b16 %v4439
        %v4447 = vunpack.c.l.b16 %v4440
        %v4448 = vpack.c.b16 %v4447, %v4446
        %v4451 = vsel %vm1655, %v4445, 0
        %4453 = vmatpush.bf16.msra.mxu0 0
        %4454 = vmatpush.bf16.msra.mxu0 0
        %4455 = vmatpush.bf16.msra.mxu0 0
        %4456 = vmatpush.bf16.msra.mxu0 0
        %4457 = vmatpush.bf16.msra.mxu0 0
        %4458 = vmatpush.bf16.msra.mxu0 0
        %4459 = vmatpush.bf16.msra.mxu0 0
        %4460 = vmatpush.bf16.msra.mxu0 %v4448
        %4461 = vmatmul.bf16.gmra.mxu0 %v4451
        %v4462 = vpop.f32.mrf.mxu0
        %v4463 = vadd.f32 0.0, %v4462
        %v4464 = vpop.f32.mrf.mxu0
        %v4465 = vadd.f32 0.0, %v4464
        %4466 = vdwg.mxu0
        %v4467 = vrot.slane %v1399, 4
        %v4468 = vrot.slane %v1401, 4
        %v4471 = vunpack.c.l.b16 %v4321
        %v4472 = vunpack.c.l.b16 %v4322
        %v4473 = vpack.c.b16 %v4472, %v4471
        %v4474 = vunpack.c.l.b16 %v4467
        %v4475 = vunpack.c.l.b16 %v4468
        %v4476 = vpack.c.b16 %v4475, %v4474
        %v4479 = vsel %vm1655, %v4473, 0
        %4481 = vmatpush.bf16.msra.mxu0 0
        %4482 = vmatpush.bf16.msra.mxu0 0
        %4483 = vmatpush.bf16.msra.mxu0 0
        %4484 = vmatpush.bf16.msra.mxu0 0
        %4485 = vmatpush.bf16.msra.mxu0 0
        %4486 = vmatpush.bf16.msra.mxu0 0
        %4487 = vmatpush.bf16.msra.mxu0 0
        %4488 = vmatpush.bf16.msra.mxu0 %v4476
        %4489 = vmatmul.bf16.gmra.mxu0 %v4479
        %v4490 = vpop.f32.mrf.mxu0
        %v4491 = vadd.f32 0.0, %v4490
        %v4492 = vpop.f32.mrf.mxu0
        %v4493 = vadd.f32 0.0, %v4492
        %4494 = vdwg.mxu0
        %v4495 = vrot.slane %v1403, 4
        %v4496 = vrot.slane %v1405, 4
        %v4499 = vunpack.c.l.b16 %v4323
        %v4500 = vunpack.c.l.b16 %v4324
        %v4501 = vpack.c.b16 %v4500, %v4499
        %v4502 = vunpack.c.l.b16 %v4495
        %v4503 = vunpack.c.l.b16 %v4496
        %v4504 = vpack.c.b16 %v4503, %v4502
        %v4507 = vsel %vm1655, %v4501, 0
        %4509 = vmatpush.bf16.msra.mxu0 0
        %4510 = vmatpush.bf16.msra.mxu0 0
        %4511 = vmatpush.bf16.msra.mxu0 0
        %4512 = vmatpush.bf16.msra.mxu0 0
        %4513 = vmatpush.bf16.msra.mxu0 0
        %4514 = vmatpush.bf16.msra.mxu0 0
        %4515 = vmatpush.bf16.msra.mxu0 0
        %4516 = vmatpush.bf16.msra.mxu0 %v4504
        %4517 = vmatmul.bf16.gmra.mxu0 %v4507
        %v4518 = vpop.f32.mrf.mxu0
        %v4519 = vadd.f32 0.0, %v4518
        %v4520 = vpop.f32.mrf.mxu0
        %v4521 = vadd.f32 0.0, %v4520
        %4522 = vdwg.mxu0
        %v4523 = vrot.slane %v1407, 4
        %v4524 = vrot.slane %v1409, 4
        %v4527 = vunpack.c.l.b16 %v4325
        %v4528 = vunpack.c.l.b16 %v4326
        %v4529 = vpack.c.b16 %v4528, %v4527
        %v4530 = vunpack.c.l.b16 %v4523
        %v4531 = vunpack.c.l.b16 %v4524
        %v4532 = vpack.c.b16 %v4531, %v4530
        %v4535 = vsel %vm1655, %v4529, 0
        %4537 = vmatpush.bf16.msra.mxu0 0
        %4538 = vmatpush.bf16.msra.mxu0 0
        %4539 = vmatpush.bf16.msra.mxu0 0
        %4540 = vmatpush.bf16.msra.mxu0 0
        %4541 = vmatpush.bf16.msra.mxu0 0
        %4542 = vmatpush.bf16.msra.mxu0 0
        %4543 = vmatpush.bf16.msra.mxu0 0
        %4544 = vmatpush.bf16.msra.mxu0 %v4532
        %4545 = vmatmul.bf16.gmra.mxu0 %v4535
        %v4546 = vpop.f32.mrf.mxu0
        %v4547 = vadd.f32 0.0, %v4546
        %v4548 = vpop.f32.mrf.mxu0
        %v4549 = vadd.f32 0.0, %v4548
        %4550 = vdwg.mxu0
        %v4551 = vrcp.pop %v4265
        %v4552 = vmul.f32 %v4265, %v4551
        %v4553 = vsub.f32 1.0, %v4552
        %v4554 = vmul.f32 %v4551, %v4553
        %v4555 = vadd.f32 %v4551, %v4554
        %vm4556 = vweird.f32 %v4265
        %vm4557 = vweird.f32 %v4551
        %vm4558 = vmor %vm4556, %vm4557
        %v4559 = vsel %vm4558, %v4551, %v4555
        %v4560 = vand.u32 2147483647, %v4265
        %vm4561 = vcmp.eq.f32.partialorder %v4560, 8.507059e+37
        %v4562 = vand.u32 %v4265, 2147483648
        %v4563 = vor.u32 1.1754944e-38, %v4562
        %v4564 = vsel %vm4561, %v4563, %v4559
        %v4565 = vrcp.pop %v4268
        %v4566 = vmul.f32 %v4268, %v4565
        %v4567 = vsub.f32 1.0, %v4566
        %v4568 = vmul.f32 %v4565, %v4567
        %v4569 = vadd.f32 %v4565, %v4568
        %vm4570 = vweird.f32 %v4268
        %vm4571 = vweird.f32 %v4565
        %vm4572 = vmor %vm4570, %vm4571
        %v4573 = vsel %vm4572, %v4565, %v4569
        %v4574 = vand.u32 2147483647, %v4268
        %vm4575 = vcmp.eq.f32.partialorder %v4574, 8.507059e+37
        %v4576 = vand.u32 %v4268, 2147483648
        %v4577 = vor.u32 1.1754944e-38, %v4576
        %v4578 = vsel %vm4575, %v4577, %v4573
        %v4579 = vrcp.pop %v4271
        %v4580 = vmul.f32 %v4271, %v4579
        %v4581 = vsub.f32 1.0, %v4580
        %v4582 = vmul.f32 %v4579, %v4581
        %v4583 = vadd.f32 %v4579, %v4582
        %vm4584 = vweird.f32 %v4271
        %vm4585 = vweird.f32 %v4579
        %vm4586 = vmor %vm4584, %vm4585
        %v4587 = vsel %vm4586, %v4579, %v4583
        %v4588 = vand.u32 2147483647, %v4271
        %vm4589 = vcmp.eq.f32.partialorder %v4588, 8.507059e+37
        %v4590 = vand.u32 %v4271, 2147483648
        %v4591 = vor.u32 1.1754944e-38, %v4590
        %v4592 = vsel %vm4589, %v4591, %v4587
        %v4593 = vrcp.pop %v4274
        %v4594 = vmul.f32 %v4274, %v4593
        %v4595 = vsub.f32 1.0, %v4594
        %v4596 = vmul.f32 %v4593, %v4595
        %v4597 = vadd.f32 %v4593, %v4596
        %vm4598 = vweird.f32 %v4274
        %vm4599 = vweird.f32 %v4593
        %vm4600 = vmor %vm4598, %vm4599
        %v4601 = vsel %vm4600, %v4593, %v4597
        %v4602 = vand.u32 2147483647, %v4274
        %vm4603 = vcmp.eq.f32.partialorder %v4602, 8.507059e+37
        %v4604 = vand.u32 %v4274, 2147483648
        %v4605 = vor.u32 1.1754944e-38, %v4604
        %v4606 = vsel %vm4603, %v4605, %v4601
        %v4607 = vrcp.pop %v4277
        %v4608 = vmul.f32 %v4277, %v4607
        %v4609 = vsub.f32 1.0, %v4608
        %v4610 = vmul.f32 %v4607, %v4609
        %v4611 = vadd.f32 %v4607, %v4610
        %vm4612 = vweird.f32 %v4277
        %vm4613 = vweird.f32 %v4607
        %vm4614 = vmor %vm4612, %vm4613
        %v4615 = vsel %vm4614, %v4607, %v4611
        %v4616 = vand.u32 2147483647, %v4277
        %vm4617 = vcmp.eq.f32.partialorder %v4616, 8.507059e+37
        %v4618 = vand.u32 %v4277, 2147483648
        %v4619 = vor.u32 1.1754944e-38, %v4618
        %v4620 = vsel %vm4617, %v4619, %v4615
        %v4621 = vrcp.pop %v4280
        %v4622 = vmul.f32 %v4280, %v4621
        %v4623 = vsub.f32 1.0, %v4622
        %v4624 = vmul.f32 %v4621, %v4623
        %v4625 = vadd.f32 %v4621, %v4624
        %vm4626 = vweird.f32 %v4280
        %vm4627 = vweird.f32 %v4621
        %vm4628 = vmor %vm4626, %vm4627
        %v4629 = vsel %vm4628, %v4621, %v4625
        %v4630 = vand.u32 2147483647, %v4280
        %vm4631 = vcmp.eq.f32.partialorder %v4630, 8.507059e+37
        %v4632 = vand.u32 %v4280, 2147483648
        %v4633 = vor.u32 1.1754944e-38, %v4632
        %v4634 = vsel %vm4631, %v4633, %v4629
        %v4635 = vrcp.pop %v4283
        %v4636 = vmul.f32 %v4283, %v4635
        %v4637 = vsub.f32 1.0, %v4636
        %v4638 = vmul.f32 %v4635, %v4637
        %v4639 = vadd.f32 %v4635, %v4638
        %vm4640 = vweird.f32 %v4283
        %vm4641 = vweird.f32 %v4635
        %vm4642 = vmor %vm4640, %vm4641
        %v4643 = vsel %vm4642, %v4635, %v4639
        %v4644 = vand.u32 2147483647, %v4283
        %vm4645 = vcmp.eq.f32.partialorder %v4644, 8.507059e+37
        %v4646 = vand.u32 %v4283, 2147483648
        %v4647 = vor.u32 1.1754944e-38, %v4646
        %v4648 = vsel %vm4645, %v4647, %v4643
        %v4649 = vrcp.pop %v4286
        %v4650 = vmul.f32 %v4286, %v4649
        %v4651 = vsub.f32 1.0, %v4650
        %v4652 = vmul.f32 %v4649, %v4651
        %v4653 = vadd.f32 %v4649, %v4652
        %vm4654 = vweird.f32 %v4286
        %vm4655 = vweird.f32 %v4649
        %vm4656 = vmor %vm4654, %vm4655
        %v4657 = vsel %vm4656, %v4649, %v4653
        %v4658 = vand.u32 2147483647, %v4286
        %vm4659 = vcmp.eq.f32.partialorder %v4658, 8.507059e+37
        %v4660 = vand.u32 %v4286, 2147483648
        %v4661 = vor.u32 1.1754944e-38, %v4660
        %v4662 = vsel %vm4659, %v4661, %v4657
        %v4663 = vrcp.pop %v4289
        %v4664 = vmul.f32 %v4289, %v4663
        %v4665 = vsub.f32 1.0, %v4664
        %v4666 = vmul.f32 %v4663, %v4665
        %v4667 = vadd.f32 %v4663, %v4666
        %vm4668 = vweird.f32 %v4289
        %vm4669 = vweird.f32 %v4663
        %vm4670 = vmor %vm4668, %vm4669
        %v4671 = vsel %vm4670, %v4663, %v4667
        %v4672 = vand.u32 2147483647, %v4289
        %vm4673 = vcmp.eq.f32.partialorder %v4672, 8.507059e+37
        %v4674 = vand.u32 %v4289, 2147483648
        %v4675 = vor.u32 1.1754944e-38, %v4674
        %v4676 = vsel %vm4673, %v4675, %v4671
        %v4677 = vrcp.pop %v4292
        %v4678 = vmul.f32 %v4292, %v4677
        %v4679 = vsub.f32 1.0, %v4678
        %v4680 = vmul.f32 %v4677, %v4679
        %v4681 = vadd.f32 %v4677, %v4680
        %vm4682 = vweird.f32 %v4292
        %vm4683 = vweird.f32 %v4677
        %vm4684 = vmor %vm4682, %vm4683
        %v4685 = vsel %vm4684, %v4677, %v4681
        %v4686 = vand.u32 2147483647, %v4292
        %vm4687 = vcmp.eq.f32.partialorder %v4686, 8.507059e+37
        %v4688 = vand.u32 %v4292, 2147483648
        %v4689 = vor.u32 1.1754944e-38, %v4688
        %v4690 = vsel %vm4687, %v4689, %v4685
        %v4691 = vrcp.pop %v4295
        %v4692 = vmul.f32 %v4295, %v4691
        %v4693 = vsub.f32 1.0, %v4692
        %v4694 = vmul.f32 %v4691, %v4693
        %v4695 = vadd.f32 %v4691, %v4694
        %vm4696 = vweird.f32 %v4295
        %vm4697 = vweird.f32 %v4691
        %vm4698 = vmor %vm4696, %vm4697
        %v4699 = vsel %vm4698, %v4691, %v4695
        %v4700 = vand.u32 2147483647, %v4295
        %vm4701 = vcmp.eq.f32.partialorder %v4700, 8.507059e+37
        %v4702 = vand.u32 %v4295, 2147483648
        %v4703 = vor.u32 1.1754944e-38, %v4702
        %v4704 = vsel %vm4701, %v4703, %v4699
        %v4705 = vrcp.pop %v4298
        %v4706 = vmul.f32 %v4298, %v4705
        %v4707 = vsub.f32 1.0, %v4706
        %v4708 = vmul.f32 %v4705, %v4707
        %v4709 = vadd.f32 %v4705, %v4708
        %vm4710 = vweird.f32 %v4298
        %vm4711 = vweird.f32 %v4705
        %vm4712 = vmor %vm4710, %vm4711
        %v4713 = vsel %vm4712, %v4705, %v4709
        %v4714 = vand.u32 2147483647, %v4298
        %vm4715 = vcmp.eq.f32.partialorder %v4714, 8.507059e+37
        %v4716 = vand.u32 %v4298, 2147483648
        %v4717 = vor.u32 1.1754944e-38, %v4716
        %v4718 = vsel %vm4715, %v4717, %v4713
        %v4719 = vrcp.pop %v4301
        %v4720 = vmul.f32 %v4301, %v4719
        %v4721 = vsub.f32 1.0, %v4720
        %v4722 = vmul.f32 %v4719, %v4721
        %v4723 = vadd.f32 %v4719, %v4722
        %vm4724 = vweird.f32 %v4301
        %vm4725 = vweird.f32 %v4719
        %vm4726 = vmor %vm4724, %vm4725
        %v4727 = vsel %vm4726, %v4719, %v4723
        %v4728 = vand.u32 2147483647, %v4301
        %vm4729 = vcmp.eq.f32.partialorder %v4728, 8.507059e+37
        %v4730 = vand.u32 %v4301, 2147483648
        %v4731 = vor.u32 1.1754944e-38, %v4730
        %v4732 = vsel %vm4729, %v4731, %v4727
        %v4733 = vrcp.pop %v4304
        %v4734 = vmul.f32 %v4304, %v4733
        %v4735 = vsub.f32 1.0, %v4734
        %v4736 = vmul.f32 %v4733, %v4735
        %v4737 = vadd.f32 %v4733, %v4736
        %vm4738 = vweird.f32 %v4304
        %vm4739 = vweird.f32 %v4733
        %vm4740 = vmor %vm4738, %vm4739
        %v4741 = vsel %vm4740, %v4733, %v4737
        %v4742 = vand.u32 2147483647, %v4304
        %vm4743 = vcmp.eq.f32.partialorder %v4742, 8.507059e+37
        %v4744 = vand.u32 %v4304, 2147483648
        %v4745 = vor.u32 1.1754944e-38, %v4744
        %v4746 = vsel %vm4743, %v4745, %v4741
        %v4747 = vrcp.pop %v4307
        %v4748 = vmul.f32 %v4307, %v4747
        %v4749 = vsub.f32 1.0, %v4748
        %v4750 = vmul.f32 %v4747, %v4749
        %v4751 = vadd.f32 %v4747, %v4750
        %vm4752 = vweird.f32 %v4307
        %vm4753 = vweird.f32 %v4747
        %vm4754 = vmor %vm4752, %vm4753
        %v4755 = vsel %vm4754, %v4747, %v4751
        %v4756 = vand.u32 2147483647, %v4307
        %vm4757 = vcmp.eq.f32.partialorder %v4756, 8.507059e+37
        %v4758 = vand.u32 %v4307, 2147483648
        %v4759 = vor.u32 1.1754944e-38, %v4758
        %v4760 = vsel %vm4757, %v4759, %v4755
        %v4761 = vrcp.pop %v4310
        %v4762 = vmul.f32 %v4310, %v4761
        %v4763 = vsub.f32 1.0, %v4762
        %v4764 = vmul.f32 %v4761, %v4763
        %v4765 = vadd.f32 %v4761, %v4764
        %vm4766 = vweird.f32 %v4310
        %vm4767 = vweird.f32 %v4761
        %vm4768 = vmor %vm4766, %vm4767
        %v4769 = vsel %vm4768, %v4761, %v4765
        %v4770 = vand.u32 2147483647, %v4310
        %vm4771 = vcmp.eq.f32.partialorder %v4770, 8.507059e+37
        %v4772 = vand.u32 %v4310, 2147483648
        %v4773 = vor.u32 1.1754944e-38, %v4772
        %v4774 = vsel %vm4771, %v4773, %v4769
        %v4775 = vmul.f32 %v4351, %v4564
        %v4776 = vmul.f32 %v4353, %v4578
        %v4777 = vmul.f32 %v4379, %v4592
        %v4778 = vmul.f32 %v4381, %v4606
        %v4779 = vmul.f32 %v4407, %v4620
        %v4780 = vmul.f32 %v4409, %v4634
        %v4781 = vmul.f32 %v4435, %v4648
        %v4782 = vmul.f32 %v4437, %v4662
        %v4783 = vmul.f32 %v4463, %v4676
        %v4784 = vmul.f32 %v4465, %v4690
        %v4785 = vmul.f32 %v4491, %v4704
        %v4786 = vmul.f32 %v4493, %v4718
        %v4787 = vmul.f32 %v4519, %v4732
        %v4788 = vmul.f32 %v4521, %v4746
        %v4789 = vmul.f32 %v4547, %v4760
        %v4790 = vmul.f32 %v4549, %v4774
        %v4791 = vadd.f32 %v3954, %v4775
        %v4792 = vadd.f32 %v3955, %v4776
        %v4793 = vadd.f32 %v3956, %v4777
        %v4794 = vadd.f32 %v3957, %v4778
        %v4795 = vadd.f32 %v3958, %v4779
        %v4796 = vadd.f32 %v3959, %v4780
        %v4797 = vadd.f32 %v3960, %v4781
        %v4798 = vadd.f32 %v3961, %v4782
        %v4799 = vadd.f32 %v3962, %v4783
        %v4800 = vadd.f32 %v3963, %v4784
        %v4801 = vadd.f32 %v3964, %v4785
        %v4802 = vadd.f32 %v3965, %v4786
        %v4803 = vadd.f32 %v3966, %v4787
        %v4804 = vadd.f32 %v3967, %v4788
        %v4805 = vadd.f32 %v3968, %v4789
        %v4806 = vadd.f32 %v3969, %v4790
        %v4807 = vld [vmem:[%s4] sm:$0x1]
        %v4809 = vperm.slane %v4807, 0
        %v4811 = vadd.f32 %v4791, %v4809
        %v4812 = vadd.f32 %v4792, %v4809
        %v4813 = vadd.f32 %v4793, %v4809
        %v4814 = vadd.f32 %v4794, %v4809
        %v4815 = vadd.f32 %v4795, %v4809
        %v4816 = vadd.f32 %v4796, %v4809
        %v4817 = vadd.f32 %v4797, %v4809
        %v4818 = vadd.f32 %v4798, %v4809
        %v4819 = vadd.f32 %v4799, %v4809
        %v4820 = vadd.f32 %v4800, %v4809
        %v4821 = vadd.f32 %v4801, %v4809
        %v4822 = vadd.f32 %v4802, %v4809
        %v4823 = vadd.f32 %v4803, %v4809
        %v4824 = vadd.f32 %v4804, %v4809
        %v4825 = vadd.f32 %v4805, %v4809
        %v4826 = vadd.f32 %v4806, %v4809
        %v4827 = vmul.f32 %v4811, %v1362
        %v4828 = vmul.f32 %v4812, %v1363
        %v4829 = vmul.f32 %v4813, %v1364
        %v4830 = vmul.f32 %v4814, %v1365
        %v4831 = vmul.f32 %v4815, %v1366
        %v4832 = vmul.f32 %v4816, %v1367
        %v4833 = vmul.f32 %v4817, %v1368
        %v4834 = vmul.f32 %v4818, %v1369
        %v4835 = vmul.f32 %v4819, %v1370
        %v4836 = vmul.f32 %v4820, %v1371
        %v4837 = vmul.f32 %v4821, %v1372
        %v4838 = vmul.f32 %v4822, %v1373
        %v4839 = vmul.f32 %v4823, %v1374
        %v4840 = vmul.f32 %v4824, %v1375
        %v4841 = vmul.f32 %v4825, %v1376
        %v4842 = vmul.f32 %v4826, %v1377
        %4843 = vst [vmem:[%s320] sm:$0xff] %v4827
        %4844 = vst [vmem:[%s320 + $0x8] sm:$0xff] %v4828
        %4845 = vst [vmem:[%s320 + $0x10] sm:$0xff] %v4829
        %4846 = vst [vmem:[%s320 + $0x18] sm:$0xff] %v4830
        %4847 = vst [vmem:[%s320 + $0x20] sm:$0xff] %v4831
        %4848 = vst [vmem:[%s320 + $0x28] sm:$0xff] %v4832
        %4849 = vst [vmem:[%s320 + $0x30] sm:$0xff] %v4833
        %4850 = vst [vmem:[%s320 + $0x38] sm:$0xff] %v4834
        %4851 = vst [vmem:[%s320 + $0x40] sm:$0xff] %v4835
        %4852 = vst [vmem:[%s320 + $0x48] sm:$0xff] %v4836
        %4853 = vst [vmem:[%s320 + $0x50] sm:$0xff] %v4837
        %4854 = vst [vmem:[%s320 + $0x58] sm:$0xff] %v4838
        %4855 = vst [vmem:[%s320 + $0x60] sm:$0xff] %v4839
        %4856 = vst [vmem:[%s320 + $0x68] sm:$0xff] %v4840
        %4857 = vst [vmem:[%s320 + $0x70] sm:$0xff] %v4841
        %4858 = vst [vmem:[%s320 + $0x78] sm:$0xff] %v4842
        %s4859 = sand.u32 %s164, 1
        %s4860 = scalar_lea.sflag [#allocation4], %s4859
        %s4861 = sand.u32 %s164, 1
        %s4862 = smul.addr %s4861, 128
        %s4863 = scalar_lea.vmem [#allocation10], %s4862
        // Predicated region
        $region61: #{tpu_custom_call.1} parent=43 // pred_check
          %p4864 = pneg %p174
        $region62: #{tpu_custom_call.1} parent=43 // pred_check_branch
          %4866 = sbr.rel (%p4864) target = $region64
        $region63: #{tpu_custom_call.1} parent=43 // pred_region
          %s4867 = smul.u32 8, %s25
          %4869 = vsyncadd %s4860, 0
          %s4870 = smul.addr %s4867, 2
          %s4871 = smul.addr %s4870, 8
          %s4872 = scalar_lea.hbm %s6, %s4871
          %s4873 = sshll.u32 %s4863, 4
          %s4874 = int_to_ptr.vmem [resolvable:$true] %s4873
          %s4875 = sshll.u32 %s4872, 4
          %s4876 = int_to_ptr.hbm [resolvable:$true] %s4875
          %4881 = dma.vmem_to_hbm [thread:$0]  %s4874, 2048, %s4876, %s4860, 128, 128, 8
        $region64: #{tpu_custom_call.1} parent=43 // pred_fallthru
          _
      $region44: #{tpu_custom_call.1} parent=5 // pred_fallthru
        _
      %p4882 = scmp.le.s32.totalorder 2, %s20
      // Predicated region
      $region65: #{tpu_custom_call.1} parent=5 // pred_check
        %p4883 = pneg %p4882
      $region66: #{tpu_custom_call.1} parent=5 // pred_check_branch
        %4885 = sbr.rel (%p4883) target = $region68
      $region67: #{tpu_custom_call.1} parent=5 // pred_region
        %s4886 = ssub.s32 %s20, 2
        // Predicated region
        $region69: #{tpu_custom_call.1} parent=67 // pred_check
          %p4887 = pneg %p180
        $region70: #{tpu_custom_call.1} parent=67 // pred_check_branch
          %4889 = sbr.rel (%p4887) target = $region72
        $region71: #{tpu_custom_call.1} parent=67 // pred_region
          %s4890 = sand.u32 %s165, 1
          %s4891 = scalar_lea.sflag [#allocation4], %s4890
          %s4892 = sand.u32 %s165, 1
          %s4893 = smul.addr %s4892, 128
          %s4894 = scalar_lea.vmem [#allocation10], %s4893
          %4896 = dma.done %s4891, 2048
        $region72: #{tpu_custom_call.1} parent=67 // pred_fallthru
          _
      $region68: #{tpu_custom_call.1} parent=5 // pred_fallthru
        _
    $region6: #{tpu_custom_call.1} parent=1 // loop_footer
      %s24 = sadd.s32 1, %s20
    $region7: #{tpu_custom_call.1} parent=1 // loop_footer_branch
      %19 = sbr.rel target = $region3
    $region8: #{tpu_custom_call.1} parent=1 // loop_exit
      _
    %4897 = vsyncpa [#allocation3], 1
    %s4898 = scalar_lea.sflag [#allocation3], 1
    %4899 = vsyncpa %s4898, 1
    %4900 = vsyncpa [#allocation6], 1
    %4901 = vsyncpa [#allocation9], 1
    %4902 = vsyncpa [#allocation4], 1
    %s4903 = scalar_lea.sflag [#allocation4], 1
    %4904 = vsyncpa %s4903, 1

</llo_original>
